<compile_context>
chip_gen: v7x
topology: tpu7x:2x2x1
jax: 0.10.0
libtpu: 0.0.40
codegen_flags: <defaults>
</compile_context>

<pallas_src>
import functools
import math

import jax
import jax.numpy as jnp
from jax import lax
from jax.experimental import pallas as pl
from jax.experimental.pallas import tpu as pltpu

PARAM_ORDER = (
    "wq", "bq", "wk", "bk", "wv", "bv", "wo", "bo",
    "ln1_g", "ln1_b", "w1", "b1", "w2", "b2", "ln2_g", "ln2_b",
)
MATMUL_WEIGHTS = ("wq", "wk", "wv", "wo", "w1", "w2")

LN_EPS = 1e-12

# Cached (reshape_heads, single_buffer_weights) variant that lowers on this chip.
_KERNEL_VARIANT = None


def _layer_norm(v, gamma, beta):
    # TF-style layernorm: eps inside the sqrt. Done in f32.
    u = jnp.mean(v, axis=-1, keepdims=True)
    s = jnp.mean((v - u) ** 2, axis=-1, keepdims=True)
    return gamma * ((v - u) / jnp.sqrt(s + LN_EPS)) + beta


def _gelu(v):
    # exact erf-based gelu (matches the PyTorch reference `gelu`)
    return v * 0.5 * (1.0 + lax.erf(v / math.sqrt(2.0)))


def encoder_layer_kernel(
    mask_ref, x_ref,
    wq_ref, bq_ref, wk_ref, bk_ref, wv_ref, bv_ref, wo_ref, bo_ref,
    ln1_g_ref, ln1_b_ref, w1_ref, b1_ref, w2_ref, b2_ref,
    ln2_g_ref, ln2_b_ref,
    out_ref,
    *, num_heads, reshape_heads,
):
    bb, S, H = x_ref.shape
    nh = num_heads
    dh = H // nh

    x = x_ref[...].reshape(bb * S, H)                  # f32 residual path
    x_bf = x.astype(jnp.bfloat16)
    mask = mask_ref[...]                               # [bb, 1, S] additive mask

    # ---- QKV projections: bf16 MXU matmuls, f32 accumulation.
    # The 1/sqrt(dh) attention scale is pre-folded into wq/bq offline.
    q = jnp.dot(x_bf, wq_ref[...], preferred_element_type=jnp.float32) + bq_ref[...]
    k = jnp.dot(x_bf, wk_ref[...], preferred_element_type=jnp.float32) + bk_ref[...]
    v = jnp.dot(x_bf, wv_ref[...], preferred_element_type=jnp.float32) + bv_ref[...]

    # ---- Head split: one relayout per operand (reshape + minor-preserving
    # transpose) when supported, otherwise nh static lane slices + a single
    # leading-axis stack.  Either way all bb batch rows are handled at once.
    def split_heads(t):
        t_bf = t.astype(jnp.bfloat16)
        if reshape_heads:
            t4 = jnp.transpose(t_bf.reshape(bb, S, nh, dh), (0, 2, 1, 3))
            return t4.reshape(bb * nh, S, dh)
        t3 = t_bf.reshape(bb, S, H)
        heads = jnp.stack(
            [t3[:, :, h * dh:(h + 1) * dh] for h in range(nh)], axis=0)
        return heads.reshape(nh * bb, S, dh)

    qh, kh, vh = split_heads(q), split_heads(k), split_heads(v)

    # ---- Batched attention over all bb*nh heads in one pair of einsums.
    scores = jnp.einsum('hqd,hkd->hqk', qh, kh,
                        preferred_element_type=jnp.float32)        # [bb*nh, S, S]
    if reshape_heads:
        scores = (scores.reshape(bb, nh, S, S) + mask[:, :, None, :]
                  ).reshape(bb * nh, S, S)
    else:
        scores = (scores.reshape(nh, bb, S, S) + mask[None]
                  ).reshape(nh * bb, S, S)
    scores = scores - jnp.max(scores, axis=-1, keepdims=True)
    p = jnp.exp(scores)
    p = (p * pl.reciprocal(jnp.sum(p, axis=-1, keepdims=True), approx=True)
         ).astype(jnp.bfloat16)
    # TODO(synk): attention-probs dropout is a no-op (inference semantics).
    ctx = jnp.einsum('hqk,hkd->hqd', p, vh,
                     preferred_element_type=jnp.float32)           # [bb*nh, S, dh]

    # ---- Head merge feeding the output projection (no per-row concat).
    ctx_bf = ctx.astype(jnp.bfloat16)
    if reshape_heads:
        ctx2 = jnp.transpose(ctx_bf.reshape(bb, nh, S, dh), (0, 2, 1, 3)
                             ).reshape(bb * S, H)
    else:
        c4 = ctx_bf.reshape(nh, bb, S, dh)
        ctx2 = jnp.concatenate(
            [c4[h].reshape(bb * S, dh) for h in range(nh)], axis=-1)

    attn = jnp.dot(ctx2, wo_ref[...], preferred_element_type=jnp.float32) + bo_ref[...]
    h1 = _layer_norm(attn + x, ln1_g_ref[...], ln1_b_ref[...])      # f32

    # ---- Intermediate (feed-forward): gelu(x W1 + b1) W2 + b2, residual + LN.
    inter = _gelu(jnp.dot(h1.astype(jnp.bfloat16), w1_ref[...],
                          preferred_element_type=jnp.float32) + b1_ref[...])
    ffn = jnp.dot(inter.astype(jnp.bfloat16), w2_ref[...],
                  preferred_element_type=jnp.float32) + b2_ref[...]
    out = _layer_norm(ffn + h1, ln2_g_ref[...], ln2_b_ref[...])

    out_ref[...] = out.reshape(bb, S, H).astype(out_ref.dtype)


@functools.lru_cache(maxsize=None)
def _vmem_capacity_bytes():
    try:
        info = pltpu.get_tpu_info()
        cap = getattr(info, "vmem_capacity_bytes", None)
        if cap:
            return int(cap)
    except Exception:
        pass
    return 64 << 20   # conservative fallback (v7x per-TensorCore VMEM)


def _step_vmem_bytes(bb, S, H, nh, weight_bytes, weight_bufs=2):
    """Conservative per-grid-step VMEM estimate (weights + pipelined tiles +
    live intermediates: f32 q/k/v/ctx, FFN hidden [bb*S,4H], nh*S*S scores)."""
    R = bb * S
    tiles = 2 * (R * H * 4) * 2          # x input + output tile, double-buffered
    tiles += 2 * (bb * S * 4)            # mask tile
    acts = R * H * 4 * 8                 # f32: x, q, k, v, ctx, attn, h1, out
    acts += R * H * 2 * 5                # bf16 copies (x, q/k/v heads, ctx)
    acts += R * 4 * H * (4 + 2)          # FFN hidden f32 + bf16
    acts += bb * nh * S * S * (4 + 2)    # attention scores f32 + probs bf16
    return weight_bufs * weight_bytes + tiles + acts


def _pick_block_b(B, S, H, nh, weight_bytes, vmem_budget,
                  max_rows=1024, max_bb=16):
    """Fold several batch rows into one grid step, VMEM-aware, while keeping
    the grid >= 2 steps so "parallel" batch steps can use both v7x TCs."""
    if S % 8 != 0:          # keep the (bb,S,H)->(bb*S,H) flatten layout-trivial
        return 1
    limit = min(max_bb, max(1, B // 2))
    bb = 1
    for cand in range(1, limit + 1):
        if B % cand != 0 or cand * S > max_rows:
            continue
        if _step_vmem_bytes(cand, S, H, nh, weight_bytes) > vmem_budget:
            continue
        bb = cand
    return bb


@functools.lru_cache(maxsize=None)
def _build_layer_call(B, S, H, num_heads, bb, param_shapes, weight_bytes,
                      vmem_limit, out_dtype, donate, reshape_heads,
                      single_buffer_weights):
    kernel = functools.partial(encoder_layer_kernel, num_heads=num_heads,
                               reshape_heads=reshape_heads)

    def weight_spec(shape):
        nd = len(shape)
        kwargs = {}
        if single_buffer_weights:
            # Grid-invariant operands: single-buffer to halve resident weight
            # VMEM (double-buffering a constant-index_map block buys nothing).
            kwargs["pipeline_mode"] = pl.Buffered(1)
        return pl.BlockSpec(shape, lambda b, _nd=nd: (0,) * _nd, **kwargs)

    in_specs = [
        pl.BlockSpec((bb, 1, S), lambda b: (b, 0, 0)),   # mask  [B,1,S]
        pl.BlockSpec((bb, S, H), lambda b: (b, 0, 0)),   # x     [B,S,H]
    ] + [weight_spec(s) for s in param_shapes]

    flops = 24 * B * S * H * H + 4 * B * S * S * H
    transcendentals = B * num_heads * S * S + 4 * B * S * H   # softmax exp + gelu erf
    bytes_accessed = weight_bytes + 2 * B * S * H * 4 + B * S * 4

    return pl.pallas_call(
        kernel,
        out_shape=jax.ShapeDtypeStruct((B, S, H), jnp.dtype(out_dtype)),
        grid=(B // bb,),
        in_specs=in_specs,
        out_specs=pl.BlockSpec((bb, S, H), lambda b: (b, 0, 0)),
        input_output_aliases=({1: 0} if donate else {}),
        compiler_params=pltpu.CompilerParams(
            dimension_semantics=("parallel",),     # batch rows are independent
            vmem_limit_bytes=int(vmem_limit)),
        cost_estimate=pl.CostEstimate(
            flops=int(flops),
            transcendentals=int(transcendentals),
            bytes_accessed=int(bytes_accessed)),
    )


def run_encoder_layer(x, mask3, params, num_heads, donate=False):
    global _KERNEL_VARIANT
    B, S, H = x.shape
    weight_bytes = sum(int(params[n].size) * params[n].dtype.itemsize
                       for n in PARAM_ORDER)
    cap = int(0.87 * _vmem_capacity_bytes())            # generation-aware VMEM cap
    bb = _pick_block_b(B, S, H, num_heads, weight_bytes, cap)
    est = _step_vmem_bytes(bb, S, H, num_heads, weight_bytes)
    vmem_limit = int(min(cap, max(est, 32 << 20)))
    param_shapes = tuple(tuple(int(d) for d in params[n].shape)
                         for n in PARAM_ORDER)
    args = (mask3, x, *[params[n] for n in PARAM_ORDER])

    # Probe kernel variants in decreasing-performance order on the first call
    # and cache the first one that lowers on this chip:
    #   (reshape-based head split, single-buffered weights) -> ... -> safest.
    variants = ([_KERNEL_VARIANT] if _KERNEL_VARIANT is not None else
                [(True, True), (True, False), (False, True), (False, False)])
    last_err = None
    for reshape_heads, single_buffer in variants:
        try:
            call = _build_layer_call(B, S, H, num_heads, bb, param_shapes,
                                     weight_bytes, vmem_limit, str(x.dtype),
                                     donate, reshape_heads, single_buffer)
            out = call(*args)
        except Exception as e:    # variant not supported by this Mosaic build
            last_err = e
            continue
        _KERNEL_VARIANT = (reshape_heads, single_buffer)
        return out
    raise last_err


def prepare_layer_params(params, num_heads):
    """One-time parameter prep (call once at load time, NOT per forward):
      * fold the 1/sqrt(dh) attention scale into wq/bq (zero in-kernel cost),
      * cast the six matmul weights to bf16 (halves weight DMA + VMEM).
    Biases and LayerNorm params stay f32 for f32 epilogues."""
    H = params["wq"].shape[0]
    dh = H // num_heads
    scale = 1.0 / math.sqrt(dh)
    prepared = dict(params)
    prepared["wq"] = params["wq"] * scale
    prepared["bq"] = params["bq"] * scale
    for name in MATMUL_WEIGHTS:
        prepared[name] = prepared[name].astype(jnp.bfloat16)
    return prepared


def prepare_encoder_params(layer_params, num_heads):
    return [prepare_layer_params(p, num_heads) for p in layer_params]


def encoder_forward(hidden_states, attention_mask, prepared_layer_params,
                    num_heads, output_all_encoded_layers=True):
    """Mirrors Encoder.forward. attention_mask: [B,1,1,S] additive mask.
    `prepared_layer_params` must come from prepare_encoder_params()."""
    B, S, H = hidden_states.shape
    mask3 = attention_mask.reshape(B, 1, S).astype(jnp.float32)   # glue
    donate = not output_all_encoded_layers      # alias x->out when safe
    all_encoder_layers = []
    for params in prepared_layer_params:
        hidden_states = run_encoder_layer(hidden_states, mask3, params,
                                          num_heads, donate=donate)
        if output_all_encoded_layers:
            all_encoder_layers.append(hidden_states)
    if not output_all_encoded_layers:
        all_encoder_layers.append(hidden_states)
    return all_encoder_layers


def encoder_reference(hidden_states, attention_mask, layer_params, num_heads,
                      output_all_encoded_layers=True):
    """Pure-JAX f32 reference mirroring the PyTorch module (dropout = eval)."""
    B, S, H = hidden_states.shape
    nh = num_heads
    dh = H // nh
    mask = attention_mask.reshape(B, 1, 1, S).astype(jnp.float32)
    outs = []
    h = hidden_states
    for p in layer_params:
        q = h @ p["wq"] + p["bq"]
        k = h @ p["wk"] + p["bk"]
        v = h @ p["wv"] + p["bv"]

        def split(t):
            return jnp.transpose(t.reshape(B, S, nh, dh), (0, 2, 1, 3))

        qh, kh, vh = split(q), split(k), split(v)
        sc = jnp.einsum('bhqd,bhkd->bhqk', qh, kh) / math.sqrt(dh) + mask
        pr = jax.nn.softmax(sc, axis=-1)
        ctx = jnp.einsum('bhqk,bhkd->bhqd', pr, vh)
        ctx = jnp.transpose(ctx, (0, 2, 1, 3)).reshape(B, S, H)
        attn = ctx @ p["wo"] + p["bo"]
        h1 = _layer_norm(attn + h, p["ln1_g"], p["ln1_b"])
        inter = _gelu(h1 @ p["w1"] + p["b1"])
        ffn = inter @ p["w2"] + p["b2"]
        h = _layer_norm(ffn + h1, p["ln2_g"], p["ln2_b"])
        if output_all_encoded_layers:
            outs.append(h)
    if not output_all_encoded_layers:
        outs.append(h)
    return outs


def init_layer_params(key, hidden_size):
    """Deterministic synthetic init; linear weights stored transposed [in, out]."""
    H = hidden_size
    ks = jax.random.split(key, 6)
    std = 0.02

    def lin(k, d_in, d_out):
        w = jax.random.normal(k, (d_in, d_out), jnp.float32) * std
        b = jnp.zeros((1, d_out), jnp.float32)
        return w, b

    wq, bq = lin(ks[0], H, H)
    wk, bk = lin(ks[1], H, H)
    wv, bv = lin(ks[2], H, H)
    wo, bo = lin(ks[3], H, H)
    w1, b1 = lin(ks[4], H, 4 * H)
    w2, b2 = lin(ks[5], 4 * H, H)
    return {
        "wq": wq, "bq": bq, "wk": wk, "bk": bk, "wv": wv, "bv": bv,
        "wo": wo, "bo": bo,
        "ln1_g": jnp.ones((1, H), jnp.float32),
        "ln1_b": jnp.zeros((1, H), jnp.float32),
        "w1": w1, "b1": b1, "w2": w2, "b2": b2,
        "ln2_g": jnp.ones((1, H), jnp.float32),
        "ln2_b": jnp.zeros((1, H), jnp.float32),
    }


if __name__ == "__main__":
    B, S, H = 2, 8, 32          # batch, seq, hidden
    NUM_HEADS = 2
    NUM_LAYERS = 2              # args.num_hidden_layers

    key = jax.random.PRNGKey(0)
    k_x, k_m, k_p = jax.random.split(key, 3)

    hidden_states = jax.random.normal(k_x, (B, S, H), jnp.float32)

    # Additive BERT-style attention mask [B, 1, 1, S]: 0 = attend, -1e4 = masked.
    keep = (jax.random.uniform(k_m, (B, S)) > 0.2).astype(jnp.float32)
    attention_mask = ((1.0 - keep) * -10000.0).reshape(B, 1, 1, S)

    layer_keys = jax.random.split(k_p, NUM_LAYERS)
    layer_params = [init_layer_params(k, H) for k in layer_keys]

    # One-time parameter preparation (bf16 weights, scale folded into wq/bq).
    prepared = prepare_encoder_params(layer_params, NUM_HEADS)

    outs = encoder_forward(hidden_states, attention_mask, prepared, NUM_HEADS,
                           output_all_encoded_layers=True)
    jax.block_until_ready(outs)
    assert len(outs) == NUM_LAYERS and outs[-1].shape == (B, S, H)

    # Tolerance-checked pure-JAX f32 reference.
    refs = encoder_reference(hidden_states, attention_mask, layer_params,
                             NUM_HEADS, output_all_encoded_layers=True)
    for o, r in zip(outs, refs):
        assert float(jnp.max(jnp.abs(o - r))) < 5e-2

    # Also exercise the final-layer-only path (input/output buffer aliasing).
    last = encoder_forward(hidden_states, attention_mask, prepared, NUM_HEADS,
                           output_all_encoded_layers=False)
    jax.block_until_ready(last)
    assert len(last) == 1 and last[0].shape == (B, S, H)

    print("KERNEL_OK")
</pallas_src>

<mosaic_0001>
module attributes {stable_mosaic.version = 11 : i64} {
  func.func @encoder_layer_kernel(%arg0: i32, %arg1: memref<1x1x8xf32, #tpu.memory_space<vmem>>, %arg2: memref<1x8x32xf32, #tpu.memory_space<vmem>>, %arg3: memref<32x32xbf16, #tpu.memory_space<vmem>>, %arg4: memref<1x32xf32, #tpu.memory_space<vmem>>, %arg5: memref<32x32xbf16, #tpu.memory_space<vmem>>, %arg6: memref<1x32xf32, #tpu.memory_space<vmem>>, %arg7: memref<32x32xbf16, #tpu.memory_space<vmem>>, %arg8: memref<1x32xf32, #tpu.memory_space<vmem>>, %arg9: memref<32x32xbf16, #tpu.memory_space<vmem>>, %arg10: memref<1x32xf32, #tpu.memory_space<vmem>>, %arg11: memref<1x32xf32, #tpu.memory_space<vmem>>, %arg12: memref<1x32xf32, #tpu.memory_space<vmem>>, %arg13: memref<32x128xbf16, #tpu.memory_space<vmem>>, %arg14: memref<1x128xf32, #tpu.memory_space<vmem>>, %arg15: memref<128x32xbf16, #tpu.memory_space<vmem>>, %arg16: memref<1x32xf32, #tpu.memory_space<vmem>>, %arg17: memref<1x32xf32, #tpu.memory_space<vmem>>, %arg18: memref<1x32xf32, #tpu.memory_space<vmem>>, %arg19: memref<1x8x32xf32, #tpu.memory_space<vmem>>) attributes {dimension_semantics = [#tpu.dimension_semantics<parallel>], iteration_bounds = array<i64: 2>, scalar_prefetch = 0 : i64, scratch_operands = 0 : i64, tpu.core_type = #tpu.core_type<tc>, window_params = [{transform_indices = @transform_0, window_bounds = array<i64: 1, 1, 8>}, {transform_indices = @transform_1, window_bounds = array<i64: 1, 8, 32>}, {pipeline_mode = #tpu.pipeline_mode<synchronous>, transform_indices = @transform_2, window_bounds = array<i64: 32, 32>}, {pipeline_mode = #tpu.pipeline_mode<synchronous>, transform_indices = @transform_3, window_bounds = array<i64: 1, 32>}, {pipeline_mode = #tpu.pipeline_mode<synchronous>, transform_indices = @transform_4, window_bounds = array<i64: 32, 32>}, {pipeline_mode = #tpu.pipeline_mode<synchronous>, transform_indices = @transform_5, window_bounds = array<i64: 1, 32>}, {pipeline_mode = #tpu.pipeline_mode<synchronous>, transform_indices = @transform_6, window_bounds = array<i64: 32, 32>}, {pipeline_mode = #tpu.pipeline_mode<synchronous>, transform_indices = @transform_7, window_bounds = array<i64: 1, 32>}, {pipeline_mode = #tpu.pipeline_mode<synchronous>, transform_indices = @transform_8, window_bounds = array<i64: 32, 32>}, {pipeline_mode = #tpu.pipeline_mode<synchronous>, transform_indices = @transform_9, window_bounds = array<i64: 1, 32>}, {pipeline_mode = #tpu.pipeline_mode<synchronous>, transform_indices = @transform_10, window_bounds = array<i64: 1, 32>}, {pipeline_mode = #tpu.pipeline_mode<synchronous>, transform_indices = @transform_11, window_bounds = array<i64: 1, 32>}, {pipeline_mode = #tpu.pipeline_mode<synchronous>, transform_indices = @transform_12, window_bounds = array<i64: 32, 128>}, {pipeline_mode = #tpu.pipeline_mode<synchronous>, transform_indices = @transform_13, window_bounds = array<i64: 1, 128>}, {pipeline_mode = #tpu.pipeline_mode<synchronous>, transform_indices = @transform_14, window_bounds = array<i64: 128, 32>}, {pipeline_mode = #tpu.pipeline_mode<synchronous>, transform_indices = @transform_15, window_bounds = array<i64: 1, 32>}, {pipeline_mode = #tpu.pipeline_mode<synchronous>, transform_indices = @transform_16, window_bounds = array<i64: 1, 32>}, {pipeline_mode = #tpu.pipeline_mode<synchronous>, transform_indices = @transform_17, window_bounds = array<i64: 1, 32>}, {transform_indices = @transform_18, window_bounds = array<i64: 1, 8, 32>}]} {
    %c0 = arith.constant 0 : index
    %c0_0 = arith.constant 0 : index
    %c0_1 = arith.constant 0 : index
    %0 = vector.load %arg2[%c0, %c0_0, %c0_1] : memref<1x8x32xf32, #tpu.memory_space<vmem>>, vector<1x8x32xf32>
    %1 = vector.shape_cast %0 : vector<1x8x32xf32> to vector<8x32xf32>
    %2 = arith.truncf %1 : vector<8x32xf32> to vector<8x32xbf16>
    %c0_2 = arith.constant 0 : index
    %c0_3 = arith.constant 0 : index
    %c0_4 = arith.constant 0 : index
    %3 = vector.load %arg1[%c0_2, %c0_3, %c0_4] : memref<1x1x8xf32, #tpu.memory_space<vmem>>, vector<1x1x8xf32>
    %c0_5 = arith.constant 0 : index
    %c0_6 = arith.constant 0 : index
    %4 = vector.load %arg3[%c0_5, %c0_6] : memref<32x32xbf16, #tpu.memory_space<vmem>>, vector<32x32xbf16>
    %cst = arith.constant dense<0.000000e+00> : vector<8x32xf32>
    %5 = tpu.matmul %2, %4, %cst {dimension_numbers = #tpu.dot_dimension_numbers<[1], [0], [0], [1], [0, 0, 1, 1], [], []>} : vector<8x32xbf16>, vector<32x32xbf16>, vector<8x32xf32> -> vector<8x32xf32>
    %c0_7 = arith.constant 0 : index
    %c0_8 = arith.constant 0 : index
    %6 = vector.load %arg4[%c0_7, %c0_8] : memref<1x32xf32, #tpu.memory_space<vmem>>, vector<1x32xf32>
    %7 = vector.broadcast %6 : vector<1x32xf32> to vector<8x32xf32>
    %8 = arith.addf %5, %7 : vector<8x32xf32>
    %c0_9 = arith.constant 0 : index
    %c0_10 = arith.constant 0 : index
    %9 = vector.load %arg5[%c0_9, %c0_10] : memref<32x32xbf16, #tpu.memory_space<vmem>>, vector<32x32xbf16>
    %cst_11 = arith.constant dense<0.000000e+00> : vector<8x32xf32>
    %10 = tpu.matmul %2, %9, %cst_11 {dimension_numbers = #tpu.dot_dimension_numbers<[1], [0], [0], [1], [0, 0, 1, 1], [], []>} : vector<8x32xbf16>, vector<32x32xbf16>, vector<8x32xf32> -> vector<8x32xf32>
    %c0_12 = arith.constant 0 : index
    %c0_13 = arith.constant 0 : index
    %11 = vector.load %arg6[%c0_12, %c0_13] : memref<1x32xf32, #tpu.memory_space<vmem>>, vector<1x32xf32>
    %12 = vector.broadcast %11 : vector<1x32xf32> to vector<8x32xf32>
    %13 = arith.addf %10, %12 : vector<8x32xf32>
    %c0_14 = arith.constant 0 : index
    %c0_15 = arith.constant 0 : index
    %14 = vector.load %arg7[%c0_14, %c0_15] : memref<32x32xbf16, #tpu.memory_space<vmem>>, vector<32x32xbf16>
    %cst_16 = arith.constant dense<0.000000e+00> : vector<8x32xf32>
    %15 = tpu.matmul %2, %14, %cst_16 {dimension_numbers = #tpu.dot_dimension_numbers<[1], [0], [0], [1], [0, 0, 1, 1], [], []>} : vector<8x32xbf16>, vector<32x32xbf16>, vector<8x32xf32> -> vector<8x32xf32>
    %c0_17 = arith.constant 0 : index
    %c0_18 = arith.constant 0 : index
    %16 = vector.load %arg8[%c0_17, %c0_18] : memref<1x32xf32, #tpu.memory_space<vmem>>, vector<1x32xf32>
    %17 = vector.broadcast %16 : vector<1x32xf32> to vector<8x32xf32>
    %18 = arith.addf %15, %17 : vector<8x32xf32>
    %19 = arith.truncf %8 : vector<8x32xf32> to vector<8x32xbf16>
    %20 = vector.shape_cast %19 : vector<8x32xbf16> to vector<1x8x2x16xbf16>
    %21 = tpu.transpose %20, [0, 2, 1, 3] : vector<1x8x2x16xbf16> -> vector<1x2x8x16xbf16>
    %22 = vector.shape_cast %21 : vector<1x2x8x16xbf16> to vector<2x8x16xbf16>
    %23 = arith.truncf %13 : vector<8x32xf32> to vector<8x32xbf16>
    %24 = vector.shape_cast %23 : vector<8x32xbf16> to vector<1x8x2x16xbf16>
    %25 = tpu.transpose %24, [0, 2, 1, 3] : vector<1x8x2x16xbf16> -> vector<1x2x8x16xbf16>
    %26 = vector.shape_cast %25 : vector<1x2x8x16xbf16> to vector<2x8x16xbf16>
    %27 = arith.truncf %18 : vector<8x32xf32> to vector<8x32xbf16>
    %28 = vector.shape_cast %27 : vector<8x32xbf16> to vector<1x8x2x16xbf16>
    %29 = tpu.transpose %28, [0, 2, 1, 3] : vector<1x8x2x16xbf16> -> vector<1x2x8x16xbf16>
    %30 = vector.shape_cast %29 : vector<1x2x8x16xbf16> to vector<2x8x16xbf16>
    "tpu.trace_start"() <{level = 10 : i32, message = "hqd,hkd->hqk"}> : () -> ()
    %cst_19 = arith.constant dense<0.000000e+00> : vector<2x8x8xf32>
    %31 = tpu.matmul %22, %26, %cst_19 {dimension_numbers = #tpu.dot_dimension_numbers<[2], [2], [1], [1], [0, 0, 0, 1, 1, 1], [0], [0]>} : vector<2x8x16xbf16>, vector<2x8x16xbf16>, vector<2x8x8xf32> -> vector<2x8x8xf32>
    "tpu.trace_stop"() : () -> ()
    %32 = vector.shape_cast %31 : vector<2x8x8xf32> to vector<1x2x8x8xf32>
    %33 = vector.shape_cast %3 : vector<1x1x8xf32> to vector<1x1x1x8xf32>
    %34 = vector.broadcast %33 : vector<1x1x1x8xf32> to vector<1x2x8x8xf32>
    %35 = arith.addf %32, %34 : vector<1x2x8x8xf32>
    %36 = vector.shape_cast %35 : vector<1x2x8x8xf32> to vector<2x8x8xf32>
    %cst_20 = arith.constant dense<0xFF800000> : vector<2x8xf32>
    %37 = vector.multi_reduction <maximumf>, %36, %cst_20 [2] : vector<2x8x8xf32> to vector<2x8xf32>
    %38 = vector.shape_cast %37 : vector<2x8xf32> to vector<2x8x1xf32>
    %39 = vector.broadcast %38 : vector<2x8x1xf32> to vector<2x8x8xf32>
    %40 = arith.subf %36, %39 : vector<2x8x8xf32>
    %41 = math.exp %40 : vector<2x8x8xf32>
    %cst_21 = arith.constant dense<0.000000e+00> : vector<2x8xf32>
    %42 = vector.multi_reduction <add>, %41, %cst_21 [2] : vector<2x8x8xf32> to vector<2x8xf32>
    %43 = vector.shape_cast %42 : vector<2x8xf32> to vector<2x8x1xf32>
    %44 = tpu.reciprocal %43 {approx = true} : vector<2x8x1xf32> -> vector<2x8x1xf32>
    %45 = vector.broadcast %44 : vector<2x8x1xf32> to vector<2x8x8xf32>
    %46 = arith.mulf %41, %45 : vector<2x8x8xf32>
    %47 = arith.truncf %46 : vector<2x8x8xf32> to vector<2x8x8xbf16>
    "tpu.trace_start"() <{level = 10 : i32, message = "hqk,hkd->hqd"}> : () -> ()
    %cst_22 = arith.constant dense<0.000000e+00> : vector<2x8x16xf32>
    %48 = tpu.matmul %47, %30, %cst_22 {dimension_numbers = #tpu.dot_dimension_numbers<[2], [1], [1], [2], [0, 0, 0, 1, 1, 2], [0], [0]>} : vector<2x8x8xbf16>, vector<2x8x16xbf16>, vector<2x8x16xf32> -> vector<2x8x16xf32>
    "tpu.trace_stop"() : () -> ()
    %49 = arith.truncf %48 : vector<2x8x16xf32> to vector<2x8x16xbf16>
    %50 = vector.shape_cast %49 : vector<2x8x16xbf16> to vector<1x2x8x16xbf16>
    %51 = tpu.transpose %50, [0, 2, 1, 3] : vector<1x2x8x16xbf16> -> vector<1x8x2x16xbf16>
    %52 = vector.shape_cast %51 : vector<1x8x2x16xbf16> to vector<8x32xbf16>
    %c0_23 = arith.constant 0 : index
    %c0_24 = arith.constant 0 : index
    %53 = vector.load %arg9[%c0_23, %c0_24] : memref<32x32xbf16, #tpu.memory_space<vmem>>, vector<32x32xbf16>
    %cst_25 = arith.constant dense<0.000000e+00> : vector<8x32xf32>
    %54 = tpu.matmul %52, %53, %cst_25 {dimension_numbers = #tpu.dot_dimension_numbers<[1], [0], [0], [1], [0, 0, 1, 1], [], []>} : vector<8x32xbf16>, vector<32x32xbf16>, vector<8x32xf32> -> vector<8x32xf32>
    %c0_26 = arith.constant 0 : index
    %c0_27 = arith.constant 0 : index
    %55 = vector.load %arg10[%c0_26, %c0_27] : memref<1x32xf32, #tpu.memory_space<vmem>>, vector<1x32xf32>
    %56 = vector.broadcast %55 : vector<1x32xf32> to vector<8x32xf32>
    %57 = arith.addf %54, %56 : vector<8x32xf32>
    %58 = arith.addf %57, %1 : vector<8x32xf32>
    %c0_28 = arith.constant 0 : index
    %c0_29 = arith.constant 0 : index
    %59 = vector.load %arg11[%c0_28, %c0_29] : memref<1x32xf32, #tpu.memory_space<vmem>>, vector<1x32xf32>
    %c0_30 = arith.constant 0 : index
    %c0_31 = arith.constant 0 : index
    %60 = vector.load %arg12[%c0_30, %c0_31] : memref<1x32xf32, #tpu.memory_space<vmem>>, vector<1x32xf32>
    %cst_32 = arith.constant dense<0.000000e+00> : vector<8xf32>
    %61 = vector.multi_reduction <add>, %58, %cst_32 [1] : vector<8x32xf32> to vector<8xf32>
    %62 = vector.shape_cast %61 : vector<8xf32> to vector<8x1xf32>
    %cst_33 = arith.constant 3.200000e+01 : f32
    %63 = vector.broadcast %cst_33 : f32 to vector<8x1xf32>
    %64 = arith.divf %62, %63 : vector<8x1xf32>
    %65 = vector.broadcast %64 : vector<8x1xf32> to vector<8x32xf32>
    %66 = arith.subf %58, %65 : vector<8x32xf32>
    %67 = arith.mulf %66, %66 : vector<8x32xf32>
    %cst_34 = arith.constant dense<0.000000e+00> : vector<8xf32>
    %68 = vector.multi_reduction <add>, %67, %cst_34 [1] : vector<8x32xf32> to vector<8xf32>
    %69 = vector.shape_cast %68 : vector<8xf32> to vector<8x1xf32>
    %cst_35 = arith.constant 3.200000e+01 : f32
    %70 = vector.broadcast %cst_35 : f32 to vector<8x1xf32>
    %71 = arith.divf %69, %70 : vector<8x1xf32>
    %72 = vector.broadcast %64 : vector<8x1xf32> to vector<8x32xf32>
    %73 = arith.subf %58, %72 : vector<8x32xf32>
    %cst_36 = arith.constant 9.99999996E-13 : f32
    %74 = vector.broadcast %cst_36 : f32 to vector<8x1xf32>
    %75 = arith.addf %71, %74 : vector<8x1xf32>
    %76 = math.sqrt %75 : vector<8x1xf32>
    %77 = vector.broadcast %76 : vector<8x1xf32> to vector<8x32xf32>
    %78 = arith.divf %73, %77 : vector<8x32xf32>
    %79 = vector.broadcast %59 : vector<1x32xf32> to vector<8x32xf32>
    %80 = arith.mulf %79, %78 : vector<8x32xf32>
    %81 = vector.broadcast %60 : vector<1x32xf32> to vector<8x32xf32>
    %82 = arith.addf %80, %81 : vector<8x32xf32>
    %83 = arith.truncf %82 : vector<8x32xf32> to vector<8x32xbf16>
    %c0_37 = arith.constant 0 : index
    %c0_38 = arith.constant 0 : index
    %84 = vector.load %arg13[%c0_37, %c0_38] : memref<32x128xbf16, #tpu.memory_space<vmem>>, vector<32x128xbf16>
    %cst_39 = arith.constant dense<0.000000e+00> : vector<8x128xf32>
    %85 = tpu.matmul %83, %84, %cst_39 {dimension_numbers = #tpu.dot_dimension_numbers<[1], [0], [0], [1], [0, 0, 1, 1], [], []>} : vector<8x32xbf16>, vector<32x128xbf16>, vector<8x128xf32> -> vector<8x128xf32>
    %c0_40 = arith.constant 0 : index
    %c0_41 = arith.constant 0 : index
    %86 = vector.load %arg14[%c0_40, %c0_41] : memref<1x128xf32, #tpu.memory_space<vmem>>, vector<1x128xf32>
    %87 = vector.broadcast %86 : vector<1x128xf32> to vector<8x128xf32>
    %88 = arith.addf %85, %87 : vector<8x128xf32>
    %cst_42 = arith.constant 5.000000e-01 : f32
    %89 = vector.broadcast %cst_42 : f32 to vector<8x128xf32>
    %90 = arith.mulf %88, %89 : vector<8x128xf32>
    %cst_43 = arith.constant 1.41421354 : f32
    %91 = vector.broadcast %cst_43 : f32 to vector<8x128xf32>
    %92 = arith.divf %88, %91 : vector<8x128xf32>
    %93 = math.erf %92 : vector<8x128xf32>
    %cst_44 = arith.constant 1.000000e+00 : f32
    %94 = vector.broadcast %cst_44 : f32 to vector<8x128xf32>
    %95 = arith.addf %94, %93 : vector<8x128xf32>
    %96 = arith.mulf %90, %95 : vector<8x128xf32>
    %97 = arith.truncf %96 : vector<8x128xf32> to vector<8x128xbf16>
    %c0_45 = arith.constant 0 : index
    %c0_46 = arith.constant 0 : index
    %98 = vector.load %arg15[%c0_45, %c0_46] : memref<128x32xbf16, #tpu.memory_space<vmem>>, vector<128x32xbf16>
    %cst_47 = arith.constant dense<0.000000e+00> : vector<8x32xf32>
    %99 = tpu.matmul %97, %98, %cst_47 {dimension_numbers = #tpu.dot_dimension_numbers<[1], [0], [0], [1], [0, 0, 1, 1], [], []>} : vector<8x128xbf16>, vector<128x32xbf16>, vector<8x32xf32> -> vector<8x32xf32>
    %c0_48 = arith.constant 0 : index
    %c0_49 = arith.constant 0 : index
    %100 = vector.load %arg16[%c0_48, %c0_49] : memref<1x32xf32, #tpu.memory_space<vmem>>, vector<1x32xf32>
    %101 = vector.broadcast %100 : vector<1x32xf32> to vector<8x32xf32>
    %102 = arith.addf %99, %101 : vector<8x32xf32>
    %103 = arith.addf %102, %82 : vector<8x32xf32>
    %c0_50 = arith.constant 0 : index
    %c0_51 = arith.constant 0 : index
    %104 = vector.load %arg17[%c0_50, %c0_51] : memref<1x32xf32, #tpu.memory_space<vmem>>, vector<1x32xf32>
    %c0_52 = arith.constant 0 : index
    %c0_53 = arith.constant 0 : index
    %105 = vector.load %arg18[%c0_52, %c0_53] : memref<1x32xf32, #tpu.memory_space<vmem>>, vector<1x32xf32>
    %cst_54 = arith.constant dense<0.000000e+00> : vector<8xf32>
    %106 = vector.multi_reduction <add>, %103, %cst_54 [1] : vector<8x32xf32> to vector<8xf32>
    %107 = vector.shape_cast %106 : vector<8xf32> to vector<8x1xf32>
    %cst_55 = arith.constant 3.200000e+01 : f32
    %108 = vector.broadcast %cst_55 : f32 to vector<8x1xf32>
    %109 = arith.divf %107, %108 : vector<8x1xf32>
    %110 = vector.broadcast %109 : vector<8x1xf32> to vector<8x32xf32>
    %111 = arith.subf %103, %110 : vector<8x32xf32>
    %112 = arith.mulf %111, %111 : vector<8x32xf32>
    %cst_56 = arith.constant dense<0.000000e+00> : vector<8xf32>
    %113 = vector.multi_reduction <add>, %112, %cst_56 [1] : vector<8x32xf32> to vector<8xf32>
    %114 = vector.shape_cast %113 : vector<8xf32> to vector<8x1xf32>
    %cst_57 = arith.constant 3.200000e+01 : f32
    %115 = vector.broadcast %cst_57 : f32 to vector<8x1xf32>
    %116 = arith.divf %114, %115 : vector<8x1xf32>
    %117 = vector.broadcast %109 : vector<8x1xf32> to vector<8x32xf32>
    %118 = arith.subf %103, %117 : vector<8x32xf32>
    %cst_58 = arith.constant 9.99999996E-13 : f32
    %119 = vector.broadcast %cst_58 : f32 to vector<8x1xf32>
    %120 = arith.addf %116, %119 : vector<8x1xf32>
    %121 = math.sqrt %120 : vector<8x1xf32>
    %122 = vector.broadcast %121 : vector<8x1xf32> to vector<8x32xf32>
    %123 = arith.divf %118, %122 : vector<8x32xf32>
    %124 = vector.broadcast %104 : vector<1x32xf32> to vector<8x32xf32>
    %125 = arith.mulf %124, %123 : vector<8x32xf32>
    %126 = vector.broadcast %105 : vector<1x32xf32> to vector<8x32xf32>
    %127 = arith.addf %125, %126 : vector<8x32xf32>
    %128 = vector.shape_cast %127 : vector<8x32xf32> to vector<1x8x32xf32>
    %c0_59 = arith.constant 0 : index
    %c0_60 = arith.constant 0 : index
    %c0_61 = arith.constant 0 : index
    %129 = vector.load %arg19[%c0_59, %c0_60, %c0_61] : memref<1x8x32xf32, #tpu.memory_space<vmem>>, vector<1x8x32xf32>
    tpu.vector_store %arg19[%c0_59, %c0_60, %c0_61], %128 {strides = array<i32>} : memref<1x8x32xf32, #tpu.memory_space<vmem>>, vector<1x8x32xf32>,
    return
  }
  func.func @transform_0(%arg0: i32) -> (i32, i32, i32) {
    %c0_i32 = arith.constant 0 : i32
    %c0_i32_0 = arith.constant 0 : i32
    %c0_i32_1 = arith.constant 0 : i32
    return %arg0, %c0_i32, %c0_i32_0 : i32, i32, i32
  }
  func.func @transform_1(%arg0: i32) -> (i32, i32, i32) {
    %c0_i32 = arith.constant 0 : i32
    %c0_i32_0 = arith.constant 0 : i32
    %c0_i32_1 = arith.constant 0 : i32
    return %arg0, %c0_i32, %c0_i32_0 : i32, i32, i32
  }
  func.func @transform_2(%arg0: i32) -> (i32, i32) {
    %c0_i32 = arith.constant 0 : i32
    %c0_i32_0 = arith.constant 0 : i32
    %c0_i32_1 = arith.constant 0 : i32
    return %c0_i32, %c0_i32_0 : i32, i32
  }
  func.func @transform_3(%arg0: i32) -> (i32, i32) {
    %c0_i32 = arith.constant 0 : i32
    %c0_i32_0 = arith.constant 0 : i32
    %c0_i32_1 = arith.constant 0 : i32
    return %c0_i32, %c0_i32_0 : i32, i32
  }
  func.func @transform_4(%arg0: i32) -> (i32, i32) {
    %c0_i32 = arith.constant 0 : i32
    %c0_i32_0 = arith.constant 0 : i32
    %c0_i32_1 = arith.constant 0 : i32
    return %c0_i32, %c0_i32_0 : i32, i32
  }
  func.func @transform_5(%arg0: i32) -> (i32, i32) {
    %c0_i32 = arith.constant 0 : i32
    %c0_i32_0 = arith.constant 0 : i32
    %c0_i32_1 = arith.constant 0 : i32
    return %c0_i32, %c0_i32_0 : i32, i32
  }
  func.func @transform_6(%arg0: i32) -> (i32, i32) {
    %c0_i32 = arith.constant 0 : i32
    %c0_i32_0 = arith.constant 0 : i32
    %c0_i32_1 = arith.constant 0 : i32
    return %c0_i32, %c0_i32_0 : i32, i32
  }
  func.func @transform_7(%arg0: i32) -> (i32, i32) {
    %c0_i32 = arith.constant 0 : i32
    %c0_i32_0 = arith.constant 0 : i32
    %c0_i32_1 = arith.constant 0 : i32
    return %c0_i32, %c0_i32_0 : i32, i32
  }
  func.func @transform_8(%arg0: i32) -> (i32, i32) {
    %c0_i32 = arith.constant 0 : i32
    %c0_i32_0 = arith.constant 0 : i32
    %c0_i32_1 = arith.constant 0 : i32
    return %c0_i32, %c0_i32_0 : i32, i32
  }
  func.func @transform_9(%arg0: i32) -> (i32, i32) {
    %c0_i32 = arith.constant 0 : i32
    %c0_i32_0 = arith.constant 0 : i32
    %c0_i32_1 = arith.constant 0 : i32
    return %c0_i32, %c0_i32_0 : i32, i32
  }
  func.func @transform_10(%arg0: i32) -> (i32, i32) {
    %c0_i32 = arith.constant 0 : i32
    %c0_i32_0 = arith.constant 0 : i32
    %c0_i32_1 = arith.constant 0 : i32
    return %c0_i32, %c0_i32_0 : i32, i32
  }
  func.func @transform_11(%arg0: i32) -> (i32, i32) {
    %c0_i32 = arith.constant 0 : i32
    %c0_i32_0 = arith.constant 0 : i32
    %c0_i32_1 = arith.constant 0 : i32
    return %c0_i32, %c0_i32_0 : i32, i32
  }
  func.func @transform_12(%arg0: i32) -> (i32, i32) {
    %c0_i32 = arith.constant 0 : i32
    %c0_i32_0 = arith.constant 0 : i32
    %c0_i32_1 = arith.constant 0 : i32
    return %c0_i32, %c0_i32_0 : i32, i32
  }
  func.func @transform_13(%arg0: i32) -> (i32, i32) {
    %c0_i32 = arith.constant 0 : i32
    %c0_i32_0 = arith.constant 0 : i32
    %c0_i32_1 = arith.constant 0 : i32
    return %c0_i32, %c0_i32_0 : i32, i32
  }
  func.func @transform_14(%arg0: i32) -> (i32, i32) {
    %c0_i32 = arith.constant 0 : i32
    %c0_i32_0 = arith.constant 0 : i32
    %c0_i32_1 = arith.constant 0 : i32
    return %c0_i32, %c0_i32_0 : i32, i32
  }
  func.func @transform_15(%arg0: i32) -> (i32, i32) {
    %c0_i32 = arith.constant 0 : i32
    %c0_i32_0 = arith.constant 0 : i32
    %c0_i32_1 = arith.constant 0 : i32
    return %c0_i32, %c0_i32_0 : i32, i32
  }
  func.func @transform_16(%arg0: i32) -> (i32, i32) {
    %c0_i32 = arith.constant 0 : i32
    %c0_i32_0 = arith.constant 0 : i32
    %c0_i32_1 = arith.constant 0 : i32
    return %c0_i32, %c0_i32_0 : i32, i32
  }
  func.func @transform_17(%arg0: i32) -> (i32, i32) {
    %c0_i32 = arith.constant 0 : i32
    %c0_i32_0 = arith.constant 0 : i32
    %c0_i32_1 = arith.constant 0 : i32
    return %c0_i32, %c0_i32_0 : i32, i32
  }
  func.func @transform_18(%arg0: i32) -> (i32, i32, i32) {
    %c0_i32 = arith.constant 0 : i32
    %c0_i32_0 = arith.constant 0 : i32
    %c0_i32_1 = arith.constant 0 : i32
    return %arg0, %c0_i32, %c0_i32_0 : i32, i32, i32
  }
}

module attributes {stable_mosaic.version = 11 : i64} {
  func.func @encoder_layer_kernel(%arg0: i32, %arg1: memref<1x1x8xf32, #tpu.memory_space<vmem>>, %arg2: memref<1x8x32xf32, #tpu.memory_space<vmem>>, %arg3: memref<32x32xbf16, #tpu.memory_space<vmem>>, %arg4: memref<1x32xf32, #tpu.memory_space<vmem>>, %arg5: memref<32x32xbf16, #tpu.memory_space<vmem>>, %arg6: memref<1x32xf32, #tpu.memory_space<vmem>>, %arg7: memref<32x32xbf16, #tpu.memory_space<vmem>>, %arg8: memref<1x32xf32, #tpu.memory_space<vmem>>, %arg9: memref<32x32xbf16, #tpu.memory_space<vmem>>, %arg10: memref<1x32xf32, #tpu.memory_space<vmem>>, %arg11: memref<1x32xf32, #tpu.memory_space<vmem>>, %arg12: memref<1x32xf32, #tpu.memory_space<vmem>>, %arg13: memref<32x128xbf16, #tpu.memory_space<vmem>>, %arg14: memref<1x128xf32, #tpu.memory_space<vmem>>, %arg15: memref<128x32xbf16, #tpu.memory_space<vmem>>, %arg16: memref<1x32xf32, #tpu.memory_space<vmem>>, %arg17: memref<1x32xf32, #tpu.memory_space<vmem>>, %arg18: memref<1x32xf32, #tpu.memory_space<vmem>>, %arg19: memref<1x8x32xf32, #tpu.memory_space<vmem>>) attributes {dimension_semantics = [#tpu.dimension_semantics<parallel>], iteration_bounds = array<i64: 2>, scalar_prefetch = 0 : i64, scratch_operands = 0 : i64, tpu.core_type = #tpu.core_type<tc>, window_params = [{transform_indices = @transform_0, window_bounds = array<i64: 1, 1, 8>}, {transform_indices = @transform_1, window_bounds = array<i64: 1, 8, 32>}, {pipeline_mode = #tpu.pipeline_mode<synchronous>, transform_indices = @transform_2, window_bounds = array<i64: 32, 32>}, {pipeline_mode = #tpu.pipeline_mode<synchronous>, transform_indices = @transform_3, window_bounds = array<i64: 1, 32>}, {pipeline_mode = #tpu.pipeline_mode<synchronous>, transform_indices = @transform_4, window_bounds = array<i64: 32, 32>}, {pipeline_mode = #tpu.pipeline_mode<synchronous>, transform_indices = @transform_5, window_bounds = array<i64: 1, 32>}, {pipeline_mode = #tpu.pipeline_mode<synchronous>, transform_indices = @transform_6, window_bounds = array<i64: 32, 32>}, {pipeline_mode = #tpu.pipeline_mode<synchronous>, transform_indices = @transform_7, window_bounds = array<i64: 1, 32>}, {pipeline_mode = #tpu.pipeline_mode<synchronous>, transform_indices = @transform_8, window_bounds = array<i64: 32, 32>}, {pipeline_mode = #tpu.pipeline_mode<synchronous>, transform_indices = @transform_9, window_bounds = array<i64: 1, 32>}, {pipeline_mode = #tpu.pipeline_mode<synchronous>, transform_indices = @transform_10, window_bounds = array<i64: 1, 32>}, {pipeline_mode = #tpu.pipeline_mode<synchronous>, transform_indices = @transform_11, window_bounds = array<i64: 1, 32>}, {pipeline_mode = #tpu.pipeline_mode<synchronous>, transform_indices = @transform_12, window_bounds = array<i64: 32, 128>}, {pipeline_mode = #tpu.pipeline_mode<synchronous>, transform_indices = @transform_13, window_bounds = array<i64: 1, 128>}, {pipeline_mode = #tpu.pipeline_mode<synchronous>, transform_indices = @transform_14, window_bounds = array<i64: 128, 32>}, {pipeline_mode = #tpu.pipeline_mode<synchronous>, transform_indices = @transform_15, window_bounds = array<i64: 1, 32>}, {pipeline_mode = #tpu.pipeline_mode<synchronous>, transform_indices = @transform_16, window_bounds = array<i64: 1, 32>}, {pipeline_mode = #tpu.pipeline_mode<synchronous>, transform_indices = @transform_17, window_bounds = array<i64: 1, 32>}, {transform_indices = @transform_18, window_bounds = array<i64: 1, 8, 32>}]} {
    %c0 = arith.constant 0 : index
    %c0_0 = arith.constant 0 : index
    %c0_1 = arith.constant 0 : index
    %0 = vector.load %arg2[%c0, %c0_0, %c0_1] : memref<1x8x32xf32, #tpu.memory_space<vmem>>, vector<1x8x32xf32>
    %1 = vector.shape_cast %0 : vector<1x8x32xf32> to vector<8x32xf32>
    %2 = arith.truncf %1 : vector<8x32xf32> to vector<8x32xbf16>
    %c0_2 = arith.constant 0 : index
    %c0_3 = arith.constant 0 : index
    %c0_4 = arith.constant 0 : index
    %3 = vector.load %arg1[%c0_2, %c0_3, %c0_4] : memref<1x1x8xf32, #tpu.memory_space<vmem>>, vector<1x1x8xf32>
    %c0_5 = arith.constant 0 : index
    %c0_6 = arith.constant 0 : index
    %4 = vector.load %arg3[%c0_5, %c0_6] : memref<32x32xbf16, #tpu.memory_space<vmem>>, vector<32x32xbf16>
    %cst = arith.constant dense<0.000000e+00> : vector<8x32xf32>
    %5 = tpu.matmul %2, %4, %cst {dimension_numbers = #tpu.dot_dimension_numbers<[1], [0], [0], [1], [0, 0, 1, 1], [], []>} : vector<8x32xbf16>, vector<32x32xbf16>, vector<8x32xf32> -> vector<8x32xf32>
    %c0_7 = arith.constant 0 : index
    %c0_8 = arith.constant 0 : index
    %6 = vector.load %arg4[%c0_7, %c0_8] : memref<1x32xf32, #tpu.memory_space<vmem>>, vector<1x32xf32>
    %7 = vector.broadcast %6 : vector<1x32xf32> to vector<8x32xf32>
    %8 = arith.addf %5, %7 : vector<8x32xf32>
    %c0_9 = arith.constant 0 : index
    %c0_10 = arith.constant 0 : index
    %9 = vector.load %arg5[%c0_9, %c0_10] : memref<32x32xbf16, #tpu.memory_space<vmem>>, vector<32x32xbf16>
    %cst_11 = arith.constant dense<0.000000e+00> : vector<8x32xf32>
    %10 = tpu.matmul %2, %9, %cst_11 {dimension_numbers = #tpu.dot_dimension_numbers<[1], [0], [0], [1], [0, 0, 1, 1], [], []>} : vector<8x32xbf16>, vector<32x32xbf16>, vector<8x32xf32> -> vector<8x32xf32>
    %c0_12 = arith.constant 0 : index
    %c0_13 = arith.constant 0 : index
    %11 = vector.load %arg6[%c0_12, %c0_13] : memref<1x32xf32, #tpu.memory_space<vmem>>, vector<1x32xf32>
    %12 = vector.broadcast %11 : vector<1x32xf32> to vector<8x32xf32>
    %13 = arith.addf %10, %12 : vector<8x32xf32>
    %c0_14 = arith.constant 0 : index
    %c0_15 = arith.constant 0 : index
    %14 = vector.load %arg7[%c0_14, %c0_15] : memref<32x32xbf16, #tpu.memory_space<vmem>>, vector<32x32xbf16>
    %cst_16 = arith.constant dense<0.000000e+00> : vector<8x32xf32>
    %15 = tpu.matmul %2, %14, %cst_16 {dimension_numbers = #tpu.dot_dimension_numbers<[1], [0], [0], [1], [0, 0, 1, 1], [], []>} : vector<8x32xbf16>, vector<32x32xbf16>, vector<8x32xf32> -> vector<8x32xf32>
    %c0_17 = arith.constant 0 : index
    %c0_18 = arith.constant 0 : index
    %16 = vector.load %arg8[%c0_17, %c0_18] : memref<1x32xf32, #tpu.memory_space<vmem>>, vector<1x32xf32>
    %17 = vector.broadcast %16 : vector<1x32xf32> to vector<8x32xf32>
    %18 = arith.addf %15, %17 : vector<8x32xf32>
    %19 = arith.truncf %8 : vector<8x32xf32> to vector<8x32xbf16>
    %20 = vector.shape_cast %19 : vector<8x32xbf16> to vector<1x8x2x16xbf16>
    %21 = tpu.transpose %20, [0, 2, 1, 3] : vector<1x8x2x16xbf16> -> vector<1x2x8x16xbf16>
    %22 = vector.shape_cast %21 : vector<1x2x8x16xbf16> to vector<2x8x16xbf16>
    %23 = arith.truncf %13 : vector<8x32xf32> to vector<8x32xbf16>
    %24 = vector.shape_cast %23 : vector<8x32xbf16> to vector<1x8x2x16xbf16>
    %25 = tpu.transpose %24, [0, 2, 1, 3] : vector<1x8x2x16xbf16> -> vector<1x2x8x16xbf16>
    %26 = vector.shape_cast %25 : vector<1x2x8x16xbf16> to vector<2x8x16xbf16>
    %27 = arith.truncf %18 : vector<8x32xf32> to vector<8x32xbf16>
    %28 = vector.shape_cast %27 : vector<8x32xbf16> to vector<1x8x2x16xbf16>
    %29 = tpu.transpose %28, [0, 2, 1, 3] : vector<1x8x2x16xbf16> -> vector<1x2x8x16xbf16>
    %30 = vector.shape_cast %29 : vector<1x2x8x16xbf16> to vector<2x8x16xbf16>
    "tpu.trace_start"() <{level = 10 : i32, message = "hqd,hkd->hqk"}> : () -> ()
    %cst_19 = arith.constant dense<0.000000e+00> : vector<2x8x8xf32>
    %31 = tpu.matmul %22, %26, %cst_19 {dimension_numbers = #tpu.dot_dimension_numbers<[2], [2], [1], [1], [0, 0, 0, 1, 1, 1], [0], [0]>} : vector<2x8x16xbf16>, vector<2x8x16xbf16>, vector<2x8x8xf32> -> vector<2x8x8xf32>
    "tpu.trace_stop"() : () -> ()
    %32 = vector.shape_cast %31 : vector<2x8x8xf32> to vector<1x2x8x8xf32>
    %33 = vector.shape_cast %3 : vector<1x1x8xf32> to vector<1x1x1x8xf32>
    %34 = vector.broadcast %33 : vector<1x1x1x8xf32> to vector<1x2x8x8xf32>
    %35 = arith.addf %32, %34 : vector<1x2x8x8xf32>
    %36 = vector.shape_cast %35 : vector<1x2x8x8xf32> to vector<2x8x8xf32>
    %cst_20 = arith.constant dense<0xFF800000> : vector<2x8xf32>
    %37 = vector.multi_reduction <maximumf>, %36, %cst_20 [2] : vector<2x8x8xf32> to vector<2x8xf32>
    %38 = vector.shape_cast %37 : vector<2x8xf32> to vector<2x8x1xf32>
    %39 = vector.broadcast %38 : vector<2x8x1xf32> to vector<2x8x8xf32>
    %40 = arith.subf %36, %39 : vector<2x8x8xf32>
    %41 = math.exp %40 : vector<2x8x8xf32>
    %cst_21 = arith.constant dense<0.000000e+00> : vector<2x8xf32>
    %42 = vector.multi_reduction <add>, %41, %cst_21 [2] : vector<2x8x8xf32> to vector<2x8xf32>
    %43 = vector.shape_cast %42 : vector<2x8xf32> to vector<2x8x1xf32>
    %44 = tpu.reciprocal %43 {approx = true} : vector<2x8x1xf32> -> vector<2x8x1xf32>
    %45 = vector.broadcast %44 : vector<2x8x1xf32> to vector<2x8x8xf32>
    %46 = arith.mulf %41, %45 : vector<2x8x8xf32>
    %47 = arith.truncf %46 : vector<2x8x8xf32> to vector<2x8x8xbf16>
    "tpu.trace_start"() <{level = 10 : i32, message = "hqk,hkd->hqd"}> : () -> ()
    %cst_22 = arith.constant dense<0.000000e+00> : vector<2x8x16xf32>
    %48 = tpu.matmul %47, %30, %cst_22 {dimension_numbers = #tpu.dot_dimension_numbers<[2], [1], [1], [2], [0, 0, 0, 1, 1, 2], [0], [0]>} : vector<2x8x8xbf16>, vector<2x8x16xbf16>, vector<2x8x16xf32> -> vector<2x8x16xf32>
    "tpu.trace_stop"() : () -> ()
    %49 = arith.truncf %48 : vector<2x8x16xf32> to vector<2x8x16xbf16>
    %50 = vector.shape_cast %49 : vector<2x8x16xbf16> to vector<1x2x8x16xbf16>
    %51 = tpu.transpose %50, [0, 2, 1, 3] : vector<1x2x8x16xbf16> -> vector<1x8x2x16xbf16>
    %52 = vector.shape_cast %51 : vector<1x8x2x16xbf16> to vector<8x32xbf16>
    %c0_23 = arith.constant 0 : index
    %c0_24 = arith.constant 0 : index
    %53 = vector.load %arg9[%c0_23, %c0_24] : memref<32x32xbf16, #tpu.memory_space<vmem>>, vector<32x32xbf16>
    %cst_25 = arith.constant dense<0.000000e+00> : vector<8x32xf32>
    %54 = tpu.matmul %52, %53, %cst_25 {dimension_numbers = #tpu.dot_dimension_numbers<[1], [0], [0], [1], [0, 0, 1, 1], [], []>} : vector<8x32xbf16>, vector<32x32xbf16>, vector<8x32xf32> -> vector<8x32xf32>
    %c0_26 = arith.constant 0 : index
    %c0_27 = arith.constant 0 : index
    %55 = vector.load %arg10[%c0_26, %c0_27] : memref<1x32xf32, #tpu.memory_space<vmem>>, vector<1x32xf32>
    %56 = vector.broadcast %55 : vector<1x32xf32> to vector<8x32xf32>
    %57 = arith.addf %54, %56 : vector<8x32xf32>
    %58 = arith.addf %57, %1 : vector<8x32xf32>
    %c0_28 = arith.constant 0 : index
    %c0_29 = arith.constant 0 : index
    %59 = vector.load %arg11[%c0_28, %c0_29] : memref<1x32xf32, #tpu.memory_space<vmem>>, vector<1x32xf32>
    %c0_30 = arith.constant 0 : index
    %c0_31 = arith.constant 0 : index
    %60 = vector.load %arg12[%c0_30, %c0_31] : memref<1x32xf32, #tpu.memory_space<vmem>>, vector<1x32xf32>
    %cst_32 = arith.constant dense<0.000000e+00> : vector<8xf32>
    %61 = vector.multi_reduction <add>, %58, %cst_32 [1] : vector<8x32xf32> to vector<8xf32>
    %62 = vector.shape_cast %61 : vector<8xf32> to vector<8x1xf32>
    %cst_33 = arith.constant 3.200000e+01 : f32
    %63 = vector.broadcast %cst_33 : f32 to vector<8x1xf32>
    %64 = arith.divf %62, %63 : vector<8x1xf32>
    %65 = vector.broadcast %64 : vector<8x1xf32> to vector<8x32xf32>
    %66 = arith.subf %58, %65 : vector<8x32xf32>
    %67 = arith.mulf %66, %66 : vector<8x32xf32>
    %cst_34 = arith.constant dense<0.000000e+00> : vector<8xf32>
    %68 = vector.multi_reduction <add>, %67, %cst_34 [1] : vector<8x32xf32> to vector<8xf32>
    %69 = vector.shape_cast %68 : vector<8xf32> to vector<8x1xf32>
    %cst_35 = arith.constant 3.200000e+01 : f32
    %70 = vector.broadcast %cst_35 : f32 to vector<8x1xf32>
    %71 = arith.divf %69, %70 : vector<8x1xf32>
    %72 = vector.broadcast %64 : vector<8x1xf32> to vector<8x32xf32>
    %73 = arith.subf %58, %72 : vector<8x32xf32>
    %cst_36 = arith.constant 9.99999996E-13 : f32
    %74 = vector.broadcast %cst_36 : f32 to vector<8x1xf32>
    %75 = arith.addf %71, %74 : vector<8x1xf32>
    %76 = math.sqrt %75 : vector<8x1xf32>
    %77 = vector.broadcast %76 : vector<8x1xf32> to vector<8x32xf32>
    %78 = arith.divf %73, %77 : vector<8x32xf32>
    %79 = vector.broadcast %59 : vector<1x32xf32> to vector<8x32xf32>
    %80 = arith.mulf %79, %78 : vector<8x32xf32>
    %81 = vector.broadcast %60 : vector<1x32xf32> to vector<8x32xf32>
    %82 = arith.addf %80, %81 : vector<8x32xf32>
    %83 = arith.truncf %82 : vector<8x32xf32> to vector<8x32xbf16>
    %c0_37 = arith.constant 0 : index
    %c0_38 = arith.constant 0 : index
    %84 = vector.load %arg13[%c0_37, %c0_38] : memref<32x128xbf16, #tpu.memory_space<vmem>>, vector<32x128xbf16>
    %cst_39 = arith.constant dense<0.000000e+00> : vector<8x128xf32>
    %85 = tpu.matmul %83, %84, %cst_39 {dimension_numbers = #tpu.dot_dimension_numbers<[1], [0], [0], [1], [0, 0, 1, 1], [], []>} : vector<8x32xbf16>, vector<32x128xbf16>, vector<8x128xf32> -> vector<8x128xf32>
    %c0_40 = arith.constant 0 : index
    %c0_41 = arith.constant 0 : index
    %86 = vector.load %arg14[%c0_40, %c0_41] : memref<1x128xf32, #tpu.memory_space<vmem>>, vector<1x128xf32>
    %87 = vector.broadcast %86 : vector<1x128xf32> to vector<8x128xf32>
    %88 = arith.addf %85, %87 : vector<8x128xf32>
    %cst_42 = arith.constant 5.000000e-01 : f32
    %89 = vector.broadcast %cst_42 : f32 to vector<8x128xf32>
    %90 = arith.mulf %88, %89 : vector<8x128xf32>
    %cst_43 = arith.constant 1.41421354 : f32
    %91 = vector.broadcast %cst_43 : f32 to vector<8x128xf32>
    %92 = arith.divf %88, %91 : vector<8x128xf32>
    %93 = math.erf %92 : vector<8x128xf32>
    %cst_44 = arith.constant 1.000000e+00 : f32
    %94 = vector.broadcast %cst_44 : f32 to vector<8x128xf32>
    %95 = arith.addf %94, %93 : vector<8x128xf32>
    %96 = arith.mulf %90, %95 : vector<8x128xf32>
    %97 = arith.truncf %96 : vector<8x128xf32> to vector<8x128xbf16>
    %c0_45 = arith.constant 0 : index
    %c0_46 = arith.constant 0 : index
    %98 = vector.load %arg15[%c0_45, %c0_46] : memref<128x32xbf16, #tpu.memory_space<vmem>>, vector<128x32xbf16>
    %cst_47 = arith.constant dense<0.000000e+00> : vector<8x32xf32>
    %99 = tpu.matmul %97, %98, %cst_47 {dimension_numbers = #tpu.dot_dimension_numbers<[1], [0], [0], [1], [0, 0, 1, 1], [], []>} : vector<8x128xbf16>, vector<128x32xbf16>, vector<8x32xf32> -> vector<8x32xf32>
    %c0_48 = arith.constant 0 : index
    %c0_49 = arith.constant 0 : index
    %100 = vector.load %arg16[%c0_48, %c0_49] : memref<1x32xf32, #tpu.memory_space<vmem>>, vector<1x32xf32>
    %101 = vector.broadcast %100 : vector<1x32xf32> to vector<8x32xf32>
    %102 = arith.addf %99, %101 : vector<8x32xf32>
    %103 = arith.addf %102, %82 : vector<8x32xf32>
    %c0_50 = arith.constant 0 : index
    %c0_51 = arith.constant 0 : index
    %104 = vector.load %arg17[%c0_50, %c0_51] : memref<1x32xf32, #tpu.memory_space<vmem>>, vector<1x32xf32>
    %c0_52 = arith.constant 0 : index
    %c0_53 = arith.constant 0 : index
    %105 = vector.load %arg18[%c0_52, %c0_53] : memref<1x32xf32, #tpu.memory_space<vmem>>, vector<1x32xf32>
    %cst_54 = arith.constant dense<0.000000e+00> : vector<8xf32>
    %106 = vector.multi_reduction <add>, %103, %cst_54 [1] : vector<8x32xf32> to vector<8xf32>
    %107 = vector.shape_cast %106 : vector<8xf32> to vector<8x1xf32>
    %cst_55 = arith.constant 3.200000e+01 : f32
    %108 = vector.broadcast %cst_55 : f32 to vector<8x1xf32>
    %109 = arith.divf %107, %108 : vector<8x1xf32>
    %110 = vector.broadcast %109 : vector<8x1xf32> to vector<8x32xf32>
    %111 = arith.subf %103, %110 : vector<8x32xf32>
    %112 = arith.mulf %111, %111 : vector<8x32xf32>
    %cst_56 = arith.constant dense<0.000000e+00> : vector<8xf32>
    %113 = vector.multi_reduction <add>, %112, %cst_56 [1] : vector<8x32xf32> to vector<8xf32>
    %114 = vector.shape_cast %113 : vector<8xf32> to vector<8x1xf32>
    %cst_57 = arith.constant 3.200000e+01 : f32
    %115 = vector.broadcast %cst_57 : f32 to vector<8x1xf32>
    %116 = arith.divf %114, %115 : vector<8x1xf32>
    %117 = vector.broadcast %109 : vector<8x1xf32> to vector<8x32xf32>
    %118 = arith.subf %103, %117 : vector<8x32xf32>
    %cst_58 = arith.constant 9.99999996E-13 : f32
    %119 = vector.broadcast %cst_58 : f32 to vector<8x1xf32>
    %120 = arith.addf %116, %119 : vector<8x1xf32>
    %121 = math.sqrt %120 : vector<8x1xf32>
    %122 = vector.broadcast %121 : vector<8x1xf32> to vector<8x32xf32>
    %123 = arith.divf %118, %122 : vector<8x32xf32>
    %124 = vector.broadcast %104 : vector<1x32xf32> to vector<8x32xf32>
    %125 = arith.mulf %124, %123 : vector<8x32xf32>
    %126 = vector.broadcast %105 : vector<1x32xf32> to vector<8x32xf32>
    %127 = arith.addf %125, %126 : vector<8x32xf32>
    %128 = vector.shape_cast %127 : vector<8x32xf32> to vector<1x8x32xf32>
    %c0_59 = arith.constant 0 : index
    %c0_60 = arith.constant 0 : index
    %c0_61 = arith.constant 0 : index
    %129 = vector.load %arg19[%c0_59, %c0_60, %c0_61] : memref<1x8x32xf32, #tpu.memory_space<vmem>>, vector<1x8x32xf32>
    tpu.vector_store %arg19[%c0_59, %c0_60, %c0_61], %128 {strides = array<i32>} : memref<1x8x32xf32, #tpu.memory_space<vmem>>, vector<1x8x32xf32>,
    return
  }
  func.func @transform_0(%arg0: i32) -> (i32, i32, i32) {
    %c0_i32 = arith.constant 0 : i32
    %c0_i32_0 = arith.constant 0 : i32
    %c0_i32_1 = arith.constant 0 : i32
    return %arg0, %c0_i32, %c0_i32_0 : i32, i32, i32
  }
  func.func @transform_1(%arg0: i32) -> (i32, i32, i32) {
    %c0_i32 = arith.constant 0 : i32
    %c0_i32_0 = arith.constant 0 : i32
    %c0_i32_1 = arith.constant 0 : i32
    return %arg0, %c0_i32, %c0_i32_0 : i32, i32, i32
  }
  func.func @transform_2(%arg0: i32) -> (i32, i32) {
    %c0_i32 = arith.constant 0 : i32
    %c0_i32_0 = arith.constant 0 : i32
    %c0_i32_1 = arith.constant 0 : i32
    return %c0_i32, %c0_i32_0 : i32, i32
  }
  func.func @transform_3(%arg0: i32) -> (i32, i32) {
    %c0_i32 = arith.constant 0 : i32
    %c0_i32_0 = arith.constant 0 : i32
    %c0_i32_1 = arith.constant 0 : i32
    return %c0_i32, %c0_i32_0 : i32, i32
  }
  func.func @transform_4(%arg0: i32) -> (i32, i32) {
    %c0_i32 = arith.constant 0 : i32
    %c0_i32_0 = arith.constant 0 : i32
    %c0_i32_1 = arith.constant 0 : i32
    return %c0_i32, %c0_i32_0 : i32, i32
  }
  func.func @transform_5(%arg0: i32) -> (i32, i32) {
    %c0_i32 = arith.constant 0 : i32
    %c0_i32_0 = arith.constant 0 : i32
    %c0_i32_1 = arith.constant 0 : i32
    return %c0_i32, %c0_i32_0 : i32, i32
  }
  func.func @transform_6(%arg0: i32) -> (i32, i32) {
    %c0_i32 = arith.constant 0 : i32
    %c0_i32_0 = arith.constant 0 : i32
    %c0_i32_1 = arith.constant 0 : i32
    return %c0_i32, %c0_i32_0 : i32, i32
  }
  func.func @transform_7(%arg0: i32) -> (i32, i32) {
    %c0_i32 = arith.constant 0 : i32
    %c0_i32_0 = arith.constant 0 : i32
    %c0_i32_1 = arith.constant 0 : i32
    return %c0_i32, %c0_i32_0 : i32, i32
  }
  func.func @transform_8(%arg0: i32) -> (i32, i32) {
    %c0_i32 = arith.constant 0 : i32
    %c0_i32_0 = arith.constant 0 : i32
    %c0_i32_1 = arith.constant 0 : i32
    return %c0_i32, %c0_i32_0 : i32, i32
  }
  func.func @transform_9(%arg0: i32) -> (i32, i32) {
    %c0_i32 = arith.constant 0 : i32
    %c0_i32_0 = arith.constant 0 : i32
    %c0_i32_1 = arith.constant 0 : i32
    return %c0_i32, %c0_i32_0 : i32, i32
  }
  func.func @transform_10(%arg0: i32) -> (i32, i32) {
    %c0_i32 = arith.constant 0 : i32
    %c0_i32_0 = arith.constant 0 : i32
    %c0_i32_1 = arith.constant 0 : i32
    return %c0_i32, %c0_i32_0 : i32, i32
  }
  func.func @transform_11(%arg0: i32) -> (i32, i32) {
    %c0_i32 = arith.constant 0 : i32
    %c0_i32_0 = arith.constant 0 : i32
    %c0_i32_1 = arith.constant 0 : i32
    return %c0_i32, %c0_i32_0 : i32, i32
  }
  func.func @transform_12(%arg0: i32) -> (i32, i32) {
    %c0_i32 = arith.constant 0 : i32
    %c0_i32_0 = arith.constant 0 : i32
    %c0_i32_1 = arith.constant 0 : i32
    return %c0_i32, %c0_i32_0 : i32, i32
  }
  func.func @transform_13(%arg0: i32) -> (i32, i32) {
    %c0_i32 = arith.constant 0 : i32
    %c0_i32_0 = arith.constant 0 : i32
    %c0_i32_1 = arith.constant 0 : i32
    return %c0_i32, %c0_i32_0 : i32, i32
  }
  func.func @transform_14(%arg0: i32) -> (i32, i32) {
    %c0_i32 = arith.constant 0 : i32
    %c0_i32_0 = arith.constant 0 : i32
    %c0_i32_1 = arith.constant 0 : i32
    return %c0_i32, %c0_i32_0 : i32, i32
  }
  func.func @transform_15(%arg0: i32) -> (i32, i32) {
    %c0_i32 = arith.constant 0 : i32
    %c0_i32_0 = arith.constant 0 : i32
    %c0_i32_1 = arith.constant 0 : i32
    return %c0_i32, %c0_i32_0 : i32, i32
  }
  func.func @transform_16(%arg0: i32) -> (i32, i32) {
    %c0_i32 = arith.constant 0 : i32
    %c0_i32_0 = arith.constant 0 : i32
    %c0_i32_1 = arith.constant 0 : i32
    return %c0_i32, %c0_i32_0 : i32, i32
  }
  func.func @transform_17(%arg0: i32) -> (i32, i32) {
    %c0_i32 = arith.constant 0 : i32
    %c0_i32_0 = arith.constant 0 : i32
    %c0_i32_1 = arith.constant 0 : i32
    return %c0_i32, %c0_i32_0 : i32, i32
  }
  func.func @transform_18(%arg0: i32) -> (i32, i32, i32) {
    %c0_i32 = arith.constant 0 : i32
    %c0_i32_0 = arith.constant 0 : i32
    %c0_i32_1 = arith.constant 0 : i32
    return %arg0, %c0_i32, %c0_i32_0 : i32, i32, i32
  }
}

module attributes {stable_mosaic.version = 11 : i64} {
  func.func @encoder_layer_kernel(%arg0: i32, %arg1: memref<1x1x8xf32, #tpu.memory_space<vmem>>, %arg2: memref<1x8x32xf32, #tpu.memory_space<vmem>>, %arg3: memref<32x32xbf16, #tpu.memory_space<vmem>>, %arg4: memref<1x32xf32, #tpu.memory_space<vmem>>, %arg5: memref<32x32xbf16, #tpu.memory_space<vmem>>, %arg6: memref<1x32xf32, #tpu.memory_space<vmem>>, %arg7: memref<32x32xbf16, #tpu.memory_space<vmem>>, %arg8: memref<1x32xf32, #tpu.memory_space<vmem>>, %arg9: memref<32x32xbf16, #tpu.memory_space<vmem>>, %arg10: memref<1x32xf32, #tpu.memory_space<vmem>>, %arg11: memref<1x32xf32, #tpu.memory_space<vmem>>, %arg12: memref<1x32xf32, #tpu.memory_space<vmem>>, %arg13: memref<32x128xbf16, #tpu.memory_space<vmem>>, %arg14: memref<1x128xf32, #tpu.memory_space<vmem>>, %arg15: memref<128x32xbf16, #tpu.memory_space<vmem>>, %arg16: memref<1x32xf32, #tpu.memory_space<vmem>>, %arg17: memref<1x32xf32, #tpu.memory_space<vmem>>, %arg18: memref<1x32xf32, #tpu.memory_space<vmem>>, %arg19: memref<1x8x32xf32, #tpu.memory_space<vmem>>) attributes {dimension_semantics = [#tpu.dimension_semantics<parallel>], iteration_bounds = array<i64: 2>, scalar_prefetch = 0 : i64, scratch_operands = 0 : i64, tpu.core_type = #tpu.core_type<tc>, window_params = [{transform_indices = @transform_0, window_bounds = array<i64: 1, 1, 8>}, {transform_indices = @transform_1, window_bounds = array<i64: 1, 8, 32>}, {pipeline_mode = #tpu.pipeline_mode<synchronous>, transform_indices = @transform_2, window_bounds = array<i64: 32, 32>}, {pipeline_mode = #tpu.pipeline_mode<synchronous>, transform_indices = @transform_3, window_bounds = array<i64: 1, 32>}, {pipeline_mode = #tpu.pipeline_mode<synchronous>, transform_indices = @transform_4, window_bounds = array<i64: 32, 32>}, {pipeline_mode = #tpu.pipeline_mode<synchronous>, transform_indices = @transform_5, window_bounds = array<i64: 1, 32>}, {pipeline_mode = #tpu.pipeline_mode<synchronous>, transform_indices = @transform_6, window_bounds = array<i64: 32, 32>}, {pipeline_mode = #tpu.pipeline_mode<synchronous>, transform_indices = @transform_7, window_bounds = array<i64: 1, 32>}, {pipeline_mode = #tpu.pipeline_mode<synchronous>, transform_indices = @transform_8, window_bounds = array<i64: 32, 32>}, {pipeline_mode = #tpu.pipeline_mode<synchronous>, transform_indices = @transform_9, window_bounds = array<i64: 1, 32>}, {pipeline_mode = #tpu.pipeline_mode<synchronous>, transform_indices = @transform_10, window_bounds = array<i64: 1, 32>}, {pipeline_mode = #tpu.pipeline_mode<synchronous>, transform_indices = @transform_11, window_bounds = array<i64: 1, 32>}, {pipeline_mode = #tpu.pipeline_mode<synchronous>, transform_indices = @transform_12, window_bounds = array<i64: 32, 128>}, {pipeline_mode = #tpu.pipeline_mode<synchronous>, transform_indices = @transform_13, window_bounds = array<i64: 1, 128>}, {pipeline_mode = #tpu.pipeline_mode<synchronous>, transform_indices = @transform_14, window_bounds = array<i64: 128, 32>}, {pipeline_mode = #tpu.pipeline_mode<synchronous>, transform_indices = @transform_15, window_bounds = array<i64: 1, 32>}, {pipeline_mode = #tpu.pipeline_mode<synchronous>, transform_indices = @transform_16, window_bounds = array<i64: 1, 32>}, {pipeline_mode = #tpu.pipeline_mode<synchronous>, transform_indices = @transform_17, window_bounds = array<i64: 1, 32>}, {transform_indices = @transform_18, window_bounds = array<i64: 1, 8, 32>}]} {
    %c0 = arith.constant 0 : index
    %c0_0 = arith.constant 0 : index
    %c0_1 = arith.constant 0 : index
    %0 = vector.load %arg2[%c0, %c0_0, %c0_1] : memref<1x8x32xf32, #tpu.memory_space<vmem>>, vector<1x8x32xf32>
    %1 = vector.shape_cast %0 : vector<1x8x32xf32> to vector<8x32xf32>
    %2 = arith.truncf %1 : vector<8x32xf32> to vector<8x32xbf16>
    %c0_2 = arith.constant 0 : index
    %c0_3 = arith.constant 0 : index
    %c0_4 = arith.constant 0 : index
    %3 = vector.load %arg1[%c0_2, %c0_3, %c0_4] : memref<1x1x8xf32, #tpu.memory_space<vmem>>, vector<1x1x8xf32>
    %c0_5 = arith.constant 0 : index
    %c0_6 = arith.constant 0 : index
    %4 = vector.load %arg3[%c0_5, %c0_6] : memref<32x32xbf16, #tpu.memory_space<vmem>>, vector<32x32xbf16>
    %cst = arith.constant dense<0.000000e+00> : vector<8x32xf32>
    %5 = tpu.matmul %2, %4, %cst {dimension_numbers = #tpu.dot_dimension_numbers<[1], [0], [0], [1], [0, 0, 1, 1], [], []>} : vector<8x32xbf16>, vector<32x32xbf16>, vector<8x32xf32> -> vector<8x32xf32>
    %c0_7 = arith.constant 0 : index
    %c0_8 = arith.constant 0 : index
    %6 = vector.load %arg4[%c0_7, %c0_8] : memref<1x32xf32, #tpu.memory_space<vmem>>, vector<1x32xf32>
    %7 = vector.broadcast %6 : vector<1x32xf32> to vector<8x32xf32>
    %8 = arith.addf %5, %7 : vector<8x32xf32>
    %c0_9 = arith.constant 0 : index
    %c0_10 = arith.constant 0 : index
    %9 = vector.load %arg5[%c0_9, %c0_10] : memref<32x32xbf16, #tpu.memory_space<vmem>>, vector<32x32xbf16>
    %cst_11 = arith.constant dense<0.000000e+00> : vector<8x32xf32>
    %10 = tpu.matmul %2, %9, %cst_11 {dimension_numbers = #tpu.dot_dimension_numbers<[1], [0], [0], [1], [0, 0, 1, 1], [], []>} : vector<8x32xbf16>, vector<32x32xbf16>, vector<8x32xf32> -> vector<8x32xf32>
    %c0_12 = arith.constant 0 : index
    %c0_13 = arith.constant 0 : index
    %11 = vector.load %arg6[%c0_12, %c0_13] : memref<1x32xf32, #tpu.memory_space<vmem>>, vector<1x32xf32>
    %12 = vector.broadcast %11 : vector<1x32xf32> to vector<8x32xf32>
    %13 = arith.addf %10, %12 : vector<8x32xf32>
    %c0_14 = arith.constant 0 : index
    %c0_15 = arith.constant 0 : index
    %14 = vector.load %arg7[%c0_14, %c0_15] : memref<32x32xbf16, #tpu.memory_space<vmem>>, vector<32x32xbf16>
    %cst_16 = arith.constant dense<0.000000e+00> : vector<8x32xf32>
    %15 = tpu.matmul %2, %14, %cst_16 {dimension_numbers = #tpu.dot_dimension_numbers<[1], [0], [0], [1], [0, 0, 1, 1], [], []>} : vector<8x32xbf16>, vector<32x32xbf16>, vector<8x32xf32> -> vector<8x32xf32>
    %c0_17 = arith.constant 0 : index
    %c0_18 = arith.constant 0 : index
    %16 = vector.load %arg8[%c0_17, %c0_18] : memref<1x32xf32, #tpu.memory_space<vmem>>, vector<1x32xf32>
    %17 = vector.broadcast %16 : vector<1x32xf32> to vector<8x32xf32>
    %18 = arith.addf %15, %17 : vector<8x32xf32>
    %19 = arith.truncf %8 : vector<8x32xf32> to vector<8x32xbf16>
    %20 = vector.shape_cast %19 : vector<8x32xbf16> to vector<1x8x32xbf16>
    %21 = vector.extract_strided_slice %20 {offsets = [0, 0, 0], sizes = [1, 8, 16], strides = [1, 1, 1]} : vector<1x8x32xbf16> to vector<1x8x16xbf16>
    %22 = vector.extract_strided_slice %20 {offsets = [0, 0, 16], sizes = [1, 8, 16], strides = [1, 1, 1]} : vector<1x8x32xbf16> to vector<1x8x16xbf16>
    %23 = vector.shape_cast %21 : vector<1x8x16xbf16> to vector<1x1x8x16xbf16>
    %24 = vector.shape_cast %22 : vector<1x8x16xbf16> to vector<1x1x8x16xbf16>
    %25 = tpu.concatenate %23, %24 in 0 : vector<1x1x8x16xbf16>, vector<1x1x8x16xbf16> -> vector<2x1x8x16xbf16>
    %26 = vector.shape_cast %25 : vector<2x1x8x16xbf16> to vector<2x8x16xbf16>
    %27 = arith.truncf %13 : vector<8x32xf32> to vector<8x32xbf16>
    %28 = vector.shape_cast %27 : vector<8x32xbf16> to vector<1x8x32xbf16>
    %29 = vector.extract_strided_slice %28 {offsets = [0, 0, 0], sizes = [1, 8, 16], strides = [1, 1, 1]} : vector<1x8x32xbf16> to vector<1x8x16xbf16>
    %30 = vector.extract_strided_slice %28 {offsets = [0, 0, 16], sizes = [1, 8, 16], strides = [1, 1, 1]} : vector<1x8x32xbf16> to vector<1x8x16xbf16>
    %31 = vector.shape_cast %29 : vector<1x8x16xbf16> to vector<1x1x8x16xbf16>
    %32 = vector.shape_cast %30 : vector<1x8x16xbf16> to vector<1x1x8x16xbf16>
    %33 = tpu.concatenate %31, %32 in 0 : vector<1x1x8x16xbf16>, vector<1x1x8x16xbf16> -> vector<2x1x8x16xbf16>
    %34 = vector.shape_cast %33 : vector<2x1x8x16xbf16> to vector<2x8x16xbf16>
    %35 = arith.truncf %18 : vector<8x32xf32> to vector<8x32xbf16>
    %36 = vector.shape_cast %35 : vector<8x32xbf16> to vector<1x8x32xbf16>
    %37 = vector.extract_strided_slice %36 {offsets = [0, 0, 0], sizes = [1, 8, 16], strides = [1, 1, 1]} : vector<1x8x32xbf16> to vector<1x8x16xbf16>
    %38 = vector.extract_strided_slice %36 {offsets = [0, 0, 16], sizes = [1, 8, 16], strides = [1, 1, 1]} : vector<1x8x32xbf16> to vector<1x8x16xbf16>
    %39 = vector.shape_cast %37 : vector<1x8x16xbf16> to vector<1x1x8x16xbf16>
    %40 = vector.shape_cast %38 : vector<1x8x16xbf16> to vector<1x1x8x16xbf16>
    %41 = tpu.concatenate %39, %40 in 0 : vector<1x1x8x16xbf16>, vector<1x1x8x16xbf16> -> vector<2x1x8x16xbf16>
    %42 = vector.shape_cast %41 : vector<2x1x8x16xbf16> to vector<2x8x16xbf16>
    "tpu.trace_start"() <{level = 10 : i32, message = "hqd,hkd->hqk"}> : () -> ()
    %cst_19 = arith.constant dense<0.000000e+00> : vector<2x8x8xf32>
    %43 = tpu.matmul %26, %34, %cst_19 {dimension_numbers = #tpu.dot_dimension_numbers<[2], [2], [1], [1], [0, 0, 0, 1, 1, 1], [0], [0]>} : vector<2x8x16xbf16>, vector<2x8x16xbf16>, vector<2x8x8xf32> -> vector<2x8x8xf32>
    "tpu.trace_stop"() : () -> ()
    %44 = vector.shape_cast %43 : vector<2x8x8xf32> to vector<2x1x8x8xf32>
    %45 = vector.shape_cast %3 : vector<1x1x8xf32> to vector<1x1x1x8xf32>
    %46 = vector.broadcast %45 : vector<1x1x1x8xf32> to vector<2x1x8x8xf32>
    %47 = arith.addf %44, %46 : vector<2x1x8x8xf32>
    %48 = vector.shape_cast %47 : vector<2x1x8x8xf32> to vector<2x8x8xf32>
    %cst_20 = arith.constant dense<0xFF800000> : vector<2x8xf32>
    %49 = vector.multi_reduction <maximumf>, %48, %cst_20 [2] : vector<2x8x8xf32> to vector<2x8xf32>
    %50 = vector.shape_cast %49 : vector<2x8xf32> to vector<2x8x1xf32>
    %51 = vector.broadcast %50 : vector<2x8x1xf32> to vector<2x8x8xf32>
    %52 = arith.subf %48, %51 : vector<2x8x8xf32>
    %53 = math.exp %52 : vector<2x8x8xf32>
    %cst_21 = arith.constant dense<0.000000e+00> : vector<2x8xf32>
    %54 = vector.multi_reduction <add>, %53, %cst_21 [2] : vector<2x8x8xf32> to vector<2x8xf32>
    %55 = vector.shape_cast %54 : vector<2x8xf32> to vector<2x8x1xf32>
    %56 = tpu.reciprocal %55 {approx = true} : vector<2x8x1xf32> -> vector<2x8x1xf32>
    %57 = vector.broadcast %56 : vector<2x8x1xf32> to vector<2x8x8xf32>
    %58 = arith.mulf %53, %57 : vector<2x8x8xf32>
    %59 = arith.truncf %58 : vector<2x8x8xf32> to vector<2x8x8xbf16>
    "tpu.trace_start"() <{level = 10 : i32, message = "hqk,hkd->hqd"}> : () -> ()
    %cst_22 = arith.constant dense<0.000000e+00> : vector<2x8x16xf32>
    %60 = tpu.matmul %59, %42, %cst_22 {dimension_numbers = #tpu.dot_dimension_numbers<[2], [1], [1], [2], [0, 0, 0, 1, 1, 2], [0], [0]>} : vector<2x8x8xbf16>, vector<2x8x16xbf16>, vector<2x8x16xf32> -> vector<2x8x16xf32>
    "tpu.trace_stop"() : () -> ()
    %61 = arith.truncf %60 : vector<2x8x16xf32> to vector<2x8x16xbf16>
    %62 = vector.shape_cast %61 : vector<2x8x16xbf16> to vector<2x1x8x16xbf16>
    %63 = vector.extract_strided_slice %62 {offsets = [0, 0, 0, 0], sizes = [1, 1, 8, 16], strides = [1, 1, 1, 1]} : vector<2x1x8x16xbf16> to vector<1x1x8x16xbf16>
    %64 = vector.shape_cast %63 : vector<1x1x8x16xbf16> to vector<1x8x16xbf16>
    %65 = vector.shape_cast %64 : vector<1x8x16xbf16> to vector<8x16xbf16>
    %66 = vector.extract_strided_slice %62 {offsets = [1, 0, 0, 0], sizes = [1, 1, 8, 16], strides = [1, 1, 1, 1]} : vector<2x1x8x16xbf16> to vector<1x1x8x16xbf16>
    %67 = vector.shape_cast %66 : vector<1x1x8x16xbf16> to vector<1x8x16xbf16>
    %68 = vector.shape_cast %67 : vector<1x8x16xbf16> to vector<8x16xbf16>
    %69 = tpu.concatenate %65, %68 in 1 : vector<8x16xbf16>, vector<8x16xbf16> -> vector<8x32xbf16>
    %c0_23 = arith.constant 0 : index
    %c0_24 = arith.constant 0 : index
    %70 = vector.load %arg9[%c0_23, %c0_24] : memref<32x32xbf16, #tpu.memory_space<vmem>>, vector<32x32xbf16>
    %cst_25 = arith.constant dense<0.000000e+00> : vector<8x32xf32>
    %71 = tpu.matmul %69, %70, %cst_25 {dimension_numbers = #tpu.dot_dimension_numbers<[1], [0], [0], [1], [0, 0, 1, 1], [], []>} : vector<8x32xbf16>, vector<32x32xbf16>, vector<8x32xf32> -> vector<8x32xf32>
    %c0_26 = arith.constant 0 : index
    %c0_27 = arith.constant 0 : index
    %72 = vector.load %arg10[%c0_26, %c0_27] : memref<1x32xf32, #tpu.memory_space<vmem>>, vector<1x32xf32>
    %73 = vector.broadcast %72 : vector<1x32xf32> to vector<8x32xf32>
    %74 = arith.addf %71, %73 : vector<8x32xf32>
    %75 = arith.addf %74, %1 : vector<8x32xf32>
    %c0_28 = arith.constant 0 : index
    %c0_29 = arith.constant 0 : index
    %76 = vector.load %arg11[%c0_28, %c0_29] : memref<1x32xf32, #tpu.memory_space<vmem>>, vector<1x32xf32>
    %c0_30 = arith.constant 0 : index
    %c0_31 = arith.constant 0 : index
    %77 = vector.load %arg12[%c0_30, %c0_31] : memref<1x32xf32, #tpu.memory_space<vmem>>, vector<1x32xf32>
    %cst_32 = arith.constant dense<0.000000e+00> : vector<8xf32>
    %78 = vector.multi_reduction <add>, %75, %cst_32 [1] : vector<8x32xf32> to vector<8xf32>
    %79 = vector.shape_cast %78 : vector<8xf32> to vector<8x1xf32>
    %cst_33 = arith.constant 3.200000e+01 : f32
    %80 = vector.broadcast %cst_33 : f32 to vector<8x1xf32>
    %81 = arith.divf %79, %80 : vector<8x1xf32>
    %82 = vector.broadcast %81 : vector<8x1xf32> to vector<8x32xf32>
    %83 = arith.subf %75, %82 : vector<8x32xf32>
    %84 = arith.mulf %83, %83 : vector<8x32xf32>
    %cst_34 = arith.constant dense<0.000000e+00> : vector<8xf32>
    %85 = vector.multi_reduction <add>, %84, %cst_34 [1] : vector<8x32xf32> to vector<8xf32>
    %86 = vector.shape_cast %85 : vector<8xf32> to vector<8x1xf32>
    %cst_35 = arith.constant 3.200000e+01 : f32
    %87 = vector.broadcast %cst_35 : f32 to vector<8x1xf32>
    %88 = arith.divf %86, %87 : vector<8x1xf32>
    %89 = vector.broadcast %81 : vector<8x1xf32> to vector<8x32xf32>
    %90 = arith.subf %75, %89 : vector<8x32xf32>
    %cst_36 = arith.constant 9.99999996E-13 : f32
    %91 = vector.broadcast %cst_36 : f32 to vector<8x1xf32>
    %92 = arith.addf %88, %91 : vector<8x1xf32>
    %93 = math.sqrt %92 : vector<8x1xf32>
    %94 = vector.broadcast %93 : vector<8x1xf32> to vector<8x32xf32>
    %95 = arith.divf %90, %94 : vector<8x32xf32>
    %96 = vector.broadcast %76 : vector<1x32xf32> to vector<8x32xf32>
    %97 = arith.mulf %96, %95 : vector<8x32xf32>
    %98 = vector.broadcast %77 : vector<1x32xf32> to vector<8x32xf32>
    %99 = arith.addf %97, %98 : vector<8x32xf32>
    %100 = arith.truncf %99 : vector<8x32xf32> to vector<8x32xbf16>
    %c0_37 = arith.constant 0 : index
    %c0_38 = arith.constant 0 : index
    %101 = vector.load %arg13[%c0_37, %c0_38] : memref<32x128xbf16, #tpu.memory_space<vmem>>, vector<32x128xbf16>
    %cst_39 = arith.constant dense<0.000000e+00> : vector<8x128xf32>
    %102 = tpu.matmul %100, %101, %cst_39 {dimension_numbers = #tpu.dot_dimension_numbers<[1], [0], [0], [1], [0, 0, 1, 1], [], []>} : vector<8x32xbf16>, vector<32x128xbf16>, vector<8x128xf32> -> vector<8x128xf32>
    %c0_40 = arith.constant 0 : index
    %c0_41 = arith.constant 0 : index
    %103 = vector.load %arg14[%c0_40, %c0_41] : memref<1x128xf32, #tpu.memory_space<vmem>>, vector<1x128xf32>
    %104 = vector.broadcast %103 : vector<1x128xf32> to vector<8x128xf32>
    %105 = arith.addf %102, %104 : vector<8x128xf32>
    %cst_42 = arith.constant 5.000000e-01 : f32
    %106 = vector.broadcast %cst_42 : f32 to vector<8x128xf32>
    %107 = arith.mulf %105, %106 : vector<8x128xf32>
    %cst_43 = arith.constant 1.41421354 : f32
    %108 = vector.broadcast %cst_43 : f32 to vector<8x128xf32>
    %109 = arith.divf %105, %108 : vector<8x128xf32>
    %110 = math.erf %109 : vector<8x128xf32>
    %cst_44 = arith.constant 1.000000e+00 : f32
    %111 = vector.broadcast %cst_44 : f32 to vector<8x128xf32>
    %112 = arith.addf %111, %110 : vector<8x128xf32>
    %113 = arith.mulf %107, %112 : vector<8x128xf32>
    %114 = arith.truncf %113 : vector<8x128xf32> to vector<8x128xbf16>
    %c0_45 = arith.constant 0 : index
    %c0_46 = arith.constant 0 : index
    %115 = vector.load %arg15[%c0_45, %c0_46] : memref<128x32xbf16, #tpu.memory_space<vmem>>, vector<128x32xbf16>
    %cst_47 = arith.constant dense<0.000000e+00> : vector<8x32xf32>
    %116 = tpu.matmul %114, %115, %cst_47 {dimension_numbers = #tpu.dot_dimension_numbers<[1], [0], [0], [1], [0, 0, 1, 1], [], []>} : vector<8x128xbf16>, vector<128x32xbf16>, vector<8x32xf32> -> vector<8x32xf32>
    %c0_48 = arith.constant 0 : index
    %c0_49 = arith.constant 0 : index
    %117 = vector.load %arg16[%c0_48, %c0_49] : memref<1x32xf32, #tpu.memory_space<vmem>>, vector<1x32xf32>
    %118 = vector.broadcast %117 : vector<1x32xf32> to vector<8x32xf32>
    %119 = arith.addf %116, %118 : vector<8x32xf32>
    %120 = arith.addf %119, %99 : vector<8x32xf32>
    %c0_50 = arith.constant 0 : index
    %c0_51 = arith.constant 0 : index
    %121 = vector.load %arg17[%c0_50, %c0_51] : memref<1x32xf32, #tpu.memory_space<vmem>>, vector<1x32xf32>
    %c0_52 = arith.constant 0 : index
    %c0_53 = arith.constant 0 : index
    %122 = vector.load %arg18[%c0_52, %c0_53] : memref<1x32xf32, #tpu.memory_space<vmem>>, vector<1x32xf32>
    %cst_54 = arith.constant dense<0.000000e+00> : vector<8xf32>
    %123 = vector.multi_reduction <add>, %120, %cst_54 [1] : vector<8x32xf32> to vector<8xf32>
    %124 = vector.shape_cast %123 : vector<8xf32> to vector<8x1xf32>
    %cst_55 = arith.constant 3.200000e+01 : f32
    %125 = vector.broadcast %cst_55 : f32 to vector<8x1xf32>
    %126 = arith.divf %124, %125 : vector<8x1xf32>
    %127 = vector.broadcast %126 : vector<8x1xf32> to vector<8x32xf32>
    %128 = arith.subf %120, %127 : vector<8x32xf32>
    %129 = arith.mulf %128, %128 : vector<8x32xf32>
    %cst_56 = arith.constant dense<0.000000e+00> : vector<8xf32>
    %130 = vector.multi_reduction <add>, %129, %cst_56 [1] : vector<8x32xf32> to vector<8xf32>
    %131 = vector.shape_cast %130 : vector<8xf32> to vector<8x1xf32>
    %cst_57 = arith.constant 3.200000e+01 : f32
    %132 = vector.broadcast %cst_57 : f32 to vector<8x1xf32>
    %133 = arith.divf %131, %132 : vector<8x1xf32>
    %134 = vector.broadcast %126 : vector<8x1xf32> to vector<8x32xf32>
    %135 = arith.subf %120, %134 : vector<8x32xf32>
    %cst_58 = arith.constant 9.99999996E-13 : f32
    %136 = vector.broadcast %cst_58 : f32 to vector<8x1xf32>
    %137 = arith.addf %133, %136 : vector<8x1xf32>
    %138 = math.sqrt %137 : vector<8x1xf32>
    %139 = vector.broadcast %138 : vector<8x1xf32> to vector<8x32xf32>
    %140 = arith.divf %135, %139 : vector<8x32xf32>
    %141 = vector.broadcast %121 : vector<1x32xf32> to vector<8x32xf32>
    %142 = arith.mulf %141, %140 : vector<8x32xf32>
    %143 = vector.broadcast %122 : vector<1x32xf32> to vector<8x32xf32>
    %144 = arith.addf %142, %143 : vector<8x32xf32>
    %145 = vector.shape_cast %144 : vector<8x32xf32> to vector<1x8x32xf32>
    %c0_59 = arith.constant 0 : index
    %c0_60 = arith.constant 0 : index
    %c0_61 = arith.constant 0 : index
    %146 = vector.load %arg19[%c0_59, %c0_60, %c0_61] : memref<1x8x32xf32, #tpu.memory_space<vmem>>, vector<1x8x32xf32>
    tpu.vector_store %arg19[%c0_59, %c0_60, %c0_61], %145 {strides = array<i32>} : memref<1x8x32xf32, #tpu.memory_space<vmem>>, vector<1x8x32xf32>,
    return
  }
  func.func @transform_0(%arg0: i32) -> (i32, i32, i32) {
    %c0_i32 = arith.constant 0 : i32
    %c0_i32_0 = arith.constant 0 : i32
    %c0_i32_1 = arith.constant 0 : i32
    return %arg0, %c0_i32, %c0_i32_0 : i32, i32, i32
  }
  func.func @transform_1(%arg0: i32) -> (i32, i32, i32) {
    %c0_i32 = arith.constant 0 : i32
    %c0_i32_0 = arith.constant 0 : i32
    %c0_i32_1 = arith.constant 0 : i32
    return %arg0, %c0_i32, %c0_i32_0 : i32, i32, i32
  }
  func.func @transform_2(%arg0: i32) -> (i32, i32) {
    %c0_i32 = arith.constant 0 : i32
    %c0_i32_0 = arith.constant 0 : i32
    %c0_i32_1 = arith.constant 0 : i32
    return %c0_i32, %c0_i32_0 : i32, i32
  }
  func.func @transform_3(%arg0: i32) -> (i32, i32) {
    %c0_i32 = arith.constant 0 : i32
    %c0_i32_0 = arith.constant 0 : i32
    %c0_i32_1 = arith.constant 0 : i32
    return %c0_i32, %c0_i32_0 : i32, i32
  }
  func.func @transform_4(%arg0: i32) -> (i32, i32) {
    %c0_i32 = arith.constant 0 : i32
    %c0_i32_0 = arith.constant 0 : i32
    %c0_i32_1 = arith.constant 0 : i32
    return %c0_i32, %c0_i32_0 : i32, i32
  }
  func.func @transform_5(%arg0: i32) -> (i32, i32) {
    %c0_i32 = arith.constant 0 : i32
    %c0_i32_0 = arith.constant 0 : i32
    %c0_i32_1 = arith.constant 0 : i32
    return %c0_i32, %c0_i32_0 : i32, i32
  }
  func.func @transform_6(%arg0: i32) -> (i32, i32) {
    %c0_i32 = arith.constant 0 : i32
    %c0_i32_0 = arith.constant 0 : i32
    %c0_i32_1 = arith.constant 0 : i32
    return %c0_i32, %c0_i32_0 : i32, i32
  }
  func.func @transform_7(%arg0: i32) -> (i32, i32) {
    %c0_i32 = arith.constant 0 : i32
    %c0_i32_0 = arith.constant 0 : i32
    %c0_i32_1 = arith.constant 0 : i32
    return %c0_i32, %c0_i32_0 : i32, i32
  }
  func.func @transform_8(%arg0: i32) -> (i32, i32) {
    %c0_i32 = arith.constant 0 : i32
    %c0_i32_0 = arith.constant 0 : i32
    %c0_i32_1 = arith.constant 0 : i32
    return %c0_i32, %c0_i32_0 : i32, i32
  }
  func.func @transform_9(%arg0: i32) -> (i32, i32) {
    %c0_i32 = arith.constant 0 : i32
    %c0_i32_0 = arith.constant 0 : i32
    %c0_i32_1 = arith.constant 0 : i32
    return %c0_i32, %c0_i32_0 : i32, i32
  }
  func.func @transform_10(%arg0: i32) -> (i32, i32) {
    %c0_i32 = arith.constant 0 : i32
    %c0_i32_0 = arith.constant 0 : i32
    %c0_i32_1 = arith.constant 0 : i32
    return %c0_i32, %c0_i32_0 : i32, i32
  }
  func.func @transform_11(%arg0: i32) -> (i32, i32) {
    %c0_i32 = arith.constant 0 : i32
    %c0_i32_0 = arith.constant 0 : i32
    %c0_i32_1 = arith.constant 0 : i32
    return %c0_i32, %c0_i32_0 : i32, i32
  }
  func.func @transform_12(%arg0: i32) -> (i32, i32) {
    %c0_i32 = arith.constant 0 : i32
    %c0_i32_0 = arith.constant 0 : i32
    %c0_i32_1 = arith.constant 0 : i32
    return %c0_i32, %c0_i32_0 : i32, i32
  }
  func.func @transform_13(%arg0: i32) -> (i32, i32) {
    %c0_i32 = arith.constant 0 : i32
    %c0_i32_0 = arith.constant 0 : i32
    %c0_i32_1 = arith.constant 0 : i32
    return %c0_i32, %c0_i32_0 : i32, i32
  }
  func.func @transform_14(%arg0: i32) -> (i32, i32) {
    %c0_i32 = arith.constant 0 : i32
    %c0_i32_0 = arith.constant 0 : i32
    %c0_i32_1 = arith.constant 0 : i32
    return %c0_i32, %c0_i32_0 : i32, i32
  }
  func.func @transform_15(%arg0: i32) -> (i32, i32) {
    %c0_i32 = arith.constant 0 : i32
    %c0_i32_0 = arith.constant 0 : i32
    %c0_i32_1 = arith.constant 0 : i32
    return %c0_i32, %c0_i32_0 : i32, i32
  }
  func.func @transform_16(%arg0: i32) -> (i32, i32) {
    %c0_i32 = arith.constant 0 : i32
    %c0_i32_0 = arith.constant 0 : i32
    %c0_i32_1 = arith.constant 0 : i32
    return %c0_i32, %c0_i32_0 : i32, i32
  }
  func.func @transform_17(%arg0: i32) -> (i32, i32) {
    %c0_i32 = arith.constant 0 : i32
    %c0_i32_0 = arith.constant 0 : i32
    %c0_i32_1 = arith.constant 0 : i32
    return %c0_i32, %c0_i32_0 : i32, i32
  }
  func.func @transform_18(%arg0: i32) -> (i32, i32, i32) {
    %c0_i32 = arith.constant 0 : i32
    %c0_i32_0 = arith.constant 0 : i32
    %c0_i32_1 = arith.constant 0 : i32
    return %arg0, %c0_i32, %c0_i32_0 : i32, i32, i32
  }
}

module attributes {stable_mosaic.version = 11 : i64} {
  func.func @encoder_layer_kernel(%arg0: i32, %arg1: memref<1x1x8xf32, #tpu.memory_space<vmem>>, %arg2: memref<1x8x32xf32, #tpu.memory_space<vmem>>, %arg3: memref<32x32xbf16, #tpu.memory_space<vmem>>, %arg4: memref<1x32xf32, #tpu.memory_space<vmem>>, %arg5: memref<32x32xbf16, #tpu.memory_space<vmem>>, %arg6: memref<1x32xf32, #tpu.memory_space<vmem>>, %arg7: memref<32x32xbf16, #tpu.memory_space<vmem>>, %arg8: memref<1x32xf32, #tpu.memory_space<vmem>>, %arg9: memref<32x32xbf16, #tpu.memory_space<vmem>>, %arg10: memref<1x32xf32, #tpu.memory_space<vmem>>, %arg11: memref<1x32xf32, #tpu.memory_space<vmem>>, %arg12: memref<1x32xf32, #tpu.memory_space<vmem>>, %arg13: memref<32x128xbf16, #tpu.memory_space<vmem>>, %arg14: memref<1x128xf32, #tpu.memory_space<vmem>>, %arg15: memref<128x32xbf16, #tpu.memory_space<vmem>>, %arg16: memref<1x32xf32, #tpu.memory_space<vmem>>, %arg17: memref<1x32xf32, #tpu.memory_space<vmem>>, %arg18: memref<1x32xf32, #tpu.memory_space<vmem>>, %arg19: memref<1x8x32xf32, #tpu.memory_space<vmem>>) attributes {dimension_semantics = [#tpu.dimension_semantics<parallel>], iteration_bounds = array<i64: 2>, scalar_prefetch = 0 : i64, scratch_operands = 0 : i64, tpu.core_type = #tpu.core_type<tc>, window_params = [{transform_indices = @transform_0, window_bounds = array<i64: 1, 1, 8>}, {transform_indices = @transform_1, window_bounds = array<i64: 1, 8, 32>}, {pipeline_mode = #tpu.pipeline_mode<synchronous>, transform_indices = @transform_2, window_bounds = array<i64: 32, 32>}, {pipeline_mode = #tpu.pipeline_mode<synchronous>, transform_indices = @transform_3, window_bounds = array<i64: 1, 32>}, {pipeline_mode = #tpu.pipeline_mode<synchronous>, transform_indices = @transform_4, window_bounds = array<i64: 32, 32>}, {pipeline_mode = #tpu.pipeline_mode<synchronous>, transform_indices = @transform_5, window_bounds = array<i64: 1, 32>}, {pipeline_mode = #tpu.pipeline_mode<synchronous>, transform_indices = @transform_6, window_bounds = array<i64: 32, 32>}, {pipeline_mode = #tpu.pipeline_mode<synchronous>, transform_indices = @transform_7, window_bounds = array<i64: 1, 32>}, {pipeline_mode = #tpu.pipeline_mode<synchronous>, transform_indices = @transform_8, window_bounds = array<i64: 32, 32>}, {pipeline_mode = #tpu.pipeline_mode<synchronous>, transform_indices = @transform_9, window_bounds = array<i64: 1, 32>}, {pipeline_mode = #tpu.pipeline_mode<synchronous>, transform_indices = @transform_10, window_bounds = array<i64: 1, 32>}, {pipeline_mode = #tpu.pipeline_mode<synchronous>, transform_indices = @transform_11, window_bounds = array<i64: 1, 32>}, {pipeline_mode = #tpu.pipeline_mode<synchronous>, transform_indices = @transform_12, window_bounds = array<i64: 32, 128>}, {pipeline_mode = #tpu.pipeline_mode<synchronous>, transform_indices = @transform_13, window_bounds = array<i64: 1, 128>}, {pipeline_mode = #tpu.pipeline_mode<synchronous>, transform_indices = @transform_14, window_bounds = array<i64: 128, 32>}, {pipeline_mode = #tpu.pipeline_mode<synchronous>, transform_indices = @transform_15, window_bounds = array<i64: 1, 32>}, {pipeline_mode = #tpu.pipeline_mode<synchronous>, transform_indices = @transform_16, window_bounds = array<i64: 1, 32>}, {pipeline_mode = #tpu.pipeline_mode<synchronous>, transform_indices = @transform_17, window_bounds = array<i64: 1, 32>}, {transform_indices = @transform_18, window_bounds = array<i64: 1, 8, 32>}]} {
    %c0 = arith.constant 0 : index
    %c0_0 = arith.constant 0 : index
    %c0_1 = arith.constant 0 : index
    %0 = vector.load %arg2[%c0, %c0_0, %c0_1] : memref<1x8x32xf32, #tpu.memory_space<vmem>>, vector<1x8x32xf32>
    %1 = vector.shape_cast %0 : vector<1x8x32xf32> to vector<8x32xf32>
    %2 = arith.truncf %1 : vector<8x32xf32> to vector<8x32xbf16>
    %c0_2 = arith.constant 0 : index
    %c0_3 = arith.constant 0 : index
    %c0_4 = arith.constant 0 : index
    %3 = vector.load %arg1[%c0_2, %c0_3, %c0_4] : memref<1x1x8xf32, #tpu.memory_space<vmem>>, vector<1x1x8xf32>
    %c0_5 = arith.constant 0 : index
    %c0_6 = arith.constant 0 : index
    %4 = vector.load %arg3[%c0_5, %c0_6] : memref<32x32xbf16, #tpu.memory_space<vmem>>, vector<32x32xbf16>
    %cst = arith.constant dense<0.000000e+00> : vector<8x32xf32>
    %5 = tpu.matmul %2, %4, %cst {dimension_numbers = #tpu.dot_dimension_numbers<[1], [0], [0], [1], [0, 0, 1, 1], [], []>} : vector<8x32xbf16>, vector<32x32xbf16>, vector<8x32xf32> -> vector<8x32xf32>
    %c0_7 = arith.constant 0 : index
    %c0_8 = arith.constant 0 : index
    %6 = vector.load %arg4[%c0_7, %c0_8] : memref<1x32xf32, #tpu.memory_space<vmem>>, vector<1x32xf32>
    %7 = vector.broadcast %6 : vector<1x32xf32> to vector<8x32xf32>
    %8 = arith.addf %5, %7 : vector<8x32xf32>
    %c0_9 = arith.constant 0 : index
    %c0_10 = arith.constant 0 : index
    %9 = vector.load %arg5[%c0_9, %c0_10] : memref<32x32xbf16, #tpu.memory_space<vmem>>, vector<32x32xbf16>
    %cst_11 = arith.constant dense<0.000000e+00> : vector<8x32xf32>
    %10 = tpu.matmul %2, %9, %cst_11 {dimension_numbers = #tpu.dot_dimension_numbers<[1], [0], [0], [1], [0, 0, 1, 1], [], []>} : vector<8x32xbf16>, vector<32x32xbf16>, vector<8x32xf32> -> vector<8x32xf32>
    %c0_12 = arith.constant 0 : index
    %c0_13 = arith.constant 0 : index
    %11 = vector.load %arg6[%c0_12, %c0_13] : memref<1x32xf32, #tpu.memory_space<vmem>>, vector<1x32xf32>
    %12 = vector.broadcast %11 : vector<1x32xf32> to vector<8x32xf32>
    %13 = arith.addf %10, %12 : vector<8x32xf32>
    %c0_14 = arith.constant 0 : index
    %c0_15 = arith.constant 0 : index
    %14 = vector.load %arg7[%c0_14, %c0_15] : memref<32x32xbf16, #tpu.memory_space<vmem>>, vector<32x32xbf16>
    %cst_16 = arith.constant dense<0.000000e+00> : vector<8x32xf32>
    %15 = tpu.matmul %2, %14, %cst_16 {dimension_numbers = #tpu.dot_dimension_numbers<[1], [0], [0], [1], [0, 0, 1, 1], [], []>} : vector<8x32xbf16>, vector<32x32xbf16>, vector<8x32xf32> -> vector<8x32xf32>
    %c0_17 = arith.constant 0 : index
    %c0_18 = arith.constant 0 : index
    %16 = vector.load %arg8[%c0_17, %c0_18] : memref<1x32xf32, #tpu.memory_space<vmem>>, vector<1x32xf32>
    %17 = vector.broadcast %16 : vector<1x32xf32> to vector<8x32xf32>
    %18 = arith.addf %15, %17 : vector<8x32xf32>
    %19 = arith.truncf %8 : vector<8x32xf32> to vector<8x32xbf16>
    %20 = vector.shape_cast %19 : vector<8x32xbf16> to vector<1x8x32xbf16>
    %21 = vector.extract_strided_slice %20 {offsets = [0, 0, 0], sizes = [1, 8, 16], strides = [1, 1, 1]} : vector<1x8x32xbf16> to vector<1x8x16xbf16>
    %22 = vector.extract_strided_slice %20 {offsets = [0, 0, 16], sizes = [1, 8, 16], strides = [1, 1, 1]} : vector<1x8x32xbf16> to vector<1x8x16xbf16>
    %23 = vector.shape_cast %21 : vector<1x8x16xbf16> to vector<1x1x8x16xbf16>
    %24 = vector.shape_cast %22 : vector<1x8x16xbf16> to vector<1x1x8x16xbf16>
    %25 = tpu.concatenate %23, %24 in 0 : vector<1x1x8x16xbf16>, vector<1x1x8x16xbf16> -> vector<2x1x8x16xbf16>
    %26 = vector.shape_cast %25 : vector<2x1x8x16xbf16> to vector<2x8x16xbf16>
    %27 = arith.truncf %13 : vector<8x32xf32> to vector<8x32xbf16>
    %28 = vector.shape_cast %27 : vector<8x32xbf16> to vector<1x8x32xbf16>
    %29 = vector.extract_strided_slice %28 {offsets = [0, 0, 0], sizes = [1, 8, 16], strides = [1, 1, 1]} : vector<1x8x32xbf16> to vector<1x8x16xbf16>
    %30 = vector.extract_strided_slice %28 {offsets = [0, 0, 16], sizes = [1, 8, 16], strides = [1, 1, 1]} : vector<1x8x32xbf16> to vector<1x8x16xbf16>
    %31 = vector.shape_cast %29 : vector<1x8x16xbf16> to vector<1x1x8x16xbf16>
    %32 = vector.shape_cast %30 : vector<1x8x16xbf16> to vector<1x1x8x16xbf16>
    %33 = tpu.concatenate %31, %32 in 0 : vector<1x1x8x16xbf16>, vector<1x1x8x16xbf16> -> vector<2x1x8x16xbf16>
    %34 = vector.shape_cast %33 : vector<2x1x8x16xbf16> to vector<2x8x16xbf16>
    %35 = arith.truncf %18 : vector<8x32xf32> to vector<8x32xbf16>
    %36 = vector.shape_cast %35 : vector<8x32xbf16> to vector<1x8x32xbf16>
    %37 = vector.extract_strided_slice %36 {offsets = [0, 0, 0], sizes = [1, 8, 16], strides = [1, 1, 1]} : vector<1x8x32xbf16> to vector<1x8x16xbf16>
    %38 = vector.extract_strided_slice %36 {offsets = [0, 0, 16], sizes = [1, 8, 16], strides = [1, 1, 1]} : vector<1x8x32xbf16> to vector<1x8x16xbf16>
    %39 = vector.shape_cast %37 : vector<1x8x16xbf16> to vector<1x1x8x16xbf16>
    %40 = vector.shape_cast %38 : vector<1x8x16xbf16> to vector<1x1x8x16xbf16>
    %41 = tpu.concatenate %39, %40 in 0 : vector<1x1x8x16xbf16>, vector<1x1x8x16xbf16> -> vector<2x1x8x16xbf16>
    %42 = vector.shape_cast %41 : vector<2x1x8x16xbf16> to vector<2x8x16xbf16>
    "tpu.trace_start"() <{level = 10 : i32, message = "hqd,hkd->hqk"}> : () -> ()
    %cst_19 = arith.constant dense<0.000000e+00> : vector<2x8x8xf32>
    %43 = tpu.matmul %26, %34, %cst_19 {dimension_numbers = #tpu.dot_dimension_numbers<[2], [2], [1], [1], [0, 0, 0, 1, 1, 1], [0], [0]>} : vector<2x8x16xbf16>, vector<2x8x16xbf16>, vector<2x8x8xf32> -> vector<2x8x8xf32>
    "tpu.trace_stop"() : () -> ()
    %44 = vector.shape_cast %43 : vector<2x8x8xf32> to vector<2x1x8x8xf32>
    %45 = vector.shape_cast %3 : vector<1x1x8xf32> to vector<1x1x1x8xf32>
    %46 = vector.broadcast %45 : vector<1x1x1x8xf32> to vector<2x1x8x8xf32>
    %47 = arith.addf %44, %46 : vector<2x1x8x8xf32>
    %48 = vector.shape_cast %47 : vector<2x1x8x8xf32> to vector<2x8x8xf32>
    %cst_20 = arith.constant dense<0xFF800000> : vector<2x8xf32>
    %49 = vector.multi_reduction <maximumf>, %48, %cst_20 [2] : vector<2x8x8xf32> to vector<2x8xf32>
    %50 = vector.shape_cast %49 : vector<2x8xf32> to vector<2x8x1xf32>
    %51 = vector.broadcast %50 : vector<2x8x1xf32> to vector<2x8x8xf32>
    %52 = arith.subf %48, %51 : vector<2x8x8xf32>
    %53 = math.exp %52 : vector<2x8x8xf32>
    %cst_21 = arith.constant dense<0.000000e+00> : vector<2x8xf32>
    %54 = vector.multi_reduction <add>, %53, %cst_21 [2] : vector<2x8x8xf32> to vector<2x8xf32>
    %55 = vector.shape_cast %54 : vector<2x8xf32> to vector<2x8x1xf32>
    %56 = tpu.reciprocal %55 {approx = true} : vector<2x8x1xf32> -> vector<2x8x1xf32>
    %57 = vector.broadcast %56 : vector<2x8x1xf32> to vector<2x8x8xf32>
    %58 = arith.mulf %53, %57 : vector<2x8x8xf32>
    %59 = arith.truncf %58 : vector<2x8x8xf32> to vector<2x8x8xbf16>
    "tpu.trace_start"() <{level = 10 : i32, message = "hqk,hkd->hqd"}> : () -> ()
    %cst_22 = arith.constant dense<0.000000e+00> : vector<2x8x16xf32>
    %60 = tpu.matmul %59, %42, %cst_22 {dimension_numbers = #tpu.dot_dimension_numbers<[2], [1], [1], [2], [0, 0, 0, 1, 1, 2], [0], [0]>} : vector<2x8x8xbf16>, vector<2x8x16xbf16>, vector<2x8x16xf32> -> vector<2x8x16xf32>
    "tpu.trace_stop"() : () -> ()
    %61 = arith.truncf %60 : vector<2x8x16xf32> to vector<2x8x16xbf16>
    %62 = vector.shape_cast %61 : vector<2x8x16xbf16> to vector<2x1x8x16xbf16>
    %63 = vector.extract_strided_slice %62 {offsets = [0, 0, 0, 0], sizes = [1, 1, 8, 16], strides = [1, 1, 1, 1]} : vector<2x1x8x16xbf16> to vector<1x1x8x16xbf16>
    %64 = vector.shape_cast %63 : vector<1x1x8x16xbf16> to vector<1x8x16xbf16>
    %65 = vector.shape_cast %64 : vector<1x8x16xbf16> to vector<8x16xbf16>
    %66 = vector.extract_strided_slice %62 {offsets = [1, 0, 0, 0], sizes = [1, 1, 8, 16], strides = [1, 1, 1, 1]} : vector<2x1x8x16xbf16> to vector<1x1x8x16xbf16>
    %67 = vector.shape_cast %66 : vector<1x1x8x16xbf16> to vector<1x8x16xbf16>
    %68 = vector.shape_cast %67 : vector<1x8x16xbf16> to vector<8x16xbf16>
    %69 = tpu.concatenate %65, %68 in 1 : vector<8x16xbf16>, vector<8x16xbf16> -> vector<8x32xbf16>
    %c0_23 = arith.constant 0 : index
    %c0_24 = arith.constant 0 : index
    %70 = vector.load %arg9[%c0_23, %c0_24] : memref<32x32xbf16, #tpu.memory_space<vmem>>, vector<32x32xbf16>
    %cst_25 = arith.constant dense<0.000000e+00> : vector<8x32xf32>
    %71 = tpu.matmul %69, %70, %cst_25 {dimension_numbers = #tpu.dot_dimension_numbers<[1], [0], [0], [1], [0, 0, 1, 1], [], []>} : vector<8x32xbf16>, vector<32x32xbf16>, vector<8x32xf32> -> vector<8x32xf32>
    %c0_26 = arith.constant 0 : index
    %c0_27 = arith.constant 0 : index
    %72 = vector.load %arg10[%c0_26, %c0_27] : memref<1x32xf32, #tpu.memory_space<vmem>>, vector<1x32xf32>
    %73 = vector.broadcast %72 : vector<1x32xf32> to vector<8x32xf32>
    %74 = arith.addf %71, %73 : vector<8x32xf32>
    %75 = arith.addf %74, %1 : vector<8x32xf32>
    %c0_28 = arith.constant 0 : index
    %c0_29 = arith.constant 0 : index
    %76 = vector.load %arg11[%c0_28, %c0_29] : memref<1x32xf32, #tpu.memory_space<vmem>>, vector<1x32xf32>
    %c0_30 = arith.constant 0 : index
    %c0_31 = arith.constant 0 : index
    %77 = vector.load %arg12[%c0_30, %c0_31] : memref<1x32xf32, #tpu.memory_space<vmem>>, vector<1x32xf32>
    %cst_32 = arith.constant dense<0.000000e+00> : vector<8xf32>
    %78 = vector.multi_reduction <add>, %75, %cst_32 [1] : vector<8x32xf32> to vector<8xf32>
    %79 = vector.shape_cast %78 : vector<8xf32> to vector<8x1xf32>
    %cst_33 = arith.constant 3.200000e+01 : f32
    %80 = vector.broadcast %cst_33 : f32 to vector<8x1xf32>
    %81 = arith.divf %79, %80 : vector<8x1xf32>
    %82 = vector.broadcast %81 : vector<8x1xf32> to vector<8x32xf32>
    %83 = arith.subf %75, %82 : vector<8x32xf32>
    %84 = arith.mulf %83, %83 : vector<8x32xf32>
    %cst_34 = arith.constant dense<0.000000e+00> : vector<8xf32>
    %85 = vector.multi_reduction <add>, %84, %cst_34 [1] : vector<8x32xf32> to vector<8xf32>
    %86 = vector.shape_cast %85 : vector<8xf32> to vector<8x1xf32>
    %cst_35 = arith.constant 3.200000e+01 : f32
    %87 = vector.broadcast %cst_35 : f32 to vector<8x1xf32>
    %88 = arith.divf %86, %87 : vector<8x1xf32>
    %89 = vector.broadcast %81 : vector<8x1xf32> to vector<8x32xf32>
    %90 = arith.subf %75, %89 : vector<8x32xf32>
    %cst_36 = arith.constant 9.99999996E-13 : f32
    %91 = vector.broadcast %cst_36 : f32 to vector<8x1xf32>
    %92 = arith.addf %88, %91 : vector<8x1xf32>
    %93 = math.sqrt %92 : vector<8x1xf32>
    %94 = vector.broadcast %93 : vector<8x1xf32> to vector<8x32xf32>
    %95 = arith.divf %90, %94 : vector<8x32xf32>
    %96 = vector.broadcast %76 : vector<1x32xf32> to vector<8x32xf32>
    %97 = arith.mulf %96, %95 : vector<8x32xf32>
    %98 = vector.broadcast %77 : vector<1x32xf32> to vector<8x32xf32>
    %99 = arith.addf %97, %98 : vector<8x32xf32>
    %100 = arith.truncf %99 : vector<8x32xf32> to vector<8x32xbf16>
    %c0_37 = arith.constant 0 : index
    %c0_38 = arith.constant 0 : index
    %101 = vector.load %arg13[%c0_37, %c0_38] : memref<32x128xbf16, #tpu.memory_space<vmem>>, vector<32x128xbf16>
    %cst_39 = arith.constant dense<0.000000e+00> : vector<8x128xf32>
    %102 = tpu.matmul %100, %101, %cst_39 {dimension_numbers = #tpu.dot_dimension_numbers<[1], [0], [0], [1], [0, 0, 1, 1], [], []>} : vector<8x32xbf16>, vector<32x128xbf16>, vector<8x128xf32> -> vector<8x128xf32>
    %c0_40 = arith.constant 0 : index
    %c0_41 = arith.constant 0 : index
    %103 = vector.load %arg14[%c0_40, %c0_41] : memref<1x128xf32, #tpu.memory_space<vmem>>, vector<1x128xf32>
    %104 = vector.broadcast %103 : vector<1x128xf32> to vector<8x128xf32>
    %105 = arith.addf %102, %104 : vector<8x128xf32>
    %cst_42 = arith.constant 5.000000e-01 : f32
    %106 = vector.broadcast %cst_42 : f32 to vector<8x128xf32>
    %107 = arith.mulf %105, %106 : vector<8x128xf32>
    %cst_43 = arith.constant 1.41421354 : f32
    %108 = vector.broadcast %cst_43 : f32 to vector<8x128xf32>
    %109 = arith.divf %105, %108 : vector<8x128xf32>
    %110 = math.erf %109 : vector<8x128xf32>
    %cst_44 = arith.constant 1.000000e+00 : f32
    %111 = vector.broadcast %cst_44 : f32 to vector<8x128xf32>
    %112 = arith.addf %111, %110 : vector<8x128xf32>
    %113 = arith.mulf %107, %112 : vector<8x128xf32>
    %114 = arith.truncf %113 : vector<8x128xf32> to vector<8x128xbf16>
    %c0_45 = arith.constant 0 : index
    %c0_46 = arith.constant 0 : index
    %115 = vector.load %arg15[%c0_45, %c0_46] : memref<128x32xbf16, #tpu.memory_space<vmem>>, vector<128x32xbf16>
    %cst_47 = arith.constant dense<0.000000e+00> : vector<8x32xf32>
    %116 = tpu.matmul %114, %115, %cst_47 {dimension_numbers = #tpu.dot_dimension_numbers<[1], [0], [0], [1], [0, 0, 1, 1], [], []>} : vector<8x128xbf16>, vector<128x32xbf16>, vector<8x32xf32> -> vector<8x32xf32>
    %c0_48 = arith.constant 0 : index
    %c0_49 = arith.constant 0 : index
    %117 = vector.load %arg16[%c0_48, %c0_49] : memref<1x32xf32, #tpu.memory_space<vmem>>, vector<1x32xf32>
    %118 = vector.broadcast %117 : vector<1x32xf32> to vector<8x32xf32>
    %119 = arith.addf %116, %118 : vector<8x32xf32>
    %120 = arith.addf %119, %99 : vector<8x32xf32>
    %c0_50 = arith.constant 0 : index
    %c0_51 = arith.constant 0 : index
    %121 = vector.load %arg17[%c0_50, %c0_51] : memref<1x32xf32, #tpu.memory_space<vmem>>, vector<1x32xf32>
    %c0_52 = arith.constant 0 : index
    %c0_53 = arith.constant 0 : index
    %122 = vector.load %arg18[%c0_52, %c0_53] : memref<1x32xf32, #tpu.memory_space<vmem>>, vector<1x32xf32>
    %cst_54 = arith.constant dense<0.000000e+00> : vector<8xf32>
    %123 = vector.multi_reduction <add>, %120, %cst_54 [1] : vector<8x32xf32> to vector<8xf32>
    %124 = vector.shape_cast %123 : vector<8xf32> to vector<8x1xf32>
    %cst_55 = arith.constant 3.200000e+01 : f32
    %125 = vector.broadcast %cst_55 : f32 to vector<8x1xf32>
    %126 = arith.divf %124, %125 : vector<8x1xf32>
    %127 = vector.broadcast %126 : vector<8x1xf32> to vector<8x32xf32>
    %128 = arith.subf %120, %127 : vector<8x32xf32>
    %129 = arith.mulf %128, %128 : vector<8x32xf32>
    %cst_56 = arith.constant dense<0.000000e+00> : vector<8xf32>
    %130 = vector.multi_reduction <add>, %129, %cst_56 [1] : vector<8x32xf32> to vector<8xf32>
    %131 = vector.shape_cast %130 : vector<8xf32> to vector<8x1xf32>
    %cst_57 = arith.constant 3.200000e+01 : f32
    %132 = vector.broadcast %cst_57 : f32 to vector<8x1xf32>
    %133 = arith.divf %131, %132 : vector<8x1xf32>
    %134 = vector.broadcast %126 : vector<8x1xf32> to vector<8x32xf32>
    %135 = arith.subf %120, %134 : vector<8x32xf32>
    %cst_58 = arith.constant 9.99999996E-13 : f32
    %136 = vector.broadcast %cst_58 : f32 to vector<8x1xf32>
    %137 = arith.addf %133, %136 : vector<8x1xf32>
    %138 = math.sqrt %137 : vector<8x1xf32>
    %139 = vector.broadcast %138 : vector<8x1xf32> to vector<8x32xf32>
    %140 = arith.divf %135, %139 : vector<8x32xf32>
    %141 = vector.broadcast %121 : vector<1x32xf32> to vector<8x32xf32>
    %142 = arith.mulf %141, %140 : vector<8x32xf32>
    %143 = vector.broadcast %122 : vector<1x32xf32> to vector<8x32xf32>
    %144 = arith.addf %142, %143 : vector<8x32xf32>
    %145 = vector.shape_cast %144 : vector<8x32xf32> to vector<1x8x32xf32>
    %c0_59 = arith.constant 0 : index
    %c0_60 = arith.constant 0 : index
    %c0_61 = arith.constant 0 : index
    %146 = vector.load %arg19[%c0_59, %c0_60, %c0_61] : memref<1x8x32xf32, #tpu.memory_space<vmem>>, vector<1x8x32xf32>
    tpu.vector_store %arg19[%c0_59, %c0_60, %c0_61], %145 {strides = array<i32>} : memref<1x8x32xf32, #tpu.memory_space<vmem>>, vector<1x8x32xf32>,
    return
  }
  func.func @transform_0(%arg0: i32) -> (i32, i32, i32) {
    %c0_i32 = arith.constant 0 : i32
    %c0_i32_0 = arith.constant 0 : i32
    %c0_i32_1 = arith.constant 0 : i32
    return %arg0, %c0_i32, %c0_i32_0 : i32, i32, i32
  }
  func.func @transform_1(%arg0: i32) -> (i32, i32, i32) {
    %c0_i32 = arith.constant 0 : i32
    %c0_i32_0 = arith.constant 0 : i32
    %c0_i32_1 = arith.constant 0 : i32
    return %arg0, %c0_i32, %c0_i32_0 : i32, i32, i32
  }
  func.func @transform_2(%arg0: i32) -> (i32, i32) {
    %c0_i32 = arith.constant 0 : i32
    %c0_i32_0 = arith.constant 0 : i32
    %c0_i32_1 = arith.constant 0 : i32
    return %c0_i32, %c0_i32_0 : i32, i32
  }
  func.func @transform_3(%arg0: i32) -> (i32, i32) {
    %c0_i32 = arith.constant 0 : i32
    %c0_i32_0 = arith.constant 0 : i32
    %c0_i32_1 = arith.constant 0 : i32
    return %c0_i32, %c0_i32_0 : i32, i32
  }
  func.func @transform_4(%arg0: i32) -> (i32, i32) {
    %c0_i32 = arith.constant 0 : i32
    %c0_i32_0 = arith.constant 0 : i32
    %c0_i32_1 = arith.constant 0 : i32
    return %c0_i32, %c0_i32_0 : i32, i32
  }
  func.func @transform_5(%arg0: i32) -> (i32, i32) {
    %c0_i32 = arith.constant 0 : i32
    %c0_i32_0 = arith.constant 0 : i32
    %c0_i32_1 = arith.constant 0 : i32
    return %c0_i32, %c0_i32_0 : i32, i32
  }
  func.func @transform_6(%arg0: i32) -> (i32, i32) {
    %c0_i32 = arith.constant 0 : i32
    %c0_i32_0 = arith.constant 0 : i32
    %c0_i32_1 = arith.constant 0 : i32
    return %c0_i32, %c0_i32_0 : i32, i32
  }
  func.func @transform_7(%arg0: i32) -> (i32, i32) {
    %c0_i32 = arith.constant 0 : i32
    %c0_i32_0 = arith.constant 0 : i32
    %c0_i32_1 = arith.constant 0 : i32
    return %c0_i32, %c0_i32_0 : i32, i32
  }
  func.func @transform_8(%arg0: i32) -> (i32, i32) {
    %c0_i32 = arith.constant 0 : i32
    %c0_i32_0 = arith.constant 0 : i32
    %c0_i32_1 = arith.constant 0 : i32
    return %c0_i32, %c0_i32_0 : i32, i32
  }
  func.func @transform_9(%arg0: i32) -> (i32, i32) {
    %c0_i32 = arith.constant 0 : i32
    %c0_i32_0 = arith.constant 0 : i32
    %c0_i32_1 = arith.constant 0 : i32
    return %c0_i32, %c0_i32_0 : i32, i32
  }
  func.func @transform_10(%arg0: i32) -> (i32, i32) {
    %c0_i32 = arith.constant 0 : i32
    %c0_i32_0 = arith.constant 0 : i32
    %c0_i32_1 = arith.constant 0 : i32
    return %c0_i32, %c0_i32_0 : i32, i32
  }
  func.func @transform_11(%arg0: i32) -> (i32, i32) {
    %c0_i32 = arith.constant 0 : i32
    %c0_i32_0 = arith.constant 0 : i32
    %c0_i32_1 = arith.constant 0 : i32
    return %c0_i32, %c0_i32_0 : i32, i32
  }
  func.func @transform_12(%arg0: i32) -> (i32, i32) {
    %c0_i32 = arith.constant 0 : i32
    %c0_i32_0 = arith.constant 0 : i32
    %c0_i32_1 = arith.constant 0 : i32
    return %c0_i32, %c0_i32_0 : i32, i32
  }
  func.func @transform_13(%arg0: i32) -> (i32, i32) {
    %c0_i32 = arith.constant 0 : i32
    %c0_i32_0 = arith.constant 0 : i32
    %c0_i32_1 = arith.constant 0 : i32
    return %c0_i32, %c0_i32_0 : i32, i32
  }
  func.func @transform_14(%arg0: i32) -> (i32, i32) {
    %c0_i32 = arith.constant 0 : i32
    %c0_i32_0 = arith.constant 0 : i32
    %c0_i32_1 = arith.constant 0 : i32
    return %c0_i32, %c0_i32_0 : i32, i32
  }
  func.func @transform_15(%arg0: i32) -> (i32, i32) {
    %c0_i32 = arith.constant 0 : i32
    %c0_i32_0 = arith.constant 0 : i32
    %c0_i32_1 = arith.constant 0 : i32
    return %c0_i32, %c0_i32_0 : i32, i32
  }
  func.func @transform_16(%arg0: i32) -> (i32, i32) {
    %c0_i32 = arith.constant 0 : i32
    %c0_i32_0 = arith.constant 0 : i32
    %c0_i32_1 = arith.constant 0 : i32
    return %c0_i32, %c0_i32_0 : i32, i32
  }
  func.func @transform_17(%arg0: i32) -> (i32, i32) {
    %c0_i32 = arith.constant 0 : i32
    %c0_i32_0 = arith.constant 0 : i32
    %c0_i32_1 = arith.constant 0 : i32
    return %c0_i32, %c0_i32_0 : i32, i32
  }
  func.func @transform_18(%arg0: i32) -> (i32, i32, i32) {
    %c0_i32 = arith.constant 0 : i32
    %c0_i32_0 = arith.constant 0 : i32
    %c0_i32_1 = arith.constant 0 : i32
    return %arg0, %c0_i32, %c0_i32_0 : i32, i32, i32
  }
}

</mosaic_0001>

<llo_original>
// kernel: tpu_custom_call.1
$region0: #{tpu_custom_call.1}
  #allocation0 [shape = 'u32[]', space=smem, size = 0x4, offset = 0x4, fixed_abs, tag = 'smem constant byte address 0x4 - core index']
  #allocation1 [shape = 'u32[144,128]{1,0:T(1,128)}', space=vmem, size = 0x12000, scoped, tag = 'internal scratch']
  %s0 = inlined_call_operand.hbm [shape: f32[2,1,8], index: 0, kind: input, shape index: {}]
  %s1 = inlined_call_operand.vmem [shape: f32[2,8,32], index: 1, kind: input, shape index: {}]
  %s2 = inlined_call_operand.vmem [shape: bf16[32,32], index: 2, kind: input, shape index: {}]
  %s3 = inlined_call_operand.vmem [shape: f32[1,32], index: 3, kind: input, shape index: {}]
  %s4 = inlined_call_operand.vmem [shape: bf16[32,32], index: 4, kind: input, shape index: {}]
  %s5 = inlined_call_operand.vmem [shape: f32[1,32], index: 5, kind: input, shape index: {}]
  %s6 = inlined_call_operand.vmem [shape: bf16[32,32], index: 6, kind: input, shape index: {}]
  %s7 = inlined_call_operand.hbm [shape: f32[1,32], index: 7, kind: input, shape index: {}]
  %s8 = inlined_call_operand.vmem [shape: bf16[32,32], index: 8, kind: input, shape index: {}]
  %s9 = inlined_call_operand.hbm [shape: f32[1,32], index: 9, kind: input, shape index: {}]
  %s10 = inlined_call_operand.vmem [shape: f32[1,32], index: 10, kind: input, shape index: {}]
  %s11 = inlined_call_operand.vmem [shape: f32[1,32], index: 11, kind: input, shape index: {}]
  %s12 = inlined_call_operand.vmem [shape: bf16[32,128], index: 12, kind: input, shape index: {}]
  %s13 = inlined_call_operand.vmem [shape: f32[1,128], index: 13, kind: input, shape index: {}]
  %s14 = inlined_call_operand.vmem [shape: bf16[128,32], index: 14, kind: input, shape index: {}]
  %s15 = inlined_call_operand.vmem [shape: f32[1,32], index: 15, kind: input, shape index: {}]
  %s16 = inlined_call_operand.vmem [shape: f32[1,32], index: 16, kind: input, shape index: {}]
  %s17 = inlined_call_operand.vmem [shape: f32[1,32], index: 17, kind: input, shape index: {}]
  %s18 = inlined_call_operand.hbm [shape: f32[2,8,32], index: 18, kind: output, shape index: {}]
  %s19 = sld [smem:[#allocation0]]
  $region117: #{tpu_custom_call.1} parent=0
    _
  %s21 = ssub.s32 1, %s19
  %s22 = scalar_select 0, %s21, %s19
  $region1: #{tpu_custom_call.1} parent=0
    #allocation2 [shape = 'u8[1024]{0}', space=vmem, size = 0x400, scoped, tag = 'input window, operand 0']
    #allocation3 [shape = 's32[2]{0}', space=sflag, size = 0x8, scoped, tag = 'scoped memory for tpu_custom_call.1']
    #allocation4 [shape = 's32[2]{0}', space=sflag, size = 0x8, scoped, tag = 'scoped memory for tpu_custom_call.1']
    #allocation5 [shape = 'u8[512]{0}', space=vmem, size = 0x400, scoped, tag = 'input window, operand 7, single buffered']
    #allocation6 [shape = 's32[1]{0}', space=sflag, size = 0x4, scoped, tag = 'scoped memory for tpu_custom_call.1']
    #allocation7 [shape = 'u8[512]{0}', space=vmem, size = 0x400, scoped, tag = 'input window, operand 9, single buffered']
    #allocation8 [shape = 'u8[8192]{0}', space=vmem, size = 0x2000, scoped, tag = 'output window, operand 0']
    %23 = vsyncpa [#allocation3], 0
    %s24 = scalar_lea.sflag [#allocation3], 1
    %25 = vsyncpa %s24, 0
    %26 = vsyncpa [#allocation6], 0
    %27 = vsyncpa [#allocation4], 0
    %s28 = scalar_lea.sflag [#allocation4], 1
    %29 = vsyncpa %s28, 0
    loop: start=0, step=1, limit=4
    $region2: #{tpu_custom_call.1} parent=1 // loop_pre_header
      _
    $region3: #{tpu_custom_call.1} parent=1 // loop_header
      %s31 = sphi 0, %s35
      %p32 = scmp.ge.s32.totalorder %s31, 4
      %s41 = sphi 0, %s43
      %s44 = sphi 0, %s41
      %s45 = sphi 0, %s44
      %s61 = sphi 0, %s45
      %s67 = sphi 0, %s69
      %s70 = sphi 0, %s67
      %s71 = sphi 0, %s70
      %s87 = sphi 0, %s71
      %s91 = sphi 0, %s91
      %s93 = sphi 0, %s91
      %s94 = sphi 0, %s93
      %s108 = sphi 0, %s94
      %s112 = sphi 0, %s112
      %s114 = sphi 0, %s112
      %s115 = sphi 0, %s114
      %s129 = sphi 0, %s115
      %s133 = sphi 0, %s133
      %s135 = sphi 0, %s133
      %s136 = sphi 0, %s135
      %s150 = sphi 0, %s136
      %s154 = sphi 0, %s154
      %s156 = sphi 0, %s154
      %s157 = sphi 0, %s156
      %s171 = sphi 0, %s157
      %s175 = sphi 0, %s175
      %s177 = sphi 0, %s175
      %s178 = sphi 0, %s177
      %s192 = sphi 0, %s178
      %s196 = sphi 0, %s196
      %s198 = sphi 0, %s196
      %s199 = sphi 0, %s198
      %s213 = sphi 0, %s199
      %s217 = sphi 0, %s217
      %s219 = sphi 0, %s217
      %s220 = sphi 0, %s219
      %s234 = sphi 0, %s220
      %s238 = sphi 0, %s238
      %s240 = sphi 0, %s238
      %s241 = sphi 0, %s240
      %s255 = sphi 0, %s241
      %s259 = sphi 0, %s259
      %s261 = sphi 0, %s259
      %s262 = sphi 0, %s261
      %s276 = sphi 0, %s262
      %s280 = sphi 0, %s280
      %s282 = sphi 0, %s280
      %s283 = sphi 0, %s282
      %s297 = sphi 0, %s283
      %s301 = sphi 0, %s301
      %s303 = sphi 0, %s301
      %s304 = sphi 0, %s303
      %s318 = sphi 0, %s304
      %s322 = sphi 0, %s322
      %s324 = sphi 0, %s322
      %s325 = sphi 0, %s324
      %s339 = sphi 0, %s325
      %s343 = sphi 0, %s343
      %s345 = sphi 0, %s343
      %s346 = sphi 0, %s345
      %s360 = sphi 0, %s346
      %s364 = sphi 0, %s364
      %s366 = sphi 0, %s364
      %s367 = sphi 0, %s366
      %s381 = sphi 0, %s367
      %s385 = sphi 0, %s385
      %s387 = sphi 0, %s385
      %s388 = sphi 0, %s387
      %s402 = sphi 0, %s388
      %s406 = sphi 0, %s406
      %s408 = sphi 0, %s406
      %s409 = sphi 0, %s408
      %s423 = sphi 0, %s409
      %s429 = sphi 0, %s431
      %s432 = sphi 0, %s429
      %s433 = sphi 0, %s432
      %s449 = sphi 0, %s433
    $region4: #{tpu_custom_call.1} parent=1 // loop_header_branch
      %34 = sbr.rel (%p32) target = $region8
    $region5: #{tpu_custom_call.1} parent=1 // loop_body
      %s36 = ssub.s32 %s31, 1
      %s37 = ssub.s32 %s31, 2
      %s38 = sadd.s32 %s31, 1
      %s39 = ssub.s32 %s31, %s38
      %p40 = scmp.eq.s32.totalorder %s39, 0
      %s42 = sadd.s32 %s41, 1
      %s43 = scalar_select %p40, %s41, %s42
      %p46 = pneg %p40
      %p47 = scmp.eq.s32.totalorder %s31, 1
      %p48 = por %p46, %p47
      %p49 = scmp.ne.s32.totalorder %s41, %s44
      %p50 = scmp.eq.s32.totalorder %s31, 0
      %p51 = por %p49, %p50
      %p52 = scmp.ne.s32.totalorder %s41, %s44
      %p53 = scmp.eq.s32.totalorder %s36, 1
      %p54 = por %p52, %p53
      %p55 = scmp.ne.s32.totalorder %s44, %s45
      %p56 = scmp.eq.s32.totalorder %s36, 0
      %p57 = por %p55, %p56
      %p58 = scmp.ne.s32.totalorder %s44, %s45
      %p59 = scmp.eq.s32.totalorder %s37, 1
      %p60 = por %p58, %p59
      %p62 = scmp.ne.s32.totalorder %s45, %s61
      %p63 = scmp.eq.s32.totalorder %s37, 0
      %p64 = por %p62, %p63
      %s65 = ssub.s32 %s31, %s38
      %p66 = scmp.eq.s32.totalorder %s65, 0
      %s68 = sadd.s32 %s67, 1
      %s69 = scalar_select %p66, %s67, %s68
      %p72 = pneg %p66
      %p73 = scmp.eq.s32.totalorder %s31, 1
      %p74 = por %p72, %p73
      %p75 = scmp.ne.s32.totalorder %s67, %s70
      %p76 = scmp.eq.s32.totalorder %s31, 0
      %p77 = por %p75, %p76
      %p78 = scmp.ne.s32.totalorder %s67, %s70
      %p79 = scmp.eq.s32.totalorder %s36, 1
      %p80 = por %p78, %p79
      %p81 = scmp.ne.s32.totalorder %s70, %s71
      %p82 = scmp.eq.s32.totalorder %s36, 0
      %p83 = por %p81, %p82
      %p84 = scmp.ne.s32.totalorder %s70, %s71
      %p85 = scmp.eq.s32.totalorder %s37, 1
      %p86 = por %p84, %p85
      %p88 = scmp.ne.s32.totalorder %s71, %s87
      %p89 = scmp.eq.s32.totalorder %s37, 0
      %p90 = por %p88, %p89
      %s92 = sadd.s32 %s91, 1
      %p95 = scmp.eq.s32.totalorder %s31, 1
      %p96 = scmp.ne.s32.totalorder %s91, %s93
      %p97 = scmp.eq.s32.totalorder %s31, 0
      %p98 = por %p96, %p97
      %p99 = scmp.ne.s32.totalorder %s91, %s93
      %p100 = scmp.eq.s32.totalorder %s36, 1
      %p101 = por %p99, %p100
      %p102 = scmp.ne.s32.totalorder %s93, %s94
      %p103 = scmp.eq.s32.totalorder %s36, 0
      %p104 = por %p102, %p103
      %p105 = scmp.ne.s32.totalorder %s93, %s94
      %p106 = scmp.eq.s32.totalorder %s37, 1
      %p107 = por %p105, %p106
      %p109 = scmp.ne.s32.totalorder %s94, %s108
      %p110 = scmp.eq.s32.totalorder %s37, 0
      %p111 = por %p109, %p110
      %s113 = sadd.s32 %s112, 1
      %p116 = scmp.eq.s32.totalorder %s31, 1
      %p117 = scmp.ne.s32.totalorder %s112, %s114
      %p118 = scmp.eq.s32.totalorder %s31, 0
      %p119 = por %p117, %p118
      %p120 = scmp.ne.s32.totalorder %s112, %s114
      %p121 = scmp.eq.s32.totalorder %s36, 1
      %p122 = por %p120, %p121
      %p123 = scmp.ne.s32.totalorder %s114, %s115
      %p124 = scmp.eq.s32.totalorder %s36, 0
      %p125 = por %p123, %p124
      %p126 = scmp.ne.s32.totalorder %s114, %s115
      %p127 = scmp.eq.s32.totalorder %s37, 1
      %p128 = por %p126, %p127
      %p130 = scmp.ne.s32.totalorder %s115, %s129
      %p131 = scmp.eq.s32.totalorder %s37, 0
      %p132 = por %p130, %p131
      %s134 = sadd.s32 %s133, 1
      %p137 = scmp.eq.s32.totalorder %s31, 1
      %p138 = scmp.ne.s32.totalorder %s133, %s135
      %p139 = scmp.eq.s32.totalorder %s31, 0
      %p140 = por %p138, %p139
      %p141 = scmp.ne.s32.totalorder %s133, %s135
      %p142 = scmp.eq.s32.totalorder %s36, 1
      %p143 = por %p141, %p142
      %p144 = scmp.ne.s32.totalorder %s135, %s136
      %p145 = scmp.eq.s32.totalorder %s36, 0
      %p146 = por %p144, %p145
      %p147 = scmp.ne.s32.totalorder %s135, %s136
      %p148 = scmp.eq.s32.totalorder %s37, 1
      %p149 = por %p147, %p148
      %p151 = scmp.ne.s32.totalorder %s136, %s150
      %p152 = scmp.eq.s32.totalorder %s37, 0
      %p153 = por %p151, %p152
      %s155 = sadd.s32 %s154, 1
      %p158 = scmp.eq.s32.totalorder %s31, 1
      %p159 = scmp.ne.s32.totalorder %s154, %s156
      %p160 = scmp.eq.s32.totalorder %s31, 0
      %p161 = por %p159, %p160
      %p162 = scmp.ne.s32.totalorder %s154, %s156
      %p163 = scmp.eq.s32.totalorder %s36, 1
      %p164 = por %p162, %p163
      %p165 = scmp.ne.s32.totalorder %s156, %s157
      %p166 = scmp.eq.s32.totalorder %s36, 0
      %p167 = por %p165, %p166
      %p168 = scmp.ne.s32.totalorder %s156, %s157
      %p169 = scmp.eq.s32.totalorder %s37, 1
      %p170 = por %p168, %p169
      %p172 = scmp.ne.s32.totalorder %s157, %s171
      %p173 = scmp.eq.s32.totalorder %s37, 0
      %p174 = por %p172, %p173
      %s176 = sadd.s32 %s175, 1
      %p179 = scmp.eq.s32.totalorder %s31, 1
      %p180 = scmp.ne.s32.totalorder %s175, %s177
      %p181 = scmp.eq.s32.totalorder %s31, 0
      %p182 = por %p180, %p181
      %p183 = scmp.ne.s32.totalorder %s175, %s177
      %p184 = scmp.eq.s32.totalorder %s36, 1
      %p185 = por %p183, %p184
      %p186 = scmp.ne.s32.totalorder %s177, %s178
      %p187 = scmp.eq.s32.totalorder %s36, 0
      %p188 = por %p186, %p187
      %p189 = scmp.ne.s32.totalorder %s177, %s178
      %p190 = scmp.eq.s32.totalorder %s37, 1
      %p191 = por %p189, %p190
      %p193 = scmp.ne.s32.totalorder %s178, %s192
      %p194 = scmp.eq.s32.totalorder %s37, 0
      %p195 = por %p193, %p194
      %s197 = sadd.s32 %s196, 1
      %p200 = scmp.eq.s32.totalorder %s31, 1
      %p201 = scmp.ne.s32.totalorder %s196, %s198
      %p202 = scmp.eq.s32.totalorder %s31, 0
      %p203 = por %p201, %p202
      %p204 = scmp.ne.s32.totalorder %s196, %s198
      %p205 = scmp.eq.s32.totalorder %s36, 1
      %p206 = por %p204, %p205
      %p207 = scmp.ne.s32.totalorder %s198, %s199
      %p208 = scmp.eq.s32.totalorder %s36, 0
      %p209 = por %p207, %p208
      %p210 = scmp.ne.s32.totalorder %s198, %s199
      %p211 = scmp.eq.s32.totalorder %s37, 1
      %p212 = por %p210, %p211
      %p214 = scmp.ne.s32.totalorder %s199, %s213
      %p215 = scmp.eq.s32.totalorder %s37, 0
      %p216 = por %p214, %p215
      %s218 = sadd.s32 %s217, 1
      %p221 = scmp.eq.s32.totalorder %s31, 1
      %p222 = scmp.ne.s32.totalorder %s217, %s219
      %p223 = scmp.eq.s32.totalorder %s31, 0
      %p224 = por %p222, %p223
      %p225 = scmp.ne.s32.totalorder %s217, %s219
      %p226 = scmp.eq.s32.totalorder %s36, 1
      %p227 = por %p225, %p226
      %p228 = scmp.ne.s32.totalorder %s219, %s220
      %p229 = scmp.eq.s32.totalorder %s36, 0
      %p230 = por %p228, %p229
      %p231 = scmp.ne.s32.totalorder %s219, %s220
      %p232 = scmp.eq.s32.totalorder %s37, 1
      %p233 = por %p231, %p232
      %p235 = scmp.ne.s32.totalorder %s220, %s234
      %p236 = scmp.eq.s32.totalorder %s37, 0
      %p237 = por %p235, %p236
      %s239 = sadd.s32 %s238, 1
      %p242 = scmp.eq.s32.totalorder %s31, 1
      %p243 = scmp.ne.s32.totalorder %s238, %s240
      %p244 = scmp.eq.s32.totalorder %s31, 0
      %p245 = por %p243, %p244
      %p246 = scmp.ne.s32.totalorder %s238, %s240
      %p247 = scmp.eq.s32.totalorder %s36, 1
      %p248 = por %p246, %p247
      %p249 = scmp.ne.s32.totalorder %s240, %s241
      %p250 = scmp.eq.s32.totalorder %s36, 0
      %p251 = por %p249, %p250
      %p252 = scmp.ne.s32.totalorder %s240, %s241
      %p253 = scmp.eq.s32.totalorder %s37, 1
      %p254 = por %p252, %p253
      %p256 = scmp.ne.s32.totalorder %s241, %s255
      %p257 = scmp.eq.s32.totalorder %s37, 0
      %p258 = por %p256, %p257
      %s260 = sadd.s32 %s259, 1
      %p263 = scmp.eq.s32.totalorder %s31, 1
      %p264 = scmp.ne.s32.totalorder %s259, %s261
      %p265 = scmp.eq.s32.totalorder %s31, 0
      %p266 = por %p264, %p265
      %p267 = scmp.ne.s32.totalorder %s259, %s261
      %p268 = scmp.eq.s32.totalorder %s36, 1
      %p269 = por %p267, %p268
      %p270 = scmp.ne.s32.totalorder %s261, %s262
      %p271 = scmp.eq.s32.totalorder %s36, 0
      %p272 = por %p270, %p271
      %p273 = scmp.ne.s32.totalorder %s261, %s262
      %p274 = scmp.eq.s32.totalorder %s37, 1
      %p275 = por %p273, %p274
      %p277 = scmp.ne.s32.totalorder %s262, %s276
      %p278 = scmp.eq.s32.totalorder %s37, 0
      %p279 = por %p277, %p278
      %s281 = sadd.s32 %s280, 1
      %p284 = scmp.eq.s32.totalorder %s31, 1
      %p285 = scmp.ne.s32.totalorder %s280, %s282
      %p286 = scmp.eq.s32.totalorder %s31, 0
      %p287 = por %p285, %p286
      %p288 = scmp.ne.s32.totalorder %s280, %s282
      %p289 = scmp.eq.s32.totalorder %s36, 1
      %p290 = por %p288, %p289
      %p291 = scmp.ne.s32.totalorder %s282, %s283
      %p292 = scmp.eq.s32.totalorder %s36, 0
      %p293 = por %p291, %p292
      %p294 = scmp.ne.s32.totalorder %s282, %s283
      %p295 = scmp.eq.s32.totalorder %s37, 1
      %p296 = por %p294, %p295
      %p298 = scmp.ne.s32.totalorder %s283, %s297
      %p299 = scmp.eq.s32.totalorder %s37, 0
      %p300 = por %p298, %p299
      %s302 = sadd.s32 %s301, 1
      %p305 = scmp.eq.s32.totalorder %s31, 1
      %p306 = scmp.ne.s32.totalorder %s301, %s303
      %p307 = scmp.eq.s32.totalorder %s31, 0
      %p308 = por %p306, %p307
      %p309 = scmp.ne.s32.totalorder %s301, %s303
      %p310 = scmp.eq.s32.totalorder %s36, 1
      %p311 = por %p309, %p310
      %p312 = scmp.ne.s32.totalorder %s303, %s304
      %p313 = scmp.eq.s32.totalorder %s36, 0
      %p314 = por %p312, %p313
      %p315 = scmp.ne.s32.totalorder %s303, %s304
      %p316 = scmp.eq.s32.totalorder %s37, 1
      %p317 = por %p315, %p316
      %p319 = scmp.ne.s32.totalorder %s304, %s318
      %p320 = scmp.eq.s32.totalorder %s37, 0
      %p321 = por %p319, %p320
      %s323 = sadd.s32 %s322, 1
      %p326 = scmp.eq.s32.totalorder %s31, 1
      %p327 = scmp.ne.s32.totalorder %s322, %s324
      %p328 = scmp.eq.s32.totalorder %s31, 0
      %p329 = por %p327, %p328
      %p330 = scmp.ne.s32.totalorder %s322, %s324
      %p331 = scmp.eq.s32.totalorder %s36, 1
      %p332 = por %p330, %p331
      %p333 = scmp.ne.s32.totalorder %s324, %s325
      %p334 = scmp.eq.s32.totalorder %s36, 0
      %p335 = por %p333, %p334
      %p336 = scmp.ne.s32.totalorder %s324, %s325
      %p337 = scmp.eq.s32.totalorder %s37, 1
      %p338 = por %p336, %p337
      %p340 = scmp.ne.s32.totalorder %s325, %s339
      %p341 = scmp.eq.s32.totalorder %s37, 0
      %p342 = por %p340, %p341
      %s344 = sadd.s32 %s343, 1
      %p347 = scmp.eq.s32.totalorder %s31, 1
      %p348 = scmp.ne.s32.totalorder %s343, %s345
      %p349 = scmp.eq.s32.totalorder %s31, 0
      %p350 = por %p348, %p349
      %p351 = scmp.ne.s32.totalorder %s343, %s345
      %p352 = scmp.eq.s32.totalorder %s36, 1
      %p353 = por %p351, %p352
      %p354 = scmp.ne.s32.totalorder %s345, %s346
      %p355 = scmp.eq.s32.totalorder %s36, 0
      %p356 = por %p354, %p355
      %p357 = scmp.ne.s32.totalorder %s345, %s346
      %p358 = scmp.eq.s32.totalorder %s37, 1
      %p359 = por %p357, %p358
      %p361 = scmp.ne.s32.totalorder %s346, %s360
      %p362 = scmp.eq.s32.totalorder %s37, 0
      %p363 = por %p361, %p362
      %s365 = sadd.s32 %s364, 1
      %p368 = scmp.eq.s32.totalorder %s31, 1
      %p369 = scmp.ne.s32.totalorder %s364, %s366
      %p370 = scmp.eq.s32.totalorder %s31, 0
      %p371 = por %p369, %p370
      %p372 = scmp.ne.s32.totalorder %s364, %s366
      %p373 = scmp.eq.s32.totalorder %s36, 1
      %p374 = por %p372, %p373
      %p375 = scmp.ne.s32.totalorder %s366, %s367
      %p376 = scmp.eq.s32.totalorder %s36, 0
      %p377 = por %p375, %p376
      %p378 = scmp.ne.s32.totalorder %s366, %s367
      %p379 = scmp.eq.s32.totalorder %s37, 1
      %p380 = por %p378, %p379
      %p382 = scmp.ne.s32.totalorder %s367, %s381
      %p383 = scmp.eq.s32.totalorder %s37, 0
      %p384 = por %p382, %p383
      %s386 = sadd.s32 %s385, 1
      %p389 = scmp.eq.s32.totalorder %s31, 1
      %p390 = scmp.ne.s32.totalorder %s385, %s387
      %p391 = scmp.eq.s32.totalorder %s31, 0
      %p392 = por %p390, %p391
      %p393 = scmp.ne.s32.totalorder %s385, %s387
      %p394 = scmp.eq.s32.totalorder %s36, 1
      %p395 = por %p393, %p394
      %p396 = scmp.ne.s32.totalorder %s387, %s388
      %p397 = scmp.eq.s32.totalorder %s36, 0
      %p398 = por %p396, %p397
      %p399 = scmp.ne.s32.totalorder %s387, %s388
      %p400 = scmp.eq.s32.totalorder %s37, 1
      %p401 = por %p399, %p400
      %p403 = scmp.ne.s32.totalorder %s388, %s402
      %p404 = scmp.eq.s32.totalorder %s37, 0
      %p405 = por %p403, %p404
      %s407 = sadd.s32 %s406, 1
      %p410 = scmp.eq.s32.totalorder %s31, 1
      %p411 = scmp.ne.s32.totalorder %s406, %s408
      %p412 = scmp.eq.s32.totalorder %s31, 0
      %p413 = por %p411, %p412
      %p414 = scmp.ne.s32.totalorder %s406, %s408
      %p415 = scmp.eq.s32.totalorder %s36, 1
      %p416 = por %p414, %p415
      %p417 = scmp.ne.s32.totalorder %s408, %s409
      %p418 = scmp.eq.s32.totalorder %s36, 0
      %p419 = por %p417, %p418
      %p420 = scmp.ne.s32.totalorder %s408, %s409
      %p421 = scmp.eq.s32.totalorder %s37, 1
      %p422 = por %p420, %p421
      %p424 = scmp.ne.s32.totalorder %s409, %s423
      %p425 = scmp.eq.s32.totalorder %s37, 0
      %p426 = por %p424, %p425
      %s427 = ssub.s32 %s31, %s38
      %p428 = scmp.eq.s32.totalorder %s427, 0
      %s430 = sadd.s32 %s429, 1
      %s431 = scalar_select %p428, %s429, %s430
      %p434 = pneg %p428
      %p435 = scmp.eq.s32.totalorder %s31, 1
      %p436 = por %p434, %p435
      %p437 = scmp.ne.s32.totalorder %s429, %s432
      %p438 = scmp.eq.s32.totalorder %s31, 0
      %p439 = por %p437, %p438
      %p440 = scmp.ne.s32.totalorder %s429, %s432
      %p441 = scmp.eq.s32.totalorder %s36, 1
      %p442 = por %p440, %p441
      %p443 = scmp.ne.s32.totalorder %s432, %s433
      %p444 = scmp.eq.s32.totalorder %s36, 0
      %p445 = por %p443, %p444
      %p446 = scmp.ne.s32.totalorder %s432, %s433
      %p447 = scmp.eq.s32.totalorder %s37, 1
      %p448 = por %p446, %p447
      %p450 = scmp.ne.s32.totalorder %s433, %s449
      %p451 = scmp.eq.s32.totalorder %s37, 0
      %p452 = por %p450, %p451
      %p453 = scmp.le.s32.totalorder 1, %s31
      %p454 = scmp.lt.s32.totalorder %s31, 3
      %p455 = pnand %p453, %p454
      %p456 = pneg %p455
      // Predicated region
      $region9: #{tpu_custom_call.1} parent=5 // pred_check
        _
      $region10: #{tpu_custom_call.1} parent=5 // pred_check_branch
        %458 = sbr.rel (%p455) target = $region12
      $region11: #{tpu_custom_call.1} parent=5 // pred_region
        %s459 = ssub.s32 %s31, 1
        // Predicated region
        $region13: #{tpu_custom_call.1} parent=11 // pred_check
          %p460 = pneg %p104
        $region14: #{tpu_custom_call.1} parent=11 // pred_check_branch
          %462 = sbr.rel (%p460) target = $region16
        $region15: #{tpu_custom_call.1} parent=11 // pred_region
          _
        $region16: #{tpu_custom_call.1} parent=11 // pred_fallthru
          _
        // Predicated region
        $region17: #{tpu_custom_call.1} parent=11 // pred_check
          %p463 = pneg %p125
        $region18: #{tpu_custom_call.1} parent=11 // pred_check_branch
          %465 = sbr.rel (%p463) target = $region20
        $region19: #{tpu_custom_call.1} parent=11 // pred_region
          _
        $region20: #{tpu_custom_call.1} parent=11 // pred_fallthru
          _
        // Predicated region
        $region21: #{tpu_custom_call.1} parent=11 // pred_check
          %p466 = pneg %p146
        $region22: #{tpu_custom_call.1} parent=11 // pred_check_branch
          %468 = sbr.rel (%p466) target = $region24
        $region23: #{tpu_custom_call.1} parent=11 // pred_region
          _
        $region24: #{tpu_custom_call.1} parent=11 // pred_fallthru
          _
        // Predicated region
        $region25: #{tpu_custom_call.1} parent=11 // pred_check
          %p469 = pneg %p167
        $region26: #{tpu_custom_call.1} parent=11 // pred_check_branch
          %471 = sbr.rel (%p469) target = $region28
        $region27: #{tpu_custom_call.1} parent=11 // pred_region
          _
        $region28: #{tpu_custom_call.1} parent=11 // pred_fallthru
          _
        // Predicated region
        $region29: #{tpu_custom_call.1} parent=11 // pred_check
          %p472 = pneg %p188
        $region30: #{tpu_custom_call.1} parent=11 // pred_check_branch
          %474 = sbr.rel (%p472) target = $region32
        $region31: #{tpu_custom_call.1} parent=11 // pred_region
          _
        $region32: #{tpu_custom_call.1} parent=11 // pred_fallthru
          _
        // Predicated region
        $region33: #{tpu_custom_call.1} parent=11 // pred_check
          %p475 = pneg %p209
        $region34: #{tpu_custom_call.1} parent=11 // pred_check_branch
          %477 = sbr.rel (%p475) target = $region36
        $region35: #{tpu_custom_call.1} parent=11 // pred_region
          %s479 = ssub.s32 16, 16
          %480 = vsyncadd [#allocation6], %s479
          %s482 = sshll.u32 [#allocation5], 4
          %s483 = int_to_ptr.vmem [resolvable:$true] %s482
          %485 = dma.hbm_to_vmem [thread:$0]  %s7, 16, %s483, [#allocation6]
        $region36: #{tpu_custom_call.1} parent=11 // pred_fallthru
          _
        // Predicated region
        $region37: #{tpu_custom_call.1} parent=11 // pred_check
          %p486 = pneg %p230
        $region38: #{tpu_custom_call.1} parent=11 // pred_check_branch
          %488 = sbr.rel (%p486) target = $region40
        $region39: #{tpu_custom_call.1} parent=11 // pred_region
          _
        $region40: #{tpu_custom_call.1} parent=11 // pred_fallthru
          _
        // Predicated region
        $region41: #{tpu_custom_call.1} parent=11 // pred_check
          %p489 = pneg %p251
        $region42: #{tpu_custom_call.1} parent=11 // pred_check_branch
          %491 = sbr.rel (%p489) target = $region44
        $region43: #{tpu_custom_call.1} parent=11 // pred_region
          %s493 = ssub.s32 16, 16
          %494 = vsyncadd [#allocation6], %s493
          %s496 = sshll.u32 [#allocation7], 4
          %s497 = int_to_ptr.vmem [resolvable:$true] %s496
          %499 = dma.hbm_to_vmem [thread:$0]  %s9, 16, %s497, [#allocation6]
        $region44: #{tpu_custom_call.1} parent=11 // pred_fallthru
          _
        // Predicated region
        $region45: #{tpu_custom_call.1} parent=11 // pred_check
          %p500 = pneg %p272
        $region46: #{tpu_custom_call.1} parent=11 // pred_check_branch
          %502 = sbr.rel (%p500) target = $region48
        $region47: #{tpu_custom_call.1} parent=11 // pred_region
          _
        $region48: #{tpu_custom_call.1} parent=11 // pred_fallthru
          _
        // Predicated region
        $region49: #{tpu_custom_call.1} parent=11 // pred_check
          %p503 = pneg %p293
        $region50: #{tpu_custom_call.1} parent=11 // pred_check_branch
          %505 = sbr.rel (%p503) target = $region52
        $region51: #{tpu_custom_call.1} parent=11 // pred_region
          _
        $region52: #{tpu_custom_call.1} parent=11 // pred_fallthru
          _
        // Predicated region
        $region53: #{tpu_custom_call.1} parent=11 // pred_check
          %p506 = pneg %p314
        $region54: #{tpu_custom_call.1} parent=11 // pred_check_branch
          %508 = sbr.rel (%p506) target = $region56
        $region55: #{tpu_custom_call.1} parent=11 // pred_region
          _
        $region56: #{tpu_custom_call.1} parent=11 // pred_fallthru
          _
        // Predicated region
        $region57: #{tpu_custom_call.1} parent=11 // pred_check
          %p509 = pneg %p335
        $region58: #{tpu_custom_call.1} parent=11 // pred_check_branch
          %511 = sbr.rel (%p509) target = $region60
        $region59: #{tpu_custom_call.1} parent=11 // pred_region
          _
        $region60: #{tpu_custom_call.1} parent=11 // pred_fallthru
          _
        // Predicated region
        $region61: #{tpu_custom_call.1} parent=11 // pred_check
          %p512 = pneg %p356
        $region62: #{tpu_custom_call.1} parent=11 // pred_check_branch
          %514 = sbr.rel (%p512) target = $region64
        $region63: #{tpu_custom_call.1} parent=11 // pred_region
          _
        $region64: #{tpu_custom_call.1} parent=11 // pred_fallthru
          _
        // Predicated region
        $region65: #{tpu_custom_call.1} parent=11 // pred_check
          %p515 = pneg %p377
        $region66: #{tpu_custom_call.1} parent=11 // pred_check_branch
          %517 = sbr.rel (%p515) target = $region68
        $region67: #{tpu_custom_call.1} parent=11 // pred_region
          _
        $region68: #{tpu_custom_call.1} parent=11 // pred_fallthru
          _
        // Predicated region
        $region69: #{tpu_custom_call.1} parent=11 // pred_check
          %p518 = pneg %p398
        $region70: #{tpu_custom_call.1} parent=11 // pred_check_branch
          %520 = sbr.rel (%p518) target = $region72
        $region71: #{tpu_custom_call.1} parent=11 // pred_region
          _
        $region72: #{tpu_custom_call.1} parent=11 // pred_fallthru
          _
        // Predicated region
        $region73: #{tpu_custom_call.1} parent=11 // pred_check
          %p521 = pneg %p419
        $region74: #{tpu_custom_call.1} parent=11 // pred_check_branch
          %523 = sbr.rel (%p521) target = $region76
        $region75: #{tpu_custom_call.1} parent=11 // pred_region
          _
        $region76: #{tpu_custom_call.1} parent=11 // pred_fallthru
          _
      $region12: #{tpu_custom_call.1} parent=5 // pred_fallthru
        _
      %p524 = scmp.lt.s32.totalorder %s31, 2
      // Predicated region
      $region77: #{tpu_custom_call.1} parent=5 // pred_check
        %p525 = pneg %p524
      $region78: #{tpu_custom_call.1} parent=5 // pred_check_branch
        %527 = sbr.rel (%p525) target = $region80
      $region79: #{tpu_custom_call.1} parent=5 // pred_region
        // Predicated region
        $region81: #{tpu_custom_call.1} parent=79 // pred_check
          %p528 = pneg %p51
        $region82: #{tpu_custom_call.1} parent=79 // pred_check_branch
          %530 = sbr.rel (%p528) target = $region84
        $region83: #{tpu_custom_call.1} parent=79 // pred_region
          %s531 = sand.u32 %s41, 1
          %s532 = scalar_lea.sflag [#allocation3], %s531
          %s533 = sand.u32 %s41, 1
          %s534 = scalar_lea.vmem [#allocation2], %s533
          %s536 = ssub.s32 16, 16
          %537 = vsyncadd %s532, %s536
          %s538 = smul.addr %s31, 16
          %s539 = scalar_lea.hbm %s0, %s538
          %s541 = sshll.u32 %s534, 4
          %s542 = int_to_ptr.vmem [resolvable:$true] %s541
          %544 = dma.hbm_to_vmem [thread:$0]  %s539, 16, %s542, %s532
        $region84: #{tpu_custom_call.1} parent=79 // pred_fallthru
          _
        // Predicated region
        $region85: #{tpu_custom_call.1} parent=79 // pred_check
          %p545 = pneg %p77
        $region86: #{tpu_custom_call.1} parent=79 // pred_check_branch
          %547 = sbr.rel (%p545) target = $region88
        $region87: #{tpu_custom_call.1} parent=79 // pred_region
          %p548 = scmp.lt.s32.totalorder %s31, 1
          %s549 = scalar_select %p548, %s31, 1
          %s550 = smul.addr %s549, 8
          %s551 = scalar_lea.vmem %s1, %s550
        $region88: #{tpu_custom_call.1} parent=79 // pred_fallthru
          _
      $region80: #{tpu_custom_call.1} parent=5 // pred_fallthru
        _
      %p552 = scmp.le.s32.totalorder 1, %s31
      %p553 = scmp.lt.s32.totalorder %s31, 3
      %p554 = pnand %p552, %p553
      %p555 = pneg %p554
      // Predicated region
      $region89: #{tpu_custom_call.1} parent=5 // pred_check
        _
      $region90: #{tpu_custom_call.1} parent=5 // pred_check_branch
        %557 = sbr.rel (%p554) target = $region92
      $region91: #{tpu_custom_call.1} parent=5 // pred_region
        %s558 = ssub.s32 %s31, 1
        %s559 = sand.u32 %s44, 1
        %s560 = scalar_lea.sflag [#allocation3], %s559
        %s561 = sand.u32 %s44, 1
        %s562 = scalar_lea.vmem [#allocation2], %s561
        // Predicated region
        $region93: #{tpu_custom_call.1} parent=91 // pred_check
          %p563 = pneg %p57
        $region94: #{tpu_custom_call.1} parent=91 // pred_check_branch
          %565 = sbr.rel (%p563) target = $region96
        $region95: #{tpu_custom_call.1} parent=91 // pred_region
          %566 = dma.done %s560, 16
        $region96: #{tpu_custom_call.1} parent=91 // pred_fallthru
          _
        // Predicated region
        $region97: #{tpu_custom_call.1} parent=91 // pred_check
          %p567 = pneg %p209
        $region98: #{tpu_custom_call.1} parent=91 // pred_check_branch
          %569 = sbr.rel (%p567) target = $region100
        $region99: #{tpu_custom_call.1} parent=91 // pred_region
          %570 = dma.done [#allocation6], 16
        $region100: #{tpu_custom_call.1} parent=91 // pred_fallthru
          _
        // Predicated region
        $region101: #{tpu_custom_call.1} parent=91 // pred_check
          %p571 = pneg %p251
        $region102: #{tpu_custom_call.1} parent=91 // pred_check_branch
          %573 = sbr.rel (%p571) target = $region104
        $region103: #{tpu_custom_call.1} parent=91 // pred_region
          %574 = dma.done [#allocation6], 16
        $region104: #{tpu_custom_call.1} parent=91 // pred_fallthru
          _
        %s575 = sand.u32 %s44, 1
        %s576 = scalar_lea.sflag [#allocation3], %s575
        %s577 = sand.u32 %s44, 1
        %s578 = scalar_lea.vmem [#allocation2], %s577
        %p579 = pneg %p57
        %p580 = pneg %p54
        %p581 = scmp.lt.s32.totalorder %s36, 1
        %s582 = scalar_select %p581, %s36, 1
        %s583 = smul.addr %s582, 8
        %s584 = scalar_lea.vmem %s1, %s583
        %p585 = pneg %p83
        %p586 = pneg %p80
        %p587 = pneg %p104
        %p588 = pneg %p101
        %p589 = pneg %p125
        %p590 = pneg %p122
        %p591 = pneg %p146
        %p592 = pneg %p143
        %p593 = pneg %p167
        %p594 = pneg %p164
        %p595 = pneg %p188
        %p596 = pneg %p185
        %p597 = pneg %p209
        %p598 = pneg %p206
        %p599 = pneg %p230
        %p600 = pneg %p227
        %p601 = pneg %p251
        %p602 = pneg %p248
        %p603 = pneg %p272
        %p604 = pneg %p269
        %p605 = pneg %p293
        %p606 = pneg %p290
        %p607 = pneg %p314
        %p608 = pneg %p311
        %p609 = pneg %p335
        %p610 = pneg %p332
        %p611 = pneg %p356
        %p612 = pneg %p353
        %p613 = pneg %p377
        %p614 = pneg %p374
        %p615 = pneg %p398
        %p616 = pneg %p395
        %p617 = pneg %p419
        %p618 = pneg %p416
        %p619 = pneg %p445
        %p620 = pneg %p442
        %s621 = sand.u32 %s432, 1
        %s622 = scalar_lea.sflag [#allocation4], %s621
        %s623 = sand.u32 %s432, 1
        %s624 = smul.addr %s623, 8
        %s625 = scalar_lea.vmem [#allocation8], %s624
        %p626 = scmp.lt.s32.totalorder %s36, 1
        %s627 = scalar_select %p626, %s36, 1
        %s628 = smul.addr %s627, 8
        %s629 = scalar_lea.vmem %s1, %s628
        %v631 = vld [vmem:[%s629] sm:$0xff]
        %v632 = vpack.c.bf16 %v631, %v631
        %v633 = vld [vmem:[%s562] sm:$0x1]
        %v634 = vld [vmem:[%s2] sm:$0xf]
        %v635 = vld [vmem:[%s2 + $0x4] sm:$0xf]
        %v636 = vld [vmem:[%s2 + $0x8] sm:$0xf]
        %v637 = vld [vmem:[%s2 + $0xc] sm:$0xf]
        %v638 = vld [vmem:[%s3] sm:$0x1]
        %v640 = vlaneseq
        %v641 = vshrl.u32 %v640, 7
        %v642 = vsub.s32 0, %v641
        %v643 = vrot.slane %v638, %v642
        %v649 = vunpack.c.l.b16 %v634
        %v650 = vunpack.c.l.b16 %v635
        %v651 = vunpack.c.l.b16 %v636
        %v652 = vunpack.c.l.b16 %v637
        %v653 = vpack.c.b16 %v650, %v649
        %v654 = vpack.c.b16 %v652, %v651
        %vm657 = vcmask 261120
        %v659 = vsel %vm657, %v632, 0
        %661 = vmatprep.subr.bf16.mxu0 0
        %662 = vmatpush1.bf16.msra.mxu0 %v653
        %663 = vmatprep.subr.bf16.mxu0 0
        %664 = vmatpush1.bf16.msra.mxu0 %v654
        %665 = vmatprep.subr.bf16.mxu0 0
        %666 = vmatpush1.bf16.msra.mxu0 0
        %667 = vmatprep.subr.bf16.mxu0 0
        %668 = vmatpush1.bf16.msra.mxu0 0
        %669 = vmatprep.subr.bf16.mxu0 0
        %670 = vmatpush1.bf16.msra.mxu0 0
        %671 = vmatprep.subr.bf16.mxu0 0
        %672 = vmatpush1.bf16.msra.mxu0 0
        %673 = vmatprep.subr.bf16.mxu0 0
        %674 = vmatpush1.bf16.msra.mxu0 0
        %675 = vmatprep.subr.bf16.mxu0 0
        %676 = vmatpush1.bf16.msra.mxu0 0
        %677 = vmatprep.subr.bf16.mxu0 0
        %678 = vmatpush1.bf16.msra.mxu0 0
        %679 = vmatprep.subr.bf16.mxu0 0
        %680 = vmatpush1.bf16.msra.mxu0 0
        %681 = vmatprep.subr.bf16.mxu0 0
        %682 = vmatpush1.bf16.msra.mxu0 0
        %683 = vmatprep.subr.bf16.mxu0 0
        %684 = vmatpush1.bf16.msra.mxu0 0
        %685 = vmatprep.subr.bf16.mxu0 0
        %686 = vmatpush1.bf16.msra.mxu0 0
        %687 = vmatprep.subr.bf16.mxu0 0
        %688 = vmatpush1.bf16.msra.mxu0 0
        %689 = vmatprep.subr.bf16.mxu0 0
        %690 = vmatpush1.bf16.msra.mxu0 0
        %691 = vmatprep.subr.bf16.mxu0 0
        %692 = vmatpush1.bf16.msra.mxu0 0
        %693 = vmatprep.mubr.bf16.mxu0 0
        %694 = vmatmul.mubr.bf16.gmra.mrb[0].mxu0 %v659
        %v695 = vpop.f32.mrb[0].mxu0
        %v696 = vadd.f32 %v643, %v695
        %v697 = vpop.f32.mrb[0].mxu0
        %v698 = vpop.f32.mrb[0].mxu0
        %v699 = vpop.f32.mrb[0].mxu0
        %700 = vdwg.mxu0
        %v701 = vld [vmem:[%s4] sm:$0xf]
        %v702 = vld [vmem:[%s4 + $0x4] sm:$0xf]
        %v703 = vld [vmem:[%s4 + $0x8] sm:$0xf]
        %v704 = vld [vmem:[%s4 + $0xc] sm:$0xf]
        %v705 = vld [vmem:[%s5] sm:$0x1]
        %v707 = vlaneseq
        %v708 = vshrl.u32 %v707, 7
        %v709 = vsub.s32 0, %v708
        %v710 = vrot.slane %v705, %v709
        %v716 = vunpack.c.l.b16 %v701
        %v717 = vunpack.c.l.b16 %v702
        %v718 = vunpack.c.l.b16 %v703
        %v719 = vunpack.c.l.b16 %v704
        %v720 = vpack.c.b16 %v717, %v716
        %v721 = vpack.c.b16 %v719, %v718
        %724 = vmatprep.subr.bf16.mxu0 0
        %725 = vmatpush1.bf16.msra.mxu0 %v720
        %726 = vmatprep.subr.bf16.mxu0 0
        %727 = vmatpush1.bf16.msra.mxu0 %v721
        %728 = vmatprep.subr.bf16.mxu0 0
        %729 = vmatpush1.bf16.msra.mxu0 0
        %730 = vmatprep.subr.bf16.mxu0 0
        %731 = vmatpush1.bf16.msra.mxu0 0
        %732 = vmatprep.subr.bf16.mxu0 0
        %733 = vmatpush1.bf16.msra.mxu0 0
        %734 = vmatprep.subr.bf16.mxu0 0
        %735 = vmatpush1.bf16.msra.mxu0 0
        %736 = vmatprep.subr.bf16.mxu0 0
        %737 = vmatpush1.bf16.msra.mxu0 0
        %738 = vmatprep.subr.bf16.mxu0 0
        %739 = vmatpush1.bf16.msra.mxu0 0
        %740 = vmatprep.subr.bf16.mxu0 0
        %741 = vmatpush1.bf16.msra.mxu0 0
        %742 = vmatprep.subr.bf16.mxu0 0
        %743 = vmatpush1.bf16.msra.mxu0 0
        %744 = vmatprep.subr.bf16.mxu0 0
        %745 = vmatpush1.bf16.msra.mxu0 0
        %746 = vmatprep.subr.bf16.mxu0 0
        %747 = vmatpush1.bf16.msra.mxu0 0
        %748 = vmatprep.subr.bf16.mxu0 0
        %749 = vmatpush1.bf16.msra.mxu0 0
        %750 = vmatprep.subr.bf16.mxu0 0
        %751 = vmatpush1.bf16.msra.mxu0 0
        %752 = vmatprep.subr.bf16.mxu0 0
        %753 = vmatpush1.bf16.msra.mxu0 0
        %754 = vmatprep.subr.bf16.mxu0 0
        %755 = vmatpush1.bf16.msra.mxu0 0
        %756 = vmatprep.mubr.bf16.mxu0 0
        %757 = vmatmul.mubr.bf16.gmra.mrb[0].mxu0 %v659
        %v758 = vpop.f32.mrb[0].mxu0
        %v759 = vadd.f32 %v710, %v758
        %v760 = vpop.f32.mrb[0].mxu0
        %v761 = vpop.f32.mrb[0].mxu0
        %v762 = vpop.f32.mrb[0].mxu0
        %763 = vdwg.mxu0
        %v764 = vld [vmem:[%s6] sm:$0xf]
        %v765 = vld [vmem:[%s6 + $0x4] sm:$0xf]
        %v766 = vld [vmem:[%s6 + $0x8] sm:$0xf]
        %v767 = vld [vmem:[%s6 + $0xc] sm:$0xf]
        %v768 = vld [vmem:[#allocation5] sm:$0x1]
        %v770 = vlaneseq
        %v771 = vshrl.u32 %v770, 7
        %v772 = vsub.s32 0, %v771
        %v773 = vrot.slane %v768, %v772
        %v779 = vunpack.c.l.b16 %v764
        %v780 = vunpack.c.l.b16 %v765
        %v781 = vunpack.c.l.b16 %v766
        %v782 = vunpack.c.l.b16 %v767
        %v783 = vpack.c.b16 %v780, %v779
        %v784 = vpack.c.b16 %v782, %v781
        %787 = vmatprep.subr.bf16.mxu0 0
        %788 = vmatpush1.bf16.msra.mxu0 %v783
        %789 = vmatprep.subr.bf16.mxu0 0
        %790 = vmatpush1.bf16.msra.mxu0 %v784
        %791 = vmatprep.subr.bf16.mxu0 0
        %792 = vmatpush1.bf16.msra.mxu0 0
        %793 = vmatprep.subr.bf16.mxu0 0
        %794 = vmatpush1.bf16.msra.mxu0 0
        %795 = vmatprep.subr.bf16.mxu0 0
        %796 = vmatpush1.bf16.msra.mxu0 0
        %797 = vmatprep.subr.bf16.mxu0 0
        %798 = vmatpush1.bf16.msra.mxu0 0
        %799 = vmatprep.subr.bf16.mxu0 0
        %800 = vmatpush1.bf16.msra.mxu0 0
        %801 = vmatprep.subr.bf16.mxu0 0
        %802 = vmatpush1.bf16.msra.mxu0 0
        %803 = vmatprep.subr.bf16.mxu0 0
        %804 = vmatpush1.bf16.msra.mxu0 0
        %805 = vmatprep.subr.bf16.mxu0 0
        %806 = vmatpush1.bf16.msra.mxu0 0
        %807 = vmatprep.subr.bf16.mxu0 0
        %808 = vmatpush1.bf16.msra.mxu0 0
        %809 = vmatprep.subr.bf16.mxu0 0
        %810 = vmatpush1.bf16.msra.mxu0 0
        %811 = vmatprep.subr.bf16.mxu0 0
        %812 = vmatpush1.bf16.msra.mxu0 0
        %813 = vmatprep.subr.bf16.mxu0 0
        %814 = vmatpush1.bf16.msra.mxu0 0
        %815 = vmatprep.subr.bf16.mxu0 0
        %816 = vmatpush1.bf16.msra.mxu0 0
        %817 = vmatprep.subr.bf16.mxu0 0
        %818 = vmatpush1.bf16.msra.mxu0 0
        %819 = vmatprep.mubr.bf16.mxu0 0
        %820 = vmatmul.mubr.bf16.gmra.mrb[0].mxu0 %v659
        %v821 = vpop.f32.mrb[0].mxu0
        %v822 = vadd.f32 %v773, %v821
        %v823 = vpop.f32.mrb[0].mxu0
        %v824 = vpop.f32.mrb[0].mxu0
        %v825 = vpop.f32.mrb[0].mxu0
        %826 = vdwg.mxu0
        %v827 = vpack.c.bf16 %v696, %v696
        %829 = vrot.lane.b32.xlu0 %v827, 112
        %v830 = vpop.permute.xlu0 %829
        %v832 = vunpack.c.l.s4 1983009808
        %v833 = vunpack.c.0.s8 %v832
        %v834 = vlaneseq
        %v835 = vshrl.u32 %v834, 7
        %v836 = vsub.s32 %v833, %v835
        %v837 = vrot.slane %v827, %v836
        %v838 = vcombine.high %v837, 0
        %v840 = vunpack.c.l.s4 1934713408
        %v841 = vunpack.c.0.s8 %v840
        %v842 = vlaneseq
        %v843 = vshrl.u32 %v842, 7
        %v844 = vsub.s32 %v841, %v843
        %v845 = vrot.slane %v837, %v844
        %v847 = vunpack.c.l.s4 1934713408
        %v848 = vunpack.c.0.s8 %v847
        %v849 = vlaneseq
        %v850 = vshrl.u32 %v849, 7
        %v851 = vsub.s32 %v848, %v850
        %v852 = vrot.slane %v838, %v851
        %v853 = vcombine.high %v845, 0
        %v854 = vcombine.high %v852, 0
        %v857 = vunpack.c.l.s4 1983009808
        %v858 = vunpack.c.0.s8 %v857
        %v859 = vlaneseq
        %v860 = vshrl.u32 %v859, 7
        %v861 = vsub.s32 %v858, %v860
        %v862 = vrot.slane %v830, %v861
        %v863 = vcombine.high %v862, 0
        %v865 = vunpack.c.l.s4 1934713408
        %v866 = vunpack.c.0.s8 %v865
        %v867 = vlaneseq
        %v868 = vshrl.u32 %v867, 7
        %v869 = vsub.s32 %v866, %v868
        %v870 = vrot.slane %v862, %v869
        %v872 = vunpack.c.l.s4 1934713408
        %v873 = vunpack.c.0.s8 %v872
        %v874 = vlaneseq
        %v875 = vshrl.u32 %v874, 7
        %v876 = vsub.s32 %v873, %v875
        %v877 = vrot.slane %v863, %v876
        %v878 = vcombine.high %v870, 0
        %v879 = vcombine.high %v877, 0
        %v882 = vpack.i.b16 %v870, %v845
        %v884 = vshrl.u32 %v845, 16
        %v885 = vshrl.u32 %v870, 16
        %v886 = vpack.i.b16 %v885, %v884
        %v890 = vpack.i.b16 %v878, %v853
        %v892 = vshrl.u32 %v853, 16
        %v893 = vshrl.u32 %v878, 16
        %v894 = vpack.i.b16 %v893, %v892
        %v898 = vpack.i.b16 %v877, %v852
        %v900 = vshrl.u32 %v852, 16
        %v901 = vshrl.u32 %v877, 16
        %v902 = vpack.i.b16 %v901, %v900
        %v906 = vpack.i.b16 %v879, %v854
        %v908 = vshrl.u32 %v854, 16
        %v909 = vshrl.u32 %v879, 16
        %v910 = vpack.i.b16 %v909, %v908
        %v912 = vcombine.low %v882, %v898
        %v914 = vunpack.c.l.s4 1983009808
        %v915 = vunpack.c.0.s8 %v914
        %v916 = vlaneseq
        %v917 = vshrl.u32 %v916, 7
        %v918 = vsub.s32 %v915, %v917
        %v919 = vrot.slane %v912, %v918
        %v920 = vcombine.low %v890, %v906
        %v922 = vunpack.c.l.s4 1983009808
        %v923 = vunpack.c.0.s8 %v922
        %v924 = vlaneseq
        %v925 = vshrl.u32 %v924, 7
        %v926 = vsub.s32 %v923, %v925
        %v927 = vrot.slane %v920, %v926
        %v928 = vcombine.low %v919, %v927
        %v930 = vunpack.c.l.s4 1934713408
        %v931 = vunpack.c.0.s8 %v930
        %v932 = vlaneseq
        %v933 = vshrl.u32 %v932, 7
        %v934 = vsub.s32 %v931, %v933
        %v935 = vrot.slane %v928, %v934
        %v936 = vcombine.low %v886, %v902
        %v938 = vunpack.c.l.s4 1983009808
        %v939 = vunpack.c.0.s8 %v938
        %v940 = vlaneseq
        %v941 = vshrl.u32 %v940, 7
        %v942 = vsub.s32 %v939, %v941
        %v943 = vrot.slane %v936, %v942
        %v944 = vcombine.low %v894, %v910
        %v946 = vunpack.c.l.s4 1983009808
        %v947 = vunpack.c.0.s8 %v946
        %v948 = vlaneseq
        %v949 = vshrl.u32 %v948, 7
        %v950 = vsub.s32 %v947, %v949
        %v951 = vrot.slane %v944, %v950
        %v952 = vcombine.low %v943, %v951
        %v954 = vunpack.c.l.s4 1934713408
        %v955 = vunpack.c.0.s8 %v954
        %v956 = vlaneseq
        %v957 = vshrl.u32 %v956, 7
        %v958 = vsub.s32 %v955, %v957
        %v959 = vrot.slane %v952, %v958
        %v962 = vpack.i.b16 %v959, %v935
        %v963 = vshrl.u32 %v935, 16
        %v964 = vshrl.u32 %v959, 16
        %v965 = vpack.i.b16 %v964, %v963
        %v966 = vpack.c.bf16 %v759, %v759
        %968 = vrot.lane.b32.xlu0 %v966, 112
        %v969 = vpop.permute.xlu0 %968
        %v971 = vunpack.c.l.s4 1983009808
        %v972 = vunpack.c.0.s8 %v971
        %v973 = vlaneseq
        %v974 = vshrl.u32 %v973, 7
        %v975 = vsub.s32 %v972, %v974
        %v976 = vrot.slane %v966, %v975
        %v977 = vcombine.high %v976, 0
        %v979 = vunpack.c.l.s4 1934713408
        %v980 = vunpack.c.0.s8 %v979
        %v981 = vlaneseq
        %v982 = vshrl.u32 %v981, 7
        %v983 = vsub.s32 %v980, %v982
        %v984 = vrot.slane %v976, %v983
        %v986 = vunpack.c.l.s4 1934713408
        %v987 = vunpack.c.0.s8 %v986
        %v988 = vlaneseq
        %v989 = vshrl.u32 %v988, 7
        %v990 = vsub.s32 %v987, %v989
        %v991 = vrot.slane %v977, %v990
        %v992 = vcombine.high %v984, 0
        %v993 = vcombine.high %v991, 0
        %v996 = vunpack.c.l.s4 1983009808
        %v997 = vunpack.c.0.s8 %v996
        %v998 = vlaneseq
        %v999 = vshrl.u32 %v998, 7
        %v1000 = vsub.s32 %v997, %v999
        %v1001 = vrot.slane %v969, %v1000
        %v1002 = vcombine.high %v1001, 0
        %v1004 = vunpack.c.l.s4 1934713408
        %v1005 = vunpack.c.0.s8 %v1004
        %v1006 = vlaneseq
        %v1007 = vshrl.u32 %v1006, 7
        %v1008 = vsub.s32 %v1005, %v1007
        %v1009 = vrot.slane %v1001, %v1008
        %v1011 = vunpack.c.l.s4 1934713408
        %v1012 = vunpack.c.0.s8 %v1011
        %v1013 = vlaneseq
        %v1014 = vshrl.u32 %v1013, 7
        %v1015 = vsub.s32 %v1012, %v1014
        %v1016 = vrot.slane %v1002, %v1015
        %v1017 = vcombine.high %v1009, 0
        %v1018 = vcombine.high %v1016, 0
        %v1021 = vpack.i.b16 %v1009, %v984
        %v1023 = vshrl.u32 %v984, 16
        %v1024 = vshrl.u32 %v1009, 16
        %v1025 = vpack.i.b16 %v1024, %v1023
        %v1029 = vpack.i.b16 %v1017, %v992
        %v1031 = vshrl.u32 %v992, 16
        %v1032 = vshrl.u32 %v1017, 16
        %v1033 = vpack.i.b16 %v1032, %v1031
        %v1037 = vpack.i.b16 %v1016, %v991
        %v1039 = vshrl.u32 %v991, 16
        %v1040 = vshrl.u32 %v1016, 16
        %v1041 = vpack.i.b16 %v1040, %v1039
        %v1045 = vpack.i.b16 %v1018, %v993
        %v1047 = vshrl.u32 %v993, 16
        %v1048 = vshrl.u32 %v1018, 16
        %v1049 = vpack.i.b16 %v1048, %v1047
        %v1051 = vcombine.low %v1021, %v1037
        %v1053 = vunpack.c.l.s4 1983009808
        %v1054 = vunpack.c.0.s8 %v1053
        %v1055 = vlaneseq
        %v1056 = vshrl.u32 %v1055, 7
        %v1057 = vsub.s32 %v1054, %v1056
        %v1058 = vrot.slane %v1051, %v1057
        %v1059 = vcombine.low %v1029, %v1045
        %v1061 = vunpack.c.l.s4 1983009808
        %v1062 = vunpack.c.0.s8 %v1061
        %v1063 = vlaneseq
        %v1064 = vshrl.u32 %v1063, 7
        %v1065 = vsub.s32 %v1062, %v1064
        %v1066 = vrot.slane %v1059, %v1065
        %v1067 = vcombine.low %v1058, %v1066
        %v1069 = vunpack.c.l.s4 1934713408
        %v1070 = vunpack.c.0.s8 %v1069
        %v1071 = vlaneseq
        %v1072 = vshrl.u32 %v1071, 7
        %v1073 = vsub.s32 %v1070, %v1072
        %v1074 = vrot.slane %v1067, %v1073
        %v1075 = vcombine.low %v1025, %v1041
        %v1077 = vunpack.c.l.s4 1983009808
        %v1078 = vunpack.c.0.s8 %v1077
        %v1079 = vlaneseq
        %v1080 = vshrl.u32 %v1079, 7
        %v1081 = vsub.s32 %v1078, %v1080
        %v1082 = vrot.slane %v1075, %v1081
        %v1083 = vcombine.low %v1033, %v1049
        %v1085 = vunpack.c.l.s4 1983009808
        %v1086 = vunpack.c.0.s8 %v1085
        %v1087 = vlaneseq
        %v1088 = vshrl.u32 %v1087, 7
        %v1089 = vsub.s32 %v1086, %v1088
        %v1090 = vrot.slane %v1083, %v1089
        %v1091 = vcombine.low %v1082, %v1090
        %v1093 = vunpack.c.l.s4 1934713408
        %v1094 = vunpack.c.0.s8 %v1093
        %v1095 = vlaneseq
        %v1096 = vshrl.u32 %v1095, 7
        %v1097 = vsub.s32 %v1094, %v1096
        %v1098 = vrot.slane %v1091, %v1097
        %v1101 = vpack.i.b16 %v1098, %v1074
        %v1102 = vshrl.u32 %v1074, 16
        %v1103 = vshrl.u32 %v1098, 16
        %v1104 = vpack.i.b16 %v1103, %v1102
        %v1105 = vpack.c.bf16 %v822, %v822
        %1107 = vrot.lane.b32.xlu0 %v1105, 112
        %v1108 = vpop.permute.xlu0 %1107
        %v1110 = vunpack.c.l.s4 1983009808
        %v1111 = vunpack.c.0.s8 %v1110
        %v1112 = vlaneseq
        %v1113 = vshrl.u32 %v1112, 7
        %v1114 = vsub.s32 %v1111, %v1113
        %v1115 = vrot.slane %v1105, %v1114
        %v1116 = vcombine.high %v1115, 0
        %v1118 = vunpack.c.l.s4 1934713408
        %v1119 = vunpack.c.0.s8 %v1118
        %v1120 = vlaneseq
        %v1121 = vshrl.u32 %v1120, 7
        %v1122 = vsub.s32 %v1119, %v1121
        %v1123 = vrot.slane %v1115, %v1122
        %v1125 = vunpack.c.l.s4 1934713408
        %v1126 = vunpack.c.0.s8 %v1125
        %v1127 = vlaneseq
        %v1128 = vshrl.u32 %v1127, 7
        %v1129 = vsub.s32 %v1126, %v1128
        %v1130 = vrot.slane %v1116, %v1129
        %v1131 = vcombine.high %v1123, 0
        %v1132 = vcombine.high %v1130, 0
        %v1135 = vunpack.c.l.s4 1983009808
        %v1136 = vunpack.c.0.s8 %v1135
        %v1137 = vlaneseq
        %v1138 = vshrl.u32 %v1137, 7
        %v1139 = vsub.s32 %v1136, %v1138
        %v1140 = vrot.slane %v1108, %v1139
        %v1141 = vcombine.high %v1140, 0
        %v1143 = vunpack.c.l.s4 1934713408
        %v1144 = vunpack.c.0.s8 %v1143
        %v1145 = vlaneseq
        %v1146 = vshrl.u32 %v1145, 7
        %v1147 = vsub.s32 %v1144, %v1146
        %v1148 = vrot.slane %v1140, %v1147
        %v1150 = vunpack.c.l.s4 1934713408
        %v1151 = vunpack.c.0.s8 %v1150
        %v1152 = vlaneseq
        %v1153 = vshrl.u32 %v1152, 7
        %v1154 = vsub.s32 %v1151, %v1153
        %v1155 = vrot.slane %v1141, %v1154
        %v1156 = vcombine.high %v1148, 0
        %v1157 = vcombine.high %v1155, 0
        %v1160 = vpack.i.b16 %v1148, %v1123
        %v1162 = vshrl.u32 %v1123, 16
        %v1163 = vshrl.u32 %v1148, 16
        %v1164 = vpack.i.b16 %v1163, %v1162
        %v1168 = vpack.i.b16 %v1156, %v1131
        %v1170 = vshrl.u32 %v1131, 16
        %v1171 = vshrl.u32 %v1156, 16
        %v1172 = vpack.i.b16 %v1171, %v1170
        %v1176 = vpack.i.b16 %v1155, %v1130
        %v1178 = vshrl.u32 %v1130, 16
        %v1179 = vshrl.u32 %v1155, 16
        %v1180 = vpack.i.b16 %v1179, %v1178
        %v1184 = vpack.i.b16 %v1157, %v1132
        %v1186 = vshrl.u32 %v1132, 16
        %v1187 = vshrl.u32 %v1157, 16
        %v1188 = vpack.i.b16 %v1187, %v1186
        %v1190 = vcombine.low %v1160, %v1176
        %v1192 = vunpack.c.l.s4 1983009808
        %v1193 = vunpack.c.0.s8 %v1192
        %v1194 = vlaneseq
        %v1195 = vshrl.u32 %v1194, 7
        %v1196 = vsub.s32 %v1193, %v1195
        %v1197 = vrot.slane %v1190, %v1196
        %v1198 = vcombine.low %v1168, %v1184
        %v1200 = vunpack.c.l.s4 1983009808
        %v1201 = vunpack.c.0.s8 %v1200
        %v1202 = vlaneseq
        %v1203 = vshrl.u32 %v1202, 7
        %v1204 = vsub.s32 %v1201, %v1203
        %v1205 = vrot.slane %v1198, %v1204
        %v1206 = vcombine.low %v1197, %v1205
        %v1208 = vunpack.c.l.s4 1934713408
        %v1209 = vunpack.c.0.s8 %v1208
        %v1210 = vlaneseq
        %v1211 = vshrl.u32 %v1210, 7
        %v1212 = vsub.s32 %v1209, %v1211
        %v1213 = vrot.slane %v1206, %v1212
        %v1214 = vcombine.low %v1164, %v1180
        %v1216 = vunpack.c.l.s4 1983009808
        %v1217 = vunpack.c.0.s8 %v1216
        %v1218 = vlaneseq
        %v1219 = vshrl.u32 %v1218, 7
        %v1220 = vsub.s32 %v1217, %v1219
        %v1221 = vrot.slane %v1214, %v1220
        %v1222 = vcombine.low %v1172, %v1188
        %v1224 = vunpack.c.l.s4 1983009808
        %v1225 = vunpack.c.0.s8 %v1224
        %v1226 = vlaneseq
        %v1227 = vshrl.u32 %v1226, 7
        %v1228 = vsub.s32 %v1225, %v1227
        %v1229 = vrot.slane %v1222, %v1228
        %v1230 = vcombine.low %v1221, %v1229
        %v1232 = vunpack.c.l.s4 1934713408
        %v1233 = vunpack.c.0.s8 %v1232
        %v1234 = vlaneseq
        %v1235 = vshrl.u32 %v1234, 7
        %v1236 = vsub.s32 %v1233, %v1235
        %v1237 = vrot.slane %v1230, %v1236
        %v1240 = vpack.i.b16 %v1237, %v1213
        %v1241 = vshrl.u32 %v1213, 16
        %v1242 = vshrl.u32 %v1237, 16
        %v1243 = vpack.i.b16 %v1242, %v1241
        %vm1244 = vcmask 130048
        %v1246 = vsel %vm1244, %v962, 0
        %v1249 = vsel %vm1244, %v1101, 0
        %1251 = vmatprep.subr.bf16.mxu0 0
        %1252 = vmatpush1.bf16.xpose.msra.mxu0 %v1249
        %1253 = vmatprep.subr.bf16.mxu0 0
        %1254 = vmatpush1.bf16.xpose.msra.mxu0 0
        %1255 = vmatprep.subr.bf16.mxu0 0
        %1256 = vmatpush1.bf16.xpose.msra.mxu0 0
        %1257 = vmatprep.subr.bf16.mxu0 0
        %1258 = vmatpush1.bf16.xpose.msra.mxu0 0
        %1259 = vmatprep.subr.bf16.mxu0 0
        %1260 = vmatpush1.bf16.xpose.msra.mxu0 0
        %1261 = vmatprep.subr.bf16.mxu0 0
        %1262 = vmatpush1.bf16.xpose.msra.mxu0 0
        %1263 = vmatprep.subr.bf16.mxu0 0
        %1264 = vmatpush1.bf16.xpose.msra.mxu0 0
        %1265 = vmatprep.subr.bf16.mxu0 0
        %1266 = vmatpush1.bf16.xpose.msra.mxu0 0
        %1267 = vmatprep.subr.bf16.mxu0 0
        %1268 = vmatpush1.bf16.xpose.msra.mxu0 0
        %1269 = vmatprep.subr.bf16.mxu0 0
        %1270 = vmatpush1.bf16.xpose.msra.mxu0 0
        %1271 = vmatprep.subr.bf16.mxu0 0
        %1272 = vmatpush1.bf16.xpose.msra.mxu0 0
        %1273 = vmatprep.subr.bf16.mxu0 0
        %1274 = vmatpush1.bf16.xpose.msra.mxu0 0
        %1275 = vmatprep.subr.bf16.mxu0 0
        %1276 = vmatpush1.bf16.xpose.msra.mxu0 0
        %1277 = vmatprep.subr.bf16.mxu0 0
        %1278 = vmatpush1.bf16.xpose.msra.mxu0 0
        %1279 = vmatprep.subr.bf16.mxu0 0
        %1280 = vmatpush1.bf16.xpose.msra.mxu0 0
        %1281 = vmatprep.subr.bf16.mxu0 0
        %1282 = vmatpush1.bf16.xpose.msra.mxu0 0
        %1283 = vmatprep.mubr.bf16.mxu0 0
        %1284 = vmatmul.mubr.bf16.gmra.mrb[0].mxu0 %v1246
        %v1285 = vpop.f32.mrb[0].mxu0
        %v1286 = vadd.f32 0.0, %v1285
        %v1287 = vpop.f32.mrb[0].mxu0
        %v1288 = vpop.f32.mrb[0].mxu0
        %v1289 = vpop.f32.mrb[0].mxu0
        %1290 = vdwg.mxu0
        %v1292 = vsel %vm1244, %v965, 0
        %v1295 = vsel %vm1244, %v1104, 0
        %1297 = vmatprep.subr.bf16.mxu0 0
        %1298 = vmatpush1.bf16.xpose.msra.mxu0 %v1295
        %1299 = vmatprep.subr.bf16.mxu0 0
        %1300 = vmatpush1.bf16.xpose.msra.mxu0 0
        %1301 = vmatprep.subr.bf16.mxu0 0
        %1302 = vmatpush1.bf16.xpose.msra.mxu0 0
        %1303 = vmatprep.subr.bf16.mxu0 0
        %1304 = vmatpush1.bf16.xpose.msra.mxu0 0
        %1305 = vmatprep.subr.bf16.mxu0 0
        %1306 = vmatpush1.bf16.xpose.msra.mxu0 0
        %1307 = vmatprep.subr.bf16.mxu0 0
        %1308 = vmatpush1.bf16.xpose.msra.mxu0 0
        %1309 = vmatprep.subr.bf16.mxu0 0
        %1310 = vmatpush1.bf16.xpose.msra.mxu0 0
        %1311 = vmatprep.subr.bf16.mxu0 0
        %1312 = vmatpush1.bf16.xpose.msra.mxu0 0
        %1313 = vmatprep.subr.bf16.mxu0 0
        %1314 = vmatpush1.bf16.xpose.msra.mxu0 0
        %1315 = vmatprep.subr.bf16.mxu0 0
        %1316 = vmatpush1.bf16.xpose.msra.mxu0 0
        %1317 = vmatprep.subr.bf16.mxu0 0
        %1318 = vmatpush1.bf16.xpose.msra.mxu0 0
        %1319 = vmatprep.subr.bf16.mxu0 0
        %1320 = vmatpush1.bf16.xpose.msra.mxu0 0
        %1321 = vmatprep.subr.bf16.mxu0 0
        %1322 = vmatpush1.bf16.xpose.msra.mxu0 0
        %1323 = vmatprep.subr.bf16.mxu0 0
        %1324 = vmatpush1.bf16.xpose.msra.mxu0 0
        %1325 = vmatprep.subr.bf16.mxu0 0
        %1326 = vmatpush1.bf16.xpose.msra.mxu0 0
        %1327 = vmatprep.subr.bf16.mxu0 0
        %1328 = vmatpush1.bf16.xpose.msra.mxu0 0
        %1329 = vmatprep.mubr.bf16.mxu0 0
        %1330 = vmatmul.mubr.bf16.gmra.mrb[0].mxu0 %v1292
        %v1331 = vpop.f32.mrb[0].mxu0
        %v1332 = vadd.f32 0.0, %v1331
        %v1333 = vpop.f32.mrb[0].mxu0
        %v1334 = vpop.f32.mrb[0].mxu0
        %v1335 = vpop.f32.mrb[0].mxu0
        %1336 = vdwg.mxu0
        %v1338 = vlaneseq
        %v1339 = vshrl.u32 %v1338, 7
        %v1340 = vsub.s32 0, %v1339
        %v1341 = vrot.slane %v633, %v1340
        %v1343 = vadd.f32 %v1286, %v1341
        %v1344 = vadd.f32 %v1332, %v1341
        %vm1345 = vcmask 64512
        %v1346 = vsel %vm1345, %v1343, -inf
        %1347 = vmax.xlane.f32.xlu0 %v1346
        %v1348 = vpop.xlane.xlu0 %1347
        %v1349 = vsel %vm1345, %v1344, -inf
        %1350 = vmax.xlane.f32.xlu0 %v1349
        %v1351 = vpop.xlane.xlu0 %1350
        %v1352 = vsub.f32 %v1343, %v1348
        %v1353 = vsub.f32 %v1344, %v1351
        %v1354 = vmul.f32 %v1352, 1.442695
        %v1355 = vpow.pop %v1354
        %v1356 = vmul.f32 %v1353, 1.442695
        %v1357 = vpow.pop %v1356
        %v1358 = vsel %vm1345, %v1355, 0.0
        %1359 = vadd.xlane.f32.xlu0 %v1358
        %v1360 = vpop.xlane.xlu0 %1359
        %v1361 = vsel %vm1345, %v1357, 0.0
        %1362 = vadd.xlane.f32.xlu0 %v1361
        %v1363 = vpop.xlane.xlu0 %1362
        %v1364 = vrcp.pop %v1360
        %v1365 = vrcp.pop %v1363
        %v1366 = vmul.f32 %v1355, %v1364
        %v1367 = vmul.f32 %v1357, %v1365
        %v1368 = vpack.c.bf16 %v1366, %v1366
        %v1369 = vpack.c.bf16 %v1367, %v1367
        %v1371 = vsel %vm1345, %v1368, 0
        %vm1373 = vcmask 1043456
        %v1375 = vsel %vm1373, %v1240, 0
        %1377 = vmatprep.subr.bf16.mxu0 0
        %1378 = vmatpush1.bf16.msra.mxu0 %v1375
        %1379 = vmatprep.subr.bf16.mxu0 0
        %1380 = vmatpush1.bf16.msra.mxu0 0
        %1381 = vmatprep.subr.bf16.mxu0 0
        %1382 = vmatpush1.bf16.msra.mxu0 0
        %1383 = vmatprep.subr.bf16.mxu0 0
        %1384 = vmatpush1.bf16.msra.mxu0 0
        %1385 = vmatprep.subr.bf16.mxu0 0
        %1386 = vmatpush1.bf16.msra.mxu0 0
        %1387 = vmatprep.subr.bf16.mxu0 0
        %1388 = vmatpush1.bf16.msra.mxu0 0
        %1389 = vmatprep.subr.bf16.mxu0 0
        %1390 = vmatpush1.bf16.msra.mxu0 0
        %1391 = vmatprep.subr.bf16.mxu0 0
        %1392 = vmatpush1.bf16.msra.mxu0 0
        %1393 = vmatprep.subr.bf16.mxu0 0
        %1394 = vmatpush1.bf16.msra.mxu0 0
        %1395 = vmatprep.subr.bf16.mxu0 0
        %1396 = vmatpush1.bf16.msra.mxu0 0
        %1397 = vmatprep.subr.bf16.mxu0 0
        %1398 = vmatpush1.bf16.msra.mxu0 0
        %1399 = vmatprep.subr.bf16.mxu0 0
        %1400 = vmatpush1.bf16.msra.mxu0 0
        %1401 = vmatprep.subr.bf16.mxu0 0
        %1402 = vmatpush1.bf16.msra.mxu0 0
        %1403 = vmatprep.subr.bf16.mxu0 0
        %1404 = vmatpush1.bf16.msra.mxu0 0
        %1405 = vmatprep.subr.bf16.mxu0 0
        %1406 = vmatpush1.bf16.msra.mxu0 0
        %1407 = vmatprep.subr.bf16.mxu0 0
        %1408 = vmatpush1.bf16.msra.mxu0 0
        %1409 = vmatprep.mubr.bf16.mxu0 0
        %1410 = vmatmul.mubr.bf16.gmra.mrb[0].mxu0 %v1371
        %v1411 = vpop.f32.mrb[0].mxu0
        %v1412 = vadd.f32 0.0, %v1411
        %v1413 = vpop.f32.mrb[0].mxu0
        %v1414 = vpop.f32.mrb[0].mxu0
        %v1415 = vpop.f32.mrb[0].mxu0
        %1416 = vdwg.mxu0
        %v1418 = vsel %vm1345, %v1369, 0
        %v1421 = vsel %vm1373, %v1243, 0
        %1423 = vmatprep.subr.bf16.mxu0 0
        %1424 = vmatpush1.bf16.msra.mxu0 %v1421
        %1425 = vmatprep.subr.bf16.mxu0 0
        %1426 = vmatpush1.bf16.msra.mxu0 0
        %1427 = vmatprep.subr.bf16.mxu0 0
        %1428 = vmatpush1.bf16.msra.mxu0 0
        %1429 = vmatprep.subr.bf16.mxu0 0
        %1430 = vmatpush1.bf16.msra.mxu0 0
        %1431 = vmatprep.subr.bf16.mxu0 0
        %1432 = vmatpush1.bf16.msra.mxu0 0
        %1433 = vmatprep.subr.bf16.mxu0 0
        %1434 = vmatpush1.bf16.msra.mxu0 0
        %1435 = vmatprep.subr.bf16.mxu0 0
        %1436 = vmatpush1.bf16.msra.mxu0 0
        %1437 = vmatprep.subr.bf16.mxu0 0
        %1438 = vmatpush1.bf16.msra.mxu0 0
        %1439 = vmatprep.subr.bf16.mxu0 0
        %1440 = vmatpush1.bf16.msra.mxu0 0
        %1441 = vmatprep.subr.bf16.mxu0 0
        %1442 = vmatpush1.bf16.msra.mxu0 0
        %1443 = vmatprep.subr.bf16.mxu0 0
        %1444 = vmatpush1.bf16.msra.mxu0 0
        %1445 = vmatprep.subr.bf16.mxu0 0
        %1446 = vmatpush1.bf16.msra.mxu0 0
        %1447 = vmatprep.subr.bf16.mxu0 0
        %1448 = vmatpush1.bf16.msra.mxu0 0
        %1449 = vmatprep.subr.bf16.mxu0 0
        %1450 = vmatpush1.bf16.msra.mxu0 0
        %1451 = vmatprep.subr.bf16.mxu0 0
        %1452 = vmatpush1.bf16.msra.mxu0 0
        %1453 = vmatprep.subr.bf16.mxu0 0
        %1454 = vmatpush1.bf16.msra.mxu0 0
        %1455 = vmatprep.mubr.bf16.mxu0 0
        %1456 = vmatmul.mubr.bf16.gmra.mrb[0].mxu0 %v1418
        %v1457 = vpop.f32.mrb[0].mxu0
        %v1458 = vadd.f32 0.0, %v1457
        %v1459 = vpop.f32.mrb[0].mxu0
        %v1460 = vpop.f32.mrb[0].mxu0
        %v1461 = vpop.f32.mrb[0].mxu0
        %1462 = vdwg.mxu0
        %v1463 = vpack.c.bf16 %v1412, %v1412
        %v1465 = vunpack.c.l.s4 1983009808
        %v1466 = vunpack.c.0.s8 %v1465
        %v1467 = vlaneseq
        %v1468 = vshrl.u32 %v1467, 7
        %v1469 = vsub.s32 %v1466, %v1468
        %v1470 = vrot.slane %v1463, %v1469
        %v1471 = vcombine.high %v1470, 0
        %v1473 = vunpack.c.l.s4 1934713408
        %v1474 = vunpack.c.0.s8 %v1473
        %v1475 = vlaneseq
        %v1476 = vshrl.u32 %v1475, 7
        %v1477 = vsub.s32 %v1474, %v1476
        %v1478 = vrot.slane %v1470, %v1477
        %v1480 = vunpack.c.l.s4 1934713408
        %v1481 = vunpack.c.0.s8 %v1480
        %v1482 = vlaneseq
        %v1483 = vshrl.u32 %v1482, 7
        %v1484 = vsub.s32 %v1481, %v1483
        %v1485 = vrot.slane %v1471, %v1484
        %v1486 = vcombine.high %v1478, 0
        %v1487 = vcombine.high %v1485, 0
        %v1488 = vpack.c.bf16 %v1458, %v1458
        %v1490 = vunpack.c.l.s4 1983009808
        %v1491 = vunpack.c.0.s8 %v1490
        %v1492 = vlaneseq
        %v1493 = vshrl.u32 %v1492, 7
        %v1494 = vsub.s32 %v1491, %v1493
        %v1495 = vrot.slane %v1488, %v1494
        %v1496 = vcombine.high %v1495, 0
        %v1498 = vunpack.c.l.s4 1934713408
        %v1499 = vunpack.c.0.s8 %v1498
        %v1500 = vlaneseq
        %v1501 = vshrl.u32 %v1500, 7
        %v1502 = vsub.s32 %v1499, %v1501
        %v1503 = vrot.slane %v1495, %v1502
        %v1505 = vunpack.c.l.s4 1934713408
        %v1506 = vunpack.c.0.s8 %v1505
        %v1507 = vlaneseq
        %v1508 = vshrl.u32 %v1507, 7
        %v1509 = vsub.s32 %v1506, %v1508
        %v1510 = vrot.slane %v1496, %v1509
        %v1511 = vcombine.high %v1503, 0
        %v1512 = vcombine.high %v1510, 0
        %v1515 = vpack.i.b16 %v1503, %v1478
        %v1517 = vshrl.u32 %v1478, 16
        %v1518 = vshrl.u32 %v1503, 16
        %v1519 = vpack.i.b16 %v1518, %v1517
        %v1523 = vpack.i.b16 %v1511, %v1486
        %v1525 = vshrl.u32 %v1486, 16
        %v1526 = vshrl.u32 %v1511, 16
        %v1527 = vpack.i.b16 %v1526, %v1525
        %v1531 = vpack.i.b16 %v1510, %v1485
        %v1533 = vshrl.u32 %v1485, 16
        %v1534 = vshrl.u32 %v1510, 16
        %v1535 = vpack.i.b16 %v1534, %v1533
        %v1539 = vpack.i.b16 %v1512, %v1487
        %v1541 = vshrl.u32 %v1487, 16
        %v1542 = vshrl.u32 %v1512, 16
        %v1543 = vpack.i.b16 %v1542, %v1541
        %v1545 = vcombine.low %v1515, %v1531
        %v1547 = vunpack.c.l.s4 1983009808
        %v1548 = vunpack.c.0.s8 %v1547
        %v1549 = vlaneseq
        %v1550 = vshrl.u32 %v1549, 7
        %v1551 = vsub.s32 %v1548, %v1550
        %v1552 = vrot.slane %v1545, %v1551
        %v1553 = vcombine.low %v1523, %v1539
        %v1555 = vunpack.c.l.s4 1983009808
        %v1556 = vunpack.c.0.s8 %v1555
        %v1557 = vlaneseq
        %v1558 = vshrl.u32 %v1557, 7
        %v1559 = vsub.s32 %v1556, %v1558
        %v1560 = vrot.slane %v1553, %v1559
        %v1561 = vcombine.low %v1552, %v1560
        %v1563 = vunpack.c.l.s4 1934713408
        %v1564 = vunpack.c.0.s8 %v1563
        %v1565 = vlaneseq
        %v1566 = vshrl.u32 %v1565, 7
        %v1567 = vsub.s32 %v1564, %v1566
        %v1568 = vrot.slane %v1561, %v1567
        %v1569 = vcombine.low %v1519, %v1535
        %v1571 = vunpack.c.l.s4 1983009808
        %v1572 = vunpack.c.0.s8 %v1571
        %v1573 = vlaneseq
        %v1574 = vshrl.u32 %v1573, 7
        %v1575 = vsub.s32 %v1572, %v1574
        %v1576 = vrot.slane %v1569, %v1575
        %v1577 = vcombine.low %v1527, %v1543
        %v1579 = vunpack.c.l.s4 1983009808
        %v1580 = vunpack.c.0.s8 %v1579
        %v1581 = vlaneseq
        %v1582 = vshrl.u32 %v1581, 7
        %v1583 = vsub.s32 %v1580, %v1582
        %v1584 = vrot.slane %v1577, %v1583
        %v1585 = vcombine.low %v1576, %v1584
        %v1587 = vunpack.c.l.s4 1934713408
        %v1588 = vunpack.c.0.s8 %v1587
        %v1589 = vlaneseq
        %v1590 = vshrl.u32 %v1589, 7
        %v1591 = vsub.s32 %v1588, %v1590
        %v1592 = vrot.slane %v1585, %v1591
        %v1595 = vpack.i.b16 %v1592, %v1568
        %v1596 = vshrl.u32 %v1568, 16
        %v1597 = vshrl.u32 %v1592, 16
        %v1598 = vpack.i.b16 %v1597, %v1596
        %1599 = vrot.lane.b32.xlu0 %v1598, 16
        %v1600 = vpop.permute.xlu0 %1599
        %v1603 = vsel %vm1244, %v1595, %v1600
        %v1604 = vld [vmem:[%s8] sm:$0xf]
        %v1605 = vld [vmem:[%s8 + $0x4] sm:$0xf]
        %v1606 = vld [vmem:[%s8 + $0x8] sm:$0xf]
        %v1607 = vld [vmem:[%s8 + $0xc] sm:$0xf]
        %v1608 = vld [vmem:[#allocation7] sm:$0x1]
        %v1610 = vlaneseq
        %v1611 = vshrl.u32 %v1610, 7
        %v1612 = vsub.s32 0, %v1611
        %v1613 = vrot.slane %v1608, %v1612
        %v1619 = vunpack.c.l.b16 %v1604
        %v1620 = vunpack.c.l.b16 %v1605
        %v1621 = vunpack.c.l.b16 %v1606
        %v1622 = vunpack.c.l.b16 %v1607
        %v1623 = vpack.c.b16 %v1620, %v1619
        %v1624 = vpack.c.b16 %v1622, %v1621
        %v1627 = vsel %vm657, %v1603, 0
        %1629 = vmatprep.subr.bf16.mxu0 0
        %1630 = vmatpush1.bf16.msra.mxu0 %v1623
        %1631 = vmatprep.subr.bf16.mxu0 0
        %1632 = vmatpush1.bf16.msra.mxu0 %v1624
        %1633 = vmatprep.subr.bf16.mxu0 0
        %1634 = vmatpush1.bf16.msra.mxu0 0
        %1635 = vmatprep.subr.bf16.mxu0 0
        %1636 = vmatpush1.bf16.msra.mxu0 0
        %1637 = vmatprep.subr.bf16.mxu0 0
        %1638 = vmatpush1.bf16.msra.mxu0 0
        %1639 = vmatprep.subr.bf16.mxu0 0
        %1640 = vmatpush1.bf16.msra.mxu0 0
        %1641 = vmatprep.subr.bf16.mxu0 0
        %1642 = vmatpush1.bf16.msra.mxu0 0
        %1643 = vmatprep.subr.bf16.mxu0 0
        %1644 = vmatpush1.bf16.msra.mxu0 0
        %1645 = vmatprep.subr.bf16.mxu0 0
        %1646 = vmatpush1.bf16.msra.mxu0 0
        %1647 = vmatprep.subr.bf16.mxu0 0
        %1648 = vmatpush1.bf16.msra.mxu0 0
        %1649 = vmatprep.subr.bf16.mxu0 0
        %1650 = vmatpush1.bf16.msra.mxu0 0
        %1651 = vmatprep.subr.bf16.mxu0 0
        %1652 = vmatpush1.bf16.msra.mxu0 0
        %1653 = vmatprep.subr.bf16.mxu0 0
        %1654 = vmatpush1.bf16.msra.mxu0 0
        %1655 = vmatprep.subr.bf16.mxu0 0
        %1656 = vmatpush1.bf16.msra.mxu0 0
        %1657 = vmatprep.subr.bf16.mxu0 0
        %1658 = vmatpush1.bf16.msra.mxu0 0
        %1659 = vmatprep.subr.bf16.mxu0 0
        %1660 = vmatpush1.bf16.msra.mxu0 0
        %1661 = vmatprep.mubr.bf16.mxu0 0
        %1662 = vmatmul.mubr.bf16.gmra.mrb[0].mxu0 %v1627
        %v1663 = vpop.f32.mrb[0].mxu0
        %v1664 = vadd.f32 %v1613, %v1663
        %v1665 = vpop.f32.mrb[0].mxu0
        %v1666 = vpop.f32.mrb[0].mxu0
        %v1667 = vpop.f32.mrb[0].mxu0
        %1668 = vdwg.mxu0
        %v1669 = vadd.f32 %v1664, %v631
        %v1670 = vld [vmem:[%s10] sm:$0x1]
        %v1671 = vld [vmem:[%s11] sm:$0x1]
        %v1672 = vsel %vm657, %v1669, 0.0
        %1673 = vadd.xlane.f32.xlu0 %v1672
        %v1674 = vpop.xlane.xlu0 %1673
        %v1675 = vrcp.pop 32.0
        %v1676 = vmul.f32 %v1674, %v1675
        %v1677 = vsub.f32 %v1669, %v1676
        %v1678 = vmul.f32 %v1677, %v1677
        %v1679 = vsel %vm657, %v1678, 0.0
        %1680 = vadd.xlane.f32.xlu0 %v1679
        %v1681 = vpop.xlane.xlu0 %1680
        %v1682 = vmul.f32 %v1681, %v1675
        %v1683 = vadd.f32 %v1682, 1e-12
        %v1684 = vrsqrt.pop %v1683
        %v1685 = vmul.f32 %v1683, %v1684
        %vm1686 = vcmp.eq.f32.partialorder %v1683, inf
        %v1687 = vsel %vm1686, %v1683, %v1685
        %vm1688 = vcmp.eq.f32.partialorder %v1683, 0.0
        %v1689 = vand.u32 %v1683, 2147483648
        %v1690 = vsel %vm1688, %v1689, %v1687
        %v1691 = vrcp.pop %v1690
        %v1692 = vmul.f32 %v1677, %v1691
        %v1694 = vlaneseq
        %v1695 = vshrl.u32 %v1694, 7
        %v1696 = vsub.s32 0, %v1695
        %v1697 = vrot.slane %v1670, %v1696
        %v1699 = vmul.f32 %v1697, %v1692
        %v1701 = vlaneseq
        %v1702 = vshrl.u32 %v1701, 7
        %v1703 = vsub.s32 0, %v1702
        %v1704 = vrot.slane %v1671, %v1703
        %v1706 = vadd.f32 %v1699, %v1704
        %v1707 = vpack.c.bf16 %v1706, %v1706
        %v1708 = vld [vmem:[%s12] sm:$0xf]
        %v1709 = vld [vmem:[%s12 + $0x4] sm:$0xf]
        %v1710 = vld [vmem:[%s12 + $0x8] sm:$0xf]
        %v1711 = vld [vmem:[%s12 + $0xc] sm:$0xf]
        %v1712 = vld [vmem:[%s13] sm:$0x1]
        %v1714 = vlaneseq
        %v1715 = vshrl.u32 %v1714, 7
        %v1716 = vsub.s32 0, %v1715
        %v1717 = vrot.slane %v1712, %v1716
        %v1723 = vunpack.c.l.b16 %v1708
        %v1724 = vunpack.c.l.b16 %v1709
        %v1725 = vunpack.c.l.b16 %v1710
        %v1726 = vunpack.c.l.b16 %v1711
        %v1727 = vpack.c.b16 %v1724, %v1723
        %v1728 = vpack.c.b16 %v1726, %v1725
        %v1732 = vsel %vm657, %v1707, 0
        %1734 = vmatprep.subr.bf16.mxu0 0
        %1735 = vmatpush1.bf16.msra.mxu0 %v1727
        %1736 = vmatprep.subr.bf16.mxu0 0
        %1737 = vmatpush1.bf16.msra.mxu0 %v1728
        %1738 = vmatprep.subr.bf16.mxu0 0
        %1739 = vmatpush1.bf16.msra.mxu0 0
        %1740 = vmatprep.subr.bf16.mxu0 0
        %1741 = vmatpush1.bf16.msra.mxu0 0
        %1742 = vmatprep.subr.bf16.mxu0 0
        %1743 = vmatpush1.bf16.msra.mxu0 0
        %1744 = vmatprep.subr.bf16.mxu0 0
        %1745 = vmatpush1.bf16.msra.mxu0 0
        %1746 = vmatprep.subr.bf16.mxu0 0
        %1747 = vmatpush1.bf16.msra.mxu0 0
        %1748 = vmatprep.subr.bf16.mxu0 0
        %1749 = vmatpush1.bf16.msra.mxu0 0
        %1750 = vmatprep.subr.bf16.mxu0 0
        %1751 = vmatpush1.bf16.msra.mxu0 0
        %1752 = vmatprep.subr.bf16.mxu0 0
        %1753 = vmatpush1.bf16.msra.mxu0 0
        %1754 = vmatprep.subr.bf16.mxu0 0
        %1755 = vmatpush1.bf16.msra.mxu0 0
        %1756 = vmatprep.subr.bf16.mxu0 0
        %1757 = vmatpush1.bf16.msra.mxu0 0
        %1758 = vmatprep.subr.bf16.mxu0 0
        %1759 = vmatpush1.bf16.msra.mxu0 0
        %1760 = vmatprep.subr.bf16.mxu0 0
        %1761 = vmatpush1.bf16.msra.mxu0 0
        %1762 = vmatprep.subr.bf16.mxu0 0
        %1763 = vmatpush1.bf16.msra.mxu0 0
        %1764 = vmatprep.subr.bf16.mxu0 0
        %1765 = vmatpush1.bf16.msra.mxu0 0
        %1766 = vmatprep.mubr.bf16.mxu0 0
        %1767 = vmatmul.mubr.bf16.gmra.mrb[0].mxu0 %v1732
        %v1768 = vpop.f32.mrb[0].mxu0
        %v1769 = vadd.f32 %v1717, %v1768
        %v1770 = vpop.f32.mrb[0].mxu0
        %v1771 = vpop.f32.mrb[0].mxu0
        %v1772 = vpop.f32.mrb[0].mxu0
        %1773 = vdwg.mxu0
        %v1774 = vmul.f32 %v1769, 0.5
        %v1775 = vrcp.pop 1.4142135
        %v1776 = vmul.f32 %v1769, %v1775
        %v1777 = verf.f32.pop %v1776
        %v1778 = vadd.f32 %v1777, 1.0
        %v1779 = vmul.f32 %v1774, %v1778
        %v1780 = vpack.c.bf16 %v1779, %v1779
        %v1781 = vld [vmem:[%s14] sm:$0xf]
        %v1782 = vld [vmem:[%s14 + $0x4] sm:$0xf]
        %v1783 = vld [vmem:[%s14 + $0x8] sm:$0xf]
        %v1784 = vld [vmem:[%s14 + $0xc] sm:$0xf]
        %v1785 = vld [vmem:[%s14 + $0x10] sm:$0xf]
        %v1786 = vld [vmem:[%s14 + $0x14] sm:$0xf]
        %v1787 = vld [vmem:[%s14 + $0x18] sm:$0xf]
        %v1788 = vld [vmem:[%s14 + $0x1c] sm:$0xf]
        %v1789 = vld [vmem:[%s14 + $0x20] sm:$0xf]
        %v1790 = vld [vmem:[%s14 + $0x24] sm:$0xf]
        %v1791 = vld [vmem:[%s14 + $0x28] sm:$0xf]
        %v1792 = vld [vmem:[%s14 + $0x2c] sm:$0xf]
        %v1793 = vld [vmem:[%s14 + $0x30] sm:$0xf]
        %v1794 = vld [vmem:[%s14 + $0x34] sm:$0xf]
        %v1795 = vld [vmem:[%s14 + $0x38] sm:$0xf]
        %v1796 = vld [vmem:[%s14 + $0x3c] sm:$0xf]
        %v1797 = vld [vmem:[%s15] sm:$0x1]
        %v1799 = vlaneseq
        %v1800 = vshrl.u32 %v1799, 7
        %v1801 = vsub.s32 0, %v1800
        %v1802 = vrot.slane %v1797, %v1801
        %v1820 = vunpack.c.l.b16 %v1781
        %v1821 = vunpack.c.l.b16 %v1782
        %v1822 = vunpack.c.l.b16 %v1783
        %v1823 = vunpack.c.l.b16 %v1784
        %v1824 = vunpack.c.l.b16 %v1785
        %v1825 = vunpack.c.l.b16 %v1786
        %v1826 = vunpack.c.l.b16 %v1787
        %v1827 = vunpack.c.l.b16 %v1788
        %v1828 = vunpack.c.l.b16 %v1789
        %v1829 = vunpack.c.l.b16 %v1790
        %v1830 = vunpack.c.l.b16 %v1791
        %v1831 = vunpack.c.l.b16 %v1792
        %v1832 = vunpack.c.l.b16 %v1793
        %v1833 = vunpack.c.l.b16 %v1794
        %v1834 = vunpack.c.l.b16 %v1795
        %v1835 = vunpack.c.l.b16 %v1796
        %v1836 = vpack.c.b16 %v1821, %v1820
        %v1837 = vpack.c.b16 %v1823, %v1822
        %v1838 = vpack.c.b16 %v1825, %v1824
        %v1839 = vpack.c.b16 %v1827, %v1826
        %v1840 = vpack.c.b16 %v1829, %v1828
        %v1841 = vpack.c.b16 %v1831, %v1830
        %v1842 = vpack.c.b16 %v1833, %v1832
        %v1843 = vpack.c.b16 %v1835, %v1834
        %1852 = vmatprep.subr.bf16.mxu0 0
        %1853 = vmatpush1.bf16.msra.mxu0 %v1836
        %1854 = vmatprep.subr.bf16.mxu0 0
        %1855 = vmatpush1.bf16.msra.mxu0 %v1837
        %1856 = vmatprep.subr.bf16.mxu0 0
        %1857 = vmatpush1.bf16.msra.mxu0 %v1838
        %1858 = vmatprep.subr.bf16.mxu0 0
        %1859 = vmatpush1.bf16.msra.mxu0 %v1839
        %1860 = vmatprep.subr.bf16.mxu0 0
        %1861 = vmatpush1.bf16.msra.mxu0 %v1840
        %1862 = vmatprep.subr.bf16.mxu0 0
        %1863 = vmatpush1.bf16.msra.mxu0 %v1841
        %1864 = vmatprep.subr.bf16.mxu0 0
        %1865 = vmatpush1.bf16.msra.mxu0 %v1842
        %1866 = vmatprep.subr.bf16.mxu0 0
        %1867 = vmatpush1.bf16.msra.mxu0 %v1843
        %1868 = vmatprep.subr.bf16.mxu0 0
        %1869 = vmatpush1.bf16.msra.mxu0 0
        %1870 = vmatprep.subr.bf16.mxu0 0
        %1871 = vmatpush1.bf16.msra.mxu0 0
        %1872 = vmatprep.subr.bf16.mxu0 0
        %1873 = vmatpush1.bf16.msra.mxu0 0
        %1874 = vmatprep.subr.bf16.mxu0 0
        %1875 = vmatpush1.bf16.msra.mxu0 0
        %1876 = vmatprep.subr.bf16.mxu0 0
        %1877 = vmatpush1.bf16.msra.mxu0 0
        %1878 = vmatprep.subr.bf16.mxu0 0
        %1879 = vmatpush1.bf16.msra.mxu0 0
        %1880 = vmatprep.subr.bf16.mxu0 0
        %1881 = vmatpush1.bf16.msra.mxu0 0
        %1882 = vmatprep.subr.bf16.mxu0 0
        %1883 = vmatpush1.bf16.msra.mxu0 0
        %1884 = vmatprep.mubr.bf16.mxu0 0
        %1885 = vmatmul.mubr.bf16.gmra.mrb[0].mxu0 %v1780
        %v1886 = vpop.f32.mrb[0].mxu0
        %v1887 = vadd.f32 %v1802, %v1886
        %v1888 = vpop.f32.mrb[0].mxu0
        %v1889 = vpop.f32.mrb[0].mxu0
        %v1890 = vpop.f32.mrb[0].mxu0
        %1891 = vdwg.mxu0
        %v1892 = vadd.f32 %v1887, %v1706
        %v1893 = vld [vmem:[%s16] sm:$0x1]
        %v1894 = vld [vmem:[%s17] sm:$0x1]
        %v1895 = vsel %vm657, %v1892, 0.0
        %1896 = vadd.xlane.f32.xlu0 %v1895
        %v1897 = vpop.xlane.xlu0 %1896
        %v1898 = vmul.f32 %v1897, %v1675
        %v1899 = vsub.f32 %v1892, %v1898
        %v1900 = vmul.f32 %v1899, %v1899
        %v1901 = vsel %vm657, %v1900, 0.0
        %1902 = vadd.xlane.f32.xlu0 %v1901
        %v1903 = vpop.xlane.xlu0 %1902
        %v1904 = vmul.f32 %v1903, %v1675
        %v1905 = vadd.f32 %v1904, 1e-12
        %v1906 = vrsqrt.pop %v1905
        %v1907 = vmul.f32 %v1905, %v1906
        %vm1908 = vcmp.eq.f32.partialorder %v1905, inf
        %v1909 = vsel %vm1908, %v1905, %v1907
        %vm1910 = vcmp.eq.f32.partialorder %v1905, 0.0
        %v1911 = vand.u32 %v1905, 2147483648
        %v1912 = vsel %vm1910, %v1911, %v1909
        %v1913 = vrcp.pop %v1912
        %v1914 = vmul.f32 %v1899, %v1913
        %v1916 = vlaneseq
        %v1917 = vshrl.u32 %v1916, 7
        %v1918 = vsub.s32 0, %v1917
        %v1919 = vrot.slane %v1893, %v1918
        %v1921 = vmul.f32 %v1919, %v1914
        %v1923 = vlaneseq
        %v1924 = vshrl.u32 %v1923, 7
        %v1925 = vsub.s32 0, %v1924
        %v1926 = vrot.slane %v1894, %v1925
        %v1928 = vadd.f32 %v1921, %v1926
        %1929 = vst.msk [vmem:[%s625] sm:$0xff] %vm657, %v1928
        %s1930 = sand.u32 %s432, 1
        %s1931 = scalar_lea.sflag [#allocation4], %s1930
        %s1932 = sand.u32 %s432, 1
        %s1933 = smul.addr %s1932, 8
        %s1934 = scalar_lea.vmem [#allocation8], %s1933
        // Predicated region
        $region105: #{tpu_custom_call.1} parent=91 // pred_check
          %p1935 = pneg %p442
        $region106: #{tpu_custom_call.1} parent=91 // pred_check_branch
          %1937 = sbr.rel (%p1935) target = $region108
        $region107: #{tpu_custom_call.1} parent=91 // pred_region
          %s1939 = ssub.s32 128, 128
          %1940 = vsyncadd %s1931, %s1939
          %s1941 = smul.addr %s36, 128
          %s1942 = scalar_lea.hbm %s18, %s1941
          %s1944 = sshll.u32 %s1934, 4
          %s1945 = int_to_ptr.vmem [resolvable:$true] %s1944
          %1947 = dma.vmem_to_hbm [thread:$0]  %s1945, 128, %s1942, %s1931
        $region108: #{tpu_custom_call.1} parent=91 // pred_fallthru
          _
      $region92: #{tpu_custom_call.1} parent=5 // pred_fallthru
        _
      %p1948 = scmp.le.s32.totalorder 2, %s31
      // Predicated region
      $region109: #{tpu_custom_call.1} parent=5 // pred_check
        %p1949 = pneg %p1948
      $region110: #{tpu_custom_call.1} parent=5 // pred_check_branch
        %1951 = sbr.rel (%p1949) target = $region112
      $region111: #{tpu_custom_call.1} parent=5 // pred_region
        %s1952 = ssub.s32 %s31, 2
        // Predicated region
        $region113: #{tpu_custom_call.1} parent=111 // pred_check
          %p1953 = pneg %p448
        $region114: #{tpu_custom_call.1} parent=111 // pred_check_branch
          %1955 = sbr.rel (%p1953) target = $region116
        $region115: #{tpu_custom_call.1} parent=111 // pred_region
          %s1956 = sand.u32 %s433, 1
          %s1957 = scalar_lea.sflag [#allocation4], %s1956
          %s1958 = sand.u32 %s433, 1
          %s1959 = smul.addr %s1958, 8
          %s1960 = scalar_lea.vmem [#allocation8], %s1959
          %1961 = dma.done %s1957, 128
        $region116: #{tpu_custom_call.1} parent=111 // pred_fallthru
          _
      $region112: #{tpu_custom_call.1} parent=5 // pred_fallthru
        _
    $region6: #{tpu_custom_call.1} parent=1 // loop_footer
      %s35 = sadd.s32 1, %s31
    $region7: #{tpu_custom_call.1} parent=1 // loop_footer_branch
      %30 = sbr.rel target = $region3
    $region8: #{tpu_custom_call.1} parent=1 // loop_exit
      _
    %1962 = vsyncpa [#allocation3], 1
    %s1963 = scalar_lea.sflag [#allocation3], 1
    %1964 = vsyncpa %s1963, 1
    %1965 = vsyncpa [#allocation6], 1
    %1966 = vsyncpa [#allocation4], 1
    %s1967 = scalar_lea.sflag [#allocation4], 1
    %1968 = vsyncpa %s1967, 1

// kernel: tpu_custom_call.1
$region0: #{tpu_custom_call.1}
  #allocation0 [shape = 'u32[]', space=smem, size = 0x4, offset = 0x4, fixed_abs, tag = 'smem constant byte address 0x4 - core index']
  #allocation1 [shape = 'u32[144,128]{1,0:T(1,128)}', space=vmem, size = 0x12000, scoped, tag = 'internal scratch']
  %s0 = inlined_call_operand.hbm [shape: f32[2,1,8], index: 0, kind: input, shape index: {}]
  %s1 = inlined_call_operand.vmem [shape: f32[2,8,32], index: 1, kind: input, shape index: {}]
  %s2 = inlined_call_operand.vmem [shape: bf16[32,32], index: 2, kind: input, shape index: {}]
  %s3 = inlined_call_operand.vmem [shape: f32[1,32], index: 3, kind: input, shape index: {}]
  %s4 = inlined_call_operand.vmem [shape: bf16[32,32], index: 4, kind: input, shape index: {}]
  %s5 = inlined_call_operand.vmem [shape: f32[1,32], index: 5, kind: input, shape index: {}]
  %s6 = inlined_call_operand.vmem [shape: bf16[32,32], index: 6, kind: input, shape index: {}]
  %s7 = inlined_call_operand.hbm [shape: f32[1,32], index: 7, kind: input, shape index: {}]
  %s8 = inlined_call_operand.vmem [shape: bf16[32,32], index: 8, kind: input, shape index: {}]
  %s9 = inlined_call_operand.hbm [shape: f32[1,32], index: 9, kind: input, shape index: {}]
  %s10 = inlined_call_operand.vmem [shape: f32[1,32], index: 10, kind: input, shape index: {}]
  %s11 = inlined_call_operand.vmem [shape: f32[1,32], index: 11, kind: input, shape index: {}]
  %s12 = inlined_call_operand.vmem [shape: bf16[32,128], index: 12, kind: input, shape index: {}]
  %s13 = inlined_call_operand.vmem [shape: f32[1,128], index: 13, kind: input, shape index: {}]
  %s14 = inlined_call_operand.vmem [shape: bf16[128,32], index: 14, kind: input, shape index: {}]
  %s15 = inlined_call_operand.vmem [shape: f32[1,32], index: 15, kind: input, shape index: {}]
  %s16 = inlined_call_operand.vmem [shape: f32[1,32], index: 16, kind: input, shape index: {}]
  %s17 = inlined_call_operand.vmem [shape: f32[1,32], index: 17, kind: input, shape index: {}]
  %s18 = inlined_call_operand.hbm [shape: f32[2,8,32], index: 18, kind: output, shape index: {}]
  %s19 = sld [smem:[#allocation0]]
  $region117: #{tpu_custom_call.1} parent=0
    _
  %s21 = ssub.s32 1, %s19
  %s22 = scalar_select 0, %s21, %s19
  $region1: #{tpu_custom_call.1} parent=0
    #allocation2 [shape = 'u8[1024]{0}', space=vmem, size = 0x400, scoped, tag = 'input window, operand 0']
    #allocation3 [shape = 's32[2]{0}', space=sflag, size = 0x8, scoped, tag = 'scoped memory for tpu_custom_call.1']
    #allocation4 [shape = 's32[2]{0}', space=sflag, size = 0x8, scoped, tag = 'scoped memory for tpu_custom_call.1']
    #allocation5 [shape = 'u8[512]{0}', space=vmem, size = 0x400, scoped, tag = 'input window, operand 7, single buffered']
    #allocation6 [shape = 's32[1]{0}', space=sflag, size = 0x4, scoped, tag = 'scoped memory for tpu_custom_call.1']
    #allocation7 [shape = 'u8[512]{0}', space=vmem, size = 0x400, scoped, tag = 'input window, operand 9, single buffered']
    #allocation8 [shape = 'u8[8192]{0}', space=vmem, size = 0x2000, scoped, tag = 'output window, operand 0']
    %23 = vsyncpa [#allocation3], 0
    %s24 = scalar_lea.sflag [#allocation3], 1
    %25 = vsyncpa %s24, 0
    %26 = vsyncpa [#allocation6], 0
    %27 = vsyncpa [#allocation4], 0
    %s28 = scalar_lea.sflag [#allocation4], 1
    %29 = vsyncpa %s28, 0
    loop: start=0, step=1, limit=4
    $region2: #{tpu_custom_call.1} parent=1 // loop_pre_header
      _
    $region3: #{tpu_custom_call.1} parent=1 // loop_header
      %s31 = sphi 0, %s35
      %p32 = scmp.ge.s32.totalorder %s31, 4
      %s41 = sphi 0, %s43
      %s44 = sphi 0, %s41
      %s45 = sphi 0, %s44
      %s61 = sphi 0, %s45
      %s67 = sphi 0, %s69
      %s70 = sphi 0, %s67
      %s71 = sphi 0, %s70
      %s87 = sphi 0, %s71
      %s91 = sphi 0, %s91
      %s93 = sphi 0, %s91
      %s94 = sphi 0, %s93
      %s108 = sphi 0, %s94
      %s112 = sphi 0, %s112
      %s114 = sphi 0, %s112
      %s115 = sphi 0, %s114
      %s129 = sphi 0, %s115
      %s133 = sphi 0, %s133
      %s135 = sphi 0, %s133
      %s136 = sphi 0, %s135
      %s150 = sphi 0, %s136
      %s154 = sphi 0, %s154
      %s156 = sphi 0, %s154
      %s157 = sphi 0, %s156
      %s171 = sphi 0, %s157
      %s175 = sphi 0, %s175
      %s177 = sphi 0, %s175
      %s178 = sphi 0, %s177
      %s192 = sphi 0, %s178
      %s196 = sphi 0, %s196
      %s198 = sphi 0, %s196
      %s199 = sphi 0, %s198
      %s213 = sphi 0, %s199
      %s217 = sphi 0, %s217
      %s219 = sphi 0, %s217
      %s220 = sphi 0, %s219
      %s234 = sphi 0, %s220
      %s238 = sphi 0, %s238
      %s240 = sphi 0, %s238
      %s241 = sphi 0, %s240
      %s255 = sphi 0, %s241
      %s259 = sphi 0, %s259
      %s261 = sphi 0, %s259
      %s262 = sphi 0, %s261
      %s276 = sphi 0, %s262
      %s280 = sphi 0, %s280
      %s282 = sphi 0, %s280
      %s283 = sphi 0, %s282
      %s297 = sphi 0, %s283
      %s301 = sphi 0, %s301
      %s303 = sphi 0, %s301
      %s304 = sphi 0, %s303
      %s318 = sphi 0, %s304
      %s322 = sphi 0, %s322
      %s324 = sphi 0, %s322
      %s325 = sphi 0, %s324
      %s339 = sphi 0, %s325
      %s343 = sphi 0, %s343
      %s345 = sphi 0, %s343
      %s346 = sphi 0, %s345
      %s360 = sphi 0, %s346
      %s364 = sphi 0, %s364
      %s366 = sphi 0, %s364
      %s367 = sphi 0, %s366
      %s381 = sphi 0, %s367
      %s385 = sphi 0, %s385
      %s387 = sphi 0, %s385
      %s388 = sphi 0, %s387
      %s402 = sphi 0, %s388
      %s406 = sphi 0, %s406
      %s408 = sphi 0, %s406
      %s409 = sphi 0, %s408
      %s423 = sphi 0, %s409
      %s429 = sphi 0, %s431
      %s432 = sphi 0, %s429
      %s433 = sphi 0, %s432
      %s449 = sphi 0, %s433
    $region4: #{tpu_custom_call.1} parent=1 // loop_header_branch
      %34 = sbr.rel (%p32) target = $region8
    $region5: #{tpu_custom_call.1} parent=1 // loop_body
      %s36 = ssub.s32 %s31, 1
      %s37 = ssub.s32 %s31, 2
      %s38 = sadd.s32 %s31, 1
      %s39 = ssub.s32 %s31, %s38
      %p40 = scmp.eq.s32.totalorder %s39, 0
      %s42 = sadd.s32 %s41, 1
      %s43 = scalar_select %p40, %s41, %s42
      %p46 = pneg %p40
      %p47 = scmp.eq.s32.totalorder %s31, 1
      %p48 = por %p46, %p47
      %p49 = scmp.ne.s32.totalorder %s41, %s44
      %p50 = scmp.eq.s32.totalorder %s31, 0
      %p51 = por %p49, %p50
      %p52 = scmp.ne.s32.totalorder %s41, %s44
      %p53 = scmp.eq.s32.totalorder %s36, 1
      %p54 = por %p52, %p53
      %p55 = scmp.ne.s32.totalorder %s44, %s45
      %p56 = scmp.eq.s32.totalorder %s36, 0
      %p57 = por %p55, %p56
      %p58 = scmp.ne.s32.totalorder %s44, %s45
      %p59 = scmp.eq.s32.totalorder %s37, 1
      %p60 = por %p58, %p59
      %p62 = scmp.ne.s32.totalorder %s45, %s61
      %p63 = scmp.eq.s32.totalorder %s37, 0
      %p64 = por %p62, %p63
      %s65 = ssub.s32 %s31, %s38
      %p66 = scmp.eq.s32.totalorder %s65, 0
      %s68 = sadd.s32 %s67, 1
      %s69 = scalar_select %p66, %s67, %s68
      %p72 = pneg %p66
      %p73 = scmp.eq.s32.totalorder %s31, 1
      %p74 = por %p72, %p73
      %p75 = scmp.ne.s32.totalorder %s67, %s70
      %p76 = scmp.eq.s32.totalorder %s31, 0
      %p77 = por %p75, %p76
      %p78 = scmp.ne.s32.totalorder %s67, %s70
      %p79 = scmp.eq.s32.totalorder %s36, 1
      %p80 = por %p78, %p79
      %p81 = scmp.ne.s32.totalorder %s70, %s71
      %p82 = scmp.eq.s32.totalorder %s36, 0
      %p83 = por %p81, %p82
      %p84 = scmp.ne.s32.totalorder %s70, %s71
      %p85 = scmp.eq.s32.totalorder %s37, 1
      %p86 = por %p84, %p85
      %p88 = scmp.ne.s32.totalorder %s71, %s87
      %p89 = scmp.eq.s32.totalorder %s37, 0
      %p90 = por %p88, %p89
      %s92 = sadd.s32 %s91, 1
      %p95 = scmp.eq.s32.totalorder %s31, 1
      %p96 = scmp.ne.s32.totalorder %s91, %s93
      %p97 = scmp.eq.s32.totalorder %s31, 0
      %p98 = por %p96, %p97
      %p99 = scmp.ne.s32.totalorder %s91, %s93
      %p100 = scmp.eq.s32.totalorder %s36, 1
      %p101 = por %p99, %p100
      %p102 = scmp.ne.s32.totalorder %s93, %s94
      %p103 = scmp.eq.s32.totalorder %s36, 0
      %p104 = por %p102, %p103
      %p105 = scmp.ne.s32.totalorder %s93, %s94
      %p106 = scmp.eq.s32.totalorder %s37, 1
      %p107 = por %p105, %p106
      %p109 = scmp.ne.s32.totalorder %s94, %s108
      %p110 = scmp.eq.s32.totalorder %s37, 0
      %p111 = por %p109, %p110
      %s113 = sadd.s32 %s112, 1
      %p116 = scmp.eq.s32.totalorder %s31, 1
      %p117 = scmp.ne.s32.totalorder %s112, %s114
      %p118 = scmp.eq.s32.totalorder %s31, 0
      %p119 = por %p117, %p118
      %p120 = scmp.ne.s32.totalorder %s112, %s114
      %p121 = scmp.eq.s32.totalorder %s36, 1
      %p122 = por %p120, %p121
      %p123 = scmp.ne.s32.totalorder %s114, %s115
      %p124 = scmp.eq.s32.totalorder %s36, 0
      %p125 = por %p123, %p124
      %p126 = scmp.ne.s32.totalorder %s114, %s115
      %p127 = scmp.eq.s32.totalorder %s37, 1
      %p128 = por %p126, %p127
      %p130 = scmp.ne.s32.totalorder %s115, %s129
      %p131 = scmp.eq.s32.totalorder %s37, 0
      %p132 = por %p130, %p131
      %s134 = sadd.s32 %s133, 1
      %p137 = scmp.eq.s32.totalorder %s31, 1
      %p138 = scmp.ne.s32.totalorder %s133, %s135
      %p139 = scmp.eq.s32.totalorder %s31, 0
      %p140 = por %p138, %p139
      %p141 = scmp.ne.s32.totalorder %s133, %s135
      %p142 = scmp.eq.s32.totalorder %s36, 1
      %p143 = por %p141, %p142
      %p144 = scmp.ne.s32.totalorder %s135, %s136
      %p145 = scmp.eq.s32.totalorder %s36, 0
      %p146 = por %p144, %p145
      %p147 = scmp.ne.s32.totalorder %s135, %s136
      %p148 = scmp.eq.s32.totalorder %s37, 1
      %p149 = por %p147, %p148
      %p151 = scmp.ne.s32.totalorder %s136, %s150
      %p152 = scmp.eq.s32.totalorder %s37, 0
      %p153 = por %p151, %p152
      %s155 = sadd.s32 %s154, 1
      %p158 = scmp.eq.s32.totalorder %s31, 1
      %p159 = scmp.ne.s32.totalorder %s154, %s156
      %p160 = scmp.eq.s32.totalorder %s31, 0
      %p161 = por %p159, %p160
      %p162 = scmp.ne.s32.totalorder %s154, %s156
      %p163 = scmp.eq.s32.totalorder %s36, 1
      %p164 = por %p162, %p163
      %p165 = scmp.ne.s32.totalorder %s156, %s157
      %p166 = scmp.eq.s32.totalorder %s36, 0
      %p167 = por %p165, %p166
      %p168 = scmp.ne.s32.totalorder %s156, %s157
      %p169 = scmp.eq.s32.totalorder %s37, 1
      %p170 = por %p168, %p169
      %p172 = scmp.ne.s32.totalorder %s157, %s171
      %p173 = scmp.eq.s32.totalorder %s37, 0
      %p174 = por %p172, %p173
      %s176 = sadd.s32 %s175, 1
      %p179 = scmp.eq.s32.totalorder %s31, 1
      %p180 = scmp.ne.s32.totalorder %s175, %s177
      %p181 = scmp.eq.s32.totalorder %s31, 0
      %p182 = por %p180, %p181
      %p183 = scmp.ne.s32.totalorder %s175, %s177
      %p184 = scmp.eq.s32.totalorder %s36, 1
      %p185 = por %p183, %p184
      %p186 = scmp.ne.s32.totalorder %s177, %s178
      %p187 = scmp.eq.s32.totalorder %s36, 0
      %p188 = por %p186, %p187
      %p189 = scmp.ne.s32.totalorder %s177, %s178
      %p190 = scmp.eq.s32.totalorder %s37, 1
      %p191 = por %p189, %p190
      %p193 = scmp.ne.s32.totalorder %s178, %s192
      %p194 = scmp.eq.s32.totalorder %s37, 0
      %p195 = por %p193, %p194
      %s197 = sadd.s32 %s196, 1
      %p200 = scmp.eq.s32.totalorder %s31, 1
      %p201 = scmp.ne.s32.totalorder %s196, %s198
      %p202 = scmp.eq.s32.totalorder %s31, 0
      %p203 = por %p201, %p202
      %p204 = scmp.ne.s32.totalorder %s196, %s198
      %p205 = scmp.eq.s32.totalorder %s36, 1
      %p206 = por %p204, %p205
      %p207 = scmp.ne.s32.totalorder %s198, %s199
      %p208 = scmp.eq.s32.totalorder %s36, 0
      %p209 = por %p207, %p208
      %p210 = scmp.ne.s32.totalorder %s198, %s199
      %p211 = scmp.eq.s32.totalorder %s37, 1
      %p212 = por %p210, %p211
      %p214 = scmp.ne.s32.totalorder %s199, %s213
      %p215 = scmp.eq.s32.totalorder %s37, 0
      %p216 = por %p214, %p215
      %s218 = sadd.s32 %s217, 1
      %p221 = scmp.eq.s32.totalorder %s31, 1
      %p222 = scmp.ne.s32.totalorder %s217, %s219
      %p223 = scmp.eq.s32.totalorder %s31, 0
      %p224 = por %p222, %p223
      %p225 = scmp.ne.s32.totalorder %s217, %s219
      %p226 = scmp.eq.s32.totalorder %s36, 1
      %p227 = por %p225, %p226
      %p228 = scmp.ne.s32.totalorder %s219, %s220
      %p229 = scmp.eq.s32.totalorder %s36, 0
      %p230 = por %p228, %p229
      %p231 = scmp.ne.s32.totalorder %s219, %s220
      %p232 = scmp.eq.s32.totalorder %s37, 1
      %p233 = por %p231, %p232
      %p235 = scmp.ne.s32.totalorder %s220, %s234
      %p236 = scmp.eq.s32.totalorder %s37, 0
      %p237 = por %p235, %p236
      %s239 = sadd.s32 %s238, 1
      %p242 = scmp.eq.s32.totalorder %s31, 1
      %p243 = scmp.ne.s32.totalorder %s238, %s240
      %p244 = scmp.eq.s32.totalorder %s31, 0
      %p245 = por %p243, %p244
      %p246 = scmp.ne.s32.totalorder %s238, %s240
      %p247 = scmp.eq.s32.totalorder %s36, 1
      %p248 = por %p246, %p247
      %p249 = scmp.ne.s32.totalorder %s240, %s241
      %p250 = scmp.eq.s32.totalorder %s36, 0
      %p251 = por %p249, %p250
      %p252 = scmp.ne.s32.totalorder %s240, %s241
      %p253 = scmp.eq.s32.totalorder %s37, 1
      %p254 = por %p252, %p253
      %p256 = scmp.ne.s32.totalorder %s241, %s255
      %p257 = scmp.eq.s32.totalorder %s37, 0
      %p258 = por %p256, %p257
      %s260 = sadd.s32 %s259, 1
      %p263 = scmp.eq.s32.totalorder %s31, 1
      %p264 = scmp.ne.s32.totalorder %s259, %s261
      %p265 = scmp.eq.s32.totalorder %s31, 0
      %p266 = por %p264, %p265
      %p267 = scmp.ne.s32.totalorder %s259, %s261
      %p268 = scmp.eq.s32.totalorder %s36, 1
      %p269 = por %p267, %p268
      %p270 = scmp.ne.s32.totalorder %s261, %s262
      %p271 = scmp.eq.s32.totalorder %s36, 0
      %p272 = por %p270, %p271
      %p273 = scmp.ne.s32.totalorder %s261, %s262
      %p274 = scmp.eq.s32.totalorder %s37, 1
      %p275 = por %p273, %p274
      %p277 = scmp.ne.s32.totalorder %s262, %s276
      %p278 = scmp.eq.s32.totalorder %s37, 0
      %p279 = por %p277, %p278
      %s281 = sadd.s32 %s280, 1
      %p284 = scmp.eq.s32.totalorder %s31, 1
      %p285 = scmp.ne.s32.totalorder %s280, %s282
      %p286 = scmp.eq.s32.totalorder %s31, 0
      %p287 = por %p285, %p286
      %p288 = scmp.ne.s32.totalorder %s280, %s282
      %p289 = scmp.eq.s32.totalorder %s36, 1
      %p290 = por %p288, %p289
      %p291 = scmp.ne.s32.totalorder %s282, %s283
      %p292 = scmp.eq.s32.totalorder %s36, 0
      %p293 = por %p291, %p292
      %p294 = scmp.ne.s32.totalorder %s282, %s283
      %p295 = scmp.eq.s32.totalorder %s37, 1
      %p296 = por %p294, %p295
      %p298 = scmp.ne.s32.totalorder %s283, %s297
      %p299 = scmp.eq.s32.totalorder %s37, 0
      %p300 = por %p298, %p299
      %s302 = sadd.s32 %s301, 1
      %p305 = scmp.eq.s32.totalorder %s31, 1
      %p306 = scmp.ne.s32.totalorder %s301, %s303
      %p307 = scmp.eq.s32.totalorder %s31, 0
      %p308 = por %p306, %p307
      %p309 = scmp.ne.s32.totalorder %s301, %s303
      %p310 = scmp.eq.s32.totalorder %s36, 1
      %p311 = por %p309, %p310
      %p312 = scmp.ne.s32.totalorder %s303, %s304
      %p313 = scmp.eq.s32.totalorder %s36, 0
      %p314 = por %p312, %p313
      %p315 = scmp.ne.s32.totalorder %s303, %s304
      %p316 = scmp.eq.s32.totalorder %s37, 1
      %p317 = por %p315, %p316
      %p319 = scmp.ne.s32.totalorder %s304, %s318
      %p320 = scmp.eq.s32.totalorder %s37, 0
      %p321 = por %p319, %p320
      %s323 = sadd.s32 %s322, 1
      %p326 = scmp.eq.s32.totalorder %s31, 1
      %p327 = scmp.ne.s32.totalorder %s322, %s324
      %p328 = scmp.eq.s32.totalorder %s31, 0
      %p329 = por %p327, %p328
      %p330 = scmp.ne.s32.totalorder %s322, %s324
      %p331 = scmp.eq.s32.totalorder %s36, 1
      %p332 = por %p330, %p331
      %p333 = scmp.ne.s32.totalorder %s324, %s325
      %p334 = scmp.eq.s32.totalorder %s36, 0
      %p335 = por %p333, %p334
      %p336 = scmp.ne.s32.totalorder %s324, %s325
      %p337 = scmp.eq.s32.totalorder %s37, 1
      %p338 = por %p336, %p337
      %p340 = scmp.ne.s32.totalorder %s325, %s339
      %p341 = scmp.eq.s32.totalorder %s37, 0
      %p342 = por %p340, %p341
      %s344 = sadd.s32 %s343, 1
      %p347 = scmp.eq.s32.totalorder %s31, 1
      %p348 = scmp.ne.s32.totalorder %s343, %s345
      %p349 = scmp.eq.s32.totalorder %s31, 0
      %p350 = por %p348, %p349
      %p351 = scmp.ne.s32.totalorder %s343, %s345
      %p352 = scmp.eq.s32.totalorder %s36, 1
      %p353 = por %p351, %p352
      %p354 = scmp.ne.s32.totalorder %s345, %s346
      %p355 = scmp.eq.s32.totalorder %s36, 0
      %p356 = por %p354, %p355
      %p357 = scmp.ne.s32.totalorder %s345, %s346
      %p358 = scmp.eq.s32.totalorder %s37, 1
      %p359 = por %p357, %p358
      %p361 = scmp.ne.s32.totalorder %s346, %s360
      %p362 = scmp.eq.s32.totalorder %s37, 0
      %p363 = por %p361, %p362
      %s365 = sadd.s32 %s364, 1
      %p368 = scmp.eq.s32.totalorder %s31, 1
      %p369 = scmp.ne.s32.totalorder %s364, %s366
      %p370 = scmp.eq.s32.totalorder %s31, 0
      %p371 = por %p369, %p370
      %p372 = scmp.ne.s32.totalorder %s364, %s366
      %p373 = scmp.eq.s32.totalorder %s36, 1
      %p374 = por %p372, %p373
      %p375 = scmp.ne.s32.totalorder %s366, %s367
      %p376 = scmp.eq.s32.totalorder %s36, 0
      %p377 = por %p375, %p376
      %p378 = scmp.ne.s32.totalorder %s366, %s367
      %p379 = scmp.eq.s32.totalorder %s37, 1
      %p380 = por %p378, %p379
      %p382 = scmp.ne.s32.totalorder %s367, %s381
      %p383 = scmp.eq.s32.totalorder %s37, 0
      %p384 = por %p382, %p383
      %s386 = sadd.s32 %s385, 1
      %p389 = scmp.eq.s32.totalorder %s31, 1
      %p390 = scmp.ne.s32.totalorder %s385, %s387
      %p391 = scmp.eq.s32.totalorder %s31, 0
      %p392 = por %p390, %p391
      %p393 = scmp.ne.s32.totalorder %s385, %s387
      %p394 = scmp.eq.s32.totalorder %s36, 1
      %p395 = por %p393, %p394
      %p396 = scmp.ne.s32.totalorder %s387, %s388
      %p397 = scmp.eq.s32.totalorder %s36, 0
      %p398 = por %p396, %p397
      %p399 = scmp.ne.s32.totalorder %s387, %s388
      %p400 = scmp.eq.s32.totalorder %s37, 1
      %p401 = por %p399, %p400
      %p403 = scmp.ne.s32.totalorder %s388, %s402
      %p404 = scmp.eq.s32.totalorder %s37, 0
      %p405 = por %p403, %p404
      %s407 = sadd.s32 %s406, 1
      %p410 = scmp.eq.s32.totalorder %s31, 1
      %p411 = scmp.ne.s32.totalorder %s406, %s408
      %p412 = scmp.eq.s32.totalorder %s31, 0
      %p413 = por %p411, %p412
      %p414 = scmp.ne.s32.totalorder %s406, %s408
      %p415 = scmp.eq.s32.totalorder %s36, 1
      %p416 = por %p414, %p415
      %p417 = scmp.ne.s32.totalorder %s408, %s409
      %p418 = scmp.eq.s32.totalorder %s36, 0
      %p419 = por %p417, %p418
      %p420 = scmp.ne.s32.totalorder %s408, %s409
      %p421 = scmp.eq.s32.totalorder %s37, 1
      %p422 = por %p420, %p421
      %p424 = scmp.ne.s32.totalorder %s409, %s423
      %p425 = scmp.eq.s32.totalorder %s37, 0
      %p426 = por %p424, %p425
      %s427 = ssub.s32 %s31, %s38
      %p428 = scmp.eq.s32.totalorder %s427, 0
      %s430 = sadd.s32 %s429, 1
      %s431 = scalar_select %p428, %s429, %s430
      %p434 = pneg %p428
      %p435 = scmp.eq.s32.totalorder %s31, 1
      %p436 = por %p434, %p435
      %p437 = scmp.ne.s32.totalorder %s429, %s432
      %p438 = scmp.eq.s32.totalorder %s31, 0
      %p439 = por %p437, %p438
      %p440 = scmp.ne.s32.totalorder %s429, %s432
      %p441 = scmp.eq.s32.totalorder %s36, 1
      %p442 = por %p440, %p441
      %p443 = scmp.ne.s32.totalorder %s432, %s433
      %p444 = scmp.eq.s32.totalorder %s36, 0
      %p445 = por %p443, %p444
      %p446 = scmp.ne.s32.totalorder %s432, %s433
      %p447 = scmp.eq.s32.totalorder %s37, 1
      %p448 = por %p446, %p447
      %p450 = scmp.ne.s32.totalorder %s433, %s449
      %p451 = scmp.eq.s32.totalorder %s37, 0
      %p452 = por %p450, %p451
      %p453 = scmp.le.s32.totalorder 1, %s31
      %p454 = scmp.lt.s32.totalorder %s31, 3
      %p455 = pnand %p453, %p454
      %p456 = pneg %p455
      // Predicated region
      $region9: #{tpu_custom_call.1} parent=5 // pred_check
        _
      $region10: #{tpu_custom_call.1} parent=5 // pred_check_branch
        %458 = sbr.rel (%p455) target = $region12
      $region11: #{tpu_custom_call.1} parent=5 // pred_region
        %s459 = ssub.s32 %s31, 1
        // Predicated region
        $region13: #{tpu_custom_call.1} parent=11 // pred_check
          %p460 = pneg %p104
        $region14: #{tpu_custom_call.1} parent=11 // pred_check_branch
          %462 = sbr.rel (%p460) target = $region16
        $region15: #{tpu_custom_call.1} parent=11 // pred_region
          _
        $region16: #{tpu_custom_call.1} parent=11 // pred_fallthru
          _
        // Predicated region
        $region17: #{tpu_custom_call.1} parent=11 // pred_check
          %p463 = pneg %p125
        $region18: #{tpu_custom_call.1} parent=11 // pred_check_branch
          %465 = sbr.rel (%p463) target = $region20
        $region19: #{tpu_custom_call.1} parent=11 // pred_region
          _
        $region20: #{tpu_custom_call.1} parent=11 // pred_fallthru
          _
        // Predicated region
        $region21: #{tpu_custom_call.1} parent=11 // pred_check
          %p466 = pneg %p146
        $region22: #{tpu_custom_call.1} parent=11 // pred_check_branch
          %468 = sbr.rel (%p466) target = $region24
        $region23: #{tpu_custom_call.1} parent=11 // pred_region
          _
        $region24: #{tpu_custom_call.1} parent=11 // pred_fallthru
          _
        // Predicated region
        $region25: #{tpu_custom_call.1} parent=11 // pred_check
          %p469 = pneg %p167
        $region26: #{tpu_custom_call.1} parent=11 // pred_check_branch
          %471 = sbr.rel (%p469) target = $region28
        $region27: #{tpu_custom_call.1} parent=11 // pred_region
          _
        $region28: #{tpu_custom_call.1} parent=11 // pred_fallthru
          _
        // Predicated region
        $region29: #{tpu_custom_call.1} parent=11 // pred_check
          %p472 = pneg %p188
        $region30: #{tpu_custom_call.1} parent=11 // pred_check_branch
          %474 = sbr.rel (%p472) target = $region32
        $region31: #{tpu_custom_call.1} parent=11 // pred_region
          _
        $region32: #{tpu_custom_call.1} parent=11 // pred_fallthru
          _
        // Predicated region
        $region33: #{tpu_custom_call.1} parent=11 // pred_check
          %p475 = pneg %p209
        $region34: #{tpu_custom_call.1} parent=11 // pred_check_branch
          %477 = sbr.rel (%p475) target = $region36
        $region35: #{tpu_custom_call.1} parent=11 // pred_region
          %s479 = ssub.s32 16, 16
          %480 = vsyncadd [#allocation6], %s479
          %s482 = sshll.u32 [#allocation5], 4
          %s483 = int_to_ptr.vmem [resolvable:$true] %s482
          %485 = dma.hbm_to_vmem [thread:$0]  %s7, 16, %s483, [#allocation6]
        $region36: #{tpu_custom_call.1} parent=11 // pred_fallthru
          _
        // Predicated region
        $region37: #{tpu_custom_call.1} parent=11 // pred_check
          %p486 = pneg %p230
        $region38: #{tpu_custom_call.1} parent=11 // pred_check_branch
          %488 = sbr.rel (%p486) target = $region40
        $region39: #{tpu_custom_call.1} parent=11 // pred_region
          _
        $region40: #{tpu_custom_call.1} parent=11 // pred_fallthru
          _
        // Predicated region
        $region41: #{tpu_custom_call.1} parent=11 // pred_check
          %p489 = pneg %p251
        $region42: #{tpu_custom_call.1} parent=11 // pred_check_branch
          %491 = sbr.rel (%p489) target = $region44
        $region43: #{tpu_custom_call.1} parent=11 // pred_region
          %s493 = ssub.s32 16, 16
          %494 = vsyncadd [#allocation6], %s493
          %s496 = sshll.u32 [#allocation7], 4
          %s497 = int_to_ptr.vmem [resolvable:$true] %s496
          %499 = dma.hbm_to_vmem [thread:$0]  %s9, 16, %s497, [#allocation6]
        $region44: #{tpu_custom_call.1} parent=11 // pred_fallthru
          _
        // Predicated region
        $region45: #{tpu_custom_call.1} parent=11 // pred_check
          %p500 = pneg %p272
        $region46: #{tpu_custom_call.1} parent=11 // pred_check_branch
          %502 = sbr.rel (%p500) target = $region48
        $region47: #{tpu_custom_call.1} parent=11 // pred_region
          _
        $region48: #{tpu_custom_call.1} parent=11 // pred_fallthru
          _
        // Predicated region
        $region49: #{tpu_custom_call.1} parent=11 // pred_check
          %p503 = pneg %p293
        $region50: #{tpu_custom_call.1} parent=11 // pred_check_branch
          %505 = sbr.rel (%p503) target = $region52
        $region51: #{tpu_custom_call.1} parent=11 // pred_region
          _
        $region52: #{tpu_custom_call.1} parent=11 // pred_fallthru
          _
        // Predicated region
        $region53: #{tpu_custom_call.1} parent=11 // pred_check
          %p506 = pneg %p314
        $region54: #{tpu_custom_call.1} parent=11 // pred_check_branch
          %508 = sbr.rel (%p506) target = $region56
        $region55: #{tpu_custom_call.1} parent=11 // pred_region
          _
        $region56: #{tpu_custom_call.1} parent=11 // pred_fallthru
          _
        // Predicated region
        $region57: #{tpu_custom_call.1} parent=11 // pred_check
          %p509 = pneg %p335
        $region58: #{tpu_custom_call.1} parent=11 // pred_check_branch
          %511 = sbr.rel (%p509) target = $region60
        $region59: #{tpu_custom_call.1} parent=11 // pred_region
          _
        $region60: #{tpu_custom_call.1} parent=11 // pred_fallthru
          _
        // Predicated region
        $region61: #{tpu_custom_call.1} parent=11 // pred_check
          %p512 = pneg %p356
        $region62: #{tpu_custom_call.1} parent=11 // pred_check_branch
          %514 = sbr.rel (%p512) target = $region64
        $region63: #{tpu_custom_call.1} parent=11 // pred_region
          _
        $region64: #{tpu_custom_call.1} parent=11 // pred_fallthru
          _
        // Predicated region
        $region65: #{tpu_custom_call.1} parent=11 // pred_check
          %p515 = pneg %p377
        $region66: #{tpu_custom_call.1} parent=11 // pred_check_branch
          %517 = sbr.rel (%p515) target = $region68
        $region67: #{tpu_custom_call.1} parent=11 // pred_region
          _
        $region68: #{tpu_custom_call.1} parent=11 // pred_fallthru
          _
        // Predicated region
        $region69: #{tpu_custom_call.1} parent=11 // pred_check
          %p518 = pneg %p398
        $region70: #{tpu_custom_call.1} parent=11 // pred_check_branch
          %520 = sbr.rel (%p518) target = $region72
        $region71: #{tpu_custom_call.1} parent=11 // pred_region
          _
        $region72: #{tpu_custom_call.1} parent=11 // pred_fallthru
          _
        // Predicated region
        $region73: #{tpu_custom_call.1} parent=11 // pred_check
          %p521 = pneg %p419
        $region74: #{tpu_custom_call.1} parent=11 // pred_check_branch
          %523 = sbr.rel (%p521) target = $region76
        $region75: #{tpu_custom_call.1} parent=11 // pred_region
          _
        $region76: #{tpu_custom_call.1} parent=11 // pred_fallthru
          _
      $region12: #{tpu_custom_call.1} parent=5 // pred_fallthru
        _
      %p524 = scmp.lt.s32.totalorder %s31, 2
      // Predicated region
      $region77: #{tpu_custom_call.1} parent=5 // pred_check
        %p525 = pneg %p524
      $region78: #{tpu_custom_call.1} parent=5 // pred_check_branch
        %527 = sbr.rel (%p525) target = $region80
      $region79: #{tpu_custom_call.1} parent=5 // pred_region
        // Predicated region
        $region81: #{tpu_custom_call.1} parent=79 // pred_check
          %p528 = pneg %p51
        $region82: #{tpu_custom_call.1} parent=79 // pred_check_branch
          %530 = sbr.rel (%p528) target = $region84
        $region83: #{tpu_custom_call.1} parent=79 // pred_region
          %s531 = sand.u32 %s41, 1
          %s532 = scalar_lea.sflag [#allocation3], %s531
          %s533 = sand.u32 %s41, 1
          %s534 = scalar_lea.vmem [#allocation2], %s533
          %s536 = ssub.s32 16, 16
          %537 = vsyncadd %s532, %s536
          %s538 = smul.addr %s31, 16
          %s539 = scalar_lea.hbm %s0, %s538
          %s541 = sshll.u32 %s534, 4
          %s542 = int_to_ptr.vmem [resolvable:$true] %s541
          %544 = dma.hbm_to_vmem [thread:$0]  %s539, 16, %s542, %s532
        $region84: #{tpu_custom_call.1} parent=79 // pred_fallthru
          _
        // Predicated region
        $region85: #{tpu_custom_call.1} parent=79 // pred_check
          %p545 = pneg %p77
        $region86: #{tpu_custom_call.1} parent=79 // pred_check_branch
          %547 = sbr.rel (%p545) target = $region88
        $region87: #{tpu_custom_call.1} parent=79 // pred_region
          %p548 = scmp.lt.s32.totalorder %s31, 1
          %s549 = scalar_select %p548, %s31, 1
          %s550 = smul.addr %s549, 8
          %s551 = scalar_lea.vmem %s1, %s550
        $region88: #{tpu_custom_call.1} parent=79 // pred_fallthru
          _
      $region80: #{tpu_custom_call.1} parent=5 // pred_fallthru
        _
      %p552 = scmp.le.s32.totalorder 1, %s31
      %p553 = scmp.lt.s32.totalorder %s31, 3
      %p554 = pnand %p552, %p553
      %p555 = pneg %p554
      // Predicated region
      $region89: #{tpu_custom_call.1} parent=5 // pred_check
        _
      $region90: #{tpu_custom_call.1} parent=5 // pred_check_branch
        %557 = sbr.rel (%p554) target = $region92
      $region91: #{tpu_custom_call.1} parent=5 // pred_region
        %s558 = ssub.s32 %s31, 1
        %s559 = sand.u32 %s44, 1
        %s560 = scalar_lea.sflag [#allocation3], %s559
        %s561 = sand.u32 %s44, 1
        %s562 = scalar_lea.vmem [#allocation2], %s561
        // Predicated region
        $region93: #{tpu_custom_call.1} parent=91 // pred_check
          %p563 = pneg %p57
        $region94: #{tpu_custom_call.1} parent=91 // pred_check_branch
          %565 = sbr.rel (%p563) target = $region96
        $region95: #{tpu_custom_call.1} parent=91 // pred_region
          %566 = dma.done %s560, 16
        $region96: #{tpu_custom_call.1} parent=91 // pred_fallthru
          _
        // Predicated region
        $region97: #{tpu_custom_call.1} parent=91 // pred_check
          %p567 = pneg %p209
        $region98: #{tpu_custom_call.1} parent=91 // pred_check_branch
          %569 = sbr.rel (%p567) target = $region100
        $region99: #{tpu_custom_call.1} parent=91 // pred_region
          %570 = dma.done [#allocation6], 16
        $region100: #{tpu_custom_call.1} parent=91 // pred_fallthru
          _
        // Predicated region
        $region101: #{tpu_custom_call.1} parent=91 // pred_check
          %p571 = pneg %p251
        $region102: #{tpu_custom_call.1} parent=91 // pred_check_branch
          %573 = sbr.rel (%p571) target = $region104
        $region103: #{tpu_custom_call.1} parent=91 // pred_region
          %574 = dma.done [#allocation6], 16
        $region104: #{tpu_custom_call.1} parent=91 // pred_fallthru
          _
        %s575 = sand.u32 %s44, 1
        %s576 = scalar_lea.sflag [#allocation3], %s575
        %s577 = sand.u32 %s44, 1
        %s578 = scalar_lea.vmem [#allocation2], %s577
        %p579 = pneg %p57
        %p580 = pneg %p54
        %p581 = scmp.lt.s32.totalorder %s36, 1
        %s582 = scalar_select %p581, %s36, 1
        %s583 = smul.addr %s582, 8
        %s584 = scalar_lea.vmem %s1, %s583
        %p585 = pneg %p83
        %p586 = pneg %p80
        %p587 = pneg %p104
        %p588 = pneg %p101
        %p589 = pneg %p125
        %p590 = pneg %p122
        %p591 = pneg %p146
        %p592 = pneg %p143
        %p593 = pneg %p167
        %p594 = pneg %p164
        %p595 = pneg %p188
        %p596 = pneg %p185
        %p597 = pneg %p209
        %p598 = pneg %p206
        %p599 = pneg %p230
        %p600 = pneg %p227
        %p601 = pneg %p251
        %p602 = pneg %p248
        %p603 = pneg %p272
        %p604 = pneg %p269
        %p605 = pneg %p293
        %p606 = pneg %p290
        %p607 = pneg %p314
        %p608 = pneg %p311
        %p609 = pneg %p335
        %p610 = pneg %p332
        %p611 = pneg %p356
        %p612 = pneg %p353
        %p613 = pneg %p377
        %p614 = pneg %p374
        %p615 = pneg %p398
        %p616 = pneg %p395
        %p617 = pneg %p419
        %p618 = pneg %p416
        %p619 = pneg %p445
        %p620 = pneg %p442
        %s621 = sand.u32 %s432, 1
        %s622 = scalar_lea.sflag [#allocation4], %s621
        %s623 = sand.u32 %s432, 1
        %s624 = smul.addr %s623, 8
        %s625 = scalar_lea.vmem [#allocation8], %s624
        %p626 = scmp.lt.s32.totalorder %s36, 1
        %s627 = scalar_select %p626, %s36, 1
        %s628 = smul.addr %s627, 8
        %s629 = scalar_lea.vmem %s1, %s628
        %v631 = vld [vmem:[%s629] sm:$0xff]
        %v632 = vpack.c.bf16 %v631, %v631
        %v633 = vld [vmem:[%s562] sm:$0x1]
        %v634 = vld [vmem:[%s2] sm:$0xf]
        %v635 = vld [vmem:[%s2 + $0x4] sm:$0xf]
        %v636 = vld [vmem:[%s2 + $0x8] sm:$0xf]
        %v637 = vld [vmem:[%s2 + $0xc] sm:$0xf]
        %v638 = vld [vmem:[%s3] sm:$0x1]
        %v640 = vlaneseq
        %v641 = vshrl.u32 %v640, 7
        %v642 = vsub.s32 0, %v641
        %v643 = vrot.slane %v638, %v642
        %v649 = vunpack.c.l.b16 %v634
        %v650 = vunpack.c.l.b16 %v635
        %v651 = vunpack.c.l.b16 %v636
        %v652 = vunpack.c.l.b16 %v637
        %v653 = vpack.c.b16 %v650, %v649
        %v654 = vpack.c.b16 %v652, %v651
        %vm657 = vcmask 261120
        %v659 = vsel %vm657, %v632, 0
        %661 = vmatprep.subr.bf16.mxu0 0
        %662 = vmatpush1.bf16.msra.mxu0 %v653
        %663 = vmatprep.subr.bf16.mxu0 0
        %664 = vmatpush1.bf16.msra.mxu0 %v654
        %665 = vmatprep.subr.bf16.mxu0 0
        %666 = vmatpush1.bf16.msra.mxu0 0
        %667 = vmatprep.subr.bf16.mxu0 0
        %668 = vmatpush1.bf16.msra.mxu0 0
        %669 = vmatprep.subr.bf16.mxu0 0
        %670 = vmatpush1.bf16.msra.mxu0 0
        %671 = vmatprep.subr.bf16.mxu0 0
        %672 = vmatpush1.bf16.msra.mxu0 0
        %673 = vmatprep.subr.bf16.mxu0 0
        %674 = vmatpush1.bf16.msra.mxu0 0
        %675 = vmatprep.subr.bf16.mxu0 0
        %676 = vmatpush1.bf16.msra.mxu0 0
        %677 = vmatprep.subr.bf16.mxu0 0
        %678 = vmatpush1.bf16.msra.mxu0 0
        %679 = vmatprep.subr.bf16.mxu0 0
        %680 = vmatpush1.bf16.msra.mxu0 0
        %681 = vmatprep.subr.bf16.mxu0 0
        %682 = vmatpush1.bf16.msra.mxu0 0
        %683 = vmatprep.subr.bf16.mxu0 0
        %684 = vmatpush1.bf16.msra.mxu0 0
        %685 = vmatprep.subr.bf16.mxu0 0
        %686 = vmatpush1.bf16.msra.mxu0 0
        %687 = vmatprep.subr.bf16.mxu0 0
        %688 = vmatpush1.bf16.msra.mxu0 0
        %689 = vmatprep.subr.bf16.mxu0 0
        %690 = vmatpush1.bf16.msra.mxu0 0
        %691 = vmatprep.subr.bf16.mxu0 0
        %692 = vmatpush1.bf16.msra.mxu0 0
        %693 = vmatprep.mubr.bf16.mxu0 0
        %694 = vmatmul.mubr.bf16.gmra.mrb[0].mxu0 %v659
        %v695 = vpop.f32.mrb[0].mxu0
        %v696 = vadd.f32 %v643, %v695
        %v697 = vpop.f32.mrb[0].mxu0
        %v698 = vpop.f32.mrb[0].mxu0
        %v699 = vpop.f32.mrb[0].mxu0
        %700 = vdwg.mxu0
        %v701 = vld [vmem:[%s4] sm:$0xf]
        %v702 = vld [vmem:[%s4 + $0x4] sm:$0xf]
        %v703 = vld [vmem:[%s4 + $0x8] sm:$0xf]
        %v704 = vld [vmem:[%s4 + $0xc] sm:$0xf]
        %v705 = vld [vmem:[%s5] sm:$0x1]
        %v707 = vlaneseq
        %v708 = vshrl.u32 %v707, 7
        %v709 = vsub.s32 0, %v708
        %v710 = vrot.slane %v705, %v709
        %v716 = vunpack.c.l.b16 %v701
        %v717 = vunpack.c.l.b16 %v702
        %v718 = vunpack.c.l.b16 %v703
        %v719 = vunpack.c.l.b16 %v704
        %v720 = vpack.c.b16 %v717, %v716
        %v721 = vpack.c.b16 %v719, %v718
        %724 = vmatprep.subr.bf16.mxu0 0
        %725 = vmatpush1.bf16.msra.mxu0 %v720
        %726 = vmatprep.subr.bf16.mxu0 0
        %727 = vmatpush1.bf16.msra.mxu0 %v721
        %728 = vmatprep.subr.bf16.mxu0 0
        %729 = vmatpush1.bf16.msra.mxu0 0
        %730 = vmatprep.subr.bf16.mxu0 0
        %731 = vmatpush1.bf16.msra.mxu0 0
        %732 = vmatprep.subr.bf16.mxu0 0
        %733 = vmatpush1.bf16.msra.mxu0 0
        %734 = vmatprep.subr.bf16.mxu0 0
        %735 = vmatpush1.bf16.msra.mxu0 0
        %736 = vmatprep.subr.bf16.mxu0 0
        %737 = vmatpush1.bf16.msra.mxu0 0
        %738 = vmatprep.subr.bf16.mxu0 0
        %739 = vmatpush1.bf16.msra.mxu0 0
        %740 = vmatprep.subr.bf16.mxu0 0
        %741 = vmatpush1.bf16.msra.mxu0 0
        %742 = vmatprep.subr.bf16.mxu0 0
        %743 = vmatpush1.bf16.msra.mxu0 0
        %744 = vmatprep.subr.bf16.mxu0 0
        %745 = vmatpush1.bf16.msra.mxu0 0
        %746 = vmatprep.subr.bf16.mxu0 0
        %747 = vmatpush1.bf16.msra.mxu0 0
        %748 = vmatprep.subr.bf16.mxu0 0
        %749 = vmatpush1.bf16.msra.mxu0 0
        %750 = vmatprep.subr.bf16.mxu0 0
        %751 = vmatpush1.bf16.msra.mxu0 0
        %752 = vmatprep.subr.bf16.mxu0 0
        %753 = vmatpush1.bf16.msra.mxu0 0
        %754 = vmatprep.subr.bf16.mxu0 0
        %755 = vmatpush1.bf16.msra.mxu0 0
        %756 = vmatprep.mubr.bf16.mxu0 0
        %757 = vmatmul.mubr.bf16.gmra.mrb[0].mxu0 %v659
        %v758 = vpop.f32.mrb[0].mxu0
        %v759 = vadd.f32 %v710, %v758
        %v760 = vpop.f32.mrb[0].mxu0
        %v761 = vpop.f32.mrb[0].mxu0
        %v762 = vpop.f32.mrb[0].mxu0
        %763 = vdwg.mxu0
        %v764 = vld [vmem:[%s6] sm:$0xf]
        %v765 = vld [vmem:[%s6 + $0x4] sm:$0xf]
        %v766 = vld [vmem:[%s6 + $0x8] sm:$0xf]
        %v767 = vld [vmem:[%s6 + $0xc] sm:$0xf]
        %v768 = vld [vmem:[#allocation5] sm:$0x1]
        %v770 = vlaneseq
        %v771 = vshrl.u32 %v770, 7
        %v772 = vsub.s32 0, %v771
        %v773 = vrot.slane %v768, %v772
        %v779 = vunpack.c.l.b16 %v764
        %v780 = vunpack.c.l.b16 %v765
        %v781 = vunpack.c.l.b16 %v766
        %v782 = vunpack.c.l.b16 %v767
        %v783 = vpack.c.b16 %v780, %v779
        %v784 = vpack.c.b16 %v782, %v781
        %787 = vmatprep.subr.bf16.mxu0 0
        %788 = vmatpush1.bf16.msra.mxu0 %v783
        %789 = vmatprep.subr.bf16.mxu0 0
        %790 = vmatpush1.bf16.msra.mxu0 %v784
        %791 = vmatprep.subr.bf16.mxu0 0
        %792 = vmatpush1.bf16.msra.mxu0 0
        %793 = vmatprep.subr.bf16.mxu0 0
        %794 = vmatpush1.bf16.msra.mxu0 0
        %795 = vmatprep.subr.bf16.mxu0 0
        %796 = vmatpush1.bf16.msra.mxu0 0
        %797 = vmatprep.subr.bf16.mxu0 0
        %798 = vmatpush1.bf16.msra.mxu0 0
        %799 = vmatprep.subr.bf16.mxu0 0
        %800 = vmatpush1.bf16.msra.mxu0 0
        %801 = vmatprep.subr.bf16.mxu0 0
        %802 = vmatpush1.bf16.msra.mxu0 0
        %803 = vmatprep.subr.bf16.mxu0 0
        %804 = vmatpush1.bf16.msra.mxu0 0
        %805 = vmatprep.subr.bf16.mxu0 0
        %806 = vmatpush1.bf16.msra.mxu0 0
        %807 = vmatprep.subr.bf16.mxu0 0
        %808 = vmatpush1.bf16.msra.mxu0 0
        %809 = vmatprep.subr.bf16.mxu0 0
        %810 = vmatpush1.bf16.msra.mxu0 0
        %811 = vmatprep.subr.bf16.mxu0 0
        %812 = vmatpush1.bf16.msra.mxu0 0
        %813 = vmatprep.subr.bf16.mxu0 0
        %814 = vmatpush1.bf16.msra.mxu0 0
        %815 = vmatprep.subr.bf16.mxu0 0
        %816 = vmatpush1.bf16.msra.mxu0 0
        %817 = vmatprep.subr.bf16.mxu0 0
        %818 = vmatpush1.bf16.msra.mxu0 0
        %819 = vmatprep.mubr.bf16.mxu0 0
        %820 = vmatmul.mubr.bf16.gmra.mrb[0].mxu0 %v659
        %v821 = vpop.f32.mrb[0].mxu0
        %v822 = vadd.f32 %v773, %v821
        %v823 = vpop.f32.mrb[0].mxu0
        %v824 = vpop.f32.mrb[0].mxu0
        %v825 = vpop.f32.mrb[0].mxu0
        %826 = vdwg.mxu0
        %v827 = vpack.c.bf16 %v696, %v696
        %829 = vrot.lane.b32.xlu0 %v827, 112
        %v830 = vpop.permute.xlu0 %829
        %v832 = vunpack.c.l.s4 1983009808
        %v833 = vunpack.c.0.s8 %v832
        %v834 = vlaneseq
        %v835 = vshrl.u32 %v834, 7
        %v836 = vsub.s32 %v833, %v835
        %v837 = vrot.slane %v827, %v836
        %v838 = vcombine.high %v837, 0
        %v840 = vunpack.c.l.s4 1934713408
        %v841 = vunpack.c.0.s8 %v840
        %v842 = vlaneseq
        %v843 = vshrl.u32 %v842, 7
        %v844 = vsub.s32 %v841, %v843
        %v845 = vrot.slane %v837, %v844
        %v847 = vunpack.c.l.s4 1934713408
        %v848 = vunpack.c.0.s8 %v847
        %v849 = vlaneseq
        %v850 = vshrl.u32 %v849, 7
        %v851 = vsub.s32 %v848, %v850
        %v852 = vrot.slane %v838, %v851
        %v853 = vcombine.high %v845, 0
        %v854 = vcombine.high %v852, 0
        %v857 = vunpack.c.l.s4 1983009808
        %v858 = vunpack.c.0.s8 %v857
        %v859 = vlaneseq
        %v860 = vshrl.u32 %v859, 7
        %v861 = vsub.s32 %v858, %v860
        %v862 = vrot.slane %v830, %v861
        %v863 = vcombine.high %v862, 0
        %v865 = vunpack.c.l.s4 1934713408
        %v866 = vunpack.c.0.s8 %v865
        %v867 = vlaneseq
        %v868 = vshrl.u32 %v867, 7
        %v869 = vsub.s32 %v866, %v868
        %v870 = vrot.slane %v862, %v869
        %v872 = vunpack.c.l.s4 1934713408
        %v873 = vunpack.c.0.s8 %v872
        %v874 = vlaneseq
        %v875 = vshrl.u32 %v874, 7
        %v876 = vsub.s32 %v873, %v875
        %v877 = vrot.slane %v863, %v876
        %v878 = vcombine.high %v870, 0
        %v879 = vcombine.high %v877, 0
        %v882 = vpack.i.b16 %v870, %v845
        %v884 = vshrl.u32 %v845, 16
        %v885 = vshrl.u32 %v870, 16
        %v886 = vpack.i.b16 %v885, %v884
        %v890 = vpack.i.b16 %v878, %v853
        %v892 = vshrl.u32 %v853, 16
        %v893 = vshrl.u32 %v878, 16
        %v894 = vpack.i.b16 %v893, %v892
        %v898 = vpack.i.b16 %v877, %v852
        %v900 = vshrl.u32 %v852, 16
        %v901 = vshrl.u32 %v877, 16
        %v902 = vpack.i.b16 %v901, %v900
        %v906 = vpack.i.b16 %v879, %v854
        %v908 = vshrl.u32 %v854, 16
        %v909 = vshrl.u32 %v879, 16
        %v910 = vpack.i.b16 %v909, %v908
        %v912 = vcombine.low %v882, %v898
        %v914 = vunpack.c.l.s4 1983009808
        %v915 = vunpack.c.0.s8 %v914
        %v916 = vlaneseq
        %v917 = vshrl.u32 %v916, 7
        %v918 = vsub.s32 %v915, %v917
        %v919 = vrot.slane %v912, %v918
        %v920 = vcombine.low %v890, %v906
        %v922 = vunpack.c.l.s4 1983009808
        %v923 = vunpack.c.0.s8 %v922
        %v924 = vlaneseq
        %v925 = vshrl.u32 %v924, 7
        %v926 = vsub.s32 %v923, %v925
        %v927 = vrot.slane %v920, %v926
        %v928 = vcombine.low %v919, %v927
        %v930 = vunpack.c.l.s4 1934713408
        %v931 = vunpack.c.0.s8 %v930
        %v932 = vlaneseq
        %v933 = vshrl.u32 %v932, 7
        %v934 = vsub.s32 %v931, %v933
        %v935 = vrot.slane %v928, %v934
        %v936 = vcombine.low %v886, %v902
        %v938 = vunpack.c.l.s4 1983009808
        %v939 = vunpack.c.0.s8 %v938
        %v940 = vlaneseq
        %v941 = vshrl.u32 %v940, 7
        %v942 = vsub.s32 %v939, %v941
        %v943 = vrot.slane %v936, %v942
        %v944 = vcombine.low %v894, %v910
        %v946 = vunpack.c.l.s4 1983009808
        %v947 = vunpack.c.0.s8 %v946
        %v948 = vlaneseq
        %v949 = vshrl.u32 %v948, 7
        %v950 = vsub.s32 %v947, %v949
        %v951 = vrot.slane %v944, %v950
        %v952 = vcombine.low %v943, %v951
        %v954 = vunpack.c.l.s4 1934713408
        %v955 = vunpack.c.0.s8 %v954
        %v956 = vlaneseq
        %v957 = vshrl.u32 %v956, 7
        %v958 = vsub.s32 %v955, %v957
        %v959 = vrot.slane %v952, %v958
        %v962 = vpack.i.b16 %v959, %v935
        %v963 = vshrl.u32 %v935, 16
        %v964 = vshrl.u32 %v959, 16
        %v965 = vpack.i.b16 %v964, %v963
        %v966 = vpack.c.bf16 %v759, %v759
        %968 = vrot.lane.b32.xlu0 %v966, 112
        %v969 = vpop.permute.xlu0 %968
        %v971 = vunpack.c.l.s4 1983009808
        %v972 = vunpack.c.0.s8 %v971
        %v973 = vlaneseq
        %v974 = vshrl.u32 %v973, 7
        %v975 = vsub.s32 %v972, %v974
        %v976 = vrot.slane %v966, %v975
        %v977 = vcombine.high %v976, 0
        %v979 = vunpack.c.l.s4 1934713408
        %v980 = vunpack.c.0.s8 %v979
        %v981 = vlaneseq
        %v982 = vshrl.u32 %v981, 7
        %v983 = vsub.s32 %v980, %v982
        %v984 = vrot.slane %v976, %v983
        %v986 = vunpack.c.l.s4 1934713408
        %v987 = vunpack.c.0.s8 %v986
        %v988 = vlaneseq
        %v989 = vshrl.u32 %v988, 7
        %v990 = vsub.s32 %v987, %v989
        %v991 = vrot.slane %v977, %v990
        %v992 = vcombine.high %v984, 0
        %v993 = vcombine.high %v991, 0
        %v996 = vunpack.c.l.s4 1983009808
        %v997 = vunpack.c.0.s8 %v996
        %v998 = vlaneseq
        %v999 = vshrl.u32 %v998, 7
        %v1000 = vsub.s32 %v997, %v999
        %v1001 = vrot.slane %v969, %v1000
        %v1002 = vcombine.high %v1001, 0
        %v1004 = vunpack.c.l.s4 1934713408
        %v1005 = vunpack.c.0.s8 %v1004
        %v1006 = vlaneseq
        %v1007 = vshrl.u32 %v1006, 7
        %v1008 = vsub.s32 %v1005, %v1007
        %v1009 = vrot.slane %v1001, %v1008
        %v1011 = vunpack.c.l.s4 1934713408
        %v1012 = vunpack.c.0.s8 %v1011
        %v1013 = vlaneseq
        %v1014 = vshrl.u32 %v1013, 7
        %v1015 = vsub.s32 %v1012, %v1014
        %v1016 = vrot.slane %v1002, %v1015
        %v1017 = vcombine.high %v1009, 0
        %v1018 = vcombine.high %v1016, 0
        %v1021 = vpack.i.b16 %v1009, %v984
        %v1023 = vshrl.u32 %v984, 16
        %v1024 = vshrl.u32 %v1009, 16
        %v1025 = vpack.i.b16 %v1024, %v1023
        %v1029 = vpack.i.b16 %v1017, %v992
        %v1031 = vshrl.u32 %v992, 16
        %v1032 = vshrl.u32 %v1017, 16
        %v1033 = vpack.i.b16 %v1032, %v1031
        %v1037 = vpack.i.b16 %v1016, %v991
        %v1039 = vshrl.u32 %v991, 16
        %v1040 = vshrl.u32 %v1016, 16
        %v1041 = vpack.i.b16 %v1040, %v1039
        %v1045 = vpack.i.b16 %v1018, %v993
        %v1047 = vshrl.u32 %v993, 16
        %v1048 = vshrl.u32 %v1018, 16
        %v1049 = vpack.i.b16 %v1048, %v1047
        %v1051 = vcombine.low %v1021, %v1037
        %v1053 = vunpack.c.l.s4 1983009808
        %v1054 = vunpack.c.0.s8 %v1053
        %v1055 = vlaneseq
        %v1056 = vshrl.u32 %v1055, 7
        %v1057 = vsub.s32 %v1054, %v1056
        %v1058 = vrot.slane %v1051, %v1057
        %v1059 = vcombine.low %v1029, %v1045
        %v1061 = vunpack.c.l.s4 1983009808
        %v1062 = vunpack.c.0.s8 %v1061
        %v1063 = vlaneseq
        %v1064 = vshrl.u32 %v1063, 7
        %v1065 = vsub.s32 %v1062, %v1064
        %v1066 = vrot.slane %v1059, %v1065
        %v1067 = vcombine.low %v1058, %v1066
        %v1069 = vunpack.c.l.s4 1934713408
        %v1070 = vunpack.c.0.s8 %v1069
        %v1071 = vlaneseq
        %v1072 = vshrl.u32 %v1071, 7
        %v1073 = vsub.s32 %v1070, %v1072
        %v1074 = vrot.slane %v1067, %v1073
        %v1075 = vcombine.low %v1025, %v1041
        %v1077 = vunpack.c.l.s4 1983009808
        %v1078 = vunpack.c.0.s8 %v1077
        %v1079 = vlaneseq
        %v1080 = vshrl.u32 %v1079, 7
        %v1081 = vsub.s32 %v1078, %v1080
        %v1082 = vrot.slane %v1075, %v1081
        %v1083 = vcombine.low %v1033, %v1049
        %v1085 = vunpack.c.l.s4 1983009808
        %v1086 = vunpack.c.0.s8 %v1085
        %v1087 = vlaneseq
        %v1088 = vshrl.u32 %v1087, 7
        %v1089 = vsub.s32 %v1086, %v1088
        %v1090 = vrot.slane %v1083, %v1089
        %v1091 = vcombine.low %v1082, %v1090
        %v1093 = vunpack.c.l.s4 1934713408
        %v1094 = vunpack.c.0.s8 %v1093
        %v1095 = vlaneseq
        %v1096 = vshrl.u32 %v1095, 7
        %v1097 = vsub.s32 %v1094, %v1096
        %v1098 = vrot.slane %v1091, %v1097
        %v1101 = vpack.i.b16 %v1098, %v1074
        %v1102 = vshrl.u32 %v1074, 16
        %v1103 = vshrl.u32 %v1098, 16
        %v1104 = vpack.i.b16 %v1103, %v1102
        %v1105 = vpack.c.bf16 %v822, %v822
        %1107 = vrot.lane.b32.xlu0 %v1105, 112
        %v1108 = vpop.permute.xlu0 %1107
        %v1110 = vunpack.c.l.s4 1983009808
        %v1111 = vunpack.c.0.s8 %v1110
        %v1112 = vlaneseq
        %v1113 = vshrl.u32 %v1112, 7
        %v1114 = vsub.s32 %v1111, %v1113
        %v1115 = vrot.slane %v1105, %v1114
        %v1116 = vcombine.high %v1115, 0
        %v1118 = vunpack.c.l.s4 1934713408
        %v1119 = vunpack.c.0.s8 %v1118
        %v1120 = vlaneseq
        %v1121 = vshrl.u32 %v1120, 7
        %v1122 = vsub.s32 %v1119, %v1121
        %v1123 = vrot.slane %v1115, %v1122
        %v1125 = vunpack.c.l.s4 1934713408
        %v1126 = vunpack.c.0.s8 %v1125
        %v1127 = vlaneseq
        %v1128 = vshrl.u32 %v1127, 7
        %v1129 = vsub.s32 %v1126, %v1128
        %v1130 = vrot.slane %v1116, %v1129
        %v1131 = vcombine.high %v1123, 0
        %v1132 = vcombine.high %v1130, 0
        %v1135 = vunpack.c.l.s4 1983009808
        %v1136 = vunpack.c.0.s8 %v1135
        %v1137 = vlaneseq
        %v1138 = vshrl.u32 %v1137, 7
        %v1139 = vsub.s32 %v1136, %v1138
        %v1140 = vrot.slane %v1108, %v1139
        %v1141 = vcombine.high %v1140, 0
        %v1143 = vunpack.c.l.s4 1934713408
        %v1144 = vunpack.c.0.s8 %v1143
        %v1145 = vlaneseq
        %v1146 = vshrl.u32 %v1145, 7
        %v1147 = vsub.s32 %v1144, %v1146
        %v1148 = vrot.slane %v1140, %v1147
        %v1150 = vunpack.c.l.s4 1934713408
        %v1151 = vunpack.c.0.s8 %v1150
        %v1152 = vlaneseq
        %v1153 = vshrl.u32 %v1152, 7
        %v1154 = vsub.s32 %v1151, %v1153
        %v1155 = vrot.slane %v1141, %v1154
        %v1156 = vcombine.high %v1148, 0
        %v1157 = vcombine.high %v1155, 0
        %v1160 = vpack.i.b16 %v1148, %v1123
        %v1162 = vshrl.u32 %v1123, 16
        %v1163 = vshrl.u32 %v1148, 16
        %v1164 = vpack.i.b16 %v1163, %v1162
        %v1168 = vpack.i.b16 %v1156, %v1131
        %v1170 = vshrl.u32 %v1131, 16
        %v1171 = vshrl.u32 %v1156, 16
        %v1172 = vpack.i.b16 %v1171, %v1170
        %v1176 = vpack.i.b16 %v1155, %v1130
        %v1178 = vshrl.u32 %v1130, 16
        %v1179 = vshrl.u32 %v1155, 16
        %v1180 = vpack.i.b16 %v1179, %v1178
        %v1184 = vpack.i.b16 %v1157, %v1132
        %v1186 = vshrl.u32 %v1132, 16
        %v1187 = vshrl.u32 %v1157, 16
        %v1188 = vpack.i.b16 %v1187, %v1186
        %v1190 = vcombine.low %v1160, %v1176
        %v1192 = vunpack.c.l.s4 1983009808
        %v1193 = vunpack.c.0.s8 %v1192
        %v1194 = vlaneseq
        %v1195 = vshrl.u32 %v1194, 7
        %v1196 = vsub.s32 %v1193, %v1195
        %v1197 = vrot.slane %v1190, %v1196
        %v1198 = vcombine.low %v1168, %v1184
        %v1200 = vunpack.c.l.s4 1983009808
        %v1201 = vunpack.c.0.s8 %v1200
        %v1202 = vlaneseq
        %v1203 = vshrl.u32 %v1202, 7
        %v1204 = vsub.s32 %v1201, %v1203
        %v1205 = vrot.slane %v1198, %v1204
        %v1206 = vcombine.low %v1197, %v1205
        %v1208 = vunpack.c.l.s4 1934713408
        %v1209 = vunpack.c.0.s8 %v1208
        %v1210 = vlaneseq
        %v1211 = vshrl.u32 %v1210, 7
        %v1212 = vsub.s32 %v1209, %v1211
        %v1213 = vrot.slane %v1206, %v1212
        %v1214 = vcombine.low %v1164, %v1180
        %v1216 = vunpack.c.l.s4 1983009808
        %v1217 = vunpack.c.0.s8 %v1216
        %v1218 = vlaneseq
        %v1219 = vshrl.u32 %v1218, 7
        %v1220 = vsub.s32 %v1217, %v1219
        %v1221 = vrot.slane %v1214, %v1220
        %v1222 = vcombine.low %v1172, %v1188
        %v1224 = vunpack.c.l.s4 1983009808
        %v1225 = vunpack.c.0.s8 %v1224
        %v1226 = vlaneseq
        %v1227 = vshrl.u32 %v1226, 7
        %v1228 = vsub.s32 %v1225, %v1227
        %v1229 = vrot.slane %v1222, %v1228
        %v1230 = vcombine.low %v1221, %v1229
        %v1232 = vunpack.c.l.s4 1934713408
        %v1233 = vunpack.c.0.s8 %v1232
        %v1234 = vlaneseq
        %v1235 = vshrl.u32 %v1234, 7
        %v1236 = vsub.s32 %v1233, %v1235
        %v1237 = vrot.slane %v1230, %v1236
        %v1240 = vpack.i.b16 %v1237, %v1213
        %v1241 = vshrl.u32 %v1213, 16
        %v1242 = vshrl.u32 %v1237, 16
        %v1243 = vpack.i.b16 %v1242, %v1241
        %vm1244 = vcmask 130048
        %v1246 = vsel %vm1244, %v962, 0
        %v1249 = vsel %vm1244, %v1101, 0
        %1251 = vmatprep.subr.bf16.mxu0 0
        %1252 = vmatpush1.bf16.xpose.msra.mxu0 %v1249
        %1253 = vmatprep.subr.bf16.mxu0 0
        %1254 = vmatpush1.bf16.xpose.msra.mxu0 0
        %1255 = vmatprep.subr.bf16.mxu0 0
        %1256 = vmatpush1.bf16.xpose.msra.mxu0 0
        %1257 = vmatprep.subr.bf16.mxu0 0
        %1258 = vmatpush1.bf16.xpose.msra.mxu0 0
        %1259 = vmatprep.subr.bf16.mxu0 0
        %1260 = vmatpush1.bf16.xpose.msra.mxu0 0
        %1261 = vmatprep.subr.bf16.mxu0 0
        %1262 = vmatpush1.bf16.xpose.msra.mxu0 0
        %1263 = vmatprep.subr.bf16.mxu0 0
        %1264 = vmatpush1.bf16.xpose.msra.mxu0 0
        %1265 = vmatprep.subr.bf16.mxu0 0
        %1266 = vmatpush1.bf16.xpose.msra.mxu0 0
        %1267 = vmatprep.subr.bf16.mxu0 0
        %1268 = vmatpush1.bf16.xpose.msra.mxu0 0
        %1269 = vmatprep.subr.bf16.mxu0 0
        %1270 = vmatpush1.bf16.xpose.msra.mxu0 0
        %1271 = vmatprep.subr.bf16.mxu0 0
        %1272 = vmatpush1.bf16.xpose.msra.mxu0 0
        %1273 = vmatprep.subr.bf16.mxu0 0
        %1274 = vmatpush1.bf16.xpose.msra.mxu0 0
        %1275 = vmatprep.subr.bf16.mxu0 0
        %1276 = vmatpush1.bf16.xpose.msra.mxu0 0
        %1277 = vmatprep.subr.bf16.mxu0 0
        %1278 = vmatpush1.bf16.xpose.msra.mxu0 0
        %1279 = vmatprep.subr.bf16.mxu0 0
        %1280 = vmatpush1.bf16.xpose.msra.mxu0 0
        %1281 = vmatprep.subr.bf16.mxu0 0
        %1282 = vmatpush1.bf16.xpose.msra.mxu0 0
        %1283 = vmatprep.mubr.bf16.mxu0 0
        %1284 = vmatmul.mubr.bf16.gmra.mrb[0].mxu0 %v1246
        %v1285 = vpop.f32.mrb[0].mxu0
        %v1286 = vadd.f32 0.0, %v1285
        %v1287 = vpop.f32.mrb[0].mxu0
        %v1288 = vpop.f32.mrb[0].mxu0
        %v1289 = vpop.f32.mrb[0].mxu0
        %1290 = vdwg.mxu0
        %v1292 = vsel %vm1244, %v965, 0
        %v1295 = vsel %vm1244, %v1104, 0
        %1297 = vmatprep.subr.bf16.mxu0 0
        %1298 = vmatpush1.bf16.xpose.msra.mxu0 %v1295
        %1299 = vmatprep.subr.bf16.mxu0 0
        %1300 = vmatpush1.bf16.xpose.msra.mxu0 0
        %1301 = vmatprep.subr.bf16.mxu0 0
        %1302 = vmatpush1.bf16.xpose.msra.mxu0 0
        %1303 = vmatprep.subr.bf16.mxu0 0
        %1304 = vmatpush1.bf16.xpose.msra.mxu0 0
        %1305 = vmatprep.subr.bf16.mxu0 0
        %1306 = vmatpush1.bf16.xpose.msra.mxu0 0
        %1307 = vmatprep.subr.bf16.mxu0 0
        %1308 = vmatpush1.bf16.xpose.msra.mxu0 0
        %1309 = vmatprep.subr.bf16.mxu0 0
        %1310 = vmatpush1.bf16.xpose.msra.mxu0 0
        %1311 = vmatprep.subr.bf16.mxu0 0
        %1312 = vmatpush1.bf16.xpose.msra.mxu0 0
        %1313 = vmatprep.subr.bf16.mxu0 0
        %1314 = vmatpush1.bf16.xpose.msra.mxu0 0
        %1315 = vmatprep.subr.bf16.mxu0 0
        %1316 = vmatpush1.bf16.xpose.msra.mxu0 0
        %1317 = vmatprep.subr.bf16.mxu0 0
        %1318 = vmatpush1.bf16.xpose.msra.mxu0 0
        %1319 = vmatprep.subr.bf16.mxu0 0
        %1320 = vmatpush1.bf16.xpose.msra.mxu0 0
        %1321 = vmatprep.subr.bf16.mxu0 0
        %1322 = vmatpush1.bf16.xpose.msra.mxu0 0
        %1323 = vmatprep.subr.bf16.mxu0 0
        %1324 = vmatpush1.bf16.xpose.msra.mxu0 0
        %1325 = vmatprep.subr.bf16.mxu0 0
        %1326 = vmatpush1.bf16.xpose.msra.mxu0 0
        %1327 = vmatprep.subr.bf16.mxu0 0
        %1328 = vmatpush1.bf16.xpose.msra.mxu0 0
        %1329 = vmatprep.mubr.bf16.mxu0 0
        %1330 = vmatmul.mubr.bf16.gmra.mrb[0].mxu0 %v1292
        %v1331 = vpop.f32.mrb[0].mxu0
        %v1332 = vadd.f32 0.0, %v1331
        %v1333 = vpop.f32.mrb[0].mxu0
        %v1334 = vpop.f32.mrb[0].mxu0
        %v1335 = vpop.f32.mrb[0].mxu0
        %1336 = vdwg.mxu0
        %v1338 = vlaneseq
        %v1339 = vshrl.u32 %v1338, 7
        %v1340 = vsub.s32 0, %v1339
        %v1341 = vrot.slane %v633, %v1340
        %v1343 = vadd.f32 %v1286, %v1341
        %v1344 = vadd.f32 %v1332, %v1341
        %vm1345 = vcmask 64512
        %v1346 = vsel %vm1345, %v1343, -inf
        %1347 = vmax.xlane.f32.xlu0 %v1346
        %v1348 = vpop.xlane.xlu0 %1347
        %v1349 = vsel %vm1345, %v1344, -inf
        %1350 = vmax.xlane.f32.xlu0 %v1349
        %v1351 = vpop.xlane.xlu0 %1350
        %v1352 = vsub.f32 %v1343, %v1348
        %v1353 = vsub.f32 %v1344, %v1351
        %v1354 = vmul.f32 %v1352, 1.442695
        %v1355 = vpow.pop %v1354
        %v1356 = vmul.f32 %v1353, 1.442695
        %v1357 = vpow.pop %v1356
        %v1358 = vsel %vm1345, %v1355, 0.0
        %1359 = vadd.xlane.f32.xlu0 %v1358
        %v1360 = vpop.xlane.xlu0 %1359
        %v1361 = vsel %vm1345, %v1357, 0.0
        %1362 = vadd.xlane.f32.xlu0 %v1361
        %v1363 = vpop.xlane.xlu0 %1362
        %v1364 = vrcp.pop %v1360
        %v1365 = vrcp.pop %v1363
        %v1366 = vmul.f32 %v1355, %v1364
        %v1367 = vmul.f32 %v1357, %v1365
        %v1368 = vpack.c.bf16 %v1366, %v1366
        %v1369 = vpack.c.bf16 %v1367, %v1367
        %v1371 = vsel %vm1345, %v1368, 0
        %vm1373 = vcmask 1043456
        %v1375 = vsel %vm1373, %v1240, 0
        %1377 = vmatprep.subr.bf16.mxu0 0
        %1378 = vmatpush1.bf16.msra.mxu0 %v1375
        %1379 = vmatprep.subr.bf16.mxu0 0
        %1380 = vmatpush1.bf16.msra.mxu0 0
        %1381 = vmatprep.subr.bf16.mxu0 0
        %1382 = vmatpush1.bf16.msra.mxu0 0
        %1383 = vmatprep.subr.bf16.mxu0 0
        %1384 = vmatpush1.bf16.msra.mxu0 0
        %1385 = vmatprep.subr.bf16.mxu0 0
        %1386 = vmatpush1.bf16.msra.mxu0 0
        %1387 = vmatprep.subr.bf16.mxu0 0
        %1388 = vmatpush1.bf16.msra.mxu0 0
        %1389 = vmatprep.subr.bf16.mxu0 0
        %1390 = vmatpush1.bf16.msra.mxu0 0
        %1391 = vmatprep.subr.bf16.mxu0 0
        %1392 = vmatpush1.bf16.msra.mxu0 0
        %1393 = vmatprep.subr.bf16.mxu0 0
        %1394 = vmatpush1.bf16.msra.mxu0 0
        %1395 = vmatprep.subr.bf16.mxu0 0
        %1396 = vmatpush1.bf16.msra.mxu0 0
        %1397 = vmatprep.subr.bf16.mxu0 0
        %1398 = vmatpush1.bf16.msra.mxu0 0
        %1399 = vmatprep.subr.bf16.mxu0 0
        %1400 = vmatpush1.bf16.msra.mxu0 0
        %1401 = vmatprep.subr.bf16.mxu0 0
        %1402 = vmatpush1.bf16.msra.mxu0 0
        %1403 = vmatprep.subr.bf16.mxu0 0
        %1404 = vmatpush1.bf16.msra.mxu0 0
        %1405 = vmatprep.subr.bf16.mxu0 0
        %1406 = vmatpush1.bf16.msra.mxu0 0
        %1407 = vmatprep.subr.bf16.mxu0 0
        %1408 = vmatpush1.bf16.msra.mxu0 0
        %1409 = vmatprep.mubr.bf16.mxu0 0
        %1410 = vmatmul.mubr.bf16.gmra.mrb[0].mxu0 %v1371
        %v1411 = vpop.f32.mrb[0].mxu0
        %v1412 = vadd.f32 0.0, %v1411
        %v1413 = vpop.f32.mrb[0].mxu0
        %v1414 = vpop.f32.mrb[0].mxu0
        %v1415 = vpop.f32.mrb[0].mxu0
        %1416 = vdwg.mxu0
        %v1418 = vsel %vm1345, %v1369, 0
        %v1421 = vsel %vm1373, %v1243, 0
        %1423 = vmatprep.subr.bf16.mxu0 0
        %1424 = vmatpush1.bf16.msra.mxu0 %v1421
        %1425 = vmatprep.subr.bf16.mxu0 0
        %1426 = vmatpush1.bf16.msra.mxu0 0
        %1427 = vmatprep.subr.bf16.mxu0 0
        %1428 = vmatpush1.bf16.msra.mxu0 0
        %1429 = vmatprep.subr.bf16.mxu0 0
        %1430 = vmatpush1.bf16.msra.mxu0 0
        %1431 = vmatprep.subr.bf16.mxu0 0
        %1432 = vmatpush1.bf16.msra.mxu0 0
        %1433 = vmatprep.subr.bf16.mxu0 0
        %1434 = vmatpush1.bf16.msra.mxu0 0
        %1435 = vmatprep.subr.bf16.mxu0 0
        %1436 = vmatpush1.bf16.msra.mxu0 0
        %1437 = vmatprep.subr.bf16.mxu0 0
        %1438 = vmatpush1.bf16.msra.mxu0 0
        %1439 = vmatprep.subr.bf16.mxu0 0
        %1440 = vmatpush1.bf16.msra.mxu0 0
        %1441 = vmatprep.subr.bf16.mxu0 0
        %1442 = vmatpush1.bf16.msra.mxu0 0
        %1443 = vmatprep.subr.bf16.mxu0 0
        %1444 = vmatpush1.bf16.msra.mxu0 0
        %1445 = vmatprep.subr.bf16.mxu0 0
        %1446 = vmatpush1.bf16.msra.mxu0 0
        %1447 = vmatprep.subr.bf16.mxu0 0
        %1448 = vmatpush1.bf16.msra.mxu0 0
        %1449 = vmatprep.subr.bf16.mxu0 0
        %1450 = vmatpush1.bf16.msra.mxu0 0
        %1451 = vmatprep.subr.bf16.mxu0 0
        %1452 = vmatpush1.bf16.msra.mxu0 0
        %1453 = vmatprep.subr.bf16.mxu0 0
        %1454 = vmatpush1.bf16.msra.mxu0 0
        %1455 = vmatprep.mubr.bf16.mxu0 0
        %1456 = vmatmul.mubr.bf16.gmra.mrb[0].mxu0 %v1418
        %v1457 = vpop.f32.mrb[0].mxu0
        %v1458 = vadd.f32 0.0, %v1457
        %v1459 = vpop.f32.mrb[0].mxu0
        %v1460 = vpop.f32.mrb[0].mxu0
        %v1461 = vpop.f32.mrb[0].mxu0
        %1462 = vdwg.mxu0
        %v1463 = vpack.c.bf16 %v1412, %v1412
        %v1465 = vunpack.c.l.s4 1983009808
        %v1466 = vunpack.c.0.s8 %v1465
        %v1467 = vlaneseq
        %v1468 = vshrl.u32 %v1467, 7
        %v1469 = vsub.s32 %v1466, %v1468
        %v1470 = vrot.slane %v1463, %v1469
        %v1471 = vcombine.high %v1470, 0
        %v1473 = vunpack.c.l.s4 1934713408
        %v1474 = vunpack.c.0.s8 %v1473
        %v1475 = vlaneseq
        %v1476 = vshrl.u32 %v1475, 7
        %v1477 = vsub.s32 %v1474, %v1476
        %v1478 = vrot.slane %v1470, %v1477
        %v1480 = vunpack.c.l.s4 1934713408
        %v1481 = vunpack.c.0.s8 %v1480
        %v1482 = vlaneseq
        %v1483 = vshrl.u32 %v1482, 7
        %v1484 = vsub.s32 %v1481, %v1483
        %v1485 = vrot.slane %v1471, %v1484
        %v1486 = vcombine.high %v1478, 0
        %v1487 = vcombine.high %v1485, 0
        %v1488 = vpack.c.bf16 %v1458, %v1458
        %v1490 = vunpack.c.l.s4 1983009808
        %v1491 = vunpack.c.0.s8 %v1490
        %v1492 = vlaneseq
        %v1493 = vshrl.u32 %v1492, 7
        %v1494 = vsub.s32 %v1491, %v1493
        %v1495 = vrot.slane %v1488, %v1494
        %v1496 = vcombine.high %v1495, 0
        %v1498 = vunpack.c.l.s4 1934713408
        %v1499 = vunpack.c.0.s8 %v1498
        %v1500 = vlaneseq
        %v1501 = vshrl.u32 %v1500, 7
        %v1502 = vsub.s32 %v1499, %v1501
        %v1503 = vrot.slane %v1495, %v1502
        %v1505 = vunpack.c.l.s4 1934713408
        %v1506 = vunpack.c.0.s8 %v1505
        %v1507 = vlaneseq
        %v1508 = vshrl.u32 %v1507, 7
        %v1509 = vsub.s32 %v1506, %v1508
        %v1510 = vrot.slane %v1496, %v1509
        %v1511 = vcombine.high %v1503, 0
        %v1512 = vcombine.high %v1510, 0
        %v1515 = vpack.i.b16 %v1503, %v1478
        %v1517 = vshrl.u32 %v1478, 16
        %v1518 = vshrl.u32 %v1503, 16
        %v1519 = vpack.i.b16 %v1518, %v1517
        %v1523 = vpack.i.b16 %v1511, %v1486
        %v1525 = vshrl.u32 %v1486, 16
        %v1526 = vshrl.u32 %v1511, 16
        %v1527 = vpack.i.b16 %v1526, %v1525
        %v1531 = vpack.i.b16 %v1510, %v1485
        %v1533 = vshrl.u32 %v1485, 16
        %v1534 = vshrl.u32 %v1510, 16
        %v1535 = vpack.i.b16 %v1534, %v1533
        %v1539 = vpack.i.b16 %v1512, %v1487
        %v1541 = vshrl.u32 %v1487, 16
        %v1542 = vshrl.u32 %v1512, 16
        %v1543 = vpack.i.b16 %v1542, %v1541
        %v1545 = vcombine.low %v1515, %v1531
        %v1547 = vunpack.c.l.s4 1983009808
        %v1548 = vunpack.c.0.s8 %v1547
        %v1549 = vlaneseq
        %v1550 = vshrl.u32 %v1549, 7
        %v1551 = vsub.s32 %v1548, %v1550
        %v1552 = vrot.slane %v1545, %v1551
        %v1553 = vcombine.low %v1523, %v1539
        %v1555 = vunpack.c.l.s4 1983009808
        %v1556 = vunpack.c.0.s8 %v1555
        %v1557 = vlaneseq
        %v1558 = vshrl.u32 %v1557, 7
        %v1559 = vsub.s32 %v1556, %v1558
        %v1560 = vrot.slane %v1553, %v1559
        %v1561 = vcombine.low %v1552, %v1560
        %v1563 = vunpack.c.l.s4 1934713408
        %v1564 = vunpack.c.0.s8 %v1563
        %v1565 = vlaneseq
        %v1566 = vshrl.u32 %v1565, 7
        %v1567 = vsub.s32 %v1564, %v1566
        %v1568 = vrot.slane %v1561, %v1567
        %v1569 = vcombine.low %v1519, %v1535
        %v1571 = vunpack.c.l.s4 1983009808
        %v1572 = vunpack.c.0.s8 %v1571
        %v1573 = vlaneseq
        %v1574 = vshrl.u32 %v1573, 7
        %v1575 = vsub.s32 %v1572, %v1574
        %v1576 = vrot.slane %v1569, %v1575
        %v1577 = vcombine.low %v1527, %v1543
        %v1579 = vunpack.c.l.s4 1983009808
        %v1580 = vunpack.c.0.s8 %v1579
        %v1581 = vlaneseq
        %v1582 = vshrl.u32 %v1581, 7
        %v1583 = vsub.s32 %v1580, %v1582
        %v1584 = vrot.slane %v1577, %v1583
        %v1585 = vcombine.low %v1576, %v1584
        %v1587 = vunpack.c.l.s4 1934713408
        %v1588 = vunpack.c.0.s8 %v1587
        %v1589 = vlaneseq
        %v1590 = vshrl.u32 %v1589, 7
        %v1591 = vsub.s32 %v1588, %v1590
        %v1592 = vrot.slane %v1585, %v1591
        %v1595 = vpack.i.b16 %v1592, %v1568
        %v1596 = vshrl.u32 %v1568, 16
        %v1597 = vshrl.u32 %v1592, 16
        %v1598 = vpack.i.b16 %v1597, %v1596
        %1599 = vrot.lane.b32.xlu0 %v1598, 16
        %v1600 = vpop.permute.xlu0 %1599
        %v1603 = vsel %vm1244, %v1595, %v1600
        %v1604 = vld [vmem:[%s8] sm:$0xf]
        %v1605 = vld [vmem:[%s8 + $0x4] sm:$0xf]
        %v1606 = vld [vmem:[%s8 + $0x8] sm:$0xf]
        %v1607 = vld [vmem:[%s8 + $0xc] sm:$0xf]
        %v1608 = vld [vmem:[#allocation7] sm:$0x1]
        %v1610 = vlaneseq
        %v1611 = vshrl.u32 %v1610, 7
        %v1612 = vsub.s32 0, %v1611
        %v1613 = vrot.slane %v1608, %v1612
        %v1619 = vunpack.c.l.b16 %v1604
        %v1620 = vunpack.c.l.b16 %v1605
        %v1621 = vunpack.c.l.b16 %v1606
        %v1622 = vunpack.c.l.b16 %v1607
        %v1623 = vpack.c.b16 %v1620, %v1619
        %v1624 = vpack.c.b16 %v1622, %v1621
        %v1627 = vsel %vm657, %v1603, 0
        %1629 = vmatprep.subr.bf16.mxu0 0
        %1630 = vmatpush1.bf16.msra.mxu0 %v1623
        %1631 = vmatprep.subr.bf16.mxu0 0
        %1632 = vmatpush1.bf16.msra.mxu0 %v1624
        %1633 = vmatprep.subr.bf16.mxu0 0
        %1634 = vmatpush1.bf16.msra.mxu0 0
        %1635 = vmatprep.subr.bf16.mxu0 0
        %1636 = vmatpush1.bf16.msra.mxu0 0
        %1637 = vmatprep.subr.bf16.mxu0 0
        %1638 = vmatpush1.bf16.msra.mxu0 0
        %1639 = vmatprep.subr.bf16.mxu0 0
        %1640 = vmatpush1.bf16.msra.mxu0 0
        %1641 = vmatprep.subr.bf16.mxu0 0
        %1642 = vmatpush1.bf16.msra.mxu0 0
        %1643 = vmatprep.subr.bf16.mxu0 0
        %1644 = vmatpush1.bf16.msra.mxu0 0
        %1645 = vmatprep.subr.bf16.mxu0 0
        %1646 = vmatpush1.bf16.msra.mxu0 0
        %1647 = vmatprep.subr.bf16.mxu0 0
        %1648 = vmatpush1.bf16.msra.mxu0 0
        %1649 = vmatprep.subr.bf16.mxu0 0
        %1650 = vmatpush1.bf16.msra.mxu0 0
        %1651 = vmatprep.subr.bf16.mxu0 0
        %1652 = vmatpush1.bf16.msra.mxu0 0
        %1653 = vmatprep.subr.bf16.mxu0 0
        %1654 = vmatpush1.bf16.msra.mxu0 0
        %1655 = vmatprep.subr.bf16.mxu0 0
        %1656 = vmatpush1.bf16.msra.mxu0 0
        %1657 = vmatprep.subr.bf16.mxu0 0
        %1658 = vmatpush1.bf16.msra.mxu0 0
        %1659 = vmatprep.subr.bf16.mxu0 0
        %1660 = vmatpush1.bf16.msra.mxu0 0
        %1661 = vmatprep.mubr.bf16.mxu0 0
        %1662 = vmatmul.mubr.bf16.gmra.mrb[0].mxu0 %v1627
        %v1663 = vpop.f32.mrb[0].mxu0
        %v1664 = vadd.f32 %v1613, %v1663
        %v1665 = vpop.f32.mrb[0].mxu0
        %v1666 = vpop.f32.mrb[0].mxu0
        %v1667 = vpop.f32.mrb[0].mxu0
        %1668 = vdwg.mxu0
        %v1669 = vadd.f32 %v1664, %v631
        %v1670 = vld [vmem:[%s10] sm:$0x1]
        %v1671 = vld [vmem:[%s11] sm:$0x1]
        %v1672 = vsel %vm657, %v1669, 0.0
        %1673 = vadd.xlane.f32.xlu0 %v1672
        %v1674 = vpop.xlane.xlu0 %1673
        %v1675 = vrcp.pop 32.0
        %v1676 = vmul.f32 %v1674, %v1675
        %v1677 = vsub.f32 %v1669, %v1676
        %v1678 = vmul.f32 %v1677, %v1677
        %v1679 = vsel %vm657, %v1678, 0.0
        %1680 = vadd.xlane.f32.xlu0 %v1679
        %v1681 = vpop.xlane.xlu0 %1680
        %v1682 = vmul.f32 %v1681, %v1675
        %v1683 = vadd.f32 %v1682, 1e-12
        %v1684 = vrsqrt.pop %v1683
        %v1685 = vmul.f32 %v1683, %v1684
        %vm1686 = vcmp.eq.f32.partialorder %v1683, inf
        %v1687 = vsel %vm1686, %v1683, %v1685
        %vm1688 = vcmp.eq.f32.partialorder %v1683, 0.0
        %v1689 = vand.u32 %v1683, 2147483648
        %v1690 = vsel %vm1688, %v1689, %v1687
        %v1691 = vrcp.pop %v1690
        %v1692 = vmul.f32 %v1677, %v1691
        %v1694 = vlaneseq
        %v1695 = vshrl.u32 %v1694, 7
        %v1696 = vsub.s32 0, %v1695
        %v1697 = vrot.slane %v1670, %v1696
        %v1699 = vmul.f32 %v1697, %v1692
        %v1701 = vlaneseq
        %v1702 = vshrl.u32 %v1701, 7
        %v1703 = vsub.s32 0, %v1702
        %v1704 = vrot.slane %v1671, %v1703
        %v1706 = vadd.f32 %v1699, %v1704
        %v1707 = vpack.c.bf16 %v1706, %v1706
        %v1708 = vld [vmem:[%s12] sm:$0xf]
        %v1709 = vld [vmem:[%s12 + $0x4] sm:$0xf]
        %v1710 = vld [vmem:[%s12 + $0x8] sm:$0xf]
        %v1711 = vld [vmem:[%s12 + $0xc] sm:$0xf]
        %v1712 = vld [vmem:[%s13] sm:$0x1]
        %v1714 = vlaneseq
        %v1715 = vshrl.u32 %v1714, 7
        %v1716 = vsub.s32 0, %v1715
        %v1717 = vrot.slane %v1712, %v1716
        %v1723 = vunpack.c.l.b16 %v1708
        %v1724 = vunpack.c.l.b16 %v1709
        %v1725 = vunpack.c.l.b16 %v1710
        %v1726 = vunpack.c.l.b16 %v1711
        %v1727 = vpack.c.b16 %v1724, %v1723
        %v1728 = vpack.c.b16 %v1726, %v1725
        %v1732 = vsel %vm657, %v1707, 0
        %1734 = vmatprep.subr.bf16.mxu0 0
        %1735 = vmatpush1.bf16.msra.mxu0 %v1727
        %1736 = vmatprep.subr.bf16.mxu0 0
        %1737 = vmatpush1.bf16.msra.mxu0 %v1728
        %1738 = vmatprep.subr.bf16.mxu0 0
        %1739 = vmatpush1.bf16.msra.mxu0 0
        %1740 = vmatprep.subr.bf16.mxu0 0
        %1741 = vmatpush1.bf16.msra.mxu0 0
        %1742 = vmatprep.subr.bf16.mxu0 0
        %1743 = vmatpush1.bf16.msra.mxu0 0
        %1744 = vmatprep.subr.bf16.mxu0 0
        %1745 = vmatpush1.bf16.msra.mxu0 0
        %1746 = vmatprep.subr.bf16.mxu0 0
        %1747 = vmatpush1.bf16.msra.mxu0 0
        %1748 = vmatprep.subr.bf16.mxu0 0
        %1749 = vmatpush1.bf16.msra.mxu0 0
        %1750 = vmatprep.subr.bf16.mxu0 0
        %1751 = vmatpush1.bf16.msra.mxu0 0
        %1752 = vmatprep.subr.bf16.mxu0 0
        %1753 = vmatpush1.bf16.msra.mxu0 0
        %1754 = vmatprep.subr.bf16.mxu0 0
        %1755 = vmatpush1.bf16.msra.mxu0 0
        %1756 = vmatprep.subr.bf16.mxu0 0
        %1757 = vmatpush1.bf16.msra.mxu0 0
        %1758 = vmatprep.subr.bf16.mxu0 0
        %1759 = vmatpush1.bf16.msra.mxu0 0
        %1760 = vmatprep.subr.bf16.mxu0 0
        %1761 = vmatpush1.bf16.msra.mxu0 0
        %1762 = vmatprep.subr.bf16.mxu0 0
        %1763 = vmatpush1.bf16.msra.mxu0 0
        %1764 = vmatprep.subr.bf16.mxu0 0
        %1765 = vmatpush1.bf16.msra.mxu0 0
        %1766 = vmatprep.mubr.bf16.mxu0 0
        %1767 = vmatmul.mubr.bf16.gmra.mrb[0].mxu0 %v1732
        %v1768 = vpop.f32.mrb[0].mxu0
        %v1769 = vadd.f32 %v1717, %v1768
        %v1770 = vpop.f32.mrb[0].mxu0
        %v1771 = vpop.f32.mrb[0].mxu0
        %v1772 = vpop.f32.mrb[0].mxu0
        %1773 = vdwg.mxu0
        %v1774 = vmul.f32 %v1769, 0.5
        %v1775 = vrcp.pop 1.4142135
        %v1776 = vmul.f32 %v1769, %v1775
        %v1777 = verf.f32.pop %v1776
        %v1778 = vadd.f32 %v1777, 1.0
        %v1779 = vmul.f32 %v1774, %v1778
        %v1780 = vpack.c.bf16 %v1779, %v1779
        %v1781 = vld [vmem:[%s14] sm:$0xf]
        %v1782 = vld [vmem:[%s14 + $0x4] sm:$0xf]
        %v1783 = vld [vmem:[%s14 + $0x8] sm:$0xf]
        %v1784 = vld [vmem:[%s14 + $0xc] sm:$0xf]
        %v1785 = vld [vmem:[%s14 + $0x10] sm:$0xf]
        %v1786 = vld [vmem:[%s14 + $0x14] sm:$0xf]
        %v1787 = vld [vmem:[%s14 + $0x18] sm:$0xf]
        %v1788 = vld [vmem:[%s14 + $0x1c] sm:$0xf]
        %v1789 = vld [vmem:[%s14 + $0x20] sm:$0xf]
        %v1790 = vld [vmem:[%s14 + $0x24] sm:$0xf]
        %v1791 = vld [vmem:[%s14 + $0x28] sm:$0xf]
        %v1792 = vld [vmem:[%s14 + $0x2c] sm:$0xf]
        %v1793 = vld [vmem:[%s14 + $0x30] sm:$0xf]
        %v1794 = vld [vmem:[%s14 + $0x34] sm:$0xf]
        %v1795 = vld [vmem:[%s14 + $0x38] sm:$0xf]
        %v1796 = vld [vmem:[%s14 + $0x3c] sm:$0xf]
        %v1797 = vld [vmem:[%s15] sm:$0x1]
        %v1799 = vlaneseq
        %v1800 = vshrl.u32 %v1799, 7
        %v1801 = vsub.s32 0, %v1800
        %v1802 = vrot.slane %v1797, %v1801
        %v1820 = vunpack.c.l.b16 %v1781
        %v1821 = vunpack.c.l.b16 %v1782
        %v1822 = vunpack.c.l.b16 %v1783
        %v1823 = vunpack.c.l.b16 %v1784
        %v1824 = vunpack.c.l.b16 %v1785
        %v1825 = vunpack.c.l.b16 %v1786
        %v1826 = vunpack.c.l.b16 %v1787
        %v1827 = vunpack.c.l.b16 %v1788
        %v1828 = vunpack.c.l.b16 %v1789
        %v1829 = vunpack.c.l.b16 %v1790
        %v1830 = vunpack.c.l.b16 %v1791
        %v1831 = vunpack.c.l.b16 %v1792
        %v1832 = vunpack.c.l.b16 %v1793
        %v1833 = vunpack.c.l.b16 %v1794
        %v1834 = vunpack.c.l.b16 %v1795
        %v1835 = vunpack.c.l.b16 %v1796
        %v1836 = vpack.c.b16 %v1821, %v1820
        %v1837 = vpack.c.b16 %v1823, %v1822
        %v1838 = vpack.c.b16 %v1825, %v1824
        %v1839 = vpack.c.b16 %v1827, %v1826
        %v1840 = vpack.c.b16 %v1829, %v1828
        %v1841 = vpack.c.b16 %v1831, %v1830
        %v1842 = vpack.c.b16 %v1833, %v1832
        %v1843 = vpack.c.b16 %v1835, %v1834
        %1852 = vmatprep.subr.bf16.mxu0 0
        %1853 = vmatpush1.bf16.msra.mxu0 %v1836
        %1854 = vmatprep.subr.bf16.mxu0 0
        %1855 = vmatpush1.bf16.msra.mxu0 %v1837
        %1856 = vmatprep.subr.bf16.mxu0 0
        %1857 = vmatpush1.bf16.msra.mxu0 %v1838
        %1858 = vmatprep.subr.bf16.mxu0 0
        %1859 = vmatpush1.bf16.msra.mxu0 %v1839
        %1860 = vmatprep.subr.bf16.mxu0 0
        %1861 = vmatpush1.bf16.msra.mxu0 %v1840
        %1862 = vmatprep.subr.bf16.mxu0 0
        %1863 = vmatpush1.bf16.msra.mxu0 %v1841
        %1864 = vmatprep.subr.bf16.mxu0 0
        %1865 = vmatpush1.bf16.msra.mxu0 %v1842
        %1866 = vmatprep.subr.bf16.mxu0 0
        %1867 = vmatpush1.bf16.msra.mxu0 %v1843
        %1868 = vmatprep.subr.bf16.mxu0 0
        %1869 = vmatpush1.bf16.msra.mxu0 0
        %1870 = vmatprep.subr.bf16.mxu0 0
        %1871 = vmatpush1.bf16.msra.mxu0 0
        %1872 = vmatprep.subr.bf16.mxu0 0
        %1873 = vmatpush1.bf16.msra.mxu0 0
        %1874 = vmatprep.subr.bf16.mxu0 0
        %1875 = vmatpush1.bf16.msra.mxu0 0
        %1876 = vmatprep.subr.bf16.mxu0 0
        %1877 = vmatpush1.bf16.msra.mxu0 0
        %1878 = vmatprep.subr.bf16.mxu0 0
        %1879 = vmatpush1.bf16.msra.mxu0 0
        %1880 = vmatprep.subr.bf16.mxu0 0
        %1881 = vmatpush1.bf16.msra.mxu0 0
        %1882 = vmatprep.subr.bf16.mxu0 0
        %1883 = vmatpush1.bf16.msra.mxu0 0
        %1884 = vmatprep.mubr.bf16.mxu0 0
        %1885 = vmatmul.mubr.bf16.gmra.mrb[0].mxu0 %v1780
        %v1886 = vpop.f32.mrb[0].mxu0
        %v1887 = vadd.f32 %v1802, %v1886
        %v1888 = vpop.f32.mrb[0].mxu0
        %v1889 = vpop.f32.mrb[0].mxu0
        %v1890 = vpop.f32.mrb[0].mxu0
        %1891 = vdwg.mxu0
        %v1892 = vadd.f32 %v1887, %v1706
        %v1893 = vld [vmem:[%s16] sm:$0x1]
        %v1894 = vld [vmem:[%s17] sm:$0x1]
        %v1895 = vsel %vm657, %v1892, 0.0
        %1896 = vadd.xlane.f32.xlu0 %v1895
        %v1897 = vpop.xlane.xlu0 %1896
        %v1898 = vmul.f32 %v1897, %v1675
        %v1899 = vsub.f32 %v1892, %v1898
        %v1900 = vmul.f32 %v1899, %v1899
        %v1901 = vsel %vm657, %v1900, 0.0
        %1902 = vadd.xlane.f32.xlu0 %v1901
        %v1903 = vpop.xlane.xlu0 %1902
        %v1904 = vmul.f32 %v1903, %v1675
        %v1905 = vadd.f32 %v1904, 1e-12
        %v1906 = vrsqrt.pop %v1905
        %v1907 = vmul.f32 %v1905, %v1906
        %vm1908 = vcmp.eq.f32.partialorder %v1905, inf
        %v1909 = vsel %vm1908, %v1905, %v1907
        %vm1910 = vcmp.eq.f32.partialorder %v1905, 0.0
        %v1911 = vand.u32 %v1905, 2147483648
        %v1912 = vsel %vm1910, %v1911, %v1909
        %v1913 = vrcp.pop %v1912
        %v1914 = vmul.f32 %v1899, %v1913
        %v1916 = vlaneseq
        %v1917 = vshrl.u32 %v1916, 7
        %v1918 = vsub.s32 0, %v1917
        %v1919 = vrot.slane %v1893, %v1918
        %v1921 = vmul.f32 %v1919, %v1914
        %v1923 = vlaneseq
        %v1924 = vshrl.u32 %v1923, 7
        %v1925 = vsub.s32 0, %v1924
        %v1926 = vrot.slane %v1894, %v1925
        %v1928 = vadd.f32 %v1921, %v1926
        %1929 = vst.msk [vmem:[%s625] sm:$0xff] %vm657, %v1928
        %s1930 = sand.u32 %s432, 1
        %s1931 = scalar_lea.sflag [#allocation4], %s1930
        %s1932 = sand.u32 %s432, 1
        %s1933 = smul.addr %s1932, 8
        %s1934 = scalar_lea.vmem [#allocation8], %s1933
        // Predicated region
        $region105: #{tpu_custom_call.1} parent=91 // pred_check
          %p1935 = pneg %p442
        $region106: #{tpu_custom_call.1} parent=91 // pred_check_branch
          %1937 = sbr.rel (%p1935) target = $region108
        $region107: #{tpu_custom_call.1} parent=91 // pred_region
          %s1939 = ssub.s32 128, 128
          %1940 = vsyncadd %s1931, %s1939
          %s1941 = smul.addr %s36, 128
          %s1942 = scalar_lea.hbm %s18, %s1941
          %s1944 = sshll.u32 %s1934, 4
          %s1945 = int_to_ptr.vmem [resolvable:$true] %s1944
          %1947 = dma.vmem_to_hbm [thread:$0]  %s1945, 128, %s1942, %s1931
        $region108: #{tpu_custom_call.1} parent=91 // pred_fallthru
          _
      $region92: #{tpu_custom_call.1} parent=5 // pred_fallthru
        _
      %p1948 = scmp.le.s32.totalorder 2, %s31
      // Predicated region
      $region109: #{tpu_custom_call.1} parent=5 // pred_check
        %p1949 = pneg %p1948
      $region110: #{tpu_custom_call.1} parent=5 // pred_check_branch
        %1951 = sbr.rel (%p1949) target = $region112
      $region111: #{tpu_custom_call.1} parent=5 // pred_region
        %s1952 = ssub.s32 %s31, 2
        // Predicated region
        $region113: #{tpu_custom_call.1} parent=111 // pred_check
          %p1953 = pneg %p448
        $region114: #{tpu_custom_call.1} parent=111 // pred_check_branch
          %1955 = sbr.rel (%p1953) target = $region116
        $region115: #{tpu_custom_call.1} parent=111 // pred_region
          %s1956 = sand.u32 %s433, 1
          %s1957 = scalar_lea.sflag [#allocation4], %s1956
          %s1958 = sand.u32 %s433, 1
          %s1959 = smul.addr %s1958, 8
          %s1960 = scalar_lea.vmem [#allocation8], %s1959
          %1961 = dma.done %s1957, 128
        $region116: #{tpu_custom_call.1} parent=111 // pred_fallthru
          _
      $region112: #{tpu_custom_call.1} parent=5 // pred_fallthru
        _
    $region6: #{tpu_custom_call.1} parent=1 // loop_footer
      %s35 = sadd.s32 1, %s31
    $region7: #{tpu_custom_call.1} parent=1 // loop_footer_branch
      %30 = sbr.rel target = $region3
    $region8: #{tpu_custom_call.1} parent=1 // loop_exit
      _
    %1962 = vsyncpa [#allocation3], 1
    %s1963 = scalar_lea.sflag [#allocation3], 1
    %1964 = vsyncpa %s1963, 1
    %1965 = vsyncpa [#allocation6], 1
    %1966 = vsyncpa [#allocation4], 1
    %s1967 = scalar_lea.sflag [#allocation4], 1
    %1968 = vsyncpa %s1967, 1

// kernel: tpu_custom_call.1
$region0: #{tpu_custom_call.1}
  #allocation0 [shape = 'u32[]', space=smem, size = 0x4, offset = 0x4, fixed_abs, tag = 'smem constant byte address 0x4 - core index']
  #allocation1 [shape = 'u32[144,128]{1,0:T(1,128)}', space=vmem, size = 0x12000, scoped, tag = 'internal scratch']
  %s0 = inlined_call_operand.hbm [shape: f32[2,1,8], index: 0, kind: input, shape index: {}]
  %s1 = inlined_call_operand.vmem [shape: f32[2,8,32], index: 1, kind: input, shape index: {}]
  %s2 = inlined_call_operand.vmem [shape: bf16[32,32], index: 2, kind: input, shape index: {}]
  %s3 = inlined_call_operand.vmem [shape: f32[1,32], index: 3, kind: input, shape index: {}]
  %s4 = inlined_call_operand.vmem [shape: bf16[32,32], index: 4, kind: input, shape index: {}]
  %s5 = inlined_call_operand.vmem [shape: f32[1,32], index: 5, kind: input, shape index: {}]
  %s6 = inlined_call_operand.vmem [shape: bf16[32,32], index: 6, kind: input, shape index: {}]
  %s7 = inlined_call_operand.hbm [shape: f32[1,32], index: 7, kind: input, shape index: {}]
  %s8 = inlined_call_operand.vmem [shape: bf16[32,32], index: 8, kind: input, shape index: {}]
  %s9 = inlined_call_operand.hbm [shape: f32[1,32], index: 9, kind: input, shape index: {}]
  %s10 = inlined_call_operand.vmem [shape: f32[1,32], index: 10, kind: input, shape index: {}]
  %s11 = inlined_call_operand.vmem [shape: f32[1,32], index: 11, kind: input, shape index: {}]
  %s12 = inlined_call_operand.vmem [shape: bf16[32,128], index: 12, kind: input, shape index: {}]
  %s13 = inlined_call_operand.vmem [shape: f32[1,128], index: 13, kind: input, shape index: {}]
  %s14 = inlined_call_operand.vmem [shape: bf16[128,32], index: 14, kind: input, shape index: {}]
  %s15 = inlined_call_operand.vmem [shape: f32[1,32], index: 15, kind: input, shape index: {}]
  %s16 = inlined_call_operand.vmem [shape: f32[1,32], index: 16, kind: input, shape index: {}]
  %s17 = inlined_call_operand.vmem [shape: f32[1,32], index: 17, kind: input, shape index: {}]
  %s18 = inlined_call_operand.hbm [shape: f32[2,8,32], index: 18, kind: output, shape index: {}]
  %s19 = sld [smem:[#allocation0]]
  $region117: #{tpu_custom_call.1} parent=0
    _
  %s21 = ssub.s32 1, %s19
  %s22 = scalar_select 0, %s21, %s19
  $region1: #{tpu_custom_call.1} parent=0
    #allocation2 [shape = 'u8[1024]{0}', space=vmem, size = 0x400, scoped, tag = 'input window, operand 0']
    #allocation3 [shape = 's32[2]{0}', space=sflag, size = 0x8, scoped, tag = 'scoped memory for tpu_custom_call.1']
    #allocation4 [shape = 's32[2]{0}', space=sflag, size = 0x8, scoped, tag = 'scoped memory for tpu_custom_call.1']
    #allocation5 [shape = 'u8[512]{0}', space=vmem, size = 0x400, scoped, tag = 'input window, operand 7, single buffered']
    #allocation6 [shape = 's32[1]{0}', space=sflag, size = 0x4, scoped, tag = 'scoped memory for tpu_custom_call.1']
    #allocation7 [shape = 'u8[512]{0}', space=vmem, size = 0x400, scoped, tag = 'input window, operand 9, single buffered']
    #allocation8 [shape = 'u8[8192]{0}', space=vmem, size = 0x2000, scoped, tag = 'output window, operand 0']
    %23 = vsyncpa [#allocation3], 0
    %s24 = scalar_lea.sflag [#allocation3], 1
    %25 = vsyncpa %s24, 0
    %26 = vsyncpa [#allocation6], 0
    %27 = vsyncpa [#allocation4], 0
    %s28 = scalar_lea.sflag [#allocation4], 1
    %29 = vsyncpa %s28, 0
    loop: start=0, step=1, limit=4
    $region2: #{tpu_custom_call.1} parent=1 // loop_pre_header
      _
    $region3: #{tpu_custom_call.1} parent=1 // loop_header
      %s31 = sphi 0, %s35
      %p32 = scmp.ge.s32.totalorder %s31, 4
      %s41 = sphi 0, %s43
      %s44 = sphi 0, %s41
      %s45 = sphi 0, %s44
      %s61 = sphi 0, %s45
      %s67 = sphi 0, %s69
      %s70 = sphi 0, %s67
      %s71 = sphi 0, %s70
      %s87 = sphi 0, %s71
      %s91 = sphi 0, %s91
      %s93 = sphi 0, %s91
      %s94 = sphi 0, %s93
      %s108 = sphi 0, %s94
      %s112 = sphi 0, %s112
      %s114 = sphi 0, %s112
      %s115 = sphi 0, %s114
      %s129 = sphi 0, %s115
      %s133 = sphi 0, %s133
      %s135 = sphi 0, %s133
      %s136 = sphi 0, %s135
      %s150 = sphi 0, %s136
      %s154 = sphi 0, %s154
      %s156 = sphi 0, %s154
      %s157 = sphi 0, %s156
      %s171 = sphi 0, %s157
      %s175 = sphi 0, %s175
      %s177 = sphi 0, %s175
      %s178 = sphi 0, %s177
      %s192 = sphi 0, %s178
      %s196 = sphi 0, %s196
      %s198 = sphi 0, %s196
      %s199 = sphi 0, %s198
      %s213 = sphi 0, %s199
      %s217 = sphi 0, %s217
      %s219 = sphi 0, %s217
      %s220 = sphi 0, %s219
      %s234 = sphi 0, %s220
      %s238 = sphi 0, %s238
      %s240 = sphi 0, %s238
      %s241 = sphi 0, %s240
      %s255 = sphi 0, %s241
      %s259 = sphi 0, %s259
      %s261 = sphi 0, %s259
      %s262 = sphi 0, %s261
      %s276 = sphi 0, %s262
      %s280 = sphi 0, %s280
      %s282 = sphi 0, %s280
      %s283 = sphi 0, %s282
      %s297 = sphi 0, %s283
      %s301 = sphi 0, %s301
      %s303 = sphi 0, %s301
      %s304 = sphi 0, %s303
      %s318 = sphi 0, %s304
      %s322 = sphi 0, %s322
      %s324 = sphi 0, %s322
      %s325 = sphi 0, %s324
      %s339 = sphi 0, %s325
      %s343 = sphi 0, %s343
      %s345 = sphi 0, %s343
      %s346 = sphi 0, %s345
      %s360 = sphi 0, %s346
      %s364 = sphi 0, %s364
      %s366 = sphi 0, %s364
      %s367 = sphi 0, %s366
      %s381 = sphi 0, %s367
      %s385 = sphi 0, %s385
      %s387 = sphi 0, %s385
      %s388 = sphi 0, %s387
      %s402 = sphi 0, %s388
      %s406 = sphi 0, %s406
      %s408 = sphi 0, %s406
      %s409 = sphi 0, %s408
      %s423 = sphi 0, %s409
      %s429 = sphi 0, %s431
      %s432 = sphi 0, %s429
      %s433 = sphi 0, %s432
      %s449 = sphi 0, %s433
    $region4: #{tpu_custom_call.1} parent=1 // loop_header_branch
      %34 = sbr.rel (%p32) target = $region8
    $region5: #{tpu_custom_call.1} parent=1 // loop_body
      %s36 = ssub.s32 %s31, 1
      %s37 = ssub.s32 %s31, 2
      %s38 = sadd.s32 %s31, 1
      %s39 = ssub.s32 %s31, %s38
      %p40 = scmp.eq.s32.totalorder %s39, 0
      %s42 = sadd.s32 %s41, 1
      %s43 = scalar_select %p40, %s41, %s42
      %p46 = pneg %p40
      %p47 = scmp.eq.s32.totalorder %s31, 1
      %p48 = por %p46, %p47
      %p49 = scmp.ne.s32.totalorder %s41, %s44
      %p50 = scmp.eq.s32.totalorder %s31, 0
      %p51 = por %p49, %p50
      %p52 = scmp.ne.s32.totalorder %s41, %s44
      %p53 = scmp.eq.s32.totalorder %s36, 1
      %p54 = por %p52, %p53
      %p55 = scmp.ne.s32.totalorder %s44, %s45
      %p56 = scmp.eq.s32.totalorder %s36, 0
      %p57 = por %p55, %p56
      %p58 = scmp.ne.s32.totalorder %s44, %s45
      %p59 = scmp.eq.s32.totalorder %s37, 1
      %p60 = por %p58, %p59
      %p62 = scmp.ne.s32.totalorder %s45, %s61
      %p63 = scmp.eq.s32.totalorder %s37, 0
      %p64 = por %p62, %p63
      %s65 = ssub.s32 %s31, %s38
      %p66 = scmp.eq.s32.totalorder %s65, 0
      %s68 = sadd.s32 %s67, 1
      %s69 = scalar_select %p66, %s67, %s68
      %p72 = pneg %p66
      %p73 = scmp.eq.s32.totalorder %s31, 1
      %p74 = por %p72, %p73
      %p75 = scmp.ne.s32.totalorder %s67, %s70
      %p76 = scmp.eq.s32.totalorder %s31, 0
      %p77 = por %p75, %p76
      %p78 = scmp.ne.s32.totalorder %s67, %s70
      %p79 = scmp.eq.s32.totalorder %s36, 1
      %p80 = por %p78, %p79
      %p81 = scmp.ne.s32.totalorder %s70, %s71
      %p82 = scmp.eq.s32.totalorder %s36, 0
      %p83 = por %p81, %p82
      %p84 = scmp.ne.s32.totalorder %s70, %s71
      %p85 = scmp.eq.s32.totalorder %s37, 1
      %p86 = por %p84, %p85
      %p88 = scmp.ne.s32.totalorder %s71, %s87
      %p89 = scmp.eq.s32.totalorder %s37, 0
      %p90 = por %p88, %p89
      %s92 = sadd.s32 %s91, 1
      %p95 = scmp.eq.s32.totalorder %s31, 1
      %p96 = scmp.ne.s32.totalorder %s91, %s93
      %p97 = scmp.eq.s32.totalorder %s31, 0
      %p98 = por %p96, %p97
      %p99 = scmp.ne.s32.totalorder %s91, %s93
      %p100 = scmp.eq.s32.totalorder %s36, 1
      %p101 = por %p99, %p100
      %p102 = scmp.ne.s32.totalorder %s93, %s94
      %p103 = scmp.eq.s32.totalorder %s36, 0
      %p104 = por %p102, %p103
      %p105 = scmp.ne.s32.totalorder %s93, %s94
      %p106 = scmp.eq.s32.totalorder %s37, 1
      %p107 = por %p105, %p106
      %p109 = scmp.ne.s32.totalorder %s94, %s108
      %p110 = scmp.eq.s32.totalorder %s37, 0
      %p111 = por %p109, %p110
      %s113 = sadd.s32 %s112, 1
      %p116 = scmp.eq.s32.totalorder %s31, 1
      %p117 = scmp.ne.s32.totalorder %s112, %s114
      %p118 = scmp.eq.s32.totalorder %s31, 0
      %p119 = por %p117, %p118
      %p120 = scmp.ne.s32.totalorder %s112, %s114
      %p121 = scmp.eq.s32.totalorder %s36, 1
      %p122 = por %p120, %p121
      %p123 = scmp.ne.s32.totalorder %s114, %s115
      %p124 = scmp.eq.s32.totalorder %s36, 0
      %p125 = por %p123, %p124
      %p126 = scmp.ne.s32.totalorder %s114, %s115
      %p127 = scmp.eq.s32.totalorder %s37, 1
      %p128 = por %p126, %p127
      %p130 = scmp.ne.s32.totalorder %s115, %s129
      %p131 = scmp.eq.s32.totalorder %s37, 0
      %p132 = por %p130, %p131
      %s134 = sadd.s32 %s133, 1
      %p137 = scmp.eq.s32.totalorder %s31, 1
      %p138 = scmp.ne.s32.totalorder %s133, %s135
      %p139 = scmp.eq.s32.totalorder %s31, 0
      %p140 = por %p138, %p139
      %p141 = scmp.ne.s32.totalorder %s133, %s135
      %p142 = scmp.eq.s32.totalorder %s36, 1
      %p143 = por %p141, %p142
      %p144 = scmp.ne.s32.totalorder %s135, %s136
      %p145 = scmp.eq.s32.totalorder %s36, 0
      %p146 = por %p144, %p145
      %p147 = scmp.ne.s32.totalorder %s135, %s136
      %p148 = scmp.eq.s32.totalorder %s37, 1
      %p149 = por %p147, %p148
      %p151 = scmp.ne.s32.totalorder %s136, %s150
      %p152 = scmp.eq.s32.totalorder %s37, 0
      %p153 = por %p151, %p152
      %s155 = sadd.s32 %s154, 1
      %p158 = scmp.eq.s32.totalorder %s31, 1
      %p159 = scmp.ne.s32.totalorder %s154, %s156
      %p160 = scmp.eq.s32.totalorder %s31, 0
      %p161 = por %p159, %p160
      %p162 = scmp.ne.s32.totalorder %s154, %s156
      %p163 = scmp.eq.s32.totalorder %s36, 1
      %p164 = por %p162, %p163
      %p165 = scmp.ne.s32.totalorder %s156, %s157
      %p166 = scmp.eq.s32.totalorder %s36, 0
      %p167 = por %p165, %p166
      %p168 = scmp.ne.s32.totalorder %s156, %s157
      %p169 = scmp.eq.s32.totalorder %s37, 1
      %p170 = por %p168, %p169
      %p172 = scmp.ne.s32.totalorder %s157, %s171
      %p173 = scmp.eq.s32.totalorder %s37, 0
      %p174 = por %p172, %p173
      %s176 = sadd.s32 %s175, 1
      %p179 = scmp.eq.s32.totalorder %s31, 1
      %p180 = scmp.ne.s32.totalorder %s175, %s177
      %p181 = scmp.eq.s32.totalorder %s31, 0
      %p182 = por %p180, %p181
      %p183 = scmp.ne.s32.totalorder %s175, %s177
      %p184 = scmp.eq.s32.totalorder %s36, 1
      %p185 = por %p183, %p184
      %p186 = scmp.ne.s32.totalorder %s177, %s178
      %p187 = scmp.eq.s32.totalorder %s36, 0
      %p188 = por %p186, %p187
      %p189 = scmp.ne.s32.totalorder %s177, %s178
      %p190 = scmp.eq.s32.totalorder %s37, 1
      %p191 = por %p189, %p190
      %p193 = scmp.ne.s32.totalorder %s178, %s192
      %p194 = scmp.eq.s32.totalorder %s37, 0
      %p195 = por %p193, %p194
      %s197 = sadd.s32 %s196, 1
      %p200 = scmp.eq.s32.totalorder %s31, 1
      %p201 = scmp.ne.s32.totalorder %s196, %s198
      %p202 = scmp.eq.s32.totalorder %s31, 0
      %p203 = por %p201, %p202
      %p204 = scmp.ne.s32.totalorder %s196, %s198
      %p205 = scmp.eq.s32.totalorder %s36, 1
      %p206 = por %p204, %p205
      %p207 = scmp.ne.s32.totalorder %s198, %s199
      %p208 = scmp.eq.s32.totalorder %s36, 0
      %p209 = por %p207, %p208
      %p210 = scmp.ne.s32.totalorder %s198, %s199
      %p211 = scmp.eq.s32.totalorder %s37, 1
      %p212 = por %p210, %p211
      %p214 = scmp.ne.s32.totalorder %s199, %s213
      %p215 = scmp.eq.s32.totalorder %s37, 0
      %p216 = por %p214, %p215
      %s218 = sadd.s32 %s217, 1
      %p221 = scmp.eq.s32.totalorder %s31, 1
      %p222 = scmp.ne.s32.totalorder %s217, %s219
      %p223 = scmp.eq.s32.totalorder %s31, 0
      %p224 = por %p222, %p223
      %p225 = scmp.ne.s32.totalorder %s217, %s219
      %p226 = scmp.eq.s32.totalorder %s36, 1
      %p227 = por %p225, %p226
      %p228 = scmp.ne.s32.totalorder %s219, %s220
      %p229 = scmp.eq.s32.totalorder %s36, 0
      %p230 = por %p228, %p229
      %p231 = scmp.ne.s32.totalorder %s219, %s220
      %p232 = scmp.eq.s32.totalorder %s37, 1
      %p233 = por %p231, %p232
      %p235 = scmp.ne.s32.totalorder %s220, %s234
      %p236 = scmp.eq.s32.totalorder %s37, 0
      %p237 = por %p235, %p236
      %s239 = sadd.s32 %s238, 1
      %p242 = scmp.eq.s32.totalorder %s31, 1
      %p243 = scmp.ne.s32.totalorder %s238, %s240
      %p244 = scmp.eq.s32.totalorder %s31, 0
      %p245 = por %p243, %p244
      %p246 = scmp.ne.s32.totalorder %s238, %s240
      %p247 = scmp.eq.s32.totalorder %s36, 1
      %p248 = por %p246, %p247
      %p249 = scmp.ne.s32.totalorder %s240, %s241
      %p250 = scmp.eq.s32.totalorder %s36, 0
      %p251 = por %p249, %p250
      %p252 = scmp.ne.s32.totalorder %s240, %s241
      %p253 = scmp.eq.s32.totalorder %s37, 1
      %p254 = por %p252, %p253
      %p256 = scmp.ne.s32.totalorder %s241, %s255
      %p257 = scmp.eq.s32.totalorder %s37, 0
      %p258 = por %p256, %p257
      %s260 = sadd.s32 %s259, 1
      %p263 = scmp.eq.s32.totalorder %s31, 1
      %p264 = scmp.ne.s32.totalorder %s259, %s261
      %p265 = scmp.eq.s32.totalorder %s31, 0
      %p266 = por %p264, %p265
      %p267 = scmp.ne.s32.totalorder %s259, %s261
      %p268 = scmp.eq.s32.totalorder %s36, 1
      %p269 = por %p267, %p268
      %p270 = scmp.ne.s32.totalorder %s261, %s262
      %p271 = scmp.eq.s32.totalorder %s36, 0
      %p272 = por %p270, %p271
      %p273 = scmp.ne.s32.totalorder %s261, %s262
      %p274 = scmp.eq.s32.totalorder %s37, 1
      %p275 = por %p273, %p274
      %p277 = scmp.ne.s32.totalorder %s262, %s276
      %p278 = scmp.eq.s32.totalorder %s37, 0
      %p279 = por %p277, %p278
      %s281 = sadd.s32 %s280, 1
      %p284 = scmp.eq.s32.totalorder %s31, 1
      %p285 = scmp.ne.s32.totalorder %s280, %s282
      %p286 = scmp.eq.s32.totalorder %s31, 0
      %p287 = por %p285, %p286
      %p288 = scmp.ne.s32.totalorder %s280, %s282
      %p289 = scmp.eq.s32.totalorder %s36, 1
      %p290 = por %p288, %p289
      %p291 = scmp.ne.s32.totalorder %s282, %s283
      %p292 = scmp.eq.s32.totalorder %s36, 0
      %p293 = por %p291, %p292
      %p294 = scmp.ne.s32.totalorder %s282, %s283
      %p295 = scmp.eq.s32.totalorder %s37, 1
      %p296 = por %p294, %p295
      %p298 = scmp.ne.s32.totalorder %s283, %s297
      %p299 = scmp.eq.s32.totalorder %s37, 0
      %p300 = por %p298, %p299
      %s302 = sadd.s32 %s301, 1
      %p305 = scmp.eq.s32.totalorder %s31, 1
      %p306 = scmp.ne.s32.totalorder %s301, %s303
      %p307 = scmp.eq.s32.totalorder %s31, 0
      %p308 = por %p306, %p307
      %p309 = scmp.ne.s32.totalorder %s301, %s303
      %p310 = scmp.eq.s32.totalorder %s36, 1
      %p311 = por %p309, %p310
      %p312 = scmp.ne.s32.totalorder %s303, %s304
      %p313 = scmp.eq.s32.totalorder %s36, 0
      %p314 = por %p312, %p313
      %p315 = scmp.ne.s32.totalorder %s303, %s304
      %p316 = scmp.eq.s32.totalorder %s37, 1
      %p317 = por %p315, %p316
      %p319 = scmp.ne.s32.totalorder %s304, %s318
      %p320 = scmp.eq.s32.totalorder %s37, 0
      %p321 = por %p319, %p320
      %s323 = sadd.s32 %s322, 1
      %p326 = scmp.eq.s32.totalorder %s31, 1
      %p327 = scmp.ne.s32.totalorder %s322, %s324
      %p328 = scmp.eq.s32.totalorder %s31, 0
      %p329 = por %p327, %p328
      %p330 = scmp.ne.s32.totalorder %s322, %s324
      %p331 = scmp.eq.s32.totalorder %s36, 1
      %p332 = por %p330, %p331
      %p333 = scmp.ne.s32.totalorder %s324, %s325
      %p334 = scmp.eq.s32.totalorder %s36, 0
      %p335 = por %p333, %p334
      %p336 = scmp.ne.s32.totalorder %s324, %s325
      %p337 = scmp.eq.s32.totalorder %s37, 1
      %p338 = por %p336, %p337
      %p340 = scmp.ne.s32.totalorder %s325, %s339
      %p341 = scmp.eq.s32.totalorder %s37, 0
      %p342 = por %p340, %p341
      %s344 = sadd.s32 %s343, 1
      %p347 = scmp.eq.s32.totalorder %s31, 1
      %p348 = scmp.ne.s32.totalorder %s343, %s345
      %p349 = scmp.eq.s32.totalorder %s31, 0
      %p350 = por %p348, %p349
      %p351 = scmp.ne.s32.totalorder %s343, %s345
      %p352 = scmp.eq.s32.totalorder %s36, 1
      %p353 = por %p351, %p352
      %p354 = scmp.ne.s32.totalorder %s345, %s346
      %p355 = scmp.eq.s32.totalorder %s36, 0
      %p356 = por %p354, %p355
      %p357 = scmp.ne.s32.totalorder %s345, %s346
      %p358 = scmp.eq.s32.totalorder %s37, 1
      %p359 = por %p357, %p358
      %p361 = scmp.ne.s32.totalorder %s346, %s360
      %p362 = scmp.eq.s32.totalorder %s37, 0
      %p363 = por %p361, %p362
      %s365 = sadd.s32 %s364, 1
      %p368 = scmp.eq.s32.totalorder %s31, 1
      %p369 = scmp.ne.s32.totalorder %s364, %s366
      %p370 = scmp.eq.s32.totalorder %s31, 0
      %p371 = por %p369, %p370
      %p372 = scmp.ne.s32.totalorder %s364, %s366
      %p373 = scmp.eq.s32.totalorder %s36, 1
      %p374 = por %p372, %p373
      %p375 = scmp.ne.s32.totalorder %s366, %s367
      %p376 = scmp.eq.s32.totalorder %s36, 0
      %p377 = por %p375, %p376
      %p378 = scmp.ne.s32.totalorder %s366, %s367
      %p379 = scmp.eq.s32.totalorder %s37, 1
      %p380 = por %p378, %p379
      %p382 = scmp.ne.s32.totalorder %s367, %s381
      %p383 = scmp.eq.s32.totalorder %s37, 0
      %p384 = por %p382, %p383
      %s386 = sadd.s32 %s385, 1
      %p389 = scmp.eq.s32.totalorder %s31, 1
      %p390 = scmp.ne.s32.totalorder %s385, %s387
      %p391 = scmp.eq.s32.totalorder %s31, 0
      %p392 = por %p390, %p391
      %p393 = scmp.ne.s32.totalorder %s385, %s387
      %p394 = scmp.eq.s32.totalorder %s36, 1
      %p395 = por %p393, %p394
      %p396 = scmp.ne.s32.totalorder %s387, %s388
      %p397 = scmp.eq.s32.totalorder %s36, 0
      %p398 = por %p396, %p397
      %p399 = scmp.ne.s32.totalorder %s387, %s388
      %p400 = scmp.eq.s32.totalorder %s37, 1
      %p401 = por %p399, %p400
      %p403 = scmp.ne.s32.totalorder %s388, %s402
      %p404 = scmp.eq.s32.totalorder %s37, 0
      %p405 = por %p403, %p404
      %s407 = sadd.s32 %s406, 1
      %p410 = scmp.eq.s32.totalorder %s31, 1
      %p411 = scmp.ne.s32.totalorder %s406, %s408
      %p412 = scmp.eq.s32.totalorder %s31, 0
      %p413 = por %p411, %p412
      %p414 = scmp.ne.s32.totalorder %s406, %s408
      %p415 = scmp.eq.s32.totalorder %s36, 1
      %p416 = por %p414, %p415
      %p417 = scmp.ne.s32.totalorder %s408, %s409
      %p418 = scmp.eq.s32.totalorder %s36, 0
      %p419 = por %p417, %p418
      %p420 = scmp.ne.s32.totalorder %s408, %s409
      %p421 = scmp.eq.s32.totalorder %s37, 1
      %p422 = por %p420, %p421
      %p424 = scmp.ne.s32.totalorder %s409, %s423
      %p425 = scmp.eq.s32.totalorder %s37, 0
      %p426 = por %p424, %p425
      %s427 = ssub.s32 %s31, %s38
      %p428 = scmp.eq.s32.totalorder %s427, 0
      %s430 = sadd.s32 %s429, 1
      %s431 = scalar_select %p428, %s429, %s430
      %p434 = pneg %p428
      %p435 = scmp.eq.s32.totalorder %s31, 1
      %p436 = por %p434, %p435
      %p437 = scmp.ne.s32.totalorder %s429, %s432
      %p438 = scmp.eq.s32.totalorder %s31, 0
      %p439 = por %p437, %p438
      %p440 = scmp.ne.s32.totalorder %s429, %s432
      %p441 = scmp.eq.s32.totalorder %s36, 1
      %p442 = por %p440, %p441
      %p443 = scmp.ne.s32.totalorder %s432, %s433
      %p444 = scmp.eq.s32.totalorder %s36, 0
      %p445 = por %p443, %p444
      %p446 = scmp.ne.s32.totalorder %s432, %s433
      %p447 = scmp.eq.s32.totalorder %s37, 1
      %p448 = por %p446, %p447
      %p450 = scmp.ne.s32.totalorder %s433, %s449
      %p451 = scmp.eq.s32.totalorder %s37, 0
      %p452 = por %p450, %p451
      %p453 = scmp.le.s32.totalorder 1, %s31
      %p454 = scmp.lt.s32.totalorder %s31, 3
      %p455 = pnand %p453, %p454
      %p456 = pneg %p455
      // Predicated region
      $region9: #{tpu_custom_call.1} parent=5 // pred_check
        _
      $region10: #{tpu_custom_call.1} parent=5 // pred_check_branch
        %458 = sbr.rel (%p455) target = $region12
      $region11: #{tpu_custom_call.1} parent=5 // pred_region
        %s459 = ssub.s32 %s31, 1
        // Predicated region
        $region13: #{tpu_custom_call.1} parent=11 // pred_check
          %p460 = pneg %p104
        $region14: #{tpu_custom_call.1} parent=11 // pred_check_branch
          %462 = sbr.rel (%p460) target = $region16
        $region15: #{tpu_custom_call.1} parent=11 // pred_region
          _
        $region16: #{tpu_custom_call.1} parent=11 // pred_fallthru
          _
        // Predicated region
        $region17: #{tpu_custom_call.1} parent=11 // pred_check
          %p463 = pneg %p125
        $region18: #{tpu_custom_call.1} parent=11 // pred_check_branch
          %465 = sbr.rel (%p463) target = $region20
        $region19: #{tpu_custom_call.1} parent=11 // pred_region
          _
        $region20: #{tpu_custom_call.1} parent=11 // pred_fallthru
          _
        // Predicated region
        $region21: #{tpu_custom_call.1} parent=11 // pred_check
          %p466 = pneg %p146
        $region22: #{tpu_custom_call.1} parent=11 // pred_check_branch
          %468 = sbr.rel (%p466) target = $region24
        $region23: #{tpu_custom_call.1} parent=11 // pred_region
          _
        $region24: #{tpu_custom_call.1} parent=11 // pred_fallthru
          _
        // Predicated region
        $region25: #{tpu_custom_call.1} parent=11 // pred_check
          %p469 = pneg %p167
        $region26: #{tpu_custom_call.1} parent=11 // pred_check_branch
          %471 = sbr.rel (%p469) target = $region28
        $region27: #{tpu_custom_call.1} parent=11 // pred_region
          _
        $region28: #{tpu_custom_call.1} parent=11 // pred_fallthru
          _
        // Predicated region
        $region29: #{tpu_custom_call.1} parent=11 // pred_check
          %p472 = pneg %p188
        $region30: #{tpu_custom_call.1} parent=11 // pred_check_branch
          %474 = sbr.rel (%p472) target = $region32
        $region31: #{tpu_custom_call.1} parent=11 // pred_region
          _
        $region32: #{tpu_custom_call.1} parent=11 // pred_fallthru
          _
        // Predicated region
        $region33: #{tpu_custom_call.1} parent=11 // pred_check
          %p475 = pneg %p209
        $region34: #{tpu_custom_call.1} parent=11 // pred_check_branch
          %477 = sbr.rel (%p475) target = $region36
        $region35: #{tpu_custom_call.1} parent=11 // pred_region
          %s479 = ssub.s32 16, 16
          %480 = vsyncadd [#allocation6], %s479
          %s482 = sshll.u32 [#allocation5], 4
          %s483 = int_to_ptr.vmem [resolvable:$true] %s482
          %485 = dma.hbm_to_vmem [thread:$0]  %s7, 16, %s483, [#allocation6]
        $region36: #{tpu_custom_call.1} parent=11 // pred_fallthru
          _
        // Predicated region
        $region37: #{tpu_custom_call.1} parent=11 // pred_check
          %p486 = pneg %p230
        $region38: #{tpu_custom_call.1} parent=11 // pred_check_branch
          %488 = sbr.rel (%p486) target = $region40
        $region39: #{tpu_custom_call.1} parent=11 // pred_region
          _
        $region40: #{tpu_custom_call.1} parent=11 // pred_fallthru
          _
        // Predicated region
        $region41: #{tpu_custom_call.1} parent=11 // pred_check
          %p489 = pneg %p251
        $region42: #{tpu_custom_call.1} parent=11 // pred_check_branch
          %491 = sbr.rel (%p489) target = $region44
        $region43: #{tpu_custom_call.1} parent=11 // pred_region
          %s493 = ssub.s32 16, 16
          %494 = vsyncadd [#allocation6], %s493
          %s496 = sshll.u32 [#allocation7], 4
          %s497 = int_to_ptr.vmem [resolvable:$true] %s496
          %499 = dma.hbm_to_vmem [thread:$0]  %s9, 16, %s497, [#allocation6]
        $region44: #{tpu_custom_call.1} parent=11 // pred_fallthru
          _
        // Predicated region
        $region45: #{tpu_custom_call.1} parent=11 // pred_check
          %p500 = pneg %p272
        $region46: #{tpu_custom_call.1} parent=11 // pred_check_branch
          %502 = sbr.rel (%p500) target = $region48
        $region47: #{tpu_custom_call.1} parent=11 // pred_region
          _
        $region48: #{tpu_custom_call.1} parent=11 // pred_fallthru
          _
        // Predicated region
        $region49: #{tpu_custom_call.1} parent=11 // pred_check
          %p503 = pneg %p293
        $region50: #{tpu_custom_call.1} parent=11 // pred_check_branch
          %505 = sbr.rel (%p503) target = $region52
        $region51: #{tpu_custom_call.1} parent=11 // pred_region
          _
        $region52: #{tpu_custom_call.1} parent=11 // pred_fallthru
          _
        // Predicated region
        $region53: #{tpu_custom_call.1} parent=11 // pred_check
          %p506 = pneg %p314
        $region54: #{tpu_custom_call.1} parent=11 // pred_check_branch
          %508 = sbr.rel (%p506) target = $region56
        $region55: #{tpu_custom_call.1} parent=11 // pred_region
          _
        $region56: #{tpu_custom_call.1} parent=11 // pred_fallthru
          _
        // Predicated region
        $region57: #{tpu_custom_call.1} parent=11 // pred_check
          %p509 = pneg %p335
        $region58: #{tpu_custom_call.1} parent=11 // pred_check_branch
          %511 = sbr.rel (%p509) target = $region60
        $region59: #{tpu_custom_call.1} parent=11 // pred_region
          _
        $region60: #{tpu_custom_call.1} parent=11 // pred_fallthru
          _
        // Predicated region
        $region61: #{tpu_custom_call.1} parent=11 // pred_check
          %p512 = pneg %p356
        $region62: #{tpu_custom_call.1} parent=11 // pred_check_branch
          %514 = sbr.rel (%p512) target = $region64
        $region63: #{tpu_custom_call.1} parent=11 // pred_region
          _
        $region64: #{tpu_custom_call.1} parent=11 // pred_fallthru
          _
        // Predicated region
        $region65: #{tpu_custom_call.1} parent=11 // pred_check
          %p515 = pneg %p377
        $region66: #{tpu_custom_call.1} parent=11 // pred_check_branch
          %517 = sbr.rel (%p515) target = $region68
        $region67: #{tpu_custom_call.1} parent=11 // pred_region
          _
        $region68: #{tpu_custom_call.1} parent=11 // pred_fallthru
          _
        // Predicated region
        $region69: #{tpu_custom_call.1} parent=11 // pred_check
          %p518 = pneg %p398
        $region70: #{tpu_custom_call.1} parent=11 // pred_check_branch
          %520 = sbr.rel (%p518) target = $region72
        $region71: #{tpu_custom_call.1} parent=11 // pred_region
          _
        $region72: #{tpu_custom_call.1} parent=11 // pred_fallthru
          _
        // Predicated region
        $region73: #{tpu_custom_call.1} parent=11 // pred_check
          %p521 = pneg %p419
        $region74: #{tpu_custom_call.1} parent=11 // pred_check_branch
          %523 = sbr.rel (%p521) target = $region76
        $region75: #{tpu_custom_call.1} parent=11 // pred_region
          _
        $region76: #{tpu_custom_call.1} parent=11 // pred_fallthru
          _
      $region12: #{tpu_custom_call.1} parent=5 // pred_fallthru
        _
      %p524 = scmp.lt.s32.totalorder %s31, 2
      // Predicated region
      $region77: #{tpu_custom_call.1} parent=5 // pred_check
        %p525 = pneg %p524
      $region78: #{tpu_custom_call.1} parent=5 // pred_check_branch
        %527 = sbr.rel (%p525) target = $region80
      $region79: #{tpu_custom_call.1} parent=5 // pred_region
        // Predicated region
        $region81: #{tpu_custom_call.1} parent=79 // pred_check
          %p528 = pneg %p51
        $region82: #{tpu_custom_call.1} parent=79 // pred_check_branch
          %530 = sbr.rel (%p528) target = $region84
        $region83: #{tpu_custom_call.1} parent=79 // pred_region
          %s531 = sand.u32 %s41, 1
          %s532 = scalar_lea.sflag [#allocation3], %s531
          %s533 = sand.u32 %s41, 1
          %s534 = scalar_lea.vmem [#allocation2], %s533
          %s536 = ssub.s32 16, 16
          %537 = vsyncadd %s532, %s536
          %s538 = smul.addr %s31, 16
          %s539 = scalar_lea.hbm %s0, %s538
          %s541 = sshll.u32 %s534, 4
          %s542 = int_to_ptr.vmem [resolvable:$true] %s541
          %544 = dma.hbm_to_vmem [thread:$0]  %s539, 16, %s542, %s532
        $region84: #{tpu_custom_call.1} parent=79 // pred_fallthru
          _
        // Predicated region
        $region85: #{tpu_custom_call.1} parent=79 // pred_check
          %p545 = pneg %p77
        $region86: #{tpu_custom_call.1} parent=79 // pred_check_branch
          %547 = sbr.rel (%p545) target = $region88
        $region87: #{tpu_custom_call.1} parent=79 // pred_region
          %p548 = scmp.lt.s32.totalorder %s31, 1
          %s549 = scalar_select %p548, %s31, 1
          %s550 = smul.addr %s549, 8
          %s551 = scalar_lea.vmem %s1, %s550
        $region88: #{tpu_custom_call.1} parent=79 // pred_fallthru
          _
      $region80: #{tpu_custom_call.1} parent=5 // pred_fallthru
        _
      %p552 = scmp.le.s32.totalorder 1, %s31
      %p553 = scmp.lt.s32.totalorder %s31, 3
      %p554 = pnand %p552, %p553
      %p555 = pneg %p554
      // Predicated region
      $region89: #{tpu_custom_call.1} parent=5 // pred_check
        _
      $region90: #{tpu_custom_call.1} parent=5 // pred_check_branch
        %557 = sbr.rel (%p554) target = $region92
      $region91: #{tpu_custom_call.1} parent=5 // pred_region
        %s558 = ssub.s32 %s31, 1
        %s559 = sand.u32 %s44, 1
        %s560 = scalar_lea.sflag [#allocation3], %s559
        %s561 = sand.u32 %s44, 1
        %s562 = scalar_lea.vmem [#allocation2], %s561
        // Predicated region
        $region93: #{tpu_custom_call.1} parent=91 // pred_check
          %p563 = pneg %p57
        $region94: #{tpu_custom_call.1} parent=91 // pred_check_branch
          %565 = sbr.rel (%p563) target = $region96
        $region95: #{tpu_custom_call.1} parent=91 // pred_region
          %566 = dma.done %s560, 16
        $region96: #{tpu_custom_call.1} parent=91 // pred_fallthru
          _
        // Predicated region
        $region97: #{tpu_custom_call.1} parent=91 // pred_check
          %p567 = pneg %p209
        $region98: #{tpu_custom_call.1} parent=91 // pred_check_branch
          %569 = sbr.rel (%p567) target = $region100
        $region99: #{tpu_custom_call.1} parent=91 // pred_region
          %570 = dma.done [#allocation6], 16
        $region100: #{tpu_custom_call.1} parent=91 // pred_fallthru
          _
        // Predicated region
        $region101: #{tpu_custom_call.1} parent=91 // pred_check
          %p571 = pneg %p251
        $region102: #{tpu_custom_call.1} parent=91 // pred_check_branch
          %573 = sbr.rel (%p571) target = $region104
        $region103: #{tpu_custom_call.1} parent=91 // pred_region
          %574 = dma.done [#allocation6], 16
        $region104: #{tpu_custom_call.1} parent=91 // pred_fallthru
          _
        %s575 = sand.u32 %s44, 1
        %s576 = scalar_lea.sflag [#allocation3], %s575
        %s577 = sand.u32 %s44, 1
        %s578 = scalar_lea.vmem [#allocation2], %s577
        %p579 = pneg %p57
        %p580 = pneg %p54
        %p581 = scmp.lt.s32.totalorder %s36, 1
        %s582 = scalar_select %p581, %s36, 1
        %s583 = smul.addr %s582, 8
        %s584 = scalar_lea.vmem %s1, %s583
        %p585 = pneg %p83
        %p586 = pneg %p80
        %p587 = pneg %p104
        %p588 = pneg %p101
        %p589 = pneg %p125
        %p590 = pneg %p122
        %p591 = pneg %p146
        %p592 = pneg %p143
        %p593 = pneg %p167
        %p594 = pneg %p164
        %p595 = pneg %p188
        %p596 = pneg %p185
        %p597 = pneg %p209
        %p598 = pneg %p206
        %p599 = pneg %p230
        %p600 = pneg %p227
        %p601 = pneg %p251
        %p602 = pneg %p248
        %p603 = pneg %p272
        %p604 = pneg %p269
        %p605 = pneg %p293
        %p606 = pneg %p290
        %p607 = pneg %p314
        %p608 = pneg %p311
        %p609 = pneg %p335
        %p610 = pneg %p332
        %p611 = pneg %p356
        %p612 = pneg %p353
        %p613 = pneg %p377
        %p614 = pneg %p374
        %p615 = pneg %p398
        %p616 = pneg %p395
        %p617 = pneg %p419
        %p618 = pneg %p416
        %p619 = pneg %p445
        %p620 = pneg %p442
        %s621 = sand.u32 %s432, 1
        %s622 = scalar_lea.sflag [#allocation4], %s621
        %s623 = sand.u32 %s432, 1
        %s624 = smul.addr %s623, 8
        %s625 = scalar_lea.vmem [#allocation8], %s624
        %p626 = scmp.lt.s32.totalorder %s36, 1
        %s627 = scalar_select %p626, %s36, 1
        %s628 = smul.addr %s627, 8
        %s629 = scalar_lea.vmem %s1, %s628
        %v631 = vld [vmem:[%s629] sm:$0xff]
        %v632 = vpack.c.bf16 %v631, %v631
        %v633 = vld [vmem:[%s562] sm:$0x1]
        %v634 = vld [vmem:[%s2] sm:$0xf]
        %v635 = vld [vmem:[%s2 + $0x4] sm:$0xf]
        %v636 = vld [vmem:[%s2 + $0x8] sm:$0xf]
        %v637 = vld [vmem:[%s2 + $0xc] sm:$0xf]
        %v638 = vld [vmem:[%s3] sm:$0x1]
        %v640 = vlaneseq
        %v641 = vshrl.u32 %v640, 7
        %v642 = vsub.s32 0, %v641
        %v643 = vrot.slane %v638, %v642
        %v649 = vunpack.c.l.b16 %v634
        %v650 = vunpack.c.l.b16 %v635
        %v651 = vunpack.c.l.b16 %v636
        %v652 = vunpack.c.l.b16 %v637
        %v653 = vpack.c.b16 %v650, %v649
        %v654 = vpack.c.b16 %v652, %v651
        %vm657 = vcmask 261120
        %v659 = vsel %vm657, %v632, 0
        %661 = vmatprep.subr.bf16.mxu0 0
        %662 = vmatpush1.bf16.msra.mxu0 %v653
        %663 = vmatprep.subr.bf16.mxu0 0
        %664 = vmatpush1.bf16.msra.mxu0 %v654
        %665 = vmatprep.subr.bf16.mxu0 0
        %666 = vmatpush1.bf16.msra.mxu0 0
        %667 = vmatprep.subr.bf16.mxu0 0
        %668 = vmatpush1.bf16.msra.mxu0 0
        %669 = vmatprep.subr.bf16.mxu0 0
        %670 = vmatpush1.bf16.msra.mxu0 0
        %671 = vmatprep.subr.bf16.mxu0 0
        %672 = vmatpush1.bf16.msra.mxu0 0
        %673 = vmatprep.subr.bf16.mxu0 0
        %674 = vmatpush1.bf16.msra.mxu0 0
        %675 = vmatprep.subr.bf16.mxu0 0
        %676 = vmatpush1.bf16.msra.mxu0 0
        %677 = vmatprep.subr.bf16.mxu0 0
        %678 = vmatpush1.bf16.msra.mxu0 0
        %679 = vmatprep.subr.bf16.mxu0 0
        %680 = vmatpush1.bf16.msra.mxu0 0
        %681 = vmatprep.subr.bf16.mxu0 0
        %682 = vmatpush1.bf16.msra.mxu0 0
        %683 = vmatprep.subr.bf16.mxu0 0
        %684 = vmatpush1.bf16.msra.mxu0 0
        %685 = vmatprep.subr.bf16.mxu0 0
        %686 = vmatpush1.bf16.msra.mxu0 0
        %687 = vmatprep.subr.bf16.mxu0 0
        %688 = vmatpush1.bf16.msra.mxu0 0
        %689 = vmatprep.subr.bf16.mxu0 0
        %690 = vmatpush1.bf16.msra.mxu0 0
        %691 = vmatprep.subr.bf16.mxu0 0
        %692 = vmatpush1.bf16.msra.mxu0 0
        %693 = vmatprep.mubr.bf16.mxu0 0
        %694 = vmatmul.mubr.bf16.gmra.mrb[0].mxu0 %v659
        %v695 = vpop.f32.mrb[0].mxu0
        %v696 = vadd.f32 %v643, %v695
        %v697 = vpop.f32.mrb[0].mxu0
        %v698 = vpop.f32.mrb[0].mxu0
        %v699 = vpop.f32.mrb[0].mxu0
        %700 = vdwg.mxu0
        %v701 = vld [vmem:[%s4] sm:$0xf]
        %v702 = vld [vmem:[%s4 + $0x4] sm:$0xf]
        %v703 = vld [vmem:[%s4 + $0x8] sm:$0xf]
        %v704 = vld [vmem:[%s4 + $0xc] sm:$0xf]
        %v705 = vld [vmem:[%s5] sm:$0x1]
        %v707 = vlaneseq
        %v708 = vshrl.u32 %v707, 7
        %v709 = vsub.s32 0, %v708
        %v710 = vrot.slane %v705, %v709
        %v716 = vunpack.c.l.b16 %v701
        %v717 = vunpack.c.l.b16 %v702
        %v718 = vunpack.c.l.b16 %v703
        %v719 = vunpack.c.l.b16 %v704
        %v720 = vpack.c.b16 %v717, %v716
        %v721 = vpack.c.b16 %v719, %v718
        %724 = vmatprep.subr.bf16.mxu0 0
        %725 = vmatpush1.bf16.msra.mxu0 %v720
        %726 = vmatprep.subr.bf16.mxu0 0
        %727 = vmatpush1.bf16.msra.mxu0 %v721
        %728 = vmatprep.subr.bf16.mxu0 0
        %729 = vmatpush1.bf16.msra.mxu0 0
        %730 = vmatprep.subr.bf16.mxu0 0
        %731 = vmatpush1.bf16.msra.mxu0 0
        %732 = vmatprep.subr.bf16.mxu0 0
        %733 = vmatpush1.bf16.msra.mxu0 0
        %734 = vmatprep.subr.bf16.mxu0 0
        %735 = vmatpush1.bf16.msra.mxu0 0
        %736 = vmatprep.subr.bf16.mxu0 0
        %737 = vmatpush1.bf16.msra.mxu0 0
        %738 = vmatprep.subr.bf16.mxu0 0
        %739 = vmatpush1.bf16.msra.mxu0 0
        %740 = vmatprep.subr.bf16.mxu0 0
        %741 = vmatpush1.bf16.msra.mxu0 0
        %742 = vmatprep.subr.bf16.mxu0 0
        %743 = vmatpush1.bf16.msra.mxu0 0
        %744 = vmatprep.subr.bf16.mxu0 0
        %745 = vmatpush1.bf16.msra.mxu0 0
        %746 = vmatprep.subr.bf16.mxu0 0
        %747 = vmatpush1.bf16.msra.mxu0 0
        %748 = vmatprep.subr.bf16.mxu0 0
        %749 = vmatpush1.bf16.msra.mxu0 0
        %750 = vmatprep.subr.bf16.mxu0 0
        %751 = vmatpush1.bf16.msra.mxu0 0
        %752 = vmatprep.subr.bf16.mxu0 0
        %753 = vmatpush1.bf16.msra.mxu0 0
        %754 = vmatprep.subr.bf16.mxu0 0
        %755 = vmatpush1.bf16.msra.mxu0 0
        %756 = vmatprep.mubr.bf16.mxu0 0
        %757 = vmatmul.mubr.bf16.gmra.mrb[0].mxu0 %v659
        %v758 = vpop.f32.mrb[0].mxu0
        %v759 = vadd.f32 %v710, %v758
        %v760 = vpop.f32.mrb[0].mxu0
        %v761 = vpop.f32.mrb[0].mxu0
        %v762 = vpop.f32.mrb[0].mxu0
        %763 = vdwg.mxu0
        %v764 = vld [vmem:[%s6] sm:$0xf]
        %v765 = vld [vmem:[%s6 + $0x4] sm:$0xf]
        %v766 = vld [vmem:[%s6 + $0x8] sm:$0xf]
        %v767 = vld [vmem:[%s6 + $0xc] sm:$0xf]
        %v768 = vld [vmem:[#allocation5] sm:$0x1]
        %v770 = vlaneseq
        %v771 = vshrl.u32 %v770, 7
        %v772 = vsub.s32 0, %v771
        %v773 = vrot.slane %v768, %v772
        %v779 = vunpack.c.l.b16 %v764
        %v780 = vunpack.c.l.b16 %v765
        %v781 = vunpack.c.l.b16 %v766
        %v782 = vunpack.c.l.b16 %v767
        %v783 = vpack.c.b16 %v780, %v779
        %v784 = vpack.c.b16 %v782, %v781
        %787 = vmatprep.subr.bf16.mxu0 0
        %788 = vmatpush1.bf16.msra.mxu0 %v783
        %789 = vmatprep.subr.bf16.mxu0 0
        %790 = vmatpush1.bf16.msra.mxu0 %v784
        %791 = vmatprep.subr.bf16.mxu0 0
        %792 = vmatpush1.bf16.msra.mxu0 0
        %793 = vmatprep.subr.bf16.mxu0 0
        %794 = vmatpush1.bf16.msra.mxu0 0
        %795 = vmatprep.subr.bf16.mxu0 0
        %796 = vmatpush1.bf16.msra.mxu0 0
        %797 = vmatprep.subr.bf16.mxu0 0
        %798 = vmatpush1.bf16.msra.mxu0 0
        %799 = vmatprep.subr.bf16.mxu0 0
        %800 = vmatpush1.bf16.msra.mxu0 0
        %801 = vmatprep.subr.bf16.mxu0 0
        %802 = vmatpush1.bf16.msra.mxu0 0
        %803 = vmatprep.subr.bf16.mxu0 0
        %804 = vmatpush1.bf16.msra.mxu0 0
        %805 = vmatprep.subr.bf16.mxu0 0
        %806 = vmatpush1.bf16.msra.mxu0 0
        %807 = vmatprep.subr.bf16.mxu0 0
        %808 = vmatpush1.bf16.msra.mxu0 0
        %809 = vmatprep.subr.bf16.mxu0 0
        %810 = vmatpush1.bf16.msra.mxu0 0
        %811 = vmatprep.subr.bf16.mxu0 0
        %812 = vmatpush1.bf16.msra.mxu0 0
        %813 = vmatprep.subr.bf16.mxu0 0
        %814 = vmatpush1.bf16.msra.mxu0 0
        %815 = vmatprep.subr.bf16.mxu0 0
        %816 = vmatpush1.bf16.msra.mxu0 0
        %817 = vmatprep.subr.bf16.mxu0 0
        %818 = vmatpush1.bf16.msra.mxu0 0
        %819 = vmatprep.mubr.bf16.mxu0 0
        %820 = vmatmul.mubr.bf16.gmra.mrb[0].mxu0 %v659
        %v821 = vpop.f32.mrb[0].mxu0
        %v822 = vadd.f32 %v773, %v821
        %v823 = vpop.f32.mrb[0].mxu0
        %v824 = vpop.f32.mrb[0].mxu0
        %v825 = vpop.f32.mrb[0].mxu0
        %826 = vdwg.mxu0
        %v827 = vpack.c.bf16 %v696, %v696
        %829 = vrot.lane.b32.xlu0 %v827, 112
        %v830 = vpop.permute.xlu0 %829
        %v831 = vpack.c.bf16 %v759, %v759
        %833 = vrot.lane.b32.xlu0 %v831, 112
        %v834 = vpop.permute.xlu0 %833
        %v835 = vpack.c.bf16 %v822, %v822
        %837 = vrot.lane.b32.xlu0 %v835, 112
        %v838 = vpop.permute.xlu0 %837
        %vm839 = vcmask 130048
        %v841 = vsel %vm839, %v827, 0
        %v844 = vsel %vm839, %v831, 0
        %846 = vmatprep.subr.bf16.mxu0 0
        %847 = vmatpush1.bf16.xpose.msra.mxu0 %v844
        %848 = vmatprep.subr.bf16.mxu0 0
        %849 = vmatpush1.bf16.xpose.msra.mxu0 0
        %850 = vmatprep.subr.bf16.mxu0 0
        %851 = vmatpush1.bf16.xpose.msra.mxu0 0
        %852 = vmatprep.subr.bf16.mxu0 0
        %853 = vmatpush1.bf16.xpose.msra.mxu0 0
        %854 = vmatprep.subr.bf16.mxu0 0
        %855 = vmatpush1.bf16.xpose.msra.mxu0 0
        %856 = vmatprep.subr.bf16.mxu0 0
        %857 = vmatpush1.bf16.xpose.msra.mxu0 0
        %858 = vmatprep.subr.bf16.mxu0 0
        %859 = vmatpush1.bf16.xpose.msra.mxu0 0
        %860 = vmatprep.subr.bf16.mxu0 0
        %861 = vmatpush1.bf16.xpose.msra.mxu0 0
        %862 = vmatprep.subr.bf16.mxu0 0
        %863 = vmatpush1.bf16.xpose.msra.mxu0 0
        %864 = vmatprep.subr.bf16.mxu0 0
        %865 = vmatpush1.bf16.xpose.msra.mxu0 0
        %866 = vmatprep.subr.bf16.mxu0 0
        %867 = vmatpush1.bf16.xpose.msra.mxu0 0
        %868 = vmatprep.subr.bf16.mxu0 0
        %869 = vmatpush1.bf16.xpose.msra.mxu0 0
        %870 = vmatprep.subr.bf16.mxu0 0
        %871 = vmatpush1.bf16.xpose.msra.mxu0 0
        %872 = vmatprep.subr.bf16.mxu0 0
        %873 = vmatpush1.bf16.xpose.msra.mxu0 0
        %874 = vmatprep.subr.bf16.mxu0 0
        %875 = vmatpush1.bf16.xpose.msra.mxu0 0
        %876 = vmatprep.subr.bf16.mxu0 0
        %877 = vmatpush1.bf16.xpose.msra.mxu0 0
        %878 = vmatprep.mubr.bf16.mxu0 0
        %879 = vmatmul.mubr.bf16.gmra.mrb[0].mxu0 %v841
        %v880 = vpop.f32.mrb[0].mxu0
        %v881 = vadd.f32 0.0, %v880
        %v882 = vpop.f32.mrb[0].mxu0
        %v883 = vpop.f32.mrb[0].mxu0
        %v884 = vpop.f32.mrb[0].mxu0
        %885 = vdwg.mxu0
        %v887 = vsel %vm839, %v830, 0
        %v890 = vsel %vm839, %v834, 0
        %892 = vmatprep.subr.bf16.mxu0 0
        %893 = vmatpush1.bf16.xpose.msra.mxu0 %v890
        %894 = vmatprep.subr.bf16.mxu0 0
        %895 = vmatpush1.bf16.xpose.msra.mxu0 0
        %896 = vmatprep.subr.bf16.mxu0 0
        %897 = vmatpush1.bf16.xpose.msra.mxu0 0
        %898 = vmatprep.subr.bf16.mxu0 0
        %899 = vmatpush1.bf16.xpose.msra.mxu0 0
        %900 = vmatprep.subr.bf16.mxu0 0
        %901 = vmatpush1.bf16.xpose.msra.mxu0 0
        %902 = vmatprep.subr.bf16.mxu0 0
        %903 = vmatpush1.bf16.xpose.msra.mxu0 0
        %904 = vmatprep.subr.bf16.mxu0 0
        %905 = vmatpush1.bf16.xpose.msra.mxu0 0
        %906 = vmatprep.subr.bf16.mxu0 0
        %907 = vmatpush1.bf16.xpose.msra.mxu0 0
        %908 = vmatprep.subr.bf16.mxu0 0
        %909 = vmatpush1.bf16.xpose.msra.mxu0 0
        %910 = vmatprep.subr.bf16.mxu0 0
        %911 = vmatpush1.bf16.xpose.msra.mxu0 0
        %912 = vmatprep.subr.bf16.mxu0 0
        %913 = vmatpush1.bf16.xpose.msra.mxu0 0
        %914 = vmatprep.subr.bf16.mxu0 0
        %915 = vmatpush1.bf16.xpose.msra.mxu0 0
        %916 = vmatprep.subr.bf16.mxu0 0
        %917 = vmatpush1.bf16.xpose.msra.mxu0 0
        %918 = vmatprep.subr.bf16.mxu0 0
        %919 = vmatpush1.bf16.xpose.msra.mxu0 0
        %920 = vmatprep.subr.bf16.mxu0 0
        %921 = vmatpush1.bf16.xpose.msra.mxu0 0
        %922 = vmatprep.subr.bf16.mxu0 0
        %923 = vmatpush1.bf16.xpose.msra.mxu0 0
        %924 = vmatprep.mubr.bf16.mxu0 0
        %925 = vmatmul.mubr.bf16.gmra.mrb[0].mxu0 %v887
        %v926 = vpop.f32.mrb[0].mxu0
        %v927 = vadd.f32 0.0, %v926
        %v928 = vpop.f32.mrb[0].mxu0
        %v929 = vpop.f32.mrb[0].mxu0
        %v930 = vpop.f32.mrb[0].mxu0
        %931 = vdwg.mxu0
        %v933 = vlaneseq
        %v934 = vshrl.u32 %v933, 7
        %v935 = vsub.s32 0, %v934
        %v936 = vrot.slane %v633, %v935
        %v938 = vadd.f32 %v881, %v936
        %v939 = vadd.f32 %v927, %v936
        %vm940 = vcmask 64512
        %v941 = vsel %vm940, %v938, -inf
        %942 = vmax.xlane.f32.xlu0 %v941
        %v943 = vpop.xlane.xlu0 %942
        %v944 = vsel %vm940, %v939, -inf
        %945 = vmax.xlane.f32.xlu0 %v944
        %v946 = vpop.xlane.xlu0 %945
        %v947 = vsub.f32 %v938, %v943
        %v948 = vsub.f32 %v939, %v946
        %v949 = vmul.f32 %v947, 1.442695
        %v950 = vpow.pop %v949
        %v951 = vmul.f32 %v948, 1.442695
        %v952 = vpow.pop %v951
        %v953 = vsel %vm940, %v950, 0.0
        %954 = vadd.xlane.f32.xlu0 %v953
        %v955 = vpop.xlane.xlu0 %954
        %v956 = vsel %vm940, %v952, 0.0
        %957 = vadd.xlane.f32.xlu0 %v956
        %v958 = vpop.xlane.xlu0 %957
        %v959 = vrcp.pop %v955
        %v960 = vrcp.pop %v958
        %v961 = vmul.f32 %v950, %v959
        %v962 = vmul.f32 %v952, %v960
        %v963 = vpack.c.bf16 %v961, %v961
        %v964 = vpack.c.bf16 %v962, %v962
        %v966 = vsel %vm940, %v963, 0
        %vm968 = vcmask 1043456
        %v970 = vsel %vm968, %v835, 0
        %972 = vmatprep.subr.bf16.mxu0 0
        %973 = vmatpush1.bf16.msra.mxu0 %v970
        %974 = vmatprep.subr.bf16.mxu0 0
        %975 = vmatpush1.bf16.msra.mxu0 0
        %976 = vmatprep.subr.bf16.mxu0 0
        %977 = vmatpush1.bf16.msra.mxu0 0
        %978 = vmatprep.subr.bf16.mxu0 0
        %979 = vmatpush1.bf16.msra.mxu0 0
        %980 = vmatprep.subr.bf16.mxu0 0
        %981 = vmatpush1.bf16.msra.mxu0 0
        %982 = vmatprep.subr.bf16.mxu0 0
        %983 = vmatpush1.bf16.msra.mxu0 0
        %984 = vmatprep.subr.bf16.mxu0 0
        %985 = vmatpush1.bf16.msra.mxu0 0
        %986 = vmatprep.subr.bf16.mxu0 0
        %987 = vmatpush1.bf16.msra.mxu0 0
        %988 = vmatprep.subr.bf16.mxu0 0
        %989 = vmatpush1.bf16.msra.mxu0 0
        %990 = vmatprep.subr.bf16.mxu0 0
        %991 = vmatpush1.bf16.msra.mxu0 0
        %992 = vmatprep.subr.bf16.mxu0 0
        %993 = vmatpush1.bf16.msra.mxu0 0
        %994 = vmatprep.subr.bf16.mxu0 0
        %995 = vmatpush1.bf16.msra.mxu0 0
        %996 = vmatprep.subr.bf16.mxu0 0
        %997 = vmatpush1.bf16.msra.mxu0 0
        %998 = vmatprep.subr.bf16.mxu0 0
        %999 = vmatpush1.bf16.msra.mxu0 0
        %1000 = vmatprep.subr.bf16.mxu0 0
        %1001 = vmatpush1.bf16.msra.mxu0 0
        %1002 = vmatprep.subr.bf16.mxu0 0
        %1003 = vmatpush1.bf16.msra.mxu0 0
        %1004 = vmatprep.mubr.bf16.mxu0 0
        %1005 = vmatmul.mubr.bf16.gmra.mrb[0].mxu0 %v966
        %v1006 = vpop.f32.mrb[0].mxu0
        %v1007 = vadd.f32 0.0, %v1006
        %v1008 = vpop.f32.mrb[0].mxu0
        %v1009 = vpop.f32.mrb[0].mxu0
        %v1010 = vpop.f32.mrb[0].mxu0
        %1011 = vdwg.mxu0
        %v1013 = vsel %vm940, %v964, 0
        %v1016 = vsel %vm968, %v838, 0
        %1018 = vmatprep.subr.bf16.mxu0 0
        %1019 = vmatpush1.bf16.msra.mxu0 %v1016
        %1020 = vmatprep.subr.bf16.mxu0 0
        %1021 = vmatpush1.bf16.msra.mxu0 0
        %1022 = vmatprep.subr.bf16.mxu0 0
        %1023 = vmatpush1.bf16.msra.mxu0 0
        %1024 = vmatprep.subr.bf16.mxu0 0
        %1025 = vmatpush1.bf16.msra.mxu0 0
        %1026 = vmatprep.subr.bf16.mxu0 0
        %1027 = vmatpush1.bf16.msra.mxu0 0
        %1028 = vmatprep.subr.bf16.mxu0 0
        %1029 = vmatpush1.bf16.msra.mxu0 0
        %1030 = vmatprep.subr.bf16.mxu0 0
        %1031 = vmatpush1.bf16.msra.mxu0 0
        %1032 = vmatprep.subr.bf16.mxu0 0
        %1033 = vmatpush1.bf16.msra.mxu0 0
        %1034 = vmatprep.subr.bf16.mxu0 0
        %1035 = vmatpush1.bf16.msra.mxu0 0
        %1036 = vmatprep.subr.bf16.mxu0 0
        %1037 = vmatpush1.bf16.msra.mxu0 0
        %1038 = vmatprep.subr.bf16.mxu0 0
        %1039 = vmatpush1.bf16.msra.mxu0 0
        %1040 = vmatprep.subr.bf16.mxu0 0
        %1041 = vmatpush1.bf16.msra.mxu0 0
        %1042 = vmatprep.subr.bf16.mxu0 0
        %1043 = vmatpush1.bf16.msra.mxu0 0
        %1044 = vmatprep.subr.bf16.mxu0 0
        %1045 = vmatpush1.bf16.msra.mxu0 0
        %1046 = vmatprep.subr.bf16.mxu0 0
        %1047 = vmatpush1.bf16.msra.mxu0 0
        %1048 = vmatprep.subr.bf16.mxu0 0
        %1049 = vmatpush1.bf16.msra.mxu0 0
        %1050 = vmatprep.mubr.bf16.mxu0 0
        %1051 = vmatmul.mubr.bf16.gmra.mrb[0].mxu0 %v1013
        %v1052 = vpop.f32.mrb[0].mxu0
        %v1053 = vadd.f32 0.0, %v1052
        %v1054 = vpop.f32.mrb[0].mxu0
        %v1055 = vpop.f32.mrb[0].mxu0
        %v1056 = vpop.f32.mrb[0].mxu0
        %1057 = vdwg.mxu0
        %v1058 = vpack.c.bf16 %v1007, %v1007
        %v1059 = vpack.c.bf16 %v1053, %v1053
        %1061 = vrot.lane.b32.xlu0 %v1059, 16
        %v1062 = vpop.permute.xlu0 %1061
        %v1065 = vsel %vm839, %v1058, %v1062
        %v1066 = vld [vmem:[%s8] sm:$0xf]
        %v1067 = vld [vmem:[%s8 + $0x4] sm:$0xf]
        %v1068 = vld [vmem:[%s8 + $0x8] sm:$0xf]
        %v1069 = vld [vmem:[%s8 + $0xc] sm:$0xf]
        %v1070 = vld [vmem:[#allocation7] sm:$0x1]
        %v1072 = vlaneseq
        %v1073 = vshrl.u32 %v1072, 7
        %v1074 = vsub.s32 0, %v1073
        %v1075 = vrot.slane %v1070, %v1074
        %v1081 = vunpack.c.l.b16 %v1066
        %v1082 = vunpack.c.l.b16 %v1067
        %v1083 = vunpack.c.l.b16 %v1068
        %v1084 = vunpack.c.l.b16 %v1069
        %v1085 = vpack.c.b16 %v1082, %v1081
        %v1086 = vpack.c.b16 %v1084, %v1083
        %v1089 = vsel %vm657, %v1065, 0
        %1091 = vmatprep.subr.bf16.mxu0 0
        %1092 = vmatpush1.bf16.msra.mxu0 %v1085
        %1093 = vmatprep.subr.bf16.mxu0 0
        %1094 = vmatpush1.bf16.msra.mxu0 %v1086
        %1095 = vmatprep.subr.bf16.mxu0 0
        %1096 = vmatpush1.bf16.msra.mxu0 0
        %1097 = vmatprep.subr.bf16.mxu0 0
        %1098 = vmatpush1.bf16.msra.mxu0 0
        %1099 = vmatprep.subr.bf16.mxu0 0
        %1100 = vmatpush1.bf16.msra.mxu0 0
        %1101 = vmatprep.subr.bf16.mxu0 0
        %1102 = vmatpush1.bf16.msra.mxu0 0
        %1103 = vmatprep.subr.bf16.mxu0 0
        %1104 = vmatpush1.bf16.msra.mxu0 0
        %1105 = vmatprep.subr.bf16.mxu0 0
        %1106 = vmatpush1.bf16.msra.mxu0 0
        %1107 = vmatprep.subr.bf16.mxu0 0
        %1108 = vmatpush1.bf16.msra.mxu0 0
        %1109 = vmatprep.subr.bf16.mxu0 0
        %1110 = vmatpush1.bf16.msra.mxu0 0
        %1111 = vmatprep.subr.bf16.mxu0 0
        %1112 = vmatpush1.bf16.msra.mxu0 0
        %1113 = vmatprep.subr.bf16.mxu0 0
        %1114 = vmatpush1.bf16.msra.mxu0 0
        %1115 = vmatprep.subr.bf16.mxu0 0
        %1116 = vmatpush1.bf16.msra.mxu0 0
        %1117 = vmatprep.subr.bf16.mxu0 0
        %1118 = vmatpush1.bf16.msra.mxu0 0
        %1119 = vmatprep.subr.bf16.mxu0 0
        %1120 = vmatpush1.bf16.msra.mxu0 0
        %1121 = vmatprep.subr.bf16.mxu0 0
        %1122 = vmatpush1.bf16.msra.mxu0 0
        %1123 = vmatprep.mubr.bf16.mxu0 0
        %1124 = vmatmul.mubr.bf16.gmra.mrb[0].mxu0 %v1089
        %v1125 = vpop.f32.mrb[0].mxu0
        %v1126 = vadd.f32 %v1075, %v1125
        %v1127 = vpop.f32.mrb[0].mxu0
        %v1128 = vpop.f32.mrb[0].mxu0
        %v1129 = vpop.f32.mrb[0].mxu0
        %1130 = vdwg.mxu0
        %v1131 = vadd.f32 %v1126, %v631
        %v1132 = vld [vmem:[%s10] sm:$0x1]
        %v1133 = vld [vmem:[%s11] sm:$0x1]
        %v1134 = vsel %vm657, %v1131, 0.0
        %1135 = vadd.xlane.f32.xlu0 %v1134
        %v1136 = vpop.xlane.xlu0 %1135
        %v1137 = vrcp.pop 32.0
        %v1138 = vmul.f32 %v1136, %v1137
        %v1139 = vsub.f32 %v1131, %v1138
        %v1140 = vmul.f32 %v1139, %v1139
        %v1141 = vsel %vm657, %v1140, 0.0
        %1142 = vadd.xlane.f32.xlu0 %v1141
        %v1143 = vpop.xlane.xlu0 %1142
        %v1144 = vmul.f32 %v1143, %v1137
        %v1145 = vadd.f32 %v1144, 1e-12
        %v1146 = vrsqrt.pop %v1145
        %v1147 = vmul.f32 %v1145, %v1146
        %vm1148 = vcmp.eq.f32.partialorder %v1145, inf
        %v1149 = vsel %vm1148, %v1145, %v1147
        %vm1150 = vcmp.eq.f32.partialorder %v1145, 0.0
        %v1151 = vand.u32 %v1145, 2147483648
        %v1152 = vsel %vm1150, %v1151, %v1149
        %v1153 = vrcp.pop %v1152
        %v1154 = vmul.f32 %v1139, %v1153
        %v1156 = vlaneseq
        %v1157 = vshrl.u32 %v1156, 7
        %v1158 = vsub.s32 0, %v1157
        %v1159 = vrot.slane %v1132, %v1158
        %v1161 = vmul.f32 %v1159, %v1154
        %v1163 = vlaneseq
        %v1164 = vshrl.u32 %v1163, 7
        %v1165 = vsub.s32 0, %v1164
        %v1166 = vrot.slane %v1133, %v1165
        %v1168 = vadd.f32 %v1161, %v1166
        %v1169 = vpack.c.bf16 %v1168, %v1168
        %v1170 = vld [vmem:[%s12] sm:$0xf]
        %v1171 = vld [vmem:[%s12 + $0x4] sm:$0xf]
        %v1172 = vld [vmem:[%s12 + $0x8] sm:$0xf]
        %v1173 = vld [vmem:[%s12 + $0xc] sm:$0xf]
        %v1174 = vld [vmem:[%s13] sm:$0x1]
        %v1176 = vlaneseq
        %v1177 = vshrl.u32 %v1176, 7
        %v1178 = vsub.s32 0, %v1177
        %v1179 = vrot.slane %v1174, %v1178
        %v1185 = vunpack.c.l.b16 %v1170
        %v1186 = vunpack.c.l.b16 %v1171
        %v1187 = vunpack.c.l.b16 %v1172
        %v1188 = vunpack.c.l.b16 %v1173
        %v1189 = vpack.c.b16 %v1186, %v1185
        %v1190 = vpack.c.b16 %v1188, %v1187
        %v1194 = vsel %vm657, %v1169, 0
        %1196 = vmatprep.subr.bf16.mxu0 0
        %1197 = vmatpush1.bf16.msra.mxu0 %v1189
        %1198 = vmatprep.subr.bf16.mxu0 0
        %1199 = vmatpush1.bf16.msra.mxu0 %v1190
        %1200 = vmatprep.subr.bf16.mxu0 0
        %1201 = vmatpush1.bf16.msra.mxu0 0
        %1202 = vmatprep.subr.bf16.mxu0 0
        %1203 = vmatpush1.bf16.msra.mxu0 0
        %1204 = vmatprep.subr.bf16.mxu0 0
        %1205 = vmatpush1.bf16.msra.mxu0 0
        %1206 = vmatprep.subr.bf16.mxu0 0
        %1207 = vmatpush1.bf16.msra.mxu0 0
        %1208 = vmatprep.subr.bf16.mxu0 0
        %1209 = vmatpush1.bf16.msra.mxu0 0
        %1210 = vmatprep.subr.bf16.mxu0 0
        %1211 = vmatpush1.bf16.msra.mxu0 0
        %1212 = vmatprep.subr.bf16.mxu0 0
        %1213 = vmatpush1.bf16.msra.mxu0 0
        %1214 = vmatprep.subr.bf16.mxu0 0
        %1215 = vmatpush1.bf16.msra.mxu0 0
        %1216 = vmatprep.subr.bf16.mxu0 0
        %1217 = vmatpush1.bf16.msra.mxu0 0
        %1218 = vmatprep.subr.bf16.mxu0 0
        %1219 = vmatpush1.bf16.msra.mxu0 0
        %1220 = vmatprep.subr.bf16.mxu0 0
        %1221 = vmatpush1.bf16.msra.mxu0 0
        %1222 = vmatprep.subr.bf16.mxu0 0
        %1223 = vmatpush1.bf16.msra.mxu0 0
        %1224 = vmatprep.subr.bf16.mxu0 0
        %1225 = vmatpush1.bf16.msra.mxu0 0
        %1226 = vmatprep.subr.bf16.mxu0 0
        %1227 = vmatpush1.bf16.msra.mxu0 0
        %1228 = vmatprep.mubr.bf16.mxu0 0
        %1229 = vmatmul.mubr.bf16.gmra.mrb[0].mxu0 %v1194
        %v1230 = vpop.f32.mrb[0].mxu0
        %v1231 = vadd.f32 %v1179, %v1230
        %v1232 = vpop.f32.mrb[0].mxu0
        %v1233 = vpop.f32.mrb[0].mxu0
        %v1234 = vpop.f32.mrb[0].mxu0
        %1235 = vdwg.mxu0
        %v1236 = vmul.f32 %v1231, 0.5
        %v1237 = vrcp.pop 1.4142135
        %v1238 = vmul.f32 %v1231, %v1237
        %v1239 = verf.f32.pop %v1238
        %v1240 = vadd.f32 %v1239, 1.0
        %v1241 = vmul.f32 %v1236, %v1240
        %v1242 = vpack.c.bf16 %v1241, %v1241
        %v1243 = vld [vmem:[%s14] sm:$0xf]
        %v1244 = vld [vmem:[%s14 + $0x4] sm:$0xf]
        %v1245 = vld [vmem:[%s14 + $0x8] sm:$0xf]
        %v1246 = vld [vmem:[%s14 + $0xc] sm:$0xf]
        %v1247 = vld [vmem:[%s14 + $0x10] sm:$0xf]
        %v1248 = vld [vmem:[%s14 + $0x14] sm:$0xf]
        %v1249 = vld [vmem:[%s14 + $0x18] sm:$0xf]
        %v1250 = vld [vmem:[%s14 + $0x1c] sm:$0xf]
        %v1251 = vld [vmem:[%s14 + $0x20] sm:$0xf]
        %v1252 = vld [vmem:[%s14 + $0x24] sm:$0xf]
        %v1253 = vld [vmem:[%s14 + $0x28] sm:$0xf]
        %v1254 = vld [vmem:[%s14 + $0x2c] sm:$0xf]
        %v1255 = vld [vmem:[%s14 + $0x30] sm:$0xf]
        %v1256 = vld [vmem:[%s14 + $0x34] sm:$0xf]
        %v1257 = vld [vmem:[%s14 + $0x38] sm:$0xf]
        %v1258 = vld [vmem:[%s14 + $0x3c] sm:$0xf]
        %v1259 = vld [vmem:[%s15] sm:$0x1]
        %v1261 = vlaneseq
        %v1262 = vshrl.u32 %v1261, 7
        %v1263 = vsub.s32 0, %v1262
        %v1264 = vrot.slane %v1259, %v1263
        %v1282 = vunpack.c.l.b16 %v1243
        %v1283 = vunpack.c.l.b16 %v1244
        %v1284 = vunpack.c.l.b16 %v1245
        %v1285 = vunpack.c.l.b16 %v1246
        %v1286 = vunpack.c.l.b16 %v1247
        %v1287 = vunpack.c.l.b16 %v1248
        %v1288 = vunpack.c.l.b16 %v1249
        %v1289 = vunpack.c.l.b16 %v1250
        %v1290 = vunpack.c.l.b16 %v1251
        %v1291 = vunpack.c.l.b16 %v1252
        %v1292 = vunpack.c.l.b16 %v1253
        %v1293 = vunpack.c.l.b16 %v1254
        %v1294 = vunpack.c.l.b16 %v1255
        %v1295 = vunpack.c.l.b16 %v1256
        %v1296 = vunpack.c.l.b16 %v1257
        %v1297 = vunpack.c.l.b16 %v1258
        %v1298 = vpack.c.b16 %v1283, %v1282
        %v1299 = vpack.c.b16 %v1285, %v1284
        %v1300 = vpack.c.b16 %v1287, %v1286
        %v1301 = vpack.c.b16 %v1289, %v1288
        %v1302 = vpack.c.b16 %v1291, %v1290
        %v1303 = vpack.c.b16 %v1293, %v1292
        %v1304 = vpack.c.b16 %v1295, %v1294
        %v1305 = vpack.c.b16 %v1297, %v1296
        %1314 = vmatprep.subr.bf16.mxu0 0
        %1315 = vmatpush1.bf16.msra.mxu0 %v1298
        %1316 = vmatprep.subr.bf16.mxu0 0
        %1317 = vmatpush1.bf16.msra.mxu0 %v1299
        %1318 = vmatprep.subr.bf16.mxu0 0
        %1319 = vmatpush1.bf16.msra.mxu0 %v1300
        %1320 = vmatprep.subr.bf16.mxu0 0
        %1321 = vmatpush1.bf16.msra.mxu0 %v1301
        %1322 = vmatprep.subr.bf16.mxu0 0
        %1323 = vmatpush1.bf16.msra.mxu0 %v1302
        %1324 = vmatprep.subr.bf16.mxu0 0
        %1325 = vmatpush1.bf16.msra.mxu0 %v1303
        %1326 = vmatprep.subr.bf16.mxu0 0
        %1327 = vmatpush1.bf16.msra.mxu0 %v1304
        %1328 = vmatprep.subr.bf16.mxu0 0
        %1329 = vmatpush1.bf16.msra.mxu0 %v1305
        %1330 = vmatprep.subr.bf16.mxu0 0
        %1331 = vmatpush1.bf16.msra.mxu0 0
        %1332 = vmatprep.subr.bf16.mxu0 0
        %1333 = vmatpush1.bf16.msra.mxu0 0
        %1334 = vmatprep.subr.bf16.mxu0 0
        %1335 = vmatpush1.bf16.msra.mxu0 0
        %1336 = vmatprep.subr.bf16.mxu0 0
        %1337 = vmatpush1.bf16.msra.mxu0 0
        %1338 = vmatprep.subr.bf16.mxu0 0
        %1339 = vmatpush1.bf16.msra.mxu0 0
        %1340 = vmatprep.subr.bf16.mxu0 0
        %1341 = vmatpush1.bf16.msra.mxu0 0
        %1342 = vmatprep.subr.bf16.mxu0 0
        %1343 = vmatpush1.bf16.msra.mxu0 0
        %1344 = vmatprep.subr.bf16.mxu0 0
        %1345 = vmatpush1.bf16.msra.mxu0 0
        %1346 = vmatprep.mubr.bf16.mxu0 0
        %1347 = vmatmul.mubr.bf16.gmra.mrb[0].mxu0 %v1242
        %v1348 = vpop.f32.mrb[0].mxu0
        %v1349 = vadd.f32 %v1264, %v1348
        %v1350 = vpop.f32.mrb[0].mxu0
        %v1351 = vpop.f32.mrb[0].mxu0
        %v1352 = vpop.f32.mrb[0].mxu0
        %1353 = vdwg.mxu0
        %v1354 = vadd.f32 %v1349, %v1168
        %v1355 = vld [vmem:[%s16] sm:$0x1]
        %v1356 = vld [vmem:[%s17] sm:$0x1]
        %v1357 = vsel %vm657, %v1354, 0.0
        %1358 = vadd.xlane.f32.xlu0 %v1357
        %v1359 = vpop.xlane.xlu0 %1358
        %v1360 = vmul.f32 %v1359, %v1137
        %v1361 = vsub.f32 %v1354, %v1360
        %v1362 = vmul.f32 %v1361, %v1361
        %v1363 = vsel %vm657, %v1362, 0.0
        %1364 = vadd.xlane.f32.xlu0 %v1363
        %v1365 = vpop.xlane.xlu0 %1364
        %v1366 = vmul.f32 %v1365, %v1137
        %v1367 = vadd.f32 %v1366, 1e-12
        %v1368 = vrsqrt.pop %v1367
        %v1369 = vmul.f32 %v1367, %v1368
        %vm1370 = vcmp.eq.f32.partialorder %v1367, inf
        %v1371 = vsel %vm1370, %v1367, %v1369
        %vm1372 = vcmp.eq.f32.partialorder %v1367, 0.0
        %v1373 = vand.u32 %v1367, 2147483648
        %v1374 = vsel %vm1372, %v1373, %v1371
        %v1375 = vrcp.pop %v1374
        %v1376 = vmul.f32 %v1361, %v1375
        %v1378 = vlaneseq
        %v1379 = vshrl.u32 %v1378, 7
        %v1380 = vsub.s32 0, %v1379
        %v1381 = vrot.slane %v1355, %v1380
        %v1383 = vmul.f32 %v1381, %v1376
        %v1385 = vlaneseq
        %v1386 = vshrl.u32 %v1385, 7
        %v1387 = vsub.s32 0, %v1386
        %v1388 = vrot.slane %v1356, %v1387
        %v1390 = vadd.f32 %v1383, %v1388
        %1391 = vst.msk [vmem:[%s625] sm:$0xff] %vm657, %v1390
        %s1392 = sand.u32 %s432, 1
        %s1393 = scalar_lea.sflag [#allocation4], %s1392
        %s1394 = sand.u32 %s432, 1
        %s1395 = smul.addr %s1394, 8
        %s1396 = scalar_lea.vmem [#allocation8], %s1395
        // Predicated region
        $region105: #{tpu_custom_call.1} parent=91 // pred_check
          %p1397 = pneg %p442
        $region106: #{tpu_custom_call.1} parent=91 // pred_check_branch
          %1399 = sbr.rel (%p1397) target = $region108
        $region107: #{tpu_custom_call.1} parent=91 // pred_region
          %s1401 = ssub.s32 128, 128
          %1402 = vsyncadd %s1393, %s1401
          %s1403 = smul.addr %s36, 128
          %s1404 = scalar_lea.hbm %s18, %s1403
          %s1406 = sshll.u32 %s1396, 4
          %s1407 = int_to_ptr.vmem [resolvable:$true] %s1406
          %1409 = dma.vmem_to_hbm [thread:$0]  %s1407, 128, %s1404, %s1393
        $region108: #{tpu_custom_call.1} parent=91 // pred_fallthru
          _
      $region92: #{tpu_custom_call.1} parent=5 // pred_fallthru
        _
      %p1410 = scmp.le.s32.totalorder 2, %s31
      // Predicated region
      $region109: #{tpu_custom_call.1} parent=5 // pred_check
        %p1411 = pneg %p1410
      $region110: #{tpu_custom_call.1} parent=5 // pred_check_branch
        %1413 = sbr.rel (%p1411) target = $region112
      $region111: #{tpu_custom_call.1} parent=5 // pred_region
        %s1414 = ssub.s32 %s31, 2
        // Predicated region
        $region113: #{tpu_custom_call.1} parent=111 // pred_check
          %p1415 = pneg %p448
        $region114: #{tpu_custom_call.1} parent=111 // pred_check_branch
          %1417 = sbr.rel (%p1415) target = $region116
        $region115: #{tpu_custom_call.1} parent=111 // pred_region
          %s1418 = sand.u32 %s433, 1
          %s1419 = scalar_lea.sflag [#allocation4], %s1418
          %s1420 = sand.u32 %s433, 1
          %s1421 = smul.addr %s1420, 8
          %s1422 = scalar_lea.vmem [#allocation8], %s1421
          %1423 = dma.done %s1419, 128
        $region116: #{tpu_custom_call.1} parent=111 // pred_fallthru
          _
      $region112: #{tpu_custom_call.1} parent=5 // pred_fallthru
        _
    $region6: #{tpu_custom_call.1} parent=1 // loop_footer
      %s35 = sadd.s32 1, %s31
    $region7: #{tpu_custom_call.1} parent=1 // loop_footer_branch
      %30 = sbr.rel target = $region3
    $region8: #{tpu_custom_call.1} parent=1 // loop_exit
      _
    %1424 = vsyncpa [#allocation3], 1
    %s1425 = scalar_lea.sflag [#allocation3], 1
    %1426 = vsyncpa %s1425, 1
    %1427 = vsyncpa [#allocation6], 1
    %1428 = vsyncpa [#allocation4], 1
    %s1429 = scalar_lea.sflag [#allocation4], 1
    %1430 = vsyncpa %s1429, 1

// kernel: tpu_custom_call.1
$region0: #{tpu_custom_call.1}
  #allocation0 [shape = 'u32[]', space=smem, size = 0x4, offset = 0x4, fixed_abs, tag = 'smem constant byte address 0x4 - core index']
  #allocation1 [shape = 'u32[144,128]{1,0:T(1,128)}', space=vmem, size = 0x12000, scoped, tag = 'internal scratch']
  %s0 = inlined_call_operand.hbm [shape: f32[2,1,8], index: 0, kind: input, shape index: {}]
  %s1 = inlined_call_operand.vmem [shape: f32[2,8,32], index: 1, kind: input, shape index: {}]
  %s2 = inlined_call_operand.vmem [shape: bf16[32,32], index: 2, kind: input, shape index: {}]
  %s3 = inlined_call_operand.vmem [shape: f32[1,32], index: 3, kind: input, shape index: {}]
  %s4 = inlined_call_operand.vmem [shape: bf16[32,32], index: 4, kind: input, shape index: {}]
  %s5 = inlined_call_operand.vmem [shape: f32[1,32], index: 5, kind: input, shape index: {}]
  %s6 = inlined_call_operand.vmem [shape: bf16[32,32], index: 6, kind: input, shape index: {}]
  %s7 = inlined_call_operand.hbm [shape: f32[1,32], index: 7, kind: input, shape index: {}]
  %s8 = inlined_call_operand.vmem [shape: bf16[32,32], index: 8, kind: input, shape index: {}]
  %s9 = inlined_call_operand.hbm [shape: f32[1,32], index: 9, kind: input, shape index: {}]
  %s10 = inlined_call_operand.vmem [shape: f32[1,32], index: 10, kind: input, shape index: {}]
  %s11 = inlined_call_operand.vmem [shape: f32[1,32], index: 11, kind: input, shape index: {}]
  %s12 = inlined_call_operand.vmem [shape: bf16[32,128], index: 12, kind: input, shape index: {}]
  %s13 = inlined_call_operand.vmem [shape: f32[1,128], index: 13, kind: input, shape index: {}]
  %s14 = inlined_call_operand.vmem [shape: bf16[128,32], index: 14, kind: input, shape index: {}]
  %s15 = inlined_call_operand.vmem [shape: f32[1,32], index: 15, kind: input, shape index: {}]
  %s16 = inlined_call_operand.vmem [shape: f32[1,32], index: 16, kind: input, shape index: {}]
  %s17 = inlined_call_operand.vmem [shape: f32[1,32], index: 17, kind: input, shape index: {}]
  %s18 = inlined_call_operand.hbm [shape: f32[2,8,32], index: 18, kind: output, shape index: {}]
  %s19 = sld [smem:[#allocation0]]
  $region117: #{tpu_custom_call.1} parent=0
    _
  %s21 = ssub.s32 1, %s19
  %s22 = scalar_select 0, %s21, %s19
  $region1: #{tpu_custom_call.1} parent=0
    #allocation2 [shape = 'u8[1024]{0}', space=vmem, size = 0x400, scoped, tag = 'input window, operand 0']
    #allocation3 [shape = 's32[2]{0}', space=sflag, size = 0x8, scoped, tag = 'scoped memory for tpu_custom_call.1']
    #allocation4 [shape = 's32[2]{0}', space=sflag, size = 0x8, scoped, tag = 'scoped memory for tpu_custom_call.1']
    #allocation5 [shape = 'u8[512]{0}', space=vmem, size = 0x400, scoped, tag = 'input window, operand 7, single buffered']
    #allocation6 [shape = 's32[1]{0}', space=sflag, size = 0x4, scoped, tag = 'scoped memory for tpu_custom_call.1']
    #allocation7 [shape = 'u8[512]{0}', space=vmem, size = 0x400, scoped, tag = 'input window, operand 9, single buffered']
    #allocation8 [shape = 'u8[8192]{0}', space=vmem, size = 0x2000, scoped, tag = 'output window, operand 0']
    %23 = vsyncpa [#allocation3], 0
    %s24 = scalar_lea.sflag [#allocation3], 1
    %25 = vsyncpa %s24, 0
    %26 = vsyncpa [#allocation6], 0
    %27 = vsyncpa [#allocation4], 0
    %s28 = scalar_lea.sflag [#allocation4], 1
    %29 = vsyncpa %s28, 0
    loop: start=0, step=1, limit=4
    $region2: #{tpu_custom_call.1} parent=1 // loop_pre_header
      _
    $region3: #{tpu_custom_call.1} parent=1 // loop_header
      %s31 = sphi 0, %s35
      %p32 = scmp.ge.s32.totalorder %s31, 4
      %s41 = sphi 0, %s43
      %s44 = sphi 0, %s41
      %s45 = sphi 0, %s44
      %s61 = sphi 0, %s45
      %s67 = sphi 0, %s69
      %s70 = sphi 0, %s67
      %s71 = sphi 0, %s70
      %s87 = sphi 0, %s71
      %s91 = sphi 0, %s91
      %s93 = sphi 0, %s91
      %s94 = sphi 0, %s93
      %s108 = sphi 0, %s94
      %s112 = sphi 0, %s112
      %s114 = sphi 0, %s112
      %s115 = sphi 0, %s114
      %s129 = sphi 0, %s115
      %s133 = sphi 0, %s133
      %s135 = sphi 0, %s133
      %s136 = sphi 0, %s135
      %s150 = sphi 0, %s136
      %s154 = sphi 0, %s154
      %s156 = sphi 0, %s154
      %s157 = sphi 0, %s156
      %s171 = sphi 0, %s157
      %s175 = sphi 0, %s175
      %s177 = sphi 0, %s175
      %s178 = sphi 0, %s177
      %s192 = sphi 0, %s178
      %s196 = sphi 0, %s196
      %s198 = sphi 0, %s196
      %s199 = sphi 0, %s198
      %s213 = sphi 0, %s199
      %s217 = sphi 0, %s217
      %s219 = sphi 0, %s217
      %s220 = sphi 0, %s219
      %s234 = sphi 0, %s220
      %s238 = sphi 0, %s238
      %s240 = sphi 0, %s238
      %s241 = sphi 0, %s240
      %s255 = sphi 0, %s241
      %s259 = sphi 0, %s259
      %s261 = sphi 0, %s259
      %s262 = sphi 0, %s261
      %s276 = sphi 0, %s262
      %s280 = sphi 0, %s280
      %s282 = sphi 0, %s280
      %s283 = sphi 0, %s282
      %s297 = sphi 0, %s283
      %s301 = sphi 0, %s301
      %s303 = sphi 0, %s301
      %s304 = sphi 0, %s303
      %s318 = sphi 0, %s304
      %s322 = sphi 0, %s322
      %s324 = sphi 0, %s322
      %s325 = sphi 0, %s324
      %s339 = sphi 0, %s325
      %s343 = sphi 0, %s343
      %s345 = sphi 0, %s343
      %s346 = sphi 0, %s345
      %s360 = sphi 0, %s346
      %s364 = sphi 0, %s364
      %s366 = sphi 0, %s364
      %s367 = sphi 0, %s366
      %s381 = sphi 0, %s367
      %s385 = sphi 0, %s385
      %s387 = sphi 0, %s385
      %s388 = sphi 0, %s387
      %s402 = sphi 0, %s388
      %s406 = sphi 0, %s406
      %s408 = sphi 0, %s406
      %s409 = sphi 0, %s408
      %s423 = sphi 0, %s409
      %s429 = sphi 0, %s431
      %s432 = sphi 0, %s429
      %s433 = sphi 0, %s432
      %s449 = sphi 0, %s433
    $region4: #{tpu_custom_call.1} parent=1 // loop_header_branch
      %34 = sbr.rel (%p32) target = $region8
    $region5: #{tpu_custom_call.1} parent=1 // loop_body
      %s36 = ssub.s32 %s31, 1
      %s37 = ssub.s32 %s31, 2
      %s38 = sadd.s32 %s31, 1
      %s39 = ssub.s32 %s31, %s38
      %p40 = scmp.eq.s32.totalorder %s39, 0
      %s42 = sadd.s32 %s41, 1
      %s43 = scalar_select %p40, %s41, %s42
      %p46 = pneg %p40
      %p47 = scmp.eq.s32.totalorder %s31, 1
      %p48 = por %p46, %p47
      %p49 = scmp.ne.s32.totalorder %s41, %s44
      %p50 = scmp.eq.s32.totalorder %s31, 0
      %p51 = por %p49, %p50
      %p52 = scmp.ne.s32.totalorder %s41, %s44
      %p53 = scmp.eq.s32.totalorder %s36, 1
      %p54 = por %p52, %p53
      %p55 = scmp.ne.s32.totalorder %s44, %s45
      %p56 = scmp.eq.s32.totalorder %s36, 0
      %p57 = por %p55, %p56
      %p58 = scmp.ne.s32.totalorder %s44, %s45
      %p59 = scmp.eq.s32.totalorder %s37, 1
      %p60 = por %p58, %p59
      %p62 = scmp.ne.s32.totalorder %s45, %s61
      %p63 = scmp.eq.s32.totalorder %s37, 0
      %p64 = por %p62, %p63
      %s65 = ssub.s32 %s31, %s38
      %p66 = scmp.eq.s32.totalorder %s65, 0
      %s68 = sadd.s32 %s67, 1
      %s69 = scalar_select %p66, %s67, %s68
      %p72 = pneg %p66
      %p73 = scmp.eq.s32.totalorder %s31, 1
      %p74 = por %p72, %p73
      %p75 = scmp.ne.s32.totalorder %s67, %s70
      %p76 = scmp.eq.s32.totalorder %s31, 0
      %p77 = por %p75, %p76
      %p78 = scmp.ne.s32.totalorder %s67, %s70
      %p79 = scmp.eq.s32.totalorder %s36, 1
      %p80 = por %p78, %p79
      %p81 = scmp.ne.s32.totalorder %s70, %s71
      %p82 = scmp.eq.s32.totalorder %s36, 0
      %p83 = por %p81, %p82
      %p84 = scmp.ne.s32.totalorder %s70, %s71
      %p85 = scmp.eq.s32.totalorder %s37, 1
      %p86 = por %p84, %p85
      %p88 = scmp.ne.s32.totalorder %s71, %s87
      %p89 = scmp.eq.s32.totalorder %s37, 0
      %p90 = por %p88, %p89
      %s92 = sadd.s32 %s91, 1
      %p95 = scmp.eq.s32.totalorder %s31, 1
      %p96 = scmp.ne.s32.totalorder %s91, %s93
      %p97 = scmp.eq.s32.totalorder %s31, 0
      %p98 = por %p96, %p97
      %p99 = scmp.ne.s32.totalorder %s91, %s93
      %p100 = scmp.eq.s32.totalorder %s36, 1
      %p101 = por %p99, %p100
      %p102 = scmp.ne.s32.totalorder %s93, %s94
      %p103 = scmp.eq.s32.totalorder %s36, 0
      %p104 = por %p102, %p103
      %p105 = scmp.ne.s32.totalorder %s93, %s94
      %p106 = scmp.eq.s32.totalorder %s37, 1
      %p107 = por %p105, %p106
      %p109 = scmp.ne.s32.totalorder %s94, %s108
      %p110 = scmp.eq.s32.totalorder %s37, 0
      %p111 = por %p109, %p110
      %s113 = sadd.s32 %s112, 1
      %p116 = scmp.eq.s32.totalorder %s31, 1
      %p117 = scmp.ne.s32.totalorder %s112, %s114
      %p118 = scmp.eq.s32.totalorder %s31, 0
      %p119 = por %p117, %p118
      %p120 = scmp.ne.s32.totalorder %s112, %s114
      %p121 = scmp.eq.s32.totalorder %s36, 1
      %p122 = por %p120, %p121
      %p123 = scmp.ne.s32.totalorder %s114, %s115
      %p124 = scmp.eq.s32.totalorder %s36, 0
      %p125 = por %p123, %p124
      %p126 = scmp.ne.s32.totalorder %s114, %s115
      %p127 = scmp.eq.s32.totalorder %s37, 1
      %p128 = por %p126, %p127
      %p130 = scmp.ne.s32.totalorder %s115, %s129
      %p131 = scmp.eq.s32.totalorder %s37, 0
      %p132 = por %p130, %p131
      %s134 = sadd.s32 %s133, 1
      %p137 = scmp.eq.s32.totalorder %s31, 1
      %p138 = scmp.ne.s32.totalorder %s133, %s135
      %p139 = scmp.eq.s32.totalorder %s31, 0
      %p140 = por %p138, %p139
      %p141 = scmp.ne.s32.totalorder %s133, %s135
      %p142 = scmp.eq.s32.totalorder %s36, 1
      %p143 = por %p141, %p142
      %p144 = scmp.ne.s32.totalorder %s135, %s136
      %p145 = scmp.eq.s32.totalorder %s36, 0
      %p146 = por %p144, %p145
      %p147 = scmp.ne.s32.totalorder %s135, %s136
      %p148 = scmp.eq.s32.totalorder %s37, 1
      %p149 = por %p147, %p148
      %p151 = scmp.ne.s32.totalorder %s136, %s150
      %p152 = scmp.eq.s32.totalorder %s37, 0
      %p153 = por %p151, %p152
      %s155 = sadd.s32 %s154, 1
      %p158 = scmp.eq.s32.totalorder %s31, 1
      %p159 = scmp.ne.s32.totalorder %s154, %s156
      %p160 = scmp.eq.s32.totalorder %s31, 0
      %p161 = por %p159, %p160
      %p162 = scmp.ne.s32.totalorder %s154, %s156
      %p163 = scmp.eq.s32.totalorder %s36, 1
      %p164 = por %p162, %p163
      %p165 = scmp.ne.s32.totalorder %s156, %s157
      %p166 = scmp.eq.s32.totalorder %s36, 0
      %p167 = por %p165, %p166
      %p168 = scmp.ne.s32.totalorder %s156, %s157
      %p169 = scmp.eq.s32.totalorder %s37, 1
      %p170 = por %p168, %p169
      %p172 = scmp.ne.s32.totalorder %s157, %s171
      %p173 = scmp.eq.s32.totalorder %s37, 0
      %p174 = por %p172, %p173
      %s176 = sadd.s32 %s175, 1
      %p179 = scmp.eq.s32.totalorder %s31, 1
      %p180 = scmp.ne.s32.totalorder %s175, %s177
      %p181 = scmp.eq.s32.totalorder %s31, 0
      %p182 = por %p180, %p181
      %p183 = scmp.ne.s32.totalorder %s175, %s177
      %p184 = scmp.eq.s32.totalorder %s36, 1
      %p185 = por %p183, %p184
      %p186 = scmp.ne.s32.totalorder %s177, %s178
      %p187 = scmp.eq.s32.totalorder %s36, 0
      %p188 = por %p186, %p187
      %p189 = scmp.ne.s32.totalorder %s177, %s178
      %p190 = scmp.eq.s32.totalorder %s37, 1
      %p191 = por %p189, %p190
      %p193 = scmp.ne.s32.totalorder %s178, %s192
      %p194 = scmp.eq.s32.totalorder %s37, 0
      %p195 = por %p193, %p194
      %s197 = sadd.s32 %s196, 1
      %p200 = scmp.eq.s32.totalorder %s31, 1
      %p201 = scmp.ne.s32.totalorder %s196, %s198
      %p202 = scmp.eq.s32.totalorder %s31, 0
      %p203 = por %p201, %p202
      %p204 = scmp.ne.s32.totalorder %s196, %s198
      %p205 = scmp.eq.s32.totalorder %s36, 1
      %p206 = por %p204, %p205
      %p207 = scmp.ne.s32.totalorder %s198, %s199
      %p208 = scmp.eq.s32.totalorder %s36, 0
      %p209 = por %p207, %p208
      %p210 = scmp.ne.s32.totalorder %s198, %s199
      %p211 = scmp.eq.s32.totalorder %s37, 1
      %p212 = por %p210, %p211
      %p214 = scmp.ne.s32.totalorder %s199, %s213
      %p215 = scmp.eq.s32.totalorder %s37, 0
      %p216 = por %p214, %p215
      %s218 = sadd.s32 %s217, 1
      %p221 = scmp.eq.s32.totalorder %s31, 1
      %p222 = scmp.ne.s32.totalorder %s217, %s219
      %p223 = scmp.eq.s32.totalorder %s31, 0
      %p224 = por %p222, %p223
      %p225 = scmp.ne.s32.totalorder %s217, %s219
      %p226 = scmp.eq.s32.totalorder %s36, 1
      %p227 = por %p225, %p226
      %p228 = scmp.ne.s32.totalorder %s219, %s220
      %p229 = scmp.eq.s32.totalorder %s36, 0
      %p230 = por %p228, %p229
      %p231 = scmp.ne.s32.totalorder %s219, %s220
      %p232 = scmp.eq.s32.totalorder %s37, 1
      %p233 = por %p231, %p232
      %p235 = scmp.ne.s32.totalorder %s220, %s234
      %p236 = scmp.eq.s32.totalorder %s37, 0
      %p237 = por %p235, %p236
      %s239 = sadd.s32 %s238, 1
      %p242 = scmp.eq.s32.totalorder %s31, 1
      %p243 = scmp.ne.s32.totalorder %s238, %s240
      %p244 = scmp.eq.s32.totalorder %s31, 0
      %p245 = por %p243, %p244
      %p246 = scmp.ne.s32.totalorder %s238, %s240
      %p247 = scmp.eq.s32.totalorder %s36, 1
      %p248 = por %p246, %p247
      %p249 = scmp.ne.s32.totalorder %s240, %s241
      %p250 = scmp.eq.s32.totalorder %s36, 0
      %p251 = por %p249, %p250
      %p252 = scmp.ne.s32.totalorder %s240, %s241
      %p253 = scmp.eq.s32.totalorder %s37, 1
      %p254 = por %p252, %p253
      %p256 = scmp.ne.s32.totalorder %s241, %s255
      %p257 = scmp.eq.s32.totalorder %s37, 0
      %p258 = por %p256, %p257
      %s260 = sadd.s32 %s259, 1
      %p263 = scmp.eq.s32.totalorder %s31, 1
      %p264 = scmp.ne.s32.totalorder %s259, %s261
      %p265 = scmp.eq.s32.totalorder %s31, 0
      %p266 = por %p264, %p265
      %p267 = scmp.ne.s32.totalorder %s259, %s261
      %p268 = scmp.eq.s32.totalorder %s36, 1
      %p269 = por %p267, %p268
      %p270 = scmp.ne.s32.totalorder %s261, %s262
      %p271 = scmp.eq.s32.totalorder %s36, 0
      %p272 = por %p270, %p271
      %p273 = scmp.ne.s32.totalorder %s261, %s262
      %p274 = scmp.eq.s32.totalorder %s37, 1
      %p275 = por %p273, %p274
      %p277 = scmp.ne.s32.totalorder %s262, %s276
      %p278 = scmp.eq.s32.totalorder %s37, 0
      %p279 = por %p277, %p278
      %s281 = sadd.s32 %s280, 1
      %p284 = scmp.eq.s32.totalorder %s31, 1
      %p285 = scmp.ne.s32.totalorder %s280, %s282
      %p286 = scmp.eq.s32.totalorder %s31, 0
      %p287 = por %p285, %p286
      %p288 = scmp.ne.s32.totalorder %s280, %s282
      %p289 = scmp.eq.s32.totalorder %s36, 1
      %p290 = por %p288, %p289
      %p291 = scmp.ne.s32.totalorder %s282, %s283
      %p292 = scmp.eq.s32.totalorder %s36, 0
      %p293 = por %p291, %p292
      %p294 = scmp.ne.s32.totalorder %s282, %s283
      %p295 = scmp.eq.s32.totalorder %s37, 1
      %p296 = por %p294, %p295
      %p298 = scmp.ne.s32.totalorder %s283, %s297
      %p299 = scmp.eq.s32.totalorder %s37, 0
      %p300 = por %p298, %p299
      %s302 = sadd.s32 %s301, 1
      %p305 = scmp.eq.s32.totalorder %s31, 1
      %p306 = scmp.ne.s32.totalorder %s301, %s303
      %p307 = scmp.eq.s32.totalorder %s31, 0
      %p308 = por %p306, %p307
      %p309 = scmp.ne.s32.totalorder %s301, %s303
      %p310 = scmp.eq.s32.totalorder %s36, 1
      %p311 = por %p309, %p310
      %p312 = scmp.ne.s32.totalorder %s303, %s304
      %p313 = scmp.eq.s32.totalorder %s36, 0
      %p314 = por %p312, %p313
      %p315 = scmp.ne.s32.totalorder %s303, %s304
      %p316 = scmp.eq.s32.totalorder %s37, 1
      %p317 = por %p315, %p316
      %p319 = scmp.ne.s32.totalorder %s304, %s318
      %p320 = scmp.eq.s32.totalorder %s37, 0
      %p321 = por %p319, %p320
      %s323 = sadd.s32 %s322, 1
      %p326 = scmp.eq.s32.totalorder %s31, 1
      %p327 = scmp.ne.s32.totalorder %s322, %s324
      %p328 = scmp.eq.s32.totalorder %s31, 0
      %p329 = por %p327, %p328
      %p330 = scmp.ne.s32.totalorder %s322, %s324
      %p331 = scmp.eq.s32.totalorder %s36, 1
      %p332 = por %p330, %p331
      %p333 = scmp.ne.s32.totalorder %s324, %s325
      %p334 = scmp.eq.s32.totalorder %s36, 0
      %p335 = por %p333, %p334
      %p336 = scmp.ne.s32.totalorder %s324, %s325
      %p337 = scmp.eq.s32.totalorder %s37, 1
      %p338 = por %p336, %p337
      %p340 = scmp.ne.s32.totalorder %s325, %s339
      %p341 = scmp.eq.s32.totalorder %s37, 0
      %p342 = por %p340, %p341
      %s344 = sadd.s32 %s343, 1
      %p347 = scmp.eq.s32.totalorder %s31, 1
      %p348 = scmp.ne.s32.totalorder %s343, %s345
      %p349 = scmp.eq.s32.totalorder %s31, 0
      %p350 = por %p348, %p349
      %p351 = scmp.ne.s32.totalorder %s343, %s345
      %p352 = scmp.eq.s32.totalorder %s36, 1
      %p353 = por %p351, %p352
      %p354 = scmp.ne.s32.totalorder %s345, %s346
      %p355 = scmp.eq.s32.totalorder %s36, 0
      %p356 = por %p354, %p355
      %p357 = scmp.ne.s32.totalorder %s345, %s346
      %p358 = scmp.eq.s32.totalorder %s37, 1
      %p359 = por %p357, %p358
      %p361 = scmp.ne.s32.totalorder %s346, %s360
      %p362 = scmp.eq.s32.totalorder %s37, 0
      %p363 = por %p361, %p362
      %s365 = sadd.s32 %s364, 1
      %p368 = scmp.eq.s32.totalorder %s31, 1
      %p369 = scmp.ne.s32.totalorder %s364, %s366
      %p370 = scmp.eq.s32.totalorder %s31, 0
      %p371 = por %p369, %p370
      %p372 = scmp.ne.s32.totalorder %s364, %s366
      %p373 = scmp.eq.s32.totalorder %s36, 1
      %p374 = por %p372, %p373
      %p375 = scmp.ne.s32.totalorder %s366, %s367
      %p376 = scmp.eq.s32.totalorder %s36, 0
      %p377 = por %p375, %p376
      %p378 = scmp.ne.s32.totalorder %s366, %s367
      %p379 = scmp.eq.s32.totalorder %s37, 1
      %p380 = por %p378, %p379
      %p382 = scmp.ne.s32.totalorder %s367, %s381
      %p383 = scmp.eq.s32.totalorder %s37, 0
      %p384 = por %p382, %p383
      %s386 = sadd.s32 %s385, 1
      %p389 = scmp.eq.s32.totalorder %s31, 1
      %p390 = scmp.ne.s32.totalorder %s385, %s387
      %p391 = scmp.eq.s32.totalorder %s31, 0
      %p392 = por %p390, %p391
      %p393 = scmp.ne.s32.totalorder %s385, %s387
      %p394 = scmp.eq.s32.totalorder %s36, 1
      %p395 = por %p393, %p394
      %p396 = scmp.ne.s32.totalorder %s387, %s388
      %p397 = scmp.eq.s32.totalorder %s36, 0
      %p398 = por %p396, %p397
      %p399 = scmp.ne.s32.totalorder %s387, %s388
      %p400 = scmp.eq.s32.totalorder %s37, 1
      %p401 = por %p399, %p400
      %p403 = scmp.ne.s32.totalorder %s388, %s402
      %p404 = scmp.eq.s32.totalorder %s37, 0
      %p405 = por %p403, %p404
      %s407 = sadd.s32 %s406, 1
      %p410 = scmp.eq.s32.totalorder %s31, 1
      %p411 = scmp.ne.s32.totalorder %s406, %s408
      %p412 = scmp.eq.s32.totalorder %s31, 0
      %p413 = por %p411, %p412
      %p414 = scmp.ne.s32.totalorder %s406, %s408
      %p415 = scmp.eq.s32.totalorder %s36, 1
      %p416 = por %p414, %p415
      %p417 = scmp.ne.s32.totalorder %s408, %s409
      %p418 = scmp.eq.s32.totalorder %s36, 0
      %p419 = por %p417, %p418
      %p420 = scmp.ne.s32.totalorder %s408, %s409
      %p421 = scmp.eq.s32.totalorder %s37, 1
      %p422 = por %p420, %p421
      %p424 = scmp.ne.s32.totalorder %s409, %s423
      %p425 = scmp.eq.s32.totalorder %s37, 0
      %p426 = por %p424, %p425
      %s427 = ssub.s32 %s31, %s38
      %p428 = scmp.eq.s32.totalorder %s427, 0
      %s430 = sadd.s32 %s429, 1
      %s431 = scalar_select %p428, %s429, %s430
      %p434 = pneg %p428
      %p435 = scmp.eq.s32.totalorder %s31, 1
      %p436 = por %p434, %p435
      %p437 = scmp.ne.s32.totalorder %s429, %s432
      %p438 = scmp.eq.s32.totalorder %s31, 0
      %p439 = por %p437, %p438
      %p440 = scmp.ne.s32.totalorder %s429, %s432
      %p441 = scmp.eq.s32.totalorder %s36, 1
      %p442 = por %p440, %p441
      %p443 = scmp.ne.s32.totalorder %s432, %s433
      %p444 = scmp.eq.s32.totalorder %s36, 0
      %p445 = por %p443, %p444
      %p446 = scmp.ne.s32.totalorder %s432, %s433
      %p447 = scmp.eq.s32.totalorder %s37, 1
      %p448 = por %p446, %p447
      %p450 = scmp.ne.s32.totalorder %s433, %s449
      %p451 = scmp.eq.s32.totalorder %s37, 0
      %p452 = por %p450, %p451
      %p453 = scmp.le.s32.totalorder 1, %s31
      %p454 = scmp.lt.s32.totalorder %s31, 3
      %p455 = pnand %p453, %p454
      %p456 = pneg %p455
      // Predicated region
      $region9: #{tpu_custom_call.1} parent=5 // pred_check
        _
      $region10: #{tpu_custom_call.1} parent=5 // pred_check_branch
        %458 = sbr.rel (%p455) target = $region12
      $region11: #{tpu_custom_call.1} parent=5 // pred_region
        %s459 = ssub.s32 %s31, 1
        // Predicated region
        $region13: #{tpu_custom_call.1} parent=11 // pred_check
          %p460 = pneg %p104
        $region14: #{tpu_custom_call.1} parent=11 // pred_check_branch
          %462 = sbr.rel (%p460) target = $region16
        $region15: #{tpu_custom_call.1} parent=11 // pred_region
          _
        $region16: #{tpu_custom_call.1} parent=11 // pred_fallthru
          _
        // Predicated region
        $region17: #{tpu_custom_call.1} parent=11 // pred_check
          %p463 = pneg %p125
        $region18: #{tpu_custom_call.1} parent=11 // pred_check_branch
          %465 = sbr.rel (%p463) target = $region20
        $region19: #{tpu_custom_call.1} parent=11 // pred_region
          _
        $region20: #{tpu_custom_call.1} parent=11 // pred_fallthru
          _
        // Predicated region
        $region21: #{tpu_custom_call.1} parent=11 // pred_check
          %p466 = pneg %p146
        $region22: #{tpu_custom_call.1} parent=11 // pred_check_branch
          %468 = sbr.rel (%p466) target = $region24
        $region23: #{tpu_custom_call.1} parent=11 // pred_region
          _
        $region24: #{tpu_custom_call.1} parent=11 // pred_fallthru
          _
        // Predicated region
        $region25: #{tpu_custom_call.1} parent=11 // pred_check
          %p469 = pneg %p167
        $region26: #{tpu_custom_call.1} parent=11 // pred_check_branch
          %471 = sbr.rel (%p469) target = $region28
        $region27: #{tpu_custom_call.1} parent=11 // pred_region
          _
        $region28: #{tpu_custom_call.1} parent=11 // pred_fallthru
          _
        // Predicated region
        $region29: #{tpu_custom_call.1} parent=11 // pred_check
          %p472 = pneg %p188
        $region30: #{tpu_custom_call.1} parent=11 // pred_check_branch
          %474 = sbr.rel (%p472) target = $region32
        $region31: #{tpu_custom_call.1} parent=11 // pred_region
          _
        $region32: #{tpu_custom_call.1} parent=11 // pred_fallthru
          _
        // Predicated region
        $region33: #{tpu_custom_call.1} parent=11 // pred_check
          %p475 = pneg %p209
        $region34: #{tpu_custom_call.1} parent=11 // pred_check_branch
          %477 = sbr.rel (%p475) target = $region36
        $region35: #{tpu_custom_call.1} parent=11 // pred_region
          %s479 = ssub.s32 16, 16
          %480 = vsyncadd [#allocation6], %s479
          %s482 = sshll.u32 [#allocation5], 4
          %s483 = int_to_ptr.vmem [resolvable:$true] %s482
          %485 = dma.hbm_to_vmem [thread:$0]  %s7, 16, %s483, [#allocation6]
        $region36: #{tpu_custom_call.1} parent=11 // pred_fallthru
          _
        // Predicated region
        $region37: #{tpu_custom_call.1} parent=11 // pred_check
          %p486 = pneg %p230
        $region38: #{tpu_custom_call.1} parent=11 // pred_check_branch
          %488 = sbr.rel (%p486) target = $region40
        $region39: #{tpu_custom_call.1} parent=11 // pred_region
          _
        $region40: #{tpu_custom_call.1} parent=11 // pred_fallthru
          _
        // Predicated region
        $region41: #{tpu_custom_call.1} parent=11 // pred_check
          %p489 = pneg %p251
        $region42: #{tpu_custom_call.1} parent=11 // pred_check_branch
          %491 = sbr.rel (%p489) target = $region44
        $region43: #{tpu_custom_call.1} parent=11 // pred_region
          %s493 = ssub.s32 16, 16
          %494 = vsyncadd [#allocation6], %s493
          %s496 = sshll.u32 [#allocation7], 4
          %s497 = int_to_ptr.vmem [resolvable:$true] %s496
          %499 = dma.hbm_to_vmem [thread:$0]  %s9, 16, %s497, [#allocation6]
        $region44: #{tpu_custom_call.1} parent=11 // pred_fallthru
          _
        // Predicated region
        $region45: #{tpu_custom_call.1} parent=11 // pred_check
          %p500 = pneg %p272
        $region46: #{tpu_custom_call.1} parent=11 // pred_check_branch
          %502 = sbr.rel (%p500) target = $region48
        $region47: #{tpu_custom_call.1} parent=11 // pred_region
          _
        $region48: #{tpu_custom_call.1} parent=11 // pred_fallthru
          _
        // Predicated region
        $region49: #{tpu_custom_call.1} parent=11 // pred_check
          %p503 = pneg %p293
        $region50: #{tpu_custom_call.1} parent=11 // pred_check_branch
          %505 = sbr.rel (%p503) target = $region52
        $region51: #{tpu_custom_call.1} parent=11 // pred_region
          _
        $region52: #{tpu_custom_call.1} parent=11 // pred_fallthru
          _
        // Predicated region
        $region53: #{tpu_custom_call.1} parent=11 // pred_check
          %p506 = pneg %p314
        $region54: #{tpu_custom_call.1} parent=11 // pred_check_branch
          %508 = sbr.rel (%p506) target = $region56
        $region55: #{tpu_custom_call.1} parent=11 // pred_region
          _
        $region56: #{tpu_custom_call.1} parent=11 // pred_fallthru
          _
        // Predicated region
        $region57: #{tpu_custom_call.1} parent=11 // pred_check
          %p509 = pneg %p335
        $region58: #{tpu_custom_call.1} parent=11 // pred_check_branch
          %511 = sbr.rel (%p509) target = $region60
        $region59: #{tpu_custom_call.1} parent=11 // pred_region
          _
        $region60: #{tpu_custom_call.1} parent=11 // pred_fallthru
          _
        // Predicated region
        $region61: #{tpu_custom_call.1} parent=11 // pred_check
          %p512 = pneg %p356
        $region62: #{tpu_custom_call.1} parent=11 // pred_check_branch
          %514 = sbr.rel (%p512) target = $region64
        $region63: #{tpu_custom_call.1} parent=11 // pred_region
          _
        $region64: #{tpu_custom_call.1} parent=11 // pred_fallthru
          _
        // Predicated region
        $region65: #{tpu_custom_call.1} parent=11 // pred_check
          %p515 = pneg %p377
        $region66: #{tpu_custom_call.1} parent=11 // pred_check_branch
          %517 = sbr.rel (%p515) target = $region68
        $region67: #{tpu_custom_call.1} parent=11 // pred_region
          _
        $region68: #{tpu_custom_call.1} parent=11 // pred_fallthru
          _
        // Predicated region
        $region69: #{tpu_custom_call.1} parent=11 // pred_check
          %p518 = pneg %p398
        $region70: #{tpu_custom_call.1} parent=11 // pred_check_branch
          %520 = sbr.rel (%p518) target = $region72
        $region71: #{tpu_custom_call.1} parent=11 // pred_region
          _
        $region72: #{tpu_custom_call.1} parent=11 // pred_fallthru
          _
        // Predicated region
        $region73: #{tpu_custom_call.1} parent=11 // pred_check
          %p521 = pneg %p419
        $region74: #{tpu_custom_call.1} parent=11 // pred_check_branch
          %523 = sbr.rel (%p521) target = $region76
        $region75: #{tpu_custom_call.1} parent=11 // pred_region
          _
        $region76: #{tpu_custom_call.1} parent=11 // pred_fallthru
          _
      $region12: #{tpu_custom_call.1} parent=5 // pred_fallthru
        _
      %p524 = scmp.lt.s32.totalorder %s31, 2
      // Predicated region
      $region77: #{tpu_custom_call.1} parent=5 // pred_check
        %p525 = pneg %p524
      $region78: #{tpu_custom_call.1} parent=5 // pred_check_branch
        %527 = sbr.rel (%p525) target = $region80
      $region79: #{tpu_custom_call.1} parent=5 // pred_region
        // Predicated region
        $region81: #{tpu_custom_call.1} parent=79 // pred_check
          %p528 = pneg %p51
        $region82: #{tpu_custom_call.1} parent=79 // pred_check_branch
          %530 = sbr.rel (%p528) target = $region84
        $region83: #{tpu_custom_call.1} parent=79 // pred_region
          %s531 = sand.u32 %s41, 1
          %s532 = scalar_lea.sflag [#allocation3], %s531
          %s533 = sand.u32 %s41, 1
          %s534 = scalar_lea.vmem [#allocation2], %s533
          %s536 = ssub.s32 16, 16
          %537 = vsyncadd %s532, %s536
          %s538 = smul.addr %s31, 16
          %s539 = scalar_lea.hbm %s0, %s538
          %s541 = sshll.u32 %s534, 4
          %s542 = int_to_ptr.vmem [resolvable:$true] %s541
          %544 = dma.hbm_to_vmem [thread:$0]  %s539, 16, %s542, %s532
        $region84: #{tpu_custom_call.1} parent=79 // pred_fallthru
          _
        // Predicated region
        $region85: #{tpu_custom_call.1} parent=79 // pred_check
          %p545 = pneg %p77
        $region86: #{tpu_custom_call.1} parent=79 // pred_check_branch
          %547 = sbr.rel (%p545) target = $region88
        $region87: #{tpu_custom_call.1} parent=79 // pred_region
          %p548 = scmp.lt.s32.totalorder %s31, 1
          %s549 = scalar_select %p548, %s31, 1
          %s550 = smul.addr %s549, 8
          %s551 = scalar_lea.vmem %s1, %s550
        $region88: #{tpu_custom_call.1} parent=79 // pred_fallthru
          _
      $region80: #{tpu_custom_call.1} parent=5 // pred_fallthru
        _
      %p552 = scmp.le.s32.totalorder 1, %s31
      %p553 = scmp.lt.s32.totalorder %s31, 3
      %p554 = pnand %p552, %p553
      %p555 = pneg %p554
      // Predicated region
      $region89: #{tpu_custom_call.1} parent=5 // pred_check
        _
      $region90: #{tpu_custom_call.1} parent=5 // pred_check_branch
        %557 = sbr.rel (%p554) target = $region92
      $region91: #{tpu_custom_call.1} parent=5 // pred_region
        %s558 = ssub.s32 %s31, 1
        %s559 = sand.u32 %s44, 1
        %s560 = scalar_lea.sflag [#allocation3], %s559
        %s561 = sand.u32 %s44, 1
        %s562 = scalar_lea.vmem [#allocation2], %s561
        // Predicated region
        $region93: #{tpu_custom_call.1} parent=91 // pred_check
          %p563 = pneg %p57
        $region94: #{tpu_custom_call.1} parent=91 // pred_check_branch
          %565 = sbr.rel (%p563) target = $region96
        $region95: #{tpu_custom_call.1} parent=91 // pred_region
          %566 = dma.done %s560, 16
        $region96: #{tpu_custom_call.1} parent=91 // pred_fallthru
          _
        // Predicated region
        $region97: #{tpu_custom_call.1} parent=91 // pred_check
          %p567 = pneg %p209
        $region98: #{tpu_custom_call.1} parent=91 // pred_check_branch
          %569 = sbr.rel (%p567) target = $region100
        $region99: #{tpu_custom_call.1} parent=91 // pred_region
          %570 = dma.done [#allocation6], 16
        $region100: #{tpu_custom_call.1} parent=91 // pred_fallthru
          _
        // Predicated region
        $region101: #{tpu_custom_call.1} parent=91 // pred_check
          %p571 = pneg %p251
        $region102: #{tpu_custom_call.1} parent=91 // pred_check_branch
          %573 = sbr.rel (%p571) target = $region104
        $region103: #{tpu_custom_call.1} parent=91 // pred_region
          %574 = dma.done [#allocation6], 16
        $region104: #{tpu_custom_call.1} parent=91 // pred_fallthru
          _
        %s575 = sand.u32 %s44, 1
        %s576 = scalar_lea.sflag [#allocation3], %s575
        %s577 = sand.u32 %s44, 1
        %s578 = scalar_lea.vmem [#allocation2], %s577
        %p579 = pneg %p57
        %p580 = pneg %p54
        %p581 = scmp.lt.s32.totalorder %s36, 1
        %s582 = scalar_select %p581, %s36, 1
        %s583 = smul.addr %s582, 8
        %s584 = scalar_lea.vmem %s1, %s583
        %p585 = pneg %p83
        %p586 = pneg %p80
        %p587 = pneg %p104
        %p588 = pneg %p101
        %p589 = pneg %p125
        %p590 = pneg %p122
        %p591 = pneg %p146
        %p592 = pneg %p143
        %p593 = pneg %p167
        %p594 = pneg %p164
        %p595 = pneg %p188
        %p596 = pneg %p185
        %p597 = pneg %p209
        %p598 = pneg %p206
        %p599 = pneg %p230
        %p600 = pneg %p227
        %p601 = pneg %p251
        %p602 = pneg %p248
        %p603 = pneg %p272
        %p604 = pneg %p269
        %p605 = pneg %p293
        %p606 = pneg %p290
        %p607 = pneg %p314
        %p608 = pneg %p311
        %p609 = pneg %p335
        %p610 = pneg %p332
        %p611 = pneg %p356
        %p612 = pneg %p353
        %p613 = pneg %p377
        %p614 = pneg %p374
        %p615 = pneg %p398
        %p616 = pneg %p395
        %p617 = pneg %p419
        %p618 = pneg %p416
        %p619 = pneg %p445
        %p620 = pneg %p442
        %s621 = sand.u32 %s432, 1
        %s622 = scalar_lea.sflag [#allocation4], %s621
        %s623 = sand.u32 %s432, 1
        %s624 = smul.addr %s623, 8
        %s625 = scalar_lea.vmem [#allocation8], %s624
        %p626 = scmp.lt.s32.totalorder %s36, 1
        %s627 = scalar_select %p626, %s36, 1
        %s628 = smul.addr %s627, 8
        %s629 = scalar_lea.vmem %s1, %s628
        %v631 = vld [vmem:[%s629] sm:$0xff]
        %v632 = vpack.c.bf16 %v631, %v631
        %v633 = vld [vmem:[%s562] sm:$0x1]
        %v634 = vld [vmem:[%s2] sm:$0xf]
        %v635 = vld [vmem:[%s2 + $0x4] sm:$0xf]
        %v636 = vld [vmem:[%s2 + $0x8] sm:$0xf]
        %v637 = vld [vmem:[%s2 + $0xc] sm:$0xf]
        %v638 = vld [vmem:[%s3] sm:$0x1]
        %v640 = vlaneseq
        %v641 = vshrl.u32 %v640, 7
        %v642 = vsub.s32 0, %v641
        %v643 = vrot.slane %v638, %v642
        %v649 = vunpack.c.l.b16 %v634
        %v650 = vunpack.c.l.b16 %v635
        %v651 = vunpack.c.l.b16 %v636
        %v652 = vunpack.c.l.b16 %v637
        %v653 = vpack.c.b16 %v650, %v649
        %v654 = vpack.c.b16 %v652, %v651
        %vm657 = vcmask 261120
        %v659 = vsel %vm657, %v632, 0
        %661 = vmatprep.subr.bf16.mxu0 0
        %662 = vmatpush1.bf16.msra.mxu0 %v653
        %663 = vmatprep.subr.bf16.mxu0 0
        %664 = vmatpush1.bf16.msra.mxu0 %v654
        %665 = vmatprep.subr.bf16.mxu0 0
        %666 = vmatpush1.bf16.msra.mxu0 0
        %667 = vmatprep.subr.bf16.mxu0 0
        %668 = vmatpush1.bf16.msra.mxu0 0
        %669 = vmatprep.subr.bf16.mxu0 0
        %670 = vmatpush1.bf16.msra.mxu0 0
        %671 = vmatprep.subr.bf16.mxu0 0
        %672 = vmatpush1.bf16.msra.mxu0 0
        %673 = vmatprep.subr.bf16.mxu0 0
        %674 = vmatpush1.bf16.msra.mxu0 0
        %675 = vmatprep.subr.bf16.mxu0 0
        %676 = vmatpush1.bf16.msra.mxu0 0
        %677 = vmatprep.subr.bf16.mxu0 0
        %678 = vmatpush1.bf16.msra.mxu0 0
        %679 = vmatprep.subr.bf16.mxu0 0
        %680 = vmatpush1.bf16.msra.mxu0 0
        %681 = vmatprep.subr.bf16.mxu0 0
        %682 = vmatpush1.bf16.msra.mxu0 0
        %683 = vmatprep.subr.bf16.mxu0 0
        %684 = vmatpush1.bf16.msra.mxu0 0
        %685 = vmatprep.subr.bf16.mxu0 0
        %686 = vmatpush1.bf16.msra.mxu0 0
        %687 = vmatprep.subr.bf16.mxu0 0
        %688 = vmatpush1.bf16.msra.mxu0 0
        %689 = vmatprep.subr.bf16.mxu0 0
        %690 = vmatpush1.bf16.msra.mxu0 0
        %691 = vmatprep.subr.bf16.mxu0 0
        %692 = vmatpush1.bf16.msra.mxu0 0
        %693 = vmatprep.mubr.bf16.mxu0 0
        %694 = vmatmul.mubr.bf16.gmra.mrb[0].mxu0 %v659
        %v695 = vpop.f32.mrb[0].mxu0
        %v696 = vadd.f32 %v643, %v695
        %v697 = vpop.f32.mrb[0].mxu0
        %v698 = vpop.f32.mrb[0].mxu0
        %v699 = vpop.f32.mrb[0].mxu0
        %700 = vdwg.mxu0
        %v701 = vld [vmem:[%s4] sm:$0xf]
        %v702 = vld [vmem:[%s4 + $0x4] sm:$0xf]
        %v703 = vld [vmem:[%s4 + $0x8] sm:$0xf]
        %v704 = vld [vmem:[%s4 + $0xc] sm:$0xf]
        %v705 = vld [vmem:[%s5] sm:$0x1]
        %v707 = vlaneseq
        %v708 = vshrl.u32 %v707, 7
        %v709 = vsub.s32 0, %v708
        %v710 = vrot.slane %v705, %v709
        %v716 = vunpack.c.l.b16 %v701
        %v717 = vunpack.c.l.b16 %v702
        %v718 = vunpack.c.l.b16 %v703
        %v719 = vunpack.c.l.b16 %v704
        %v720 = vpack.c.b16 %v717, %v716
        %v721 = vpack.c.b16 %v719, %v718
        %724 = vmatprep.subr.bf16.mxu0 0
        %725 = vmatpush1.bf16.msra.mxu0 %v720
        %726 = vmatprep.subr.bf16.mxu0 0
        %727 = vmatpush1.bf16.msra.mxu0 %v721
        %728 = vmatprep.subr.bf16.mxu0 0
        %729 = vmatpush1.bf16.msra.mxu0 0
        %730 = vmatprep.subr.bf16.mxu0 0
        %731 = vmatpush1.bf16.msra.mxu0 0
        %732 = vmatprep.subr.bf16.mxu0 0
        %733 = vmatpush1.bf16.msra.mxu0 0
        %734 = vmatprep.subr.bf16.mxu0 0
        %735 = vmatpush1.bf16.msra.mxu0 0
        %736 = vmatprep.subr.bf16.mxu0 0
        %737 = vmatpush1.bf16.msra.mxu0 0
        %738 = vmatprep.subr.bf16.mxu0 0
        %739 = vmatpush1.bf16.msra.mxu0 0
        %740 = vmatprep.subr.bf16.mxu0 0
        %741 = vmatpush1.bf16.msra.mxu0 0
        %742 = vmatprep.subr.bf16.mxu0 0
        %743 = vmatpush1.bf16.msra.mxu0 0
        %744 = vmatprep.subr.bf16.mxu0 0
        %745 = vmatpush1.bf16.msra.mxu0 0
        %746 = vmatprep.subr.bf16.mxu0 0
        %747 = vmatpush1.bf16.msra.mxu0 0
        %748 = vmatprep.subr.bf16.mxu0 0
        %749 = vmatpush1.bf16.msra.mxu0 0
        %750 = vmatprep.subr.bf16.mxu0 0
        %751 = vmatpush1.bf16.msra.mxu0 0
        %752 = vmatprep.subr.bf16.mxu0 0
        %753 = vmatpush1.bf16.msra.mxu0 0
        %754 = vmatprep.subr.bf16.mxu0 0
        %755 = vmatpush1.bf16.msra.mxu0 0
        %756 = vmatprep.mubr.bf16.mxu0 0
        %757 = vmatmul.mubr.bf16.gmra.mrb[0].mxu0 %v659
        %v758 = vpop.f32.mrb[0].mxu0
        %v759 = vadd.f32 %v710, %v758
        %v760 = vpop.f32.mrb[0].mxu0
        %v761 = vpop.f32.mrb[0].mxu0
        %v762 = vpop.f32.mrb[0].mxu0
        %763 = vdwg.mxu0
        %v764 = vld [vmem:[%s6] sm:$0xf]
        %v765 = vld [vmem:[%s6 + $0x4] sm:$0xf]
        %v766 = vld [vmem:[%s6 + $0x8] sm:$0xf]
        %v767 = vld [vmem:[%s6 + $0xc] sm:$0xf]
        %v768 = vld [vmem:[#allocation5] sm:$0x1]
        %v770 = vlaneseq
        %v771 = vshrl.u32 %v770, 7
        %v772 = vsub.s32 0, %v771
        %v773 = vrot.slane %v768, %v772
        %v779 = vunpack.c.l.b16 %v764
        %v780 = vunpack.c.l.b16 %v765
        %v781 = vunpack.c.l.b16 %v766
        %v782 = vunpack.c.l.b16 %v767
        %v783 = vpack.c.b16 %v780, %v779
        %v784 = vpack.c.b16 %v782, %v781
        %787 = vmatprep.subr.bf16.mxu0 0
        %788 = vmatpush1.bf16.msra.mxu0 %v783
        %789 = vmatprep.subr.bf16.mxu0 0
        %790 = vmatpush1.bf16.msra.mxu0 %v784
        %791 = vmatprep.subr.bf16.mxu0 0
        %792 = vmatpush1.bf16.msra.mxu0 0
        %793 = vmatprep.subr.bf16.mxu0 0
        %794 = vmatpush1.bf16.msra.mxu0 0
        %795 = vmatprep.subr.bf16.mxu0 0
        %796 = vmatpush1.bf16.msra.mxu0 0
        %797 = vmatprep.subr.bf16.mxu0 0
        %798 = vmatpush1.bf16.msra.mxu0 0
        %799 = vmatprep.subr.bf16.mxu0 0
        %800 = vmatpush1.bf16.msra.mxu0 0
        %801 = vmatprep.subr.bf16.mxu0 0
        %802 = vmatpush1.bf16.msra.mxu0 0
        %803 = vmatprep.subr.bf16.mxu0 0
        %804 = vmatpush1.bf16.msra.mxu0 0
        %805 = vmatprep.subr.bf16.mxu0 0
        %806 = vmatpush1.bf16.msra.mxu0 0
        %807 = vmatprep.subr.bf16.mxu0 0
        %808 = vmatpush1.bf16.msra.mxu0 0
        %809 = vmatprep.subr.bf16.mxu0 0
        %810 = vmatpush1.bf16.msra.mxu0 0
        %811 = vmatprep.subr.bf16.mxu0 0
        %812 = vmatpush1.bf16.msra.mxu0 0
        %813 = vmatprep.subr.bf16.mxu0 0
        %814 = vmatpush1.bf16.msra.mxu0 0
        %815 = vmatprep.subr.bf16.mxu0 0
        %816 = vmatpush1.bf16.msra.mxu0 0
        %817 = vmatprep.subr.bf16.mxu0 0
        %818 = vmatpush1.bf16.msra.mxu0 0
        %819 = vmatprep.mubr.bf16.mxu0 0
        %820 = vmatmul.mubr.bf16.gmra.mrb[0].mxu0 %v659
        %v821 = vpop.f32.mrb[0].mxu0
        %v822 = vadd.f32 %v773, %v821
        %v823 = vpop.f32.mrb[0].mxu0
        %v824 = vpop.f32.mrb[0].mxu0
        %v825 = vpop.f32.mrb[0].mxu0
        %826 = vdwg.mxu0
        %v827 = vpack.c.bf16 %v696, %v696
        %829 = vrot.lane.b32.xlu0 %v827, 112
        %v830 = vpop.permute.xlu0 %829
        %v831 = vpack.c.bf16 %v759, %v759
        %833 = vrot.lane.b32.xlu0 %v831, 112
        %v834 = vpop.permute.xlu0 %833
        %v835 = vpack.c.bf16 %v822, %v822
        %837 = vrot.lane.b32.xlu0 %v835, 112
        %v838 = vpop.permute.xlu0 %837
        %vm839 = vcmask 130048
        %v841 = vsel %vm839, %v827, 0
        %v844 = vsel %vm839, %v831, 0
        %846 = vmatprep.subr.bf16.mxu0 0
        %847 = vmatpush1.bf16.xpose.msra.mxu0 %v844
        %848 = vmatprep.subr.bf16.mxu0 0
        %849 = vmatpush1.bf16.xpose.msra.mxu0 0
        %850 = vmatprep.subr.bf16.mxu0 0
        %851 = vmatpush1.bf16.xpose.msra.mxu0 0
        %852 = vmatprep.subr.bf16.mxu0 0
        %853 = vmatpush1.bf16.xpose.msra.mxu0 0
        %854 = vmatprep.subr.bf16.mxu0 0
        %855 = vmatpush1.bf16.xpose.msra.mxu0 0
        %856 = vmatprep.subr.bf16.mxu0 0
        %857 = vmatpush1.bf16.xpose.msra.mxu0 0
        %858 = vmatprep.subr.bf16.mxu0 0
        %859 = vmatpush1.bf16.xpose.msra.mxu0 0
        %860 = vmatprep.subr.bf16.mxu0 0
        %861 = vmatpush1.bf16.xpose.msra.mxu0 0
        %862 = vmatprep.subr.bf16.mxu0 0
        %863 = vmatpush1.bf16.xpose.msra.mxu0 0
        %864 = vmatprep.subr.bf16.mxu0 0
        %865 = vmatpush1.bf16.xpose.msra.mxu0 0
        %866 = vmatprep.subr.bf16.mxu0 0
        %867 = vmatpush1.bf16.xpose.msra.mxu0 0
        %868 = vmatprep.subr.bf16.mxu0 0
        %869 = vmatpush1.bf16.xpose.msra.mxu0 0
        %870 = vmatprep.subr.bf16.mxu0 0
        %871 = vmatpush1.bf16.xpose.msra.mxu0 0
        %872 = vmatprep.subr.bf16.mxu0 0
        %873 = vmatpush1.bf16.xpose.msra.mxu0 0
        %874 = vmatprep.subr.bf16.mxu0 0
        %875 = vmatpush1.bf16.xpose.msra.mxu0 0
        %876 = vmatprep.subr.bf16.mxu0 0
        %877 = vmatpush1.bf16.xpose.msra.mxu0 0
        %878 = vmatprep.mubr.bf16.mxu0 0
        %879 = vmatmul.mubr.bf16.gmra.mrb[0].mxu0 %v841
        %v880 = vpop.f32.mrb[0].mxu0
        %v881 = vadd.f32 0.0, %v880
        %v882 = vpop.f32.mrb[0].mxu0
        %v883 = vpop.f32.mrb[0].mxu0
        %v884 = vpop.f32.mrb[0].mxu0
        %885 = vdwg.mxu0
        %v887 = vsel %vm839, %v830, 0
        %v890 = vsel %vm839, %v834, 0
        %892 = vmatprep.subr.bf16.mxu0 0
        %893 = vmatpush1.bf16.xpose.msra.mxu0 %v890
        %894 = vmatprep.subr.bf16.mxu0 0
        %895 = vmatpush1.bf16.xpose.msra.mxu0 0
        %896 = vmatprep.subr.bf16.mxu0 0
        %897 = vmatpush1.bf16.xpose.msra.mxu0 0
        %898 = vmatprep.subr.bf16.mxu0 0
        %899 = vmatpush1.bf16.xpose.msra.mxu0 0
        %900 = vmatprep.subr.bf16.mxu0 0
        %901 = vmatpush1.bf16.xpose.msra.mxu0 0
        %902 = vmatprep.subr.bf16.mxu0 0
        %903 = vmatpush1.bf16.xpose.msra.mxu0 0
        %904 = vmatprep.subr.bf16.mxu0 0
        %905 = vmatpush1.bf16.xpose.msra.mxu0 0
        %906 = vmatprep.subr.bf16.mxu0 0
        %907 = vmatpush1.bf16.xpose.msra.mxu0 0
        %908 = vmatprep.subr.bf16.mxu0 0
        %909 = vmatpush1.bf16.xpose.msra.mxu0 0
        %910 = vmatprep.subr.bf16.mxu0 0
        %911 = vmatpush1.bf16.xpose.msra.mxu0 0
        %912 = vmatprep.subr.bf16.mxu0 0
        %913 = vmatpush1.bf16.xpose.msra.mxu0 0
        %914 = vmatprep.subr.bf16.mxu0 0
        %915 = vmatpush1.bf16.xpose.msra.mxu0 0
        %916 = vmatprep.subr.bf16.mxu0 0
        %917 = vmatpush1.bf16.xpose.msra.mxu0 0
        %918 = vmatprep.subr.bf16.mxu0 0
        %919 = vmatpush1.bf16.xpose.msra.mxu0 0
        %920 = vmatprep.subr.bf16.mxu0 0
        %921 = vmatpush1.bf16.xpose.msra.mxu0 0
        %922 = vmatprep.subr.bf16.mxu0 0
        %923 = vmatpush1.bf16.xpose.msra.mxu0 0
        %924 = vmatprep.mubr.bf16.mxu0 0
        %925 = vmatmul.mubr.bf16.gmra.mrb[0].mxu0 %v887
        %v926 = vpop.f32.mrb[0].mxu0
        %v927 = vadd.f32 0.0, %v926
        %v928 = vpop.f32.mrb[0].mxu0
        %v929 = vpop.f32.mrb[0].mxu0
        %v930 = vpop.f32.mrb[0].mxu0
        %931 = vdwg.mxu0
        %v933 = vlaneseq
        %v934 = vshrl.u32 %v933, 7
        %v935 = vsub.s32 0, %v934
        %v936 = vrot.slane %v633, %v935
        %v938 = vadd.f32 %v881, %v936
        %v939 = vadd.f32 %v927, %v936
        %vm940 = vcmask 64512
        %v941 = vsel %vm940, %v938, -inf
        %942 = vmax.xlane.f32.xlu0 %v941
        %v943 = vpop.xlane.xlu0 %942
        %v944 = vsel %vm940, %v939, -inf
        %945 = vmax.xlane.f32.xlu0 %v944
        %v946 = vpop.xlane.xlu0 %945
        %v947 = vsub.f32 %v938, %v943
        %v948 = vsub.f32 %v939, %v946
        %v949 = vmul.f32 %v947, 1.442695
        %v950 = vpow.pop %v949
        %v951 = vmul.f32 %v948, 1.442695
        %v952 = vpow.pop %v951
        %v953 = vsel %vm940, %v950, 0.0
        %954 = vadd.xlane.f32.xlu0 %v953
        %v955 = vpop.xlane.xlu0 %954
        %v956 = vsel %vm940, %v952, 0.0
        %957 = vadd.xlane.f32.xlu0 %v956
        %v958 = vpop.xlane.xlu0 %957
        %v959 = vrcp.pop %v955
        %v960 = vrcp.pop %v958
        %v961 = vmul.f32 %v950, %v959
        %v962 = vmul.f32 %v952, %v960
        %v963 = vpack.c.bf16 %v961, %v961
        %v964 = vpack.c.bf16 %v962, %v962
        %v966 = vsel %vm940, %v963, 0
        %vm968 = vcmask 1043456
        %v970 = vsel %vm968, %v835, 0
        %972 = vmatprep.subr.bf16.mxu0 0
        %973 = vmatpush1.bf16.msra.mxu0 %v970
        %974 = vmatprep.subr.bf16.mxu0 0
        %975 = vmatpush1.bf16.msra.mxu0 0
        %976 = vmatprep.subr.bf16.mxu0 0
        %977 = vmatpush1.bf16.msra.mxu0 0
        %978 = vmatprep.subr.bf16.mxu0 0
        %979 = vmatpush1.bf16.msra.mxu0 0
        %980 = vmatprep.subr.bf16.mxu0 0
        %981 = vmatpush1.bf16.msra.mxu0 0
        %982 = vmatprep.subr.bf16.mxu0 0
        %983 = vmatpush1.bf16.msra.mxu0 0
        %984 = vmatprep.subr.bf16.mxu0 0
        %985 = vmatpush1.bf16.msra.mxu0 0
        %986 = vmatprep.subr.bf16.mxu0 0
        %987 = vmatpush1.bf16.msra.mxu0 0
        %988 = vmatprep.subr.bf16.mxu0 0
        %989 = vmatpush1.bf16.msra.mxu0 0
        %990 = vmatprep.subr.bf16.mxu0 0
        %991 = vmatpush1.bf16.msra.mxu0 0
        %992 = vmatprep.subr.bf16.mxu0 0
        %993 = vmatpush1.bf16.msra.mxu0 0
        %994 = vmatprep.subr.bf16.mxu0 0
        %995 = vmatpush1.bf16.msra.mxu0 0
        %996 = vmatprep.subr.bf16.mxu0 0
        %997 = vmatpush1.bf16.msra.mxu0 0
        %998 = vmatprep.subr.bf16.mxu0 0
        %999 = vmatpush1.bf16.msra.mxu0 0
        %1000 = vmatprep.subr.bf16.mxu0 0
        %1001 = vmatpush1.bf16.msra.mxu0 0
        %1002 = vmatprep.subr.bf16.mxu0 0
        %1003 = vmatpush1.bf16.msra.mxu0 0
        %1004 = vmatprep.mubr.bf16.mxu0 0
        %1005 = vmatmul.mubr.bf16.gmra.mrb[0].mxu0 %v966
        %v1006 = vpop.f32.mrb[0].mxu0
        %v1007 = vadd.f32 0.0, %v1006
        %v1008 = vpop.f32.mrb[0].mxu0
        %v1009 = vpop.f32.mrb[0].mxu0
        %v1010 = vpop.f32.mrb[0].mxu0
        %1011 = vdwg.mxu0
        %v1013 = vsel %vm940, %v964, 0
        %v1016 = vsel %vm968, %v838, 0
        %1018 = vmatprep.subr.bf16.mxu0 0
        %1019 = vmatpush1.bf16.msra.mxu0 %v1016
        %1020 = vmatprep.subr.bf16.mxu0 0
        %1021 = vmatpush1.bf16.msra.mxu0 0
        %1022 = vmatprep.subr.bf16.mxu0 0
        %1023 = vmatpush1.bf16.msra.mxu0 0
        %1024 = vmatprep.subr.bf16.mxu0 0
        %1025 = vmatpush1.bf16.msra.mxu0 0
        %1026 = vmatprep.subr.bf16.mxu0 0
        %1027 = vmatpush1.bf16.msra.mxu0 0
        %1028 = vmatprep.subr.bf16.mxu0 0
        %1029 = vmatpush1.bf16.msra.mxu0 0
        %1030 = vmatprep.subr.bf16.mxu0 0
        %1031 = vmatpush1.bf16.msra.mxu0 0
        %1032 = vmatprep.subr.bf16.mxu0 0
        %1033 = vmatpush1.bf16.msra.mxu0 0
        %1034 = vmatprep.subr.bf16.mxu0 0
        %1035 = vmatpush1.bf16.msra.mxu0 0
        %1036 = vmatprep.subr.bf16.mxu0 0
        %1037 = vmatpush1.bf16.msra.mxu0 0
        %1038 = vmatprep.subr.bf16.mxu0 0
        %1039 = vmatpush1.bf16.msra.mxu0 0
        %1040 = vmatprep.subr.bf16.mxu0 0
        %1041 = vmatpush1.bf16.msra.mxu0 0
        %1042 = vmatprep.subr.bf16.mxu0 0
        %1043 = vmatpush1.bf16.msra.mxu0 0
        %1044 = vmatprep.subr.bf16.mxu0 0
        %1045 = vmatpush1.bf16.msra.mxu0 0
        %1046 = vmatprep.subr.bf16.mxu0 0
        %1047 = vmatpush1.bf16.msra.mxu0 0
        %1048 = vmatprep.subr.bf16.mxu0 0
        %1049 = vmatpush1.bf16.msra.mxu0 0
        %1050 = vmatprep.mubr.bf16.mxu0 0
        %1051 = vmatmul.mubr.bf16.gmra.mrb[0].mxu0 %v1013
        %v1052 = vpop.f32.mrb[0].mxu0
        %v1053 = vadd.f32 0.0, %v1052
        %v1054 = vpop.f32.mrb[0].mxu0
        %v1055 = vpop.f32.mrb[0].mxu0
        %v1056 = vpop.f32.mrb[0].mxu0
        %1057 = vdwg.mxu0
        %v1058 = vpack.c.bf16 %v1007, %v1007
        %v1059 = vpack.c.bf16 %v1053, %v1053
        %1061 = vrot.lane.b32.xlu0 %v1059, 16
        %v1062 = vpop.permute.xlu0 %1061
        %v1065 = vsel %vm839, %v1058, %v1062
        %v1066 = vld [vmem:[%s8] sm:$0xf]
        %v1067 = vld [vmem:[%s8 + $0x4] sm:$0xf]
        %v1068 = vld [vmem:[%s8 + $0x8] sm:$0xf]
        %v1069 = vld [vmem:[%s8 + $0xc] sm:$0xf]
        %v1070 = vld [vmem:[#allocation7] sm:$0x1]
        %v1072 = vlaneseq
        %v1073 = vshrl.u32 %v1072, 7
        %v1074 = vsub.s32 0, %v1073
        %v1075 = vrot.slane %v1070, %v1074
        %v1081 = vunpack.c.l.b16 %v1066
        %v1082 = vunpack.c.l.b16 %v1067
        %v1083 = vunpack.c.l.b16 %v1068
        %v1084 = vunpack.c.l.b16 %v1069
        %v1085 = vpack.c.b16 %v1082, %v1081
        %v1086 = vpack.c.b16 %v1084, %v1083
        %v1089 = vsel %vm657, %v1065, 0
        %1091 = vmatprep.subr.bf16.mxu0 0
        %1092 = vmatpush1.bf16.msra.mxu0 %v1085
        %1093 = vmatprep.subr.bf16.mxu0 0
        %1094 = vmatpush1.bf16.msra.mxu0 %v1086
        %1095 = vmatprep.subr.bf16.mxu0 0
        %1096 = vmatpush1.bf16.msra.mxu0 0
        %1097 = vmatprep.subr.bf16.mxu0 0
        %1098 = vmatpush1.bf16.msra.mxu0 0
        %1099 = vmatprep.subr.bf16.mxu0 0
        %1100 = vmatpush1.bf16.msra.mxu0 0
        %1101 = vmatprep.subr.bf16.mxu0 0
        %1102 = vmatpush1.bf16.msra.mxu0 0
        %1103 = vmatprep.subr.bf16.mxu0 0
        %1104 = vmatpush1.bf16.msra.mxu0 0
        %1105 = vmatprep.subr.bf16.mxu0 0
        %1106 = vmatpush1.bf16.msra.mxu0 0
        %1107 = vmatprep.subr.bf16.mxu0 0
        %1108 = vmatpush1.bf16.msra.mxu0 0
        %1109 = vmatprep.subr.bf16.mxu0 0
        %1110 = vmatpush1.bf16.msra.mxu0 0
        %1111 = vmatprep.subr.bf16.mxu0 0
        %1112 = vmatpush1.bf16.msra.mxu0 0
        %1113 = vmatprep.subr.bf16.mxu0 0
        %1114 = vmatpush1.bf16.msra.mxu0 0
        %1115 = vmatprep.subr.bf16.mxu0 0
        %1116 = vmatpush1.bf16.msra.mxu0 0
        %1117 = vmatprep.subr.bf16.mxu0 0
        %1118 = vmatpush1.bf16.msra.mxu0 0
        %1119 = vmatprep.subr.bf16.mxu0 0
        %1120 = vmatpush1.bf16.msra.mxu0 0
        %1121 = vmatprep.subr.bf16.mxu0 0
        %1122 = vmatpush1.bf16.msra.mxu0 0
        %1123 = vmatprep.mubr.bf16.mxu0 0
        %1124 = vmatmul.mubr.bf16.gmra.mrb[0].mxu0 %v1089
        %v1125 = vpop.f32.mrb[0].mxu0
        %v1126 = vadd.f32 %v1075, %v1125
        %v1127 = vpop.f32.mrb[0].mxu0
        %v1128 = vpop.f32.mrb[0].mxu0
        %v1129 = vpop.f32.mrb[0].mxu0
        %1130 = vdwg.mxu0
        %v1131 = vadd.f32 %v1126, %v631
        %v1132 = vld [vmem:[%s10] sm:$0x1]
        %v1133 = vld [vmem:[%s11] sm:$0x1]
        %v1134 = vsel %vm657, %v1131, 0.0
        %1135 = vadd.xlane.f32.xlu0 %v1134
        %v1136 = vpop.xlane.xlu0 %1135
        %v1137 = vrcp.pop 32.0
        %v1138 = vmul.f32 %v1136, %v1137
        %v1139 = vsub.f32 %v1131, %v1138
        %v1140 = vmul.f32 %v1139, %v1139
        %v1141 = vsel %vm657, %v1140, 0.0
        %1142 = vadd.xlane.f32.xlu0 %v1141
        %v1143 = vpop.xlane.xlu0 %1142
        %v1144 = vmul.f32 %v1143, %v1137
        %v1145 = vadd.f32 %v1144, 1e-12
        %v1146 = vrsqrt.pop %v1145
        %v1147 = vmul.f32 %v1145, %v1146
        %vm1148 = vcmp.eq.f32.partialorder %v1145, inf
        %v1149 = vsel %vm1148, %v1145, %v1147
        %vm1150 = vcmp.eq.f32.partialorder %v1145, 0.0
        %v1151 = vand.u32 %v1145, 2147483648
        %v1152 = vsel %vm1150, %v1151, %v1149
        %v1153 = vrcp.pop %v1152
        %v1154 = vmul.f32 %v1139, %v1153
        %v1156 = vlaneseq
        %v1157 = vshrl.u32 %v1156, 7
        %v1158 = vsub.s32 0, %v1157
        %v1159 = vrot.slane %v1132, %v1158
        %v1161 = vmul.f32 %v1159, %v1154
        %v1163 = vlaneseq
        %v1164 = vshrl.u32 %v1163, 7
        %v1165 = vsub.s32 0, %v1164
        %v1166 = vrot.slane %v1133, %v1165
        %v1168 = vadd.f32 %v1161, %v1166
        %v1169 = vpack.c.bf16 %v1168, %v1168
        %v1170 = vld [vmem:[%s12] sm:$0xf]
        %v1171 = vld [vmem:[%s12 + $0x4] sm:$0xf]
        %v1172 = vld [vmem:[%s12 + $0x8] sm:$0xf]
        %v1173 = vld [vmem:[%s12 + $0xc] sm:$0xf]
        %v1174 = vld [vmem:[%s13] sm:$0x1]
        %v1176 = vlaneseq
        %v1177 = vshrl.u32 %v1176, 7
        %v1178 = vsub.s32 0, %v1177
        %v1179 = vrot.slane %v1174, %v1178
        %v1185 = vunpack.c.l.b16 %v1170
        %v1186 = vunpack.c.l.b16 %v1171
        %v1187 = vunpack.c.l.b16 %v1172
        %v1188 = vunpack.c.l.b16 %v1173
        %v1189 = vpack.c.b16 %v1186, %v1185
        %v1190 = vpack.c.b16 %v1188, %v1187
        %v1194 = vsel %vm657, %v1169, 0
        %1196 = vmatprep.subr.bf16.mxu0 0
        %1197 = vmatpush1.bf16.msra.mxu0 %v1189
        %1198 = vmatprep.subr.bf16.mxu0 0
        %1199 = vmatpush1.bf16.msra.mxu0 %v1190
        %1200 = vmatprep.subr.bf16.mxu0 0
        %1201 = vmatpush1.bf16.msra.mxu0 0
        %1202 = vmatprep.subr.bf16.mxu0 0
        %1203 = vmatpush1.bf16.msra.mxu0 0
        %1204 = vmatprep.subr.bf16.mxu0 0
        %1205 = vmatpush1.bf16.msra.mxu0 0
        %1206 = vmatprep.subr.bf16.mxu0 0
        %1207 = vmatpush1.bf16.msra.mxu0 0
        %1208 = vmatprep.subr.bf16.mxu0 0
        %1209 = vmatpush1.bf16.msra.mxu0 0
        %1210 = vmatprep.subr.bf16.mxu0 0
        %1211 = vmatpush1.bf16.msra.mxu0 0
        %1212 = vmatprep.subr.bf16.mxu0 0
        %1213 = vmatpush1.bf16.msra.mxu0 0
        %1214 = vmatprep.subr.bf16.mxu0 0
        %1215 = vmatpush1.bf16.msra.mxu0 0
        %1216 = vmatprep.subr.bf16.mxu0 0
        %1217 = vmatpush1.bf16.msra.mxu0 0
        %1218 = vmatprep.subr.bf16.mxu0 0
        %1219 = vmatpush1.bf16.msra.mxu0 0
        %1220 = vmatprep.subr.bf16.mxu0 0
        %1221 = vmatpush1.bf16.msra.mxu0 0
        %1222 = vmatprep.subr.bf16.mxu0 0
        %1223 = vmatpush1.bf16.msra.mxu0 0
        %1224 = vmatprep.subr.bf16.mxu0 0
        %1225 = vmatpush1.bf16.msra.mxu0 0
        %1226 = vmatprep.subr.bf16.mxu0 0
        %1227 = vmatpush1.bf16.msra.mxu0 0
        %1228 = vmatprep.mubr.bf16.mxu0 0
        %1229 = vmatmul.mubr.bf16.gmra.mrb[0].mxu0 %v1194
        %v1230 = vpop.f32.mrb[0].mxu0
        %v1231 = vadd.f32 %v1179, %v1230
        %v1232 = vpop.f32.mrb[0].mxu0
        %v1233 = vpop.f32.mrb[0].mxu0
        %v1234 = vpop.f32.mrb[0].mxu0
        %1235 = vdwg.mxu0
        %v1236 = vmul.f32 %v1231, 0.5
        %v1237 = vrcp.pop 1.4142135
        %v1238 = vmul.f32 %v1231, %v1237
        %v1239 = verf.f32.pop %v1238
        %v1240 = vadd.f32 %v1239, 1.0
        %v1241 = vmul.f32 %v1236, %v1240
        %v1242 = vpack.c.bf16 %v1241, %v1241
        %v1243 = vld [vmem:[%s14] sm:$0xf]
        %v1244 = vld [vmem:[%s14 + $0x4] sm:$0xf]
        %v1245 = vld [vmem:[%s14 + $0x8] sm:$0xf]
        %v1246 = vld [vmem:[%s14 + $0xc] sm:$0xf]
        %v1247 = vld [vmem:[%s14 + $0x10] sm:$0xf]
        %v1248 = vld [vmem:[%s14 + $0x14] sm:$0xf]
        %v1249 = vld [vmem:[%s14 + $0x18] sm:$0xf]
        %v1250 = vld [vmem:[%s14 + $0x1c] sm:$0xf]
        %v1251 = vld [vmem:[%s14 + $0x20] sm:$0xf]
        %v1252 = vld [vmem:[%s14 + $0x24] sm:$0xf]
        %v1253 = vld [vmem:[%s14 + $0x28] sm:$0xf]
        %v1254 = vld [vmem:[%s14 + $0x2c] sm:$0xf]
        %v1255 = vld [vmem:[%s14 + $0x30] sm:$0xf]
        %v1256 = vld [vmem:[%s14 + $0x34] sm:$0xf]
        %v1257 = vld [vmem:[%s14 + $0x38] sm:$0xf]
        %v1258 = vld [vmem:[%s14 + $0x3c] sm:$0xf]
        %v1259 = vld [vmem:[%s15] sm:$0x1]
        %v1261 = vlaneseq
        %v1262 = vshrl.u32 %v1261, 7
        %v1263 = vsub.s32 0, %v1262
        %v1264 = vrot.slane %v1259, %v1263
        %v1282 = vunpack.c.l.b16 %v1243
        %v1283 = vunpack.c.l.b16 %v1244
        %v1284 = vunpack.c.l.b16 %v1245
        %v1285 = vunpack.c.l.b16 %v1246
        %v1286 = vunpack.c.l.b16 %v1247
        %v1287 = vunpack.c.l.b16 %v1248
        %v1288 = vunpack.c.l.b16 %v1249
        %v1289 = vunpack.c.l.b16 %v1250
        %v1290 = vunpack.c.l.b16 %v1251
        %v1291 = vunpack.c.l.b16 %v1252
        %v1292 = vunpack.c.l.b16 %v1253
        %v1293 = vunpack.c.l.b16 %v1254
        %v1294 = vunpack.c.l.b16 %v1255
        %v1295 = vunpack.c.l.b16 %v1256
        %v1296 = vunpack.c.l.b16 %v1257
        %v1297 = vunpack.c.l.b16 %v1258
        %v1298 = vpack.c.b16 %v1283, %v1282
        %v1299 = vpack.c.b16 %v1285, %v1284
        %v1300 = vpack.c.b16 %v1287, %v1286
        %v1301 = vpack.c.b16 %v1289, %v1288
        %v1302 = vpack.c.b16 %v1291, %v1290
        %v1303 = vpack.c.b16 %v1293, %v1292
        %v1304 = vpack.c.b16 %v1295, %v1294
        %v1305 = vpack.c.b16 %v1297, %v1296
        %1314 = vmatprep.subr.bf16.mxu0 0
        %1315 = vmatpush1.bf16.msra.mxu0 %v1298
        %1316 = vmatprep.subr.bf16.mxu0 0
        %1317 = vmatpush1.bf16.msra.mxu0 %v1299
        %1318 = vmatprep.subr.bf16.mxu0 0
        %1319 = vmatpush1.bf16.msra.mxu0 %v1300
        %1320 = vmatprep.subr.bf16.mxu0 0
        %1321 = vmatpush1.bf16.msra.mxu0 %v1301
        %1322 = vmatprep.subr.bf16.mxu0 0
        %1323 = vmatpush1.bf16.msra.mxu0 %v1302
        %1324 = vmatprep.subr.bf16.mxu0 0
        %1325 = vmatpush1.bf16.msra.mxu0 %v1303
        %1326 = vmatprep.subr.bf16.mxu0 0
        %1327 = vmatpush1.bf16.msra.mxu0 %v1304
        %1328 = vmatprep.subr.bf16.mxu0 0
        %1329 = vmatpush1.bf16.msra.mxu0 %v1305
        %1330 = vmatprep.subr.bf16.mxu0 0
        %1331 = vmatpush1.bf16.msra.mxu0 0
        %1332 = vmatprep.subr.bf16.mxu0 0
        %1333 = vmatpush1.bf16.msra.mxu0 0
        %1334 = vmatprep.subr.bf16.mxu0 0
        %1335 = vmatpush1.bf16.msra.mxu0 0
        %1336 = vmatprep.subr.bf16.mxu0 0
        %1337 = vmatpush1.bf16.msra.mxu0 0
        %1338 = vmatprep.subr.bf16.mxu0 0
        %1339 = vmatpush1.bf16.msra.mxu0 0
        %1340 = vmatprep.subr.bf16.mxu0 0
        %1341 = vmatpush1.bf16.msra.mxu0 0
        %1342 = vmatprep.subr.bf16.mxu0 0
        %1343 = vmatpush1.bf16.msra.mxu0 0
        %1344 = vmatprep.subr.bf16.mxu0 0
        %1345 = vmatpush1.bf16.msra.mxu0 0
        %1346 = vmatprep.mubr.bf16.mxu0 0
        %1347 = vmatmul.mubr.bf16.gmra.mrb[0].mxu0 %v1242
        %v1348 = vpop.f32.mrb[0].mxu0
        %v1349 = vadd.f32 %v1264, %v1348
        %v1350 = vpop.f32.mrb[0].mxu0
        %v1351 = vpop.f32.mrb[0].mxu0
        %v1352 = vpop.f32.mrb[0].mxu0
        %1353 = vdwg.mxu0
        %v1354 = vadd.f32 %v1349, %v1168
        %v1355 = vld [vmem:[%s16] sm:$0x1]
        %v1356 = vld [vmem:[%s17] sm:$0x1]
        %v1357 = vsel %vm657, %v1354, 0.0
        %1358 = vadd.xlane.f32.xlu0 %v1357
        %v1359 = vpop.xlane.xlu0 %1358
        %v1360 = vmul.f32 %v1359, %v1137
        %v1361 = vsub.f32 %v1354, %v1360
        %v1362 = vmul.f32 %v1361, %v1361
        %v1363 = vsel %vm657, %v1362, 0.0
        %1364 = vadd.xlane.f32.xlu0 %v1363
        %v1365 = vpop.xlane.xlu0 %1364
        %v1366 = vmul.f32 %v1365, %v1137
        %v1367 = vadd.f32 %v1366, 1e-12
        %v1368 = vrsqrt.pop %v1367
        %v1369 = vmul.f32 %v1367, %v1368
        %vm1370 = vcmp.eq.f32.partialorder %v1367, inf
        %v1371 = vsel %vm1370, %v1367, %v1369
        %vm1372 = vcmp.eq.f32.partialorder %v1367, 0.0
        %v1373 = vand.u32 %v1367, 2147483648
        %v1374 = vsel %vm1372, %v1373, %v1371
        %v1375 = vrcp.pop %v1374
        %v1376 = vmul.f32 %v1361, %v1375
        %v1378 = vlaneseq
        %v1379 = vshrl.u32 %v1378, 7
        %v1380 = vsub.s32 0, %v1379
        %v1381 = vrot.slane %v1355, %v1380
        %v1383 = vmul.f32 %v1381, %v1376
        %v1385 = vlaneseq
        %v1386 = vshrl.u32 %v1385, 7
        %v1387 = vsub.s32 0, %v1386
        %v1388 = vrot.slane %v1356, %v1387
        %v1390 = vadd.f32 %v1383, %v1388
        %1391 = vst.msk [vmem:[%s625] sm:$0xff] %vm657, %v1390
        %s1392 = sand.u32 %s432, 1
        %s1393 = scalar_lea.sflag [#allocation4], %s1392
        %s1394 = sand.u32 %s432, 1
        %s1395 = smul.addr %s1394, 8
        %s1396 = scalar_lea.vmem [#allocation8], %s1395
        // Predicated region
        $region105: #{tpu_custom_call.1} parent=91 // pred_check
          %p1397 = pneg %p442
        $region106: #{tpu_custom_call.1} parent=91 // pred_check_branch
          %1399 = sbr.rel (%p1397) target = $region108
        $region107: #{tpu_custom_call.1} parent=91 // pred_region
          %s1401 = ssub.s32 128, 128
          %1402 = vsyncadd %s1393, %s1401
          %s1403 = smul.addr %s36, 128
          %s1404 = scalar_lea.hbm %s18, %s1403
          %s1406 = sshll.u32 %s1396, 4
          %s1407 = int_to_ptr.vmem [resolvable:$true] %s1406
          %1409 = dma.vmem_to_hbm [thread:$0]  %s1407, 128, %s1404, %s1393
        $region108: #{tpu_custom_call.1} parent=91 // pred_fallthru
          _
      $region92: #{tpu_custom_call.1} parent=5 // pred_fallthru
        _
      %p1410 = scmp.le.s32.totalorder 2, %s31
      // Predicated region
      $region109: #{tpu_custom_call.1} parent=5 // pred_check
        %p1411 = pneg %p1410
      $region110: #{tpu_custom_call.1} parent=5 // pred_check_branch
        %1413 = sbr.rel (%p1411) target = $region112
      $region111: #{tpu_custom_call.1} parent=5 // pred_region
        %s1414 = ssub.s32 %s31, 2
        // Predicated region
        $region113: #{tpu_custom_call.1} parent=111 // pred_check
          %p1415 = pneg %p448
        $region114: #{tpu_custom_call.1} parent=111 // pred_check_branch
          %1417 = sbr.rel (%p1415) target = $region116
        $region115: #{tpu_custom_call.1} parent=111 // pred_region
          %s1418 = sand.u32 %s433, 1
          %s1419 = scalar_lea.sflag [#allocation4], %s1418
          %s1420 = sand.u32 %s433, 1
          %s1421 = smul.addr %s1420, 8
          %s1422 = scalar_lea.vmem [#allocation8], %s1421
          %1423 = dma.done %s1419, 128
        $region116: #{tpu_custom_call.1} parent=111 // pred_fallthru
          _
      $region112: #{tpu_custom_call.1} parent=5 // pred_fallthru
        _
    $region6: #{tpu_custom_call.1} parent=1 // loop_footer
      %s35 = sadd.s32 1, %s31
    $region7: #{tpu_custom_call.1} parent=1 // loop_footer_branch
      %30 = sbr.rel target = $region3
    $region8: #{tpu_custom_call.1} parent=1 // loop_exit
      _
    %1424 = vsyncpa [#allocation3], 1
    %s1425 = scalar_lea.sflag [#allocation3], 1
    %1426 = vsyncpa %s1425, 1
    %1427 = vsyncpa [#allocation6], 1
    %1428 = vsyncpa [#allocation4], 1
    %s1429 = scalar_lea.sflag [#allocation4], 1
    %1430 = vsyncpa %s1429, 1

</llo_original>
